<compile_context>
chip_gen: v7x
topology: tpu7x:2x2x1
jax: 0.10.0
libtpu: 0.0.40
codegen_flags: <defaults>
</compile_context>

<pallas_src>
import jax
import jax.numpy as jnp
from jax.experimental import pallas as pl
from jax.experimental.pallas import tpu as pltpu


# ---------------------------------------------------------------------------
# Small helpers
# ---------------------------------------------------------------------------
def _round_up(x, m):
    return ((x + m - 1) // m) * m


def _num_tensorcores():
    """2 for v7x-style dual-TensorCore chips, else 1 (safe default)."""
    try:
        kind = jax.devices()[0].device_kind.lower().replace(" ", "")
    except Exception:
        return 1
    if "v4" in kind or "v5" in kind or "v6" in kind:
        return 1
    if "v7" in kind or "tpu7" in kind:
        return 2
    return 1


def _row_tiling(m, n_blocks, bytes_per_row, vmem_budget=8 * 1024 * 1024):
    """Row tile TM (multiple of 16 for bf16 sublane tiling) and padded M."""
    nb = max(1, int(n_blocks))
    while _round_up(-(-m // nb), 16) * bytes_per_row > vmem_budget:
        nb += 1
    m_pad = _round_up(m, 16 * nb)
    return m_pad // nb, m_pad


def _cparams(sem):
    return pltpu.CompilerParams(dimension_semantics=sem,
                                vmem_limit_bytes=32 * 1024 * 1024)


def _pool_candidate_patches(x, r, c, hp, wp):
    """Stride-2 im2col for pool candidate (r, c): (B*hp*wp, 9*Cin), tap-major."""
    b = x.shape[0]
    cin = x.shape[-1]
    taps = [x[:, r + dy: r + dy + 2 * hp - 1: 2,
               c + dx: c + dx + 2 * wp - 1: 2, :]
            for dy in range(3) for dx in range(3)]
    cand = jnp.stack(taps, axis=3)                      # (B, hp, wp, 9, Cin)
    return cand.reshape(b * hp * wp, 9 * cin)


# ---------------------------------------------------------------------------
# Pallas kernels
# ---------------------------------------------------------------------------
def _conv1_kernel(p_ref, w_ref, b_ref, o_ref):
    """conv1 GEMM against a block-diagonal weight + bias + ReLU + 2x2 max-pool.

    p_ref: (TM, 36) bf16   4 pool candidates x 9 taps stacked along K.
    w_ref: (36, 128) bf16  block-diag replication of the (9, 32) conv weight.
    b_ref: (1, 128) f32    bias tiled 4x.
    o_ref: (TM, 32)        pooled + ReLU'd rows.
    """
    y = jnp.dot(p_ref[...], w_ref[...], preferred_element_type=jnp.float32)
    y = jnp.maximum(y + b_ref[...], 0.0)                # ReLU commutes with max
    # Max over the 4 lane-groups of 32 via XLU lane rotations (cheap slot).
    t = jnp.maximum(y, pltpu.roll(y, 64, axis=1))
    t = jnp.maximum(t, pltpu.roll(t, 32, axis=1))
    o_ref[...] = t[:, :32].astype(o_ref.dtype)


def _conv_relu_pool_kernel(p_ref, w_ref, b_ref, o_ref):
    """Fused conv GEMM + bias + ReLU + 2x2 max-pool (single merged MXU GEMM).

    p_ref: (4, TM, K) bf16  im2col patches for the 4 pool candidates.
    w_ref: (K, N) bf16      conv weights in matmul layout.
    b_ref: (1, N) f32       bias.
    o_ref: (TM, N)          pooled + ReLU'd rows.
    """
    tm = o_ref.shape[0]
    k = p_ref.shape[-1]
    p = p_ref[...].reshape(4 * tm, k)                   # free: TM % 16 == 0
    y = jnp.dot(p, w_ref[...], preferred_element_type=jnp.float32) + b_ref[...]
    y = jnp.maximum(y, 0.0)
    o = jnp.maximum(jnp.maximum(y[0 * tm:1 * tm], y[1 * tm:2 * tm]),
                    jnp.maximum(y[2 * tm:3 * tm], y[3 * tm:4 * tm]))
    o_ref[...] = o.astype(o_ref.dtype)


def _fc_stack_kernel(x_ref, w1_ref, b1_ref, w2_ref, b2_ref, w3_ref, b3_ref,
                     o_ref, acc_ref):
    """fc1 (K streamed over the grid) + ReLU -> fc2 + ReLU -> fc3."""
    k = pl.program_id(0)

    @pl.when(k == 0)
    def _():
        acc_ref[...] = jnp.zeros_like(acc_ref)

    acc_ref[...] += jnp.dot(x_ref[...], w1_ref[...],
                            preferred_element_type=jnp.float32)

    @pl.when(k == pl.num_programs(0) - 1)
    def _():
        h = jnp.maximum(acc_ref[...] + b1_ref[...], 0.0).astype(jnp.bfloat16)
        h = jnp.dot(h, w2_ref[...], preferred_element_type=jnp.float32)
        h = jnp.maximum(h + b2_ref[...], 0.0).astype(jnp.bfloat16)
        o = jnp.dot(h, w3_ref[...], preferred_element_type=jnp.float32)
        o_ref[...] = (o + b3_ref[...]).astype(o_ref.dtype)


# ---------------------------------------------------------------------------
# Pallas wrappers
# ---------------------------------------------------------------------------
def conv1_relu_pool(x, w_bd, b_tiled, n_cores):
    """Conv2d(1->32, k=3) + ReLU + MaxPool2d(2,2), lane-dense block-diag GEMM."""
    b, h, w, cin = x.shape                    # cin == 1
    hp, wp = (h - 2) // 2, (w - 2) // 2
    m = b * hp * wp
    # Stack the 4 candidates along K -> (M, 36). Pure XLA glue (strided slices).
    p = jnp.concatenate([_pool_candidate_patches(x, r, c, hp, wp)
                         for r in range(2) for c in range(2)], axis=-1)
    tm, m_pad = _row_tiling(m, n_cores, 128 * 2)
    if m_pad != m:
        p = jnp.pad(p, ((0, m_pad - m), (0, 0)))        # pad rows sliced below
    out = pl.pallas_call(
        _conv1_kernel,
        grid=(m_pad // tm,),
        in_specs=[pl.BlockSpec((tm, 36), lambda i: (i, 0)),
                  pl.BlockSpec((36, 128), lambda i: (0, 0)),
                  pl.BlockSpec((1, 128), lambda i: (0, 0))],
        out_specs=pl.BlockSpec((tm, 32), lambda i: (i, 0)),
        out_shape=jax.ShapeDtypeStruct((m_pad, 32), jnp.bfloat16),
        compiler_params=_cparams(("parallel",)),
    )(p, w_bd, b_tiled)
    out = out[:m] if m_pad != m else out
    return out.reshape(b, hp, wp, 32)


def conv_relu_pool(x, wmat, bias, n_cores):
    """Conv2d(k=3, valid) + ReLU + MaxPool2d(2,2) for Cin >= 32 stages."""
    b, h, w, cin = x.shape
    cout = wmat.shape[1]
    hp, wp = (h - 2) // 2, (w - 2) // 2
    m = b * hp * wp
    k = 9 * cin
    # TODO(synk): im2col stays in XLA glue; an in-kernel 9-tap dot_general over
    # the raw NHWC activation would remove the 9x HBM blow-up entirely.
    p = jnp.stack([_pool_candidate_patches(x, r, c, hp, wp)
                   for r in range(2) for c in range(2)], axis=0)   # (4, M, K)
    tm, m_pad = _row_tiling(m, n_cores, 4 * k * 2)
    if m_pad != m:
        p = jnp.pad(p, ((0, 0), (0, m_pad - m), (0, 0)))
    out = pl.pallas_call(
        _conv_relu_pool_kernel,
        grid=(m_pad // tm,),
        in_specs=[pl.BlockSpec((4, tm, k), lambda i: (0, i, 0)),
                  pl.BlockSpec((k, cout), lambda i: (0, 0)),
                  pl.BlockSpec((1, cout), lambda i: (0, 0))],
        out_specs=pl.BlockSpec((tm, cout), lambda i: (i, 0)),
        out_shape=jax.ShapeDtypeStruct((m_pad, cout), jnp.bfloat16),
        compiler_params=_cparams(("parallel",)),
    )(p, wmat, bias)
    out = out[:m] if m_pad != m else out
    return out.reshape(b, hp, wp, cout)


def _fc_k_split(k, target=4):
    for s in range(target, 1, -1):
        if k % s == 0 and (k // s) % 128 == 0:
            return s
    return 1


def fc_stack(x, w1, b1, w2, b2, w3, b3):
    """Single-launch classifier; fc1's K dim streamed over an 'arbitrary' grid."""
    m, k = x.shape
    n1 = w1.shape[1]
    n2 = w2.shape[1]
    n_out = w3.shape[1]
    ks = _fc_k_split(k)
    tk = k // ks
    # TODO(synk): cross-pallas_call prefetch of the fc weights under conv2/3
    # (and fusing conv3 into this launch) would hide the remaining DMA latency.
    return pl.pallas_call(
        _fc_stack_kernel,
        grid=(ks,),
        in_specs=[pl.BlockSpec((m, tk), lambda i: (0, i)),
                  pl.BlockSpec((tk, n1), lambda i: (i, 0)),
                  pl.BlockSpec((1, n1), lambda i: (0, 0)),
                  pl.BlockSpec((n1, n2), lambda i: (0, 0)),
                  pl.BlockSpec((1, n2), lambda i: (0, 0)),
                  pl.BlockSpec((n2, n_out), lambda i: (0, 0)),
                  pl.BlockSpec((1, n_out), lambda i: (0, 0))],
        out_specs=pl.BlockSpec((m, n_out), lambda i: (0, 0)),
        out_shape=jax.ShapeDtypeStruct((m, n_out), jnp.float32),
        scratch_shapes=[pltpu.VMEM((m, n1), jnp.float32)],
        compiler_params=_cparams(("arbitrary",)),
    )(x, w1, b1, w2, b2, w3, b3)


# ---------------------------------------------------------------------------
# Parameters (PyTorch-default-style init in torch layout, converted once)
# ---------------------------------------------------------------------------
def init_params(key):
    def u(k, shape, fan_in):
        bound = 1.0 / float(fan_in) ** 0.5
        return jax.random.uniform(k, shape, jnp.float32, -bound, bound)

    ks = jax.random.split(key, 12)
    torch_layout = {
        "conv1_w": u(ks[0], (32, 1, 3, 3), 1 * 9),
        "conv1_b": u(ks[1], (32,), 1 * 9),
        "conv2_w": u(ks[2], (64, 32, 3, 3), 32 * 9),
        "conv2_b": u(ks[3], (64,), 32 * 9),
        "conv3_w": u(ks[4], (128, 64, 3, 3), 64 * 9),
        "conv3_b": u(ks[5], (128,), 64 * 9),
        "fc1_w": u(ks[6], (256, 128 * 6 * 6), 128 * 6 * 6),   # torch (out, in)
        "fc1_b": u(ks[7], (256,), 128 * 6 * 6),
        "fc2_w": u(ks[8], (128, 256), 256),
        "fc2_b": u(ks[9], (128,), 256),
        "fc3_w": u(ks[10], (24, 128), 128),
        "fc3_b": u(ks[11], (24,), 128),
    }
    return prepare_params(torch_layout)


def prepare_params(tp):
    """Convert torch-layout tensors to the bf16 layouts the kernels consume."""
    f32, bf16 = jnp.float32, jnp.bfloat16

    def conv_mat(w):   # (Cout, Cin, 3, 3) -> (3*3*Cin, Cout), tap-major rows
        cout, cin, kh, kw = w.shape
        return jnp.transpose(w, (2, 3, 1, 0)).reshape(kh * kw * cin, cout)

    # conv1: block-diagonal (36, 128) weight so one lane-dense GEMM produces
    # all four 2x2 pool candidates (K=9 / N=32 alone wastes >90% of the MXU).
    w1m = conv_mat(tp["conv1_w"]).astype(f32)            # (9, 32)
    z = jnp.zeros((9, 32), f32)
    w1_bd = jnp.concatenate(
        [jnp.concatenate([w1m if j == q else z for j in range(4)], axis=1)
         for q in range(4)], axis=0)                      # (36, 128)
    b1_t = jnp.tile(tp["conv1_b"].reshape(1, 32), (1, 4))  # (1, 128)

    p = {
        "c1_w": w1_bd.astype(bf16), "c1_b": b1_t.astype(f32),
        "c2_w": conv_mat(tp["conv2_w"]).astype(bf16),
        "c2_b": tp["conv2_b"].reshape(1, -1).astype(f32),
        "c3_w": conv_mat(tp["conv3_w"]).astype(bf16),
        "c3_b": tp["conv3_b"].reshape(1, -1).astype(f32),
    }
    # fc1: torch flattens NCHW (c*36 + h*6 + w); our activation is NHWC
    # flattened (h*6*128 + w*128 + c) -> permute fc1's input dim accordingly.
    fc1 = tp["fc1_w"].reshape(256, 128, 6, 6)
    p["f1_w"] = jnp.transpose(fc1, (2, 3, 1, 0)).reshape(6 * 6 * 128, 256).astype(bf16)
    p["f1_b"] = tp["fc1_b"].reshape(1, -1).astype(f32)
    p["f2_w"] = tp["fc2_w"].T.astype(bf16)
    p["f2_b"] = tp["fc2_b"].reshape(1, -1).astype(f32)
    p["f3_w"] = tp["fc3_w"].T.astype(bf16)
    p["f3_b"] = tp["fc3_b"].reshape(1, -1).astype(f32)
    return p


# ---------------------------------------------------------------------------
# Forward pass (matches ASL_CNN.forward)
# ---------------------------------------------------------------------------
def build_forward(n_cores=1):
    @jax.jit
    def forward(params, x_nchw):
        b, c, h, w = x_nchw.shape
        xb = x_nchw.astype(jnp.bfloat16)
        x = xb.reshape(b, h, w, c) if c == 1 else jnp.transpose(xb, (0, 2, 3, 1))

        x = conv1_relu_pool(x, params["c1_w"], params["c1_b"], n_cores)  # (B,30,30,32)
        x = conv_relu_pool(x, params["c2_w"], params["c2_b"], n_cores)   # (B,14,14,64)
        x = conv_relu_pool(x, params["c3_w"], params["c3_b"], n_cores)   # (B,6,6,128)

        x = x.reshape(b, -1)                                             # (B, 4608) NHWC
        return fc_stack(x, params["f1_w"], params["f1_b"],
                        params["f2_w"], params["f2_b"],
                        params["f3_w"], params["f3_b"])                  # (B, 24)
    return forward


if __name__ == "__main__":
    key = jax.random.PRNGKey(0)
    pkey, xkey = jax.random.split(key)
    params = init_params(pkey)

    # 62x62 input is implied by the classifier fan-in 128*6*6:
    # 62 -conv3x3-> 60 -pool-> 30 -> 28 -> 14 -> 12 -> 6.
    x = jax.random.normal(xkey, (2, 1, 62, 62), dtype=jnp.float32)

    forward = build_forward(_num_tensorcores())
    logits = forward(params, x)
    jax.block_until_ready(logits)
    assert logits.shape == (2, 24), logits.shape
    assert bool(jnp.all(jnp.isfinite(logits)))
    print("KERNEL_OK")
</pallas_src>

<mosaic_0001>
module attributes {stable_mosaic.version = 11 : i64} {
  func.func @_conv1_kernel(%arg0: i32, %arg1: memref<1808x36xbf16, #tpu.memory_space<vmem>>, %arg2: memref<36x128xbf16, #tpu.memory_space<vmem>>, %arg3: memref<1x128xf32, #tpu.memory_space<vmem>>, %arg4: memref<1808x32xbf16, #tpu.memory_space<vmem>>) attributes {dimension_semantics = [#tpu.dimension_semantics<parallel>], iteration_bounds = array<i64: 1>, scalar_prefetch = 0 : i64, scratch_operands = 0 : i64, tpu.core_type = #tpu.core_type<tc>, window_params = [{transform_indices = @transform_0, window_bounds = array<i64: 1808, 36>}, {pipeline_mode = #tpu.pipeline_mode<synchronous>, transform_indices = @transform_1, window_bounds = array<i64: 36, 128>}, {pipeline_mode = #tpu.pipeline_mode<synchronous>, transform_indices = @transform_2, window_bounds = array<i64: 1, 128>}, {transform_indices = @transform_3, window_bounds = array<i64: 1808, 32>}]} {
    %c0 = arith.constant 0 : index
    %c0_0 = arith.constant 0 : index
    %0 = vector.load %arg1[%c0, %c0_0] : memref<1808x36xbf16, #tpu.memory_space<vmem>>, vector<1808x36xbf16>
    %c0_1 = arith.constant 0 : index
    %c0_2 = arith.constant 0 : index
    %1 = vector.load %arg2[%c0_1, %c0_2] : memref<36x128xbf16, #tpu.memory_space<vmem>>, vector<36x128xbf16>
    %cst = arith.constant dense<0.000000e+00> : vector<1808x128xf32>
    %2 = tpu.matmul %0, %1, %cst {dimension_numbers = #tpu.dot_dimension_numbers<[1], [0], [0], [1], [0, 0, 1, 1], [], []>} : vector<1808x36xbf16>, vector<36x128xbf16>, vector<1808x128xf32> -> vector<1808x128xf32>
    %c0_3 = arith.constant 0 : index
    %c0_4 = arith.constant 0 : index
    %3 = vector.load %arg3[%c0_3, %c0_4] : memref<1x128xf32, #tpu.memory_space<vmem>>, vector<1x128xf32>
    %4 = vector.broadcast %3 : vector<1x128xf32> to vector<1808x128xf32>
    %5 = arith.addf %2, %4 : vector<1808x128xf32>
    %cst_5 = arith.constant 0.000000e+00 : f32
    %6 = vector.broadcast %cst_5 : f32 to vector<1808x128xf32>
    %7 = arith.maximumf %5, %6 : vector<1808x128xf32>
    %c64_i32 = arith.constant 64 : i32
    %8 = tpu.dynamic_rotate %7 by %c64_i32 dim 1 : vector<1808x128xf32>, i32 -> vector<1808x128xf32>
    %9 = arith.maximumf %7, %8 : vector<1808x128xf32>
    %c32_i32 = arith.constant 32 : i32
    %10 = tpu.dynamic_rotate %9 by %c32_i32 dim 1 : vector<1808x128xf32>, i32 -> vector<1808x128xf32>
    %11 = arith.maximumf %9, %10 : vector<1808x128xf32>
    %12 = vector.extract_strided_slice %11 {offsets = [0, 0], sizes = [1808, 32], strides = [1, 1]} : vector<1808x128xf32> to vector<1808x32xf32>
    %13 = arith.truncf %12 : vector<1808x32xf32> to vector<1808x32xbf16>
    %c0_6 = arith.constant 0 : index
    %c0_7 = arith.constant 0 : index
    %14 = vector.load %arg4[%c0_6, %c0_7] : memref<1808x32xbf16, #tpu.memory_space<vmem>>, vector<1808x32xbf16>
    tpu.vector_store %arg4[%c0_6, %c0_7], %13 {strides = array<i32>} : memref<1808x32xbf16, #tpu.memory_space<vmem>>, vector<1808x32xbf16>,
    return
  }
  func.func @transform_0(%arg0: i32) -> (i32, i32) {
    %c0_i32 = arith.constant 0 : i32
    %c0_i32_0 = arith.constant 0 : i32
    return %arg0, %c0_i32 : i32, i32
  }
  func.func @transform_1(%arg0: i32) -> (i32, i32) {
    %c0_i32 = arith.constant 0 : i32
    %c0_i32_0 = arith.constant 0 : i32
    %c0_i32_1 = arith.constant 0 : i32
    return %c0_i32, %c0_i32_0 : i32, i32
  }
  func.func @transform_2(%arg0: i32) -> (i32, i32) {
    %c0_i32 = arith.constant 0 : i32
    %c0_i32_0 = arith.constant 0 : i32
    %c0_i32_1 = arith.constant 0 : i32
    return %c0_i32, %c0_i32_0 : i32, i32
  }
  func.func @transform_3(%arg0: i32) -> (i32, i32) {
    %c0_i32 = arith.constant 0 : i32
    %c0_i32_0 = arith.constant 0 : i32
    return %arg0, %c0_i32 : i32, i32
  }
}

module attributes {stable_mosaic.version = 11 : i64} {
  func.func @_conv_relu_pool_kernel(%arg0: i32, %arg1: memref<4x400x288xbf16, #tpu.memory_space<vmem>>, %arg2: memref<288x64xbf16, #tpu.memory_space<vmem>>, %arg3: memref<1x64xf32, #tpu.memory_space<vmem>>, %arg4: memref<400x64xbf16, #tpu.memory_space<vmem>>) attributes {dimension_semantics = [#tpu.dimension_semantics<parallel>], iteration_bounds = array<i64: 1>, scalar_prefetch = 0 : i64, scratch_operands = 0 : i64, tpu.core_type = #tpu.core_type<tc>, window_params = [{transform_indices = @transform_0, window_bounds = array<i64: 4, 400, 288>}, {pipeline_mode = #tpu.pipeline_mode<synchronous>, transform_indices = @transform_1, window_bounds = array<i64: 288, 64>}, {pipeline_mode = #tpu.pipeline_mode<synchronous>, transform_indices = @transform_2, window_bounds = array<i64: 1, 64>}, {transform_indices = @transform_3, window_bounds = array<i64: 400, 64>}]} {
    %c0 = arith.constant 0 : index
    %c0_0 = arith.constant 0 : index
    %c0_1 = arith.constant 0 : index
    %0 = vector.load %arg1[%c0, %c0_0, %c0_1] : memref<4x400x288xbf16, #tpu.memory_space<vmem>>, vector<4x400x288xbf16>
    %1 = vector.shape_cast %0 : vector<4x400x288xbf16> to vector<1600x288xbf16>
    %c0_2 = arith.constant 0 : index
    %c0_3 = arith.constant 0 : index
    %2 = vector.load %arg2[%c0_2, %c0_3] : memref<288x64xbf16, #tpu.memory_space<vmem>>, vector<288x64xbf16>
    %cst = arith.constant dense<0.000000e+00> : vector<1600x64xf32>
    %3 = tpu.matmul %1, %2, %cst {dimension_numbers = #tpu.dot_dimension_numbers<[1], [0], [0], [1], [0, 0, 1, 1], [], []>} : vector<1600x288xbf16>, vector<288x64xbf16>, vector<1600x64xf32> -> vector<1600x64xf32>
    %c0_4 = arith.constant 0 : index
    %c0_5 = arith.constant 0 : index
    %4 = vector.load %arg3[%c0_4, %c0_5] : memref<1x64xf32, #tpu.memory_space<vmem>>, vector<1x64xf32>
    %5 = vector.broadcast %4 : vector<1x64xf32> to vector<1600x64xf32>
    %6 = arith.addf %3, %5 : vector<1600x64xf32>
    %cst_6 = arith.constant 0.000000e+00 : f32
    %7 = vector.broadcast %cst_6 : f32 to vector<1600x64xf32>
    %8 = arith.maximumf %6, %7 : vector<1600x64xf32>
    %9 = vector.extract_strided_slice %8 {offsets = [0, 0], sizes = [400, 64], strides = [1, 1]} : vector<1600x64xf32> to vector<400x64xf32>
    %10 = vector.extract_strided_slice %8 {offsets = [400, 0], sizes = [400, 64], strides = [1, 1]} : vector<1600x64xf32> to vector<400x64xf32>
    %11 = arith.maximumf %9, %10 : vector<400x64xf32>
    %12 = vector.extract_strided_slice %8 {offsets = [800, 0], sizes = [400, 64], strides = [1, 1]} : vector<1600x64xf32> to vector<400x64xf32>
    %13 = vector.extract_strided_slice %8 {offsets = [1200, 0], sizes = [400, 64], strides = [1, 1]} : vector<1600x64xf32> to vector<400x64xf32>
    %14 = arith.maximumf %12, %13 : vector<400x64xf32>
    %15 = arith.maximumf %11, %14 : vector<400x64xf32>
    %16 = arith.truncf %15 : vector<400x64xf32> to vector<400x64xbf16>
    %c0_7 = arith.constant 0 : index
    %c0_8 = arith.constant 0 : index
    %17 = vector.load %arg4[%c0_7, %c0_8] : memref<400x64xbf16, #tpu.memory_space<vmem>>, vector<400x64xbf16>
    tpu.vector_store %arg4[%c0_7, %c0_8], %16 {strides = array<i32>} : memref<400x64xbf16, #tpu.memory_space<vmem>>, vector<400x64xbf16>,
    return
  }
  func.func @transform_0(%arg0: i32) -> (i32, i32, i32) {
    %c0_i32 = arith.constant 0 : i32
    %c0_i32_0 = arith.constant 0 : i32
    %c0_i32_1 = arith.constant 0 : i32
    return %c0_i32, %arg0, %c0_i32_0 : i32, i32, i32
  }
  func.func @transform_1(%arg0: i32) -> (i32, i32) {
    %c0_i32 = arith.constant 0 : i32
    %c0_i32_0 = arith.constant 0 : i32
    %c0_i32_1 = arith.constant 0 : i32
    return %c0_i32, %c0_i32_0 : i32, i32
  }
  func.func @transform_2(%arg0: i32) -> (i32, i32) {
    %c0_i32 = arith.constant 0 : i32
    %c0_i32_0 = arith.constant 0 : i32
    %c0_i32_1 = arith.constant 0 : i32
    return %c0_i32, %c0_i32_0 : i32, i32
  }
  func.func @transform_3(%arg0: i32) -> (i32, i32) {
    %c0_i32 = arith.constant 0 : i32
    %c0_i32_0 = arith.constant 0 : i32
    return %arg0, %c0_i32 : i32, i32
  }
}

module attributes {stable_mosaic.version = 11 : i64} {
  func.func @_conv_relu_pool_kernel(%arg0: i32, %arg1: memref<4x80x576xbf16, #tpu.memory_space<vmem>>, %arg2: memref<576x128xbf16, #tpu.memory_space<vmem>>, %arg3: memref<1x128xf32, #tpu.memory_space<vmem>>, %arg4: memref<80x128xbf16, #tpu.memory_space<vmem>>) attributes {dimension_semantics = [#tpu.dimension_semantics<parallel>], iteration_bounds = array<i64: 1>, scalar_prefetch = 0 : i64, scratch_operands = 0 : i64, tpu.core_type = #tpu.core_type<tc>, window_params = [{transform_indices = @transform_0, window_bounds = array<i64: 4, 80, 576>}, {pipeline_mode = #tpu.pipeline_mode<synchronous>, transform_indices = @transform_1, window_bounds = array<i64: 576, 128>}, {pipeline_mode = #tpu.pipeline_mode<synchronous>, transform_indices = @transform_2, window_bounds = array<i64: 1, 128>}, {transform_indices = @transform_3, window_bounds = array<i64: 80, 128>}]} {
    %c0 = arith.constant 0 : index
    %c0_0 = arith.constant 0 : index
    %c0_1 = arith.constant 0 : index
    %0 = vector.load %arg1[%c0, %c0_0, %c0_1] : memref<4x80x576xbf16, #tpu.memory_space<vmem>>, vector<4x80x576xbf16>
    %1 = vector.shape_cast %0 : vector<4x80x576xbf16> to vector<320x576xbf16>
    %c0_2 = arith.constant 0 : index
    %c0_3 = arith.constant 0 : index
    %2 = vector.load %arg2[%c0_2, %c0_3] : memref<576x128xbf16, #tpu.memory_space<vmem>>, vector<576x128xbf16>
    %cst = arith.constant dense<0.000000e+00> : vector<320x128xf32>
    %3 = tpu.matmul %1, %2, %cst {dimension_numbers = #tpu.dot_dimension_numbers<[1], [0], [0], [1], [0, 0, 1, 1], [], []>} : vector<320x576xbf16>, vector<576x128xbf16>, vector<320x128xf32> -> vector<320x128xf32>
    %c0_4 = arith.constant 0 : index
    %c0_5 = arith.constant 0 : index
    %4 = vector.load %arg3[%c0_4, %c0_5] : memref<1x128xf32, #tpu.memory_space<vmem>>, vector<1x128xf32>
    %5 = vector.broadcast %4 : vector<1x128xf32> to vector<320x128xf32>
    %6 = arith.addf %3, %5 : vector<320x128xf32>
    %cst_6 = arith.constant 0.000000e+00 : f32
    %7 = vector.broadcast %cst_6 : f32 to vector<320x128xf32>
    %8 = arith.maximumf %6, %7 : vector<320x128xf32>
    %9 = vector.extract_strided_slice %8 {offsets = [0, 0], sizes = [80, 128], strides = [1, 1]} : vector<320x128xf32> to vector<80x128xf32>
    %10 = vector.extract_strided_slice %8 {offsets = [80, 0], sizes = [80, 128], strides = [1, 1]} : vector<320x128xf32> to vector<80x128xf32>
    %11 = arith.maximumf %9, %10 : vector<80x128xf32>
    %12 = vector.extract_strided_slice %8 {offsets = [160, 0], sizes = [80, 128], strides = [1, 1]} : vector<320x128xf32> to vector<80x128xf32>
    %13 = vector.extract_strided_slice %8 {offsets = [240, 0], sizes = [80, 128], strides = [1, 1]} : vector<320x128xf32> to vector<80x128xf32>
    %14 = arith.maximumf %12, %13 : vector<80x128xf32>
    %15 = arith.maximumf %11, %14 : vector<80x128xf32>
    %16 = arith.truncf %15 : vector<80x128xf32> to vector<80x128xbf16>
    %c0_7 = arith.constant 0 : index
    %c0_8 = arith.constant 0 : index
    %17 = vector.load %arg4[%c0_7, %c0_8] : memref<80x128xbf16, #tpu.memory_space<vmem>>, vector<80x128xbf16>
    tpu.vector_store %arg4[%c0_7, %c0_8], %16 {strides = array<i32>} : memref<80x128xbf16, #tpu.memory_space<vmem>>, vector<80x128xbf16>,
    return
  }
  func.func @transform_0(%arg0: i32) -> (i32, i32, i32) {
    %c0_i32 = arith.constant 0 : i32
    %c0_i32_0 = arith.constant 0 : i32
    %c0_i32_1 = arith.constant 0 : i32
    return %c0_i32, %arg0, %c0_i32_0 : i32, i32, i32
  }
  func.func @transform_1(%arg0: i32) -> (i32, i32) {
    %c0_i32 = arith.constant 0 : i32
    %c0_i32_0 = arith.constant 0 : i32
    %c0_i32_1 = arith.constant 0 : i32
    return %c0_i32, %c0_i32_0 : i32, i32
  }
  func.func @transform_2(%arg0: i32) -> (i32, i32) {
    %c0_i32 = arith.constant 0 : i32
    %c0_i32_0 = arith.constant 0 : i32
    %c0_i32_1 = arith.constant 0 : i32
    return %c0_i32, %c0_i32_0 : i32, i32
  }
  func.func @transform_3(%arg0: i32) -> (i32, i32) {
    %c0_i32 = arith.constant 0 : i32
    %c0_i32_0 = arith.constant 0 : i32
    return %arg0, %c0_i32 : i32, i32
  }
}

module attributes {stable_mosaic.version = 11 : i64} {
  func.func @_fc_stack_kernel(%arg0: i32, %arg1: memref<2x1152xbf16, #tpu.memory_space<vmem>>, %arg2: memref<1152x256xbf16, #tpu.memory_space<vmem>>, %arg3: memref<1x256xf32, #tpu.memory_space<vmem>>, %arg4: memref<256x128xbf16, #tpu.memory_space<vmem>>, %arg5: memref<1x128xf32, #tpu.memory_space<vmem>>, %arg6: memref<128x24xbf16, #tpu.memory_space<vmem>>, %arg7: memref<1x24xf32, #tpu.memory_space<vmem>>, %arg8: memref<2x24xf32, #tpu.memory_space<vmem>>, %arg9: memref<2x256xf32, #tpu.memory_space<vmem>>) attributes {dimension_semantics = [#tpu.dimension_semantics<arbitrary>], iteration_bounds = array<i64: 4>, scalar_prefetch = 0 : i64, scratch_operands = 1 : i64, tpu.core_type = #tpu.core_type<tc>, window_params = [{transform_indices = @transform_0, window_bounds = array<i64: 2, 1152>}, {transform_indices = @transform_1, window_bounds = array<i64: 1152, 256>}, {pipeline_mode = #tpu.pipeline_mode<synchronous>, transform_indices = @transform_2, window_bounds = array<i64: 1, 256>}, {pipeline_mode = #tpu.pipeline_mode<synchronous>, transform_indices = @transform_3, window_bounds = array<i64: 256, 128>}, {pipeline_mode = #tpu.pipeline_mode<synchronous>, transform_indices = @transform_4, window_bounds = array<i64: 1, 128>}, {pipeline_mode = #tpu.pipeline_mode<synchronous>, transform_indices = @transform_5, window_bounds = array<i64: 128, 24>}, {pipeline_mode = #tpu.pipeline_mode<synchronous>, transform_indices = @transform_6, window_bounds = array<i64: 1, 24>}, {pipeline_mode = #tpu.pipeline_mode<synchronous>, transform_indices = @transform_7, window_bounds = array<i64: 2, 24>}]} {
    %c0_i32 = arith.constant 0 : i32
    %0 = arith.cmpi eq, %arg0, %c0_i32 : i32
    %1 = arith.extui %0 : i1 to i32
    %c0_i32_0 = arith.constant 0 : i32
    %2 = arith.cmpi ne, %1, %c0_i32_0 : i32
    scf.if %2 {
      %cst_9 = arith.constant 0.000000e+00 : f32
      %12 = vector.broadcast %cst_9 : f32 to vector<2x256xf32>
      %c0_10 = arith.constant 0 : index
      %c0_11 = arith.constant 0 : index
      %13 = vector.load %arg9[%c0_10, %c0_11] : memref<2x256xf32, #tpu.memory_space<vmem>>, vector<2x256xf32>
      tpu.vector_store %arg9[%c0_10, %c0_11], %12 {strides = array<i32>} : memref<2x256xf32, #tpu.memory_space<vmem>>, vector<2x256xf32>,
    } else {
    }
    %c0 = arith.constant 0 : index
    %c0_1 = arith.constant 0 : index
    %3 = vector.load %arg9[%c0, %c0_1] : memref<2x256xf32, #tpu.memory_space<vmem>>, vector<2x256xf32>
    %c0_2 = arith.constant 0 : index
    %c0_3 = arith.constant 0 : index
    %4 = vector.load %arg1[%c0_2, %c0_3] : memref<2x1152xbf16, #tpu.memory_space<vmem>>, vector<2x1152xbf16>
    %c0_4 = arith.constant 0 : index
    %c0_5 = arith.constant 0 : index
    %5 = vector.load %arg2[%c0_4, %c0_5] : memref<1152x256xbf16, #tpu.memory_space<vmem>>, vector<1152x256xbf16>
    %cst = arith.constant dense<0.000000e+00> : vector<2x256xf32>
    %6 = tpu.matmul %4, %5, %cst {dimension_numbers = #tpu.dot_dimension_numbers<[1], [0], [0], [1], [0, 0, 1, 1], [], []>} : vector<2x1152xbf16>, vector<1152x256xbf16>, vector<2x256xf32> -> vector<2x256xf32>
    %7 = arith.addf %3, %6 : vector<2x256xf32>
    %c0_6 = arith.constant 0 : index
    %c0_7 = arith.constant 0 : index
    %8 = vector.load %arg9[%c0_6, %c0_7] : memref<2x256xf32, #tpu.memory_space<vmem>>, vector<2x256xf32>
    tpu.vector_store %arg9[%c0_6, %c0_7], %7 {strides = array<i32>} : memref<2x256xf32, #tpu.memory_space<vmem>>, vector<2x256xf32>,
    %c3_i32 = arith.constant 3 : i32
    %9 = arith.cmpi eq, %arg0, %c3_i32 : i32
    %10 = arith.extui %9 : i1 to i32
    %c0_i32_8 = arith.constant 0 : i32
    %11 = arith.cmpi ne, %10, %c0_i32_8 : i32
    scf.if %11 {
      %c0_9 = arith.constant 0 : index
      %c0_10 = arith.constant 0 : index
      %12 = vector.load %arg9[%c0_9, %c0_10] : memref<2x256xf32, #tpu.memory_space<vmem>>, vector<2x256xf32>
      %c0_11 = arith.constant 0 : index
      %c0_12 = arith.constant 0 : index
      %13 = vector.load %arg3[%c0_11, %c0_12] : memref<1x256xf32, #tpu.memory_space<vmem>>, vector<1x256xf32>
      %14 = vector.broadcast %13 : vector<1x256xf32> to vector<2x256xf32>
      %15 = arith.addf %12, %14 : vector<2x256xf32>
      %cst_13 = arith.constant 0.000000e+00 : f32
      %16 = vector.broadcast %cst_13 : f32 to vector<2x256xf32>
      %17 = arith.maximumf %15, %16 : vector<2x256xf32>
      %18 = arith.truncf %17 : vector<2x256xf32> to vector<2x256xbf16>
      %c0_14 = arith.constant 0 : index
      %c0_15 = arith.constant 0 : index
      %19 = vector.load %arg4[%c0_14, %c0_15] : memref<256x128xbf16, #tpu.memory_space<vmem>>, vector<256x128xbf16>
      %cst_16 = arith.constant dense<0.000000e+00> : vector<2x128xf32>
      %20 = tpu.matmul %18, %19, %cst_16 {dimension_numbers = #tpu.dot_dimension_numbers<[1], [0], [0], [1], [0, 0, 1, 1], [], []>} : vector<2x256xbf16>, vector<256x128xbf16>, vector<2x128xf32> -> vector<2x128xf32>
      %c0_17 = arith.constant 0 : index
      %c0_18 = arith.constant 0 : index
      %21 = vector.load %arg5[%c0_17, %c0_18] : memref<1x128xf32, #tpu.memory_space<vmem>>, vector<1x128xf32>
      %22 = vector.broadcast %21 : vector<1x128xf32> to vector<2x128xf32>
      %23 = arith.addf %20, %22 : vector<2x128xf32>
      %cst_19 = arith.constant 0.000000e+00 : f32
      %24 = vector.broadcast %cst_19 : f32 to vector<2x128xf32>
      %25 = arith.maximumf %23, %24 : vector<2x128xf32>
      %26 = arith.truncf %25 : vector<2x128xf32> to vector<2x128xbf16>
      %c0_20 = arith.constant 0 : index
      %c0_21 = arith.constant 0 : index
      %27 = vector.load %arg6[%c0_20, %c0_21] : memref<128x24xbf16, #tpu.memory_space<vmem>>, vector<128x24xbf16>
      %cst_22 = arith.constant dense<0.000000e+00> : vector<2x24xf32>
      %28 = tpu.matmul %26, %27, %cst_22 {dimension_numbers = #tpu.dot_dimension_numbers<[1], [0], [0], [1], [0, 0, 1, 1], [], []>} : vector<2x128xbf16>, vector<128x24xbf16>, vector<2x24xf32> -> vector<2x24xf32>
      %c0_23 = arith.constant 0 : index
      %c0_24 = arith.constant 0 : index
      %29 = vector.load %arg7[%c0_23, %c0_24] : memref<1x24xf32, #tpu.memory_space<vmem>>, vector<1x24xf32>
      %30 = vector.broadcast %29 : vector<1x24xf32> to vector<2x24xf32>
      %31 = arith.addf %28, %30 : vector<2x24xf32>
      %c0_25 = arith.constant 0 : index
      %c0_26 = arith.constant 0 : index
      %32 = vector.load %arg8[%c0_25, %c0_26] : memref<2x24xf32, #tpu.memory_space<vmem>>, vector<2x24xf32>
      tpu.vector_store %arg8[%c0_25, %c0_26], %31 {strides = array<i32>} : memref<2x24xf32, #tpu.memory_space<vmem>>, vector<2x24xf32>,
    } else {
    }
    return
  }
  func.func @transform_0(%arg0: i32) -> (i32, i32) {
    %c0_i32 = arith.constant 0 : i32
    %c0_i32_0 = arith.constant 0 : i32
    return %c0_i32, %arg0 : i32, i32
  }
  func.func @transform_1(%arg0: i32) -> (i32, i32) {
    %c0_i32 = arith.constant 0 : i32
    %c0_i32_0 = arith.constant 0 : i32
    return %arg0, %c0_i32 : i32, i32
  }
  func.func @transform_2(%arg0: i32) -> (i32, i32) {
    %c0_i32 = arith.constant 0 : i32
    %c0_i32_0 = arith.constant 0 : i32
    %c0_i32_1 = arith.constant 0 : i32
    return %c0_i32, %c0_i32_0 : i32, i32
  }
  func.func @transform_3(%arg0: i32) -> (i32, i32) {
    %c0_i32 = arith.constant 0 : i32
    %c0_i32_0 = arith.constant 0 : i32
    %c0_i32_1 = arith.constant 0 : i32
    return %c0_i32, %c0_i32_0 : i32, i32
  }
  func.func @transform_4(%arg0: i32) -> (i32, i32) {
    %c0_i32 = arith.constant 0 : i32
    %c0_i32_0 = arith.constant 0 : i32
    %c0_i32_1 = arith.constant 0 : i32
    return %c0_i32, %c0_i32_0 : i32, i32
  }
  func.func @transform_5(%arg0: i32) -> (i32, i32) {
    %c0_i32 = arith.constant 0 : i32
    %c0_i32_0 = arith.constant 0 : i32
    %c0_i32_1 = arith.constant 0 : i32
    return %c0_i32, %c0_i32_0 : i32, i32
  }
  func.func @transform_6(%arg0: i32) -> (i32, i32) {
    %c0_i32 = arith.constant 0 : i32
    %c0_i32_0 = arith.constant 0 : i32
    %c0_i32_1 = arith.constant 0 : i32
    return %c0_i32, %c0_i32_0 : i32, i32
  }
  func.func @transform_7(%arg0: i32) -> (i32, i32) {
    %c0_i32 = arith.constant 0 : i32
    %c0_i32_0 = arith.constant 0 : i32
    %c0_i32_1 = arith.constant 0 : i32
    return %c0_i32, %c0_i32_0 : i32, i32
  }
}

</mosaic_0001>

<llo_original>
// kernel: forward.4
$region0: #{forward.4}
  #allocation0 [shape = 'u32[]', space=smem, size = 0x4, offset = 0x4, fixed_abs, tag = 'smem constant byte address 0x4 - core index']
  #allocation1 [shape = 'u32[144,128]{1,0:T(1,128)}', space=vmem, size = 0x12000, scoped, tag = 'internal scratch']
  %s0 = inlined_call_operand.vmem [shape: bf16[1808,36], index: 0, kind: input, shape index: {}]
  %s1 = inlined_call_operand.vmem [shape: bf16[36,128], index: 1, kind: input, shape index: {}]
  %s2 = inlined_call_operand.vmem [shape: f32[1,128], index: 2, kind: input, shape index: {}]
  %s3 = inlined_call_operand.vmem [shape: bf16[1808,32], index: 3, kind: output, shape index: {}]
  %s4 = sld [smem:[#allocation0]]
  $region22: #{forward.4} parent=0
    _
  %s6 = ssub.s32 1, %s4
  %s7 = scalar_select 0, %s6, %s4
  // Predicated region
  $region2: #{forward.4} parent=0 // pred_check
    _
  $region3: #{forward.4} parent=0 // pred_check_branch
    %9 = sbr.rel (0) target = $region5
  $region4: #{forward.4} parent=0 // pred_region
    _
  $region5: #{forward.4} parent=0 // pred_fallthru
    _
  // Predicated region
  $region6: #{forward.4} parent=0 // pred_check
    _
  $region7: #{forward.4} parent=0 // pred_check_branch
    %11 = sbr.rel (0) target = $region9
  $region8: #{forward.4} parent=0 // pred_region
    _
  $region9: #{forward.4} parent=0 // pred_fallthru
    _
  // Predicated region
  $region10: #{forward.4} parent=0 // pred_check
    _
  $region11: #{forward.4} parent=0 // pred_check_branch
    %13 = sbr.rel (0) target = $region13
  $region12: #{forward.4} parent=0 // pred_region
    _
  $region13: #{forward.4} parent=0 // pred_fallthru
    _
  %v15 = vld [vmem:[%s0] sm:$0xf]
  %v16 = vld [vmem:[%s0 + $0x4] sm:$0xf]
  %v17 = vld [vmem:[%s0 + $0x8] sm:$0xf]
  %v18 = vld [vmem:[%s0 + $0xc] sm:$0xf]
  %v19 = vld [vmem:[%s0 + $0x10] sm:$0xf]
  %v20 = vld [vmem:[%s0 + $0x14] sm:$0xf]
  %v21 = vld [vmem:[%s0 + $0x18] sm:$0xf]
  %v22 = vld [vmem:[%s0 + $0x1c] sm:$0xf]
  %v23 = vld [vmem:[%s0 + $0x20] sm:$0xf]
  %v24 = vld [vmem:[%s0 + $0x24] sm:$0xf]
  %v25 = vld [vmem:[%s0 + $0x28] sm:$0xf]
  %v26 = vld [vmem:[%s0 + $0x2c] sm:$0xf]
  %v27 = vld [vmem:[%s0 + $0x30] sm:$0xf]
  %v28 = vld [vmem:[%s0 + $0x34] sm:$0xf]
  %v29 = vld [vmem:[%s0 + $0x38] sm:$0xf]
  %v30 = vld [vmem:[%s0 + $0x3c] sm:$0xf]
  %v31 = vld [vmem:[%s0 + $0x40] sm:$0xf]
  %v32 = vld [vmem:[%s0 + $0x44] sm:$0xf]
  %v33 = vld [vmem:[%s0 + $0x48] sm:$0xf]
  %v34 = vld [vmem:[%s0 + $0x4c] sm:$0xf]
  %v35 = vld [vmem:[%s0 + $0x50] sm:$0xf]
  %v36 = vld [vmem:[%s0 + $0x54] sm:$0xf]
  %v37 = vld [vmem:[%s0 + $0x58] sm:$0xf]
  %v38 = vld [vmem:[%s0 + $0x5c] sm:$0xf]
  %v39 = vld [vmem:[%s0 + $0x60] sm:$0xf]
  %v40 = vld [vmem:[%s0 + $0x64] sm:$0xf]
  %v41 = vld [vmem:[%s0 + $0x68] sm:$0xf]
  %v42 = vld [vmem:[%s0 + $0x6c] sm:$0xf]
  %v43 = vld [vmem:[%s0 + $0x70] sm:$0xf]
  %v44 = vld [vmem:[%s0 + $0x74] sm:$0xf]
  %v45 = vld [vmem:[%s0 + $0x78] sm:$0xf]
  %v46 = vld [vmem:[%s0 + $0x7c] sm:$0xf]
  %v47 = vld [vmem:[%s0 + $0x80] sm:$0xf]
  %v48 = vld [vmem:[%s0 + $0x84] sm:$0xf]
  %v49 = vld [vmem:[%s0 + $0x88] sm:$0xf]
  %v50 = vld [vmem:[%s0 + $0x8c] sm:$0xf]
  %v51 = vld [vmem:[%s0 + $0x90] sm:$0xf]
  %v52 = vld [vmem:[%s0 + $0x94] sm:$0xf]
  %v53 = vld [vmem:[%s0 + $0x98] sm:$0xf]
  %v54 = vld [vmem:[%s0 + $0x9c] sm:$0xf]
  %v55 = vld [vmem:[%s0 + $0xa0] sm:$0xf]
  %v56 = vld [vmem:[%s0 + $0xa4] sm:$0xf]
  %v57 = vld [vmem:[%s0 + $0xa8] sm:$0xf]
  %v58 = vld [vmem:[%s0 + $0xac] sm:$0xf]
  %v59 = vld [vmem:[%s0 + $0xb0] sm:$0xf]
  %v60 = vld [vmem:[%s0 + $0xb4] sm:$0xf]
  %v61 = vld [vmem:[%s0 + $0xb8] sm:$0xf]
  %v62 = vld [vmem:[%s0 + $0xbc] sm:$0xf]
  %v63 = vld [vmem:[%s0 + $0xc0] sm:$0xf]
  %v64 = vld [vmem:[%s0 + $0xc4] sm:$0xf]
  %v65 = vld [vmem:[%s0 + $0xc8] sm:$0xf]
  %v66 = vld [vmem:[%s0 + $0xcc] sm:$0xf]
  %v67 = vld [vmem:[%s0 + $0xd0] sm:$0xf]
  %v68 = vld [vmem:[%s0 + $0xd4] sm:$0xf]
  %v69 = vld [vmem:[%s0 + $0xd8] sm:$0xf]
  %v70 = vld [vmem:[%s0 + $0xdc] sm:$0xf]
  %v71 = vld [vmem:[%s0 + $0xe0] sm:$0xf]
  %v72 = vld [vmem:[%s0 + $0xe4] sm:$0xf]
  %v73 = vld [vmem:[%s0 + $0xe8] sm:$0xf]
  %v74 = vld [vmem:[%s0 + $0xec] sm:$0xf]
  %v75 = vld [vmem:[%s0 + $0xf0] sm:$0xf]
  %v76 = vld [vmem:[%s0 + $0xf4] sm:$0xf]
  %v77 = vld [vmem:[%s0 + $0xf8] sm:$0xf]
  %v78 = vld [vmem:[%s0 + $0xfc] sm:$0xf]
  %v79 = vld [vmem:[%s0 + $0x100] sm:$0xf]
  %v80 = vld [vmem:[%s0 + $0x104] sm:$0xf]
  %v81 = vld [vmem:[%s0 + $0x108] sm:$0xf]
  %v82 = vld [vmem:[%s0 + $0x10c] sm:$0xf]
  %v83 = vld [vmem:[%s0 + $0x110] sm:$0xf]
  %v84 = vld [vmem:[%s0 + $0x114] sm:$0xf]
  %v85 = vld [vmem:[%s0 + $0x118] sm:$0xf]
  %v86 = vld [vmem:[%s0 + $0x11c] sm:$0xf]
  %v87 = vld [vmem:[%s0 + $0x120] sm:$0xf]
  %v88 = vld [vmem:[%s0 + $0x124] sm:$0xf]
  %v89 = vld [vmem:[%s0 + $0x128] sm:$0xf]
  %v90 = vld [vmem:[%s0 + $0x12c] sm:$0xf]
  %v91 = vld [vmem:[%s0 + $0x130] sm:$0xf]
  %v92 = vld [vmem:[%s0 + $0x134] sm:$0xf]
  %v93 = vld [vmem:[%s0 + $0x138] sm:$0xf]
  %v94 = vld [vmem:[%s0 + $0x13c] sm:$0xf]
  %v95 = vld [vmem:[%s0 + $0x140] sm:$0xf]
  %v96 = vld [vmem:[%s0 + $0x144] sm:$0xf]
  %v97 = vld [vmem:[%s0 + $0x148] sm:$0xf]
  %v98 = vld [vmem:[%s0 + $0x14c] sm:$0xf]
  %v99 = vld [vmem:[%s0 + $0x150] sm:$0xf]
  %v100 = vld [vmem:[%s0 + $0x154] sm:$0xf]
  %v101 = vld [vmem:[%s0 + $0x158] sm:$0xf]
  %v102 = vld [vmem:[%s0 + $0x15c] sm:$0xf]
  %v103 = vld [vmem:[%s0 + $0x160] sm:$0xf]
  %v104 = vld [vmem:[%s0 + $0x164] sm:$0xf]
  %v105 = vld [vmem:[%s0 + $0x168] sm:$0xf]
  %v106 = vld [vmem:[%s0 + $0x16c] sm:$0xf]
  %v107 = vld [vmem:[%s0 + $0x170] sm:$0xf]
  %v108 = vld [vmem:[%s0 + $0x174] sm:$0xf]
  %v109 = vld [vmem:[%s0 + $0x178] sm:$0xf]
  %v110 = vld [vmem:[%s0 + $0x17c] sm:$0xf]
  %v111 = vld [vmem:[%s0 + $0x180] sm:$0xf]
  %v112 = vld [vmem:[%s0 + $0x184] sm:$0xf]
  %v113 = vld [vmem:[%s0 + $0x188] sm:$0xf]
  %v114 = vld [vmem:[%s0 + $0x18c] sm:$0xf]
  %v115 = vld [vmem:[%s0 + $0x190] sm:$0xf]
  %v116 = vld [vmem:[%s0 + $0x194] sm:$0xf]
  %v117 = vld [vmem:[%s0 + $0x198] sm:$0xf]
  %v118 = vld [vmem:[%s0 + $0x19c] sm:$0xf]
  %v119 = vld [vmem:[%s0 + $0x1a0] sm:$0xf]
  %v120 = vld [vmem:[%s0 + $0x1a4] sm:$0xf]
  %v121 = vld [vmem:[%s0 + $0x1a8] sm:$0xf]
  %v122 = vld [vmem:[%s0 + $0x1ac] sm:$0xf]
  %v123 = vld [vmem:[%s0 + $0x1b0] sm:$0xf]
  %v124 = vld [vmem:[%s0 + $0x1b4] sm:$0xf]
  %v125 = vld [vmem:[%s0 + $0x1b8] sm:$0xf]
  %v126 = vld [vmem:[%s0 + $0x1bc] sm:$0xf]
  %v127 = vld [vmem:[%s0 + $0x1c0] sm:$0xf]
  %v128 = vld [vmem:[%s0 + $0x1c4] sm:$0xf]
  %v129 = vld [vmem:[%s0 + $0x1c8] sm:$0xf]
  %v130 = vld [vmem:[%s0 + $0x1cc] sm:$0xf]
  %v131 = vld [vmem:[%s0 + $0x1d0] sm:$0xf]
  %v132 = vld [vmem:[%s0 + $0x1d4] sm:$0xf]
  %v133 = vld [vmem:[%s0 + $0x1d8] sm:$0xf]
  %v134 = vld [vmem:[%s0 + $0x1dc] sm:$0xf]
  %v135 = vld [vmem:[%s0 + $0x1e0] sm:$0xf]
  %v136 = vld [vmem:[%s0 + $0x1e4] sm:$0xf]
  %v137 = vld [vmem:[%s0 + $0x1e8] sm:$0xf]
  %v138 = vld [vmem:[%s0 + $0x1ec] sm:$0xf]
  %v139 = vld [vmem:[%s0 + $0x1f0] sm:$0xf]
  %v140 = vld [vmem:[%s0 + $0x1f4] sm:$0xf]
  %v141 = vld [vmem:[%s0 + $0x1f8] sm:$0xf]
  %v142 = vld [vmem:[%s0 + $0x1fc] sm:$0xf]
  %v143 = vld [vmem:[%s0 + $0x200] sm:$0xf]
  %v144 = vld [vmem:[%s0 + $0x204] sm:$0xf]
  %v145 = vld [vmem:[%s0 + $0x208] sm:$0xf]
  %v146 = vld [vmem:[%s0 + $0x20c] sm:$0xf]
  %v147 = vld [vmem:[%s0 + $0x210] sm:$0xf]
  %v148 = vld [vmem:[%s0 + $0x214] sm:$0xf]
  %v149 = vld [vmem:[%s0 + $0x218] sm:$0xf]
  %v150 = vld [vmem:[%s0 + $0x21c] sm:$0xf]
  %v151 = vld [vmem:[%s0 + $0x220] sm:$0xf]
  %v152 = vld [vmem:[%s0 + $0x224] sm:$0xf]
  %v153 = vld [vmem:[%s0 + $0x228] sm:$0xf]
  %v154 = vld [vmem:[%s0 + $0x22c] sm:$0xf]
  %v155 = vld [vmem:[%s0 + $0x230] sm:$0xf]
  %v156 = vld [vmem:[%s0 + $0x234] sm:$0xf]
  %v157 = vld [vmem:[%s0 + $0x238] sm:$0xf]
  %v158 = vld [vmem:[%s0 + $0x23c] sm:$0xf]
  %v159 = vld [vmem:[%s0 + $0x240] sm:$0xf]
  %v160 = vld [vmem:[%s0 + $0x244] sm:$0xf]
  %v161 = vld [vmem:[%s0 + $0x248] sm:$0xf]
  %v162 = vld [vmem:[%s0 + $0x24c] sm:$0xf]
  %v163 = vld [vmem:[%s0 + $0x250] sm:$0xf]
  %v164 = vld [vmem:[%s0 + $0x254] sm:$0xf]
  %v165 = vld [vmem:[%s0 + $0x258] sm:$0xf]
  %v166 = vld [vmem:[%s0 + $0x25c] sm:$0xf]
  %v167 = vld [vmem:[%s0 + $0x260] sm:$0xf]
  %v168 = vld [vmem:[%s0 + $0x264] sm:$0xf]
  %v169 = vld [vmem:[%s0 + $0x268] sm:$0xf]
  %v170 = vld [vmem:[%s0 + $0x26c] sm:$0xf]
  %v171 = vld [vmem:[%s0 + $0x270] sm:$0xf]
  %v172 = vld [vmem:[%s0 + $0x274] sm:$0xf]
  %v173 = vld [vmem:[%s0 + $0x278] sm:$0xf]
  %v174 = vld [vmem:[%s0 + $0x27c] sm:$0xf]
  %v175 = vld [vmem:[%s0 + $0x280] sm:$0xf]
  %v176 = vld [vmem:[%s0 + $0x284] sm:$0xf]
  %v177 = vld [vmem:[%s0 + $0x288] sm:$0xf]
  %v178 = vld [vmem:[%s0 + $0x28c] sm:$0xf]
  %v179 = vld [vmem:[%s0 + $0x290] sm:$0xf]
  %v180 = vld [vmem:[%s0 + $0x294] sm:$0xf]
  %v181 = vld [vmem:[%s0 + $0x298] sm:$0xf]
  %v182 = vld [vmem:[%s0 + $0x29c] sm:$0xf]
  %v183 = vld [vmem:[%s0 + $0x2a0] sm:$0xf]
  %v184 = vld [vmem:[%s0 + $0x2a4] sm:$0xf]
  %v185 = vld [vmem:[%s0 + $0x2a8] sm:$0xf]
  %v186 = vld [vmem:[%s0 + $0x2ac] sm:$0xf]
  %v187 = vld [vmem:[%s0 + $0x2b0] sm:$0xf]
  %v188 = vld [vmem:[%s0 + $0x2b4] sm:$0xf]
  %v189 = vld [vmem:[%s0 + $0x2b8] sm:$0xf]
  %v190 = vld [vmem:[%s0 + $0x2bc] sm:$0xf]
  %v191 = vld [vmem:[%s0 + $0x2c0] sm:$0xf]
  %v192 = vld [vmem:[%s0 + $0x2c4] sm:$0xf]
  %v193 = vld [vmem:[%s0 + $0x2c8] sm:$0xf]
  %v194 = vld [vmem:[%s0 + $0x2cc] sm:$0xf]
  %v195 = vld [vmem:[%s0 + $0x2d0] sm:$0xf]
  %v196 = vld [vmem:[%s0 + $0x2d4] sm:$0xf]
  %v197 = vld [vmem:[%s0 + $0x2d8] sm:$0xf]
  %v198 = vld [vmem:[%s0 + $0x2dc] sm:$0xf]
  %v199 = vld [vmem:[%s0 + $0x2e0] sm:$0xf]
  %v200 = vld [vmem:[%s0 + $0x2e4] sm:$0xf]
  %v201 = vld [vmem:[%s0 + $0x2e8] sm:$0xf]
  %v202 = vld [vmem:[%s0 + $0x2ec] sm:$0xf]
  %v203 = vld [vmem:[%s0 + $0x2f0] sm:$0xf]
  %v204 = vld [vmem:[%s0 + $0x2f4] sm:$0xf]
  %v205 = vld [vmem:[%s0 + $0x2f8] sm:$0xf]
  %v206 = vld [vmem:[%s0 + $0x2fc] sm:$0xf]
  %v207 = vld [vmem:[%s0 + $0x300] sm:$0xf]
  %v208 = vld [vmem:[%s0 + $0x304] sm:$0xf]
  %v209 = vld [vmem:[%s0 + $0x308] sm:$0xf]
  %v210 = vld [vmem:[%s0 + $0x30c] sm:$0xf]
  %v211 = vld [vmem:[%s0 + $0x310] sm:$0xf]
  %v212 = vld [vmem:[%s0 + $0x314] sm:$0xf]
  %v213 = vld [vmem:[%s0 + $0x318] sm:$0xf]
  %v214 = vld [vmem:[%s0 + $0x31c] sm:$0xf]
  %v215 = vld [vmem:[%s0 + $0x320] sm:$0xf]
  %v216 = vld [vmem:[%s0 + $0x324] sm:$0xf]
  %v217 = vld [vmem:[%s0 + $0x328] sm:$0xf]
  %v218 = vld [vmem:[%s0 + $0x32c] sm:$0xf]
  %v219 = vld [vmem:[%s0 + $0x330] sm:$0xf]
  %v220 = vld [vmem:[%s0 + $0x334] sm:$0xf]
  %v221 = vld [vmem:[%s0 + $0x338] sm:$0xf]
  %v222 = vld [vmem:[%s0 + $0x33c] sm:$0xf]
  %v223 = vld [vmem:[%s0 + $0x340] sm:$0xf]
  %v224 = vld [vmem:[%s0 + $0x344] sm:$0xf]
  %v225 = vld [vmem:[%s0 + $0x348] sm:$0xf]
  %v226 = vld [vmem:[%s0 + $0x34c] sm:$0xf]
  %v227 = vld [vmem:[%s0 + $0x350] sm:$0xf]
  %v228 = vld [vmem:[%s0 + $0x354] sm:$0xf]
  %v229 = vld [vmem:[%s0 + $0x358] sm:$0xf]
  %v230 = vld [vmem:[%s0 + $0x35c] sm:$0xf]
  %v231 = vld [vmem:[%s0 + $0x360] sm:$0xf]
  %v232 = vld [vmem:[%s0 + $0x364] sm:$0xf]
  %v233 = vld [vmem:[%s0 + $0x368] sm:$0xf]
  %v234 = vld [vmem:[%s0 + $0x36c] sm:$0xf]
  %v235 = vld [vmem:[%s0 + $0x370] sm:$0xf]
  %v236 = vld [vmem:[%s0 + $0x374] sm:$0xf]
  %v237 = vld [vmem:[%s0 + $0x378] sm:$0xf]
  %v238 = vld [vmem:[%s0 + $0x37c] sm:$0xf]
  %v239 = vld [vmem:[%s0 + $0x380] sm:$0xf]
  %v240 = vld [vmem:[%s0 + $0x384] sm:$0xf]
  %v241 = vld [vmem:[%s1] sm:$0xf]
  %v242 = vld [vmem:[%s1 + $0x4] sm:$0xf]
  %v243 = vld [vmem:[%s1 + $0x8] sm:$0xf]
  %v244 = vld [vmem:[%s1 + $0xc] sm:$0xf]
  %v245 = vld [vmem:[%s1 + $0x10] sm:$0x3]
  %v246 = vld [vmem:[%s2] sm:$0x1]
  %v248 = vlaneseq
  %v249 = vshrl.u32 %v248, 7
  %v250 = vsub.s32 0, %v249
  %v251 = vrot.slane %v246, %v250
  %v479 = vunpack.c.l.b16 %v15
  %v480 = vunpack.c.l.b16 %v16
  %v481 = vunpack.c.l.b16 %v17
  %v482 = vunpack.c.l.b16 %v18
  %v483 = vunpack.c.l.b16 %v19
  %v484 = vunpack.c.l.b16 %v20
  %v485 = vunpack.c.l.b16 %v21
  %v486 = vunpack.c.l.b16 %v22
  %v487 = vunpack.c.l.b16 %v23
  %v488 = vunpack.c.l.b16 %v24
  %v489 = vunpack.c.l.b16 %v25
  %v490 = vunpack.c.l.b16 %v26
  %v491 = vunpack.c.l.b16 %v27
  %v492 = vunpack.c.l.b16 %v28
  %v493 = vunpack.c.l.b16 %v29
  %v494 = vunpack.c.l.b16 %v30
  %v495 = vunpack.c.l.b16 %v31
  %v496 = vunpack.c.l.b16 %v32
  %v497 = vunpack.c.l.b16 %v33
  %v498 = vunpack.c.l.b16 %v34
  %v499 = vunpack.c.l.b16 %v35
  %v500 = vunpack.c.l.b16 %v36
  %v501 = vunpack.c.l.b16 %v37
  %v502 = vunpack.c.l.b16 %v38
  %v503 = vunpack.c.l.b16 %v39
  %v504 = vunpack.c.l.b16 %v40
  %v505 = vunpack.c.l.b16 %v41
  %v506 = vunpack.c.l.b16 %v42
  %v507 = vunpack.c.l.b16 %v43
  %v508 = vunpack.c.l.b16 %v44
  %v509 = vunpack.c.l.b16 %v45
  %v510 = vunpack.c.l.b16 %v46
  %v511 = vunpack.c.l.b16 %v47
  %v512 = vunpack.c.l.b16 %v48
  %v513 = vunpack.c.l.b16 %v49
  %v514 = vunpack.c.l.b16 %v50
  %v515 = vunpack.c.l.b16 %v51
  %v516 = vunpack.c.l.b16 %v52
  %v517 = vunpack.c.l.b16 %v53
  %v518 = vunpack.c.l.b16 %v54
  %v519 = vunpack.c.l.b16 %v55
  %v520 = vunpack.c.l.b16 %v56
  %v521 = vunpack.c.l.b16 %v57
  %v522 = vunpack.c.l.b16 %v58
  %v523 = vunpack.c.l.b16 %v59
  %v524 = vunpack.c.l.b16 %v60
  %v525 = vunpack.c.l.b16 %v61
  %v526 = vunpack.c.l.b16 %v62
  %v527 = vunpack.c.l.b16 %v63
  %v528 = vunpack.c.l.b16 %v64
  %v529 = vunpack.c.l.b16 %v65
  %v530 = vunpack.c.l.b16 %v66
  %v531 = vunpack.c.l.b16 %v67
  %v532 = vunpack.c.l.b16 %v68
  %v533 = vunpack.c.l.b16 %v69
  %v534 = vunpack.c.l.b16 %v70
  %v535 = vunpack.c.l.b16 %v71
  %v536 = vunpack.c.l.b16 %v72
  %v537 = vunpack.c.l.b16 %v73
  %v538 = vunpack.c.l.b16 %v74
  %v539 = vunpack.c.l.b16 %v75
  %v540 = vunpack.c.l.b16 %v76
  %v541 = vunpack.c.l.b16 %v77
  %v542 = vunpack.c.l.b16 %v78
  %v543 = vunpack.c.l.b16 %v79
  %v544 = vunpack.c.l.b16 %v80
  %v545 = vunpack.c.l.b16 %v81
  %v546 = vunpack.c.l.b16 %v82
  %v547 = vunpack.c.l.b16 %v83
  %v548 = vunpack.c.l.b16 %v84
  %v549 = vunpack.c.l.b16 %v85
  %v550 = vunpack.c.l.b16 %v86
  %v551 = vunpack.c.l.b16 %v87
  %v552 = vunpack.c.l.b16 %v88
  %v553 = vunpack.c.l.b16 %v89
  %v554 = vunpack.c.l.b16 %v90
  %v555 = vunpack.c.l.b16 %v91
  %v556 = vunpack.c.l.b16 %v92
  %v557 = vunpack.c.l.b16 %v93
  %v558 = vunpack.c.l.b16 %v94
  %v559 = vunpack.c.l.b16 %v95
  %v560 = vunpack.c.l.b16 %v96
  %v561 = vunpack.c.l.b16 %v97
  %v562 = vunpack.c.l.b16 %v98
  %v563 = vunpack.c.l.b16 %v99
  %v564 = vunpack.c.l.b16 %v100
  %v565 = vunpack.c.l.b16 %v101
  %v566 = vunpack.c.l.b16 %v102
  %v567 = vunpack.c.l.b16 %v103
  %v568 = vunpack.c.l.b16 %v104
  %v569 = vunpack.c.l.b16 %v105
  %v570 = vunpack.c.l.b16 %v106
  %v571 = vunpack.c.l.b16 %v107
  %v572 = vunpack.c.l.b16 %v108
  %v573 = vunpack.c.l.b16 %v109
  %v574 = vunpack.c.l.b16 %v110
  %v575 = vunpack.c.l.b16 %v111
  %v576 = vunpack.c.l.b16 %v112
  %v577 = vunpack.c.l.b16 %v113
  %v578 = vunpack.c.l.b16 %v114
  %v579 = vunpack.c.l.b16 %v115
  %v580 = vunpack.c.l.b16 %v116
  %v581 = vunpack.c.l.b16 %v117
  %v582 = vunpack.c.l.b16 %v118
  %v583 = vunpack.c.l.b16 %v119
  %v584 = vunpack.c.l.b16 %v120
  %v585 = vunpack.c.l.b16 %v121
  %v586 = vunpack.c.l.b16 %v122
  %v587 = vunpack.c.l.b16 %v123
  %v588 = vunpack.c.l.b16 %v124
  %v589 = vunpack.c.l.b16 %v125
  %v590 = vunpack.c.l.b16 %v126
  %v591 = vunpack.c.l.b16 %v127
  %v592 = vunpack.c.l.b16 %v128
  %v593 = vunpack.c.l.b16 %v129
  %v594 = vunpack.c.l.b16 %v130
  %v595 = vunpack.c.l.b16 %v131
  %v596 = vunpack.c.l.b16 %v132
  %v597 = vunpack.c.l.b16 %v133
  %v598 = vunpack.c.l.b16 %v134
  %v599 = vunpack.c.l.b16 %v135
  %v600 = vunpack.c.l.b16 %v136
  %v601 = vunpack.c.l.b16 %v137
  %v602 = vunpack.c.l.b16 %v138
  %v603 = vunpack.c.l.b16 %v139
  %v604 = vunpack.c.l.b16 %v140
  %v605 = vunpack.c.l.b16 %v141
  %v606 = vunpack.c.l.b16 %v142
  %v607 = vunpack.c.l.b16 %v143
  %v608 = vunpack.c.l.b16 %v144
  %v609 = vunpack.c.l.b16 %v145
  %v610 = vunpack.c.l.b16 %v146
  %v611 = vunpack.c.l.b16 %v147
  %v612 = vunpack.c.l.b16 %v148
  %v613 = vunpack.c.l.b16 %v149
  %v614 = vunpack.c.l.b16 %v150
  %v615 = vunpack.c.l.b16 %v151
  %v616 = vunpack.c.l.b16 %v152
  %v617 = vunpack.c.l.b16 %v153
  %v618 = vunpack.c.l.b16 %v154
  %v619 = vunpack.c.l.b16 %v155
  %v620 = vunpack.c.l.b16 %v156
  %v621 = vunpack.c.l.b16 %v157
  %v622 = vunpack.c.l.b16 %v158
  %v623 = vunpack.c.l.b16 %v159
  %v624 = vunpack.c.l.b16 %v160
  %v625 = vunpack.c.l.b16 %v161
  %v626 = vunpack.c.l.b16 %v162
  %v627 = vunpack.c.l.b16 %v163
  %v628 = vunpack.c.l.b16 %v164
  %v629 = vunpack.c.l.b16 %v165
  %v630 = vunpack.c.l.b16 %v166
  %v631 = vunpack.c.l.b16 %v167
  %v632 = vunpack.c.l.b16 %v168
  %v633 = vunpack.c.l.b16 %v169
  %v634 = vunpack.c.l.b16 %v170
  %v635 = vunpack.c.l.b16 %v171
  %v636 = vunpack.c.l.b16 %v172
  %v637 = vunpack.c.l.b16 %v173
  %v638 = vunpack.c.l.b16 %v174
  %v639 = vunpack.c.l.b16 %v175
  %v640 = vunpack.c.l.b16 %v176
  %v641 = vunpack.c.l.b16 %v177
  %v642 = vunpack.c.l.b16 %v178
  %v643 = vunpack.c.l.b16 %v179
  %v644 = vunpack.c.l.b16 %v180
  %v645 = vunpack.c.l.b16 %v181
  %v646 = vunpack.c.l.b16 %v182
  %v647 = vunpack.c.l.b16 %v183
  %v648 = vunpack.c.l.b16 %v184
  %v649 = vunpack.c.l.b16 %v185
  %v650 = vunpack.c.l.b16 %v186
  %v651 = vunpack.c.l.b16 %v187
  %v652 = vunpack.c.l.b16 %v188
  %v653 = vunpack.c.l.b16 %v189
  %v654 = vunpack.c.l.b16 %v190
  %v655 = vunpack.c.l.b16 %v191
  %v656 = vunpack.c.l.b16 %v192
  %v657 = vunpack.c.l.b16 %v193
  %v658 = vunpack.c.l.b16 %v194
  %v659 = vunpack.c.l.b16 %v195
  %v660 = vunpack.c.l.b16 %v196
  %v661 = vunpack.c.l.b16 %v197
  %v662 = vunpack.c.l.b16 %v198
  %v663 = vunpack.c.l.b16 %v199
  %v664 = vunpack.c.l.b16 %v200
  %v665 = vunpack.c.l.b16 %v201
  %v666 = vunpack.c.l.b16 %v202
  %v667 = vunpack.c.l.b16 %v203
  %v668 = vunpack.c.l.b16 %v204
  %v669 = vunpack.c.l.b16 %v205
  %v670 = vunpack.c.l.b16 %v206
  %v671 = vunpack.c.l.b16 %v207
  %v672 = vunpack.c.l.b16 %v208
  %v673 = vunpack.c.l.b16 %v209
  %v674 = vunpack.c.l.b16 %v210
  %v675 = vunpack.c.l.b16 %v211
  %v676 = vunpack.c.l.b16 %v212
  %v677 = vunpack.c.l.b16 %v213
  %v678 = vunpack.c.l.b16 %v214
  %v679 = vunpack.c.l.b16 %v215
  %v680 = vunpack.c.l.b16 %v216
  %v681 = vunpack.c.l.b16 %v217
  %v682 = vunpack.c.l.b16 %v218
  %v683 = vunpack.c.l.b16 %v219
  %v684 = vunpack.c.l.b16 %v220
  %v685 = vunpack.c.l.b16 %v221
  %v686 = vunpack.c.l.b16 %v222
  %v687 = vunpack.c.l.b16 %v223
  %v688 = vunpack.c.l.b16 %v224
  %v689 = vunpack.c.l.b16 %v225
  %v690 = vunpack.c.l.b16 %v226
  %v691 = vunpack.c.l.b16 %v227
  %v692 = vunpack.c.l.b16 %v228
  %v693 = vunpack.c.l.b16 %v229
  %v694 = vunpack.c.l.b16 %v230
  %v695 = vunpack.c.l.b16 %v231
  %v696 = vunpack.c.l.b16 %v232
  %v697 = vunpack.c.l.b16 %v233
  %v698 = vunpack.c.l.b16 %v234
  %v699 = vunpack.c.l.b16 %v235
  %v700 = vunpack.c.l.b16 %v236
  %v701 = vunpack.c.l.b16 %v237
  %v702 = vunpack.c.l.b16 %v238
  %v703 = vunpack.c.l.b16 %v239
  %v704 = vunpack.c.l.b16 %v240
  %v705 = vpack.c.b16 %v480, %v479
  %v706 = vpack.c.b16 %v482, %v481
  %v707 = vpack.c.b16 %v484, %v483
  %v708 = vpack.c.b16 %v486, %v485
  %v709 = vpack.c.b16 %v488, %v487
  %v710 = vpack.c.b16 %v490, %v489
  %v711 = vpack.c.b16 %v492, %v491
  %v712 = vpack.c.b16 %v494, %v493
  %v713 = vpack.c.b16 %v496, %v495
  %v714 = vpack.c.b16 %v498, %v497
  %v715 = vpack.c.b16 %v500, %v499
  %v716 = vpack.c.b16 %v502, %v501
  %v717 = vpack.c.b16 %v504, %v503
  %v718 = vpack.c.b16 %v506, %v505
  %v719 = vpack.c.b16 %v508, %v507
  %v720 = vpack.c.b16 %v510, %v509
  %v721 = vpack.c.b16 %v512, %v511
  %v722 = vpack.c.b16 %v514, %v513
  %v723 = vpack.c.b16 %v516, %v515
  %v724 = vpack.c.b16 %v518, %v517
  %v725 = vpack.c.b16 %v520, %v519
  %v726 = vpack.c.b16 %v522, %v521
  %v727 = vpack.c.b16 %v524, %v523
  %v728 = vpack.c.b16 %v526, %v525
  %v729 = vpack.c.b16 %v528, %v527
  %v730 = vpack.c.b16 %v530, %v529
  %v731 = vpack.c.b16 %v532, %v531
  %v732 = vpack.c.b16 %v534, %v533
  %v733 = vpack.c.b16 %v536, %v535
  %v734 = vpack.c.b16 %v538, %v537
  %v735 = vpack.c.b16 %v540, %v539
  %v736 = vpack.c.b16 %v542, %v541
  %v737 = vpack.c.b16 %v544, %v543
  %v738 = vpack.c.b16 %v546, %v545
  %v739 = vpack.c.b16 %v548, %v547
  %v740 = vpack.c.b16 %v550, %v549
  %v741 = vpack.c.b16 %v552, %v551
  %v742 = vpack.c.b16 %v554, %v553
  %v743 = vpack.c.b16 %v556, %v555
  %v744 = vpack.c.b16 %v558, %v557
  %v745 = vpack.c.b16 %v560, %v559
  %v746 = vpack.c.b16 %v562, %v561
  %v747 = vpack.c.b16 %v564, %v563
  %v748 = vpack.c.b16 %v566, %v565
  %v749 = vpack.c.b16 %v568, %v567
  %v750 = vpack.c.b16 %v570, %v569
  %v751 = vpack.c.b16 %v572, %v571
  %v752 = vpack.c.b16 %v574, %v573
  %v753 = vpack.c.b16 %v576, %v575
  %v754 = vpack.c.b16 %v578, %v577
  %v755 = vpack.c.b16 %v580, %v579
  %v756 = vpack.c.b16 %v582, %v581
  %v757 = vpack.c.b16 %v584, %v583
  %v758 = vpack.c.b16 %v586, %v585
  %v759 = vpack.c.b16 %v588, %v587
  %v760 = vpack.c.b16 %v590, %v589
  %v761 = vpack.c.b16 %v592, %v591
  %v762 = vpack.c.b16 %v594, %v593
  %v763 = vpack.c.b16 %v596, %v595
  %v764 = vpack.c.b16 %v598, %v597
  %v765 = vpack.c.b16 %v600, %v599
  %v766 = vpack.c.b16 %v602, %v601
  %v767 = vpack.c.b16 %v604, %v603
  %v768 = vpack.c.b16 %v606, %v605
  %v769 = vpack.c.b16 %v608, %v607
  %v770 = vpack.c.b16 %v610, %v609
  %v771 = vpack.c.b16 %v612, %v611
  %v772 = vpack.c.b16 %v614, %v613
  %v773 = vpack.c.b16 %v616, %v615
  %v774 = vpack.c.b16 %v618, %v617
  %v775 = vpack.c.b16 %v620, %v619
  %v776 = vpack.c.b16 %v622, %v621
  %v777 = vpack.c.b16 %v624, %v623
  %v778 = vpack.c.b16 %v626, %v625
  %v779 = vpack.c.b16 %v628, %v627
  %v780 = vpack.c.b16 %v630, %v629
  %v781 = vpack.c.b16 %v632, %v631
  %v782 = vpack.c.b16 %v634, %v633
  %v783 = vpack.c.b16 %v636, %v635
  %v784 = vpack.c.b16 %v638, %v637
  %v785 = vpack.c.b16 %v640, %v639
  %v786 = vpack.c.b16 %v642, %v641
  %v787 = vpack.c.b16 %v644, %v643
  %v788 = vpack.c.b16 %v646, %v645
  %v789 = vpack.c.b16 %v648, %v647
  %v790 = vpack.c.b16 %v650, %v649
  %v791 = vpack.c.b16 %v652, %v651
  %v792 = vpack.c.b16 %v654, %v653
  %v793 = vpack.c.b16 %v656, %v655
  %v794 = vpack.c.b16 %v658, %v657
  %v795 = vpack.c.b16 %v660, %v659
  %v796 = vpack.c.b16 %v662, %v661
  %v797 = vpack.c.b16 %v664, %v663
  %v798 = vpack.c.b16 %v666, %v665
  %v799 = vpack.c.b16 %v668, %v667
  %v800 = vpack.c.b16 %v670, %v669
  %v801 = vpack.c.b16 %v672, %v671
  %v802 = vpack.c.b16 %v674, %v673
  %v803 = vpack.c.b16 %v676, %v675
  %v804 = vpack.c.b16 %v678, %v677
  %v805 = vpack.c.b16 %v680, %v679
  %v806 = vpack.c.b16 %v682, %v681
  %v807 = vpack.c.b16 %v684, %v683
  %v808 = vpack.c.b16 %v686, %v685
  %v809 = vpack.c.b16 %v688, %v687
  %v810 = vpack.c.b16 %v690, %v689
  %v811 = vpack.c.b16 %v692, %v691
  %v812 = vpack.c.b16 %v694, %v693
  %v813 = vpack.c.b16 %v696, %v695
  %v814 = vpack.c.b16 %v698, %v697
  %v815 = vpack.c.b16 %v700, %v699
  %v816 = vpack.c.b16 %v702, %v701
  %v817 = vpack.c.b16 %v704, %v703
  %v823 = vunpack.c.l.b16 %v241
  %v824 = vunpack.c.l.b16 %v242
  %v825 = vunpack.c.l.b16 %v243
  %v826 = vunpack.c.l.b16 %v244
  %v827 = vunpack.c.l.b16 %v245
  %v828 = vpack.c.b16 %v824, %v823
  %v829 = vpack.c.b16 %v826, %v825
  %v830 = vpack.c.b16 %v827, %v827
  %vm833 = vcmask 293888
  %v835 = vsel %vm833, %v705, 0
  %v838 = vsel %vm833, %v706, 0
  %v841 = vsel %vm833, %v707, 0
  %v844 = vsel %vm833, %v708, 0
  %v847 = vsel %vm833, %v709, 0
  %v850 = vsel %vm833, %v710, 0
  %v853 = vsel %vm833, %v711, 0
  %v856 = vsel %vm833, %v712, 0
  %v859 = vsel %vm833, %v713, 0
  %v862 = vsel %vm833, %v714, 0
  %v865 = vsel %vm833, %v715, 0
  %v868 = vsel %vm833, %v716, 0
  %v871 = vsel %vm833, %v717, 0
  %v874 = vsel %vm833, %v718, 0
  %v877 = vsel %vm833, %v719, 0
  %v880 = vsel %vm833, %v720, 0
  %v883 = vsel %vm833, %v721, 0
  %v886 = vsel %vm833, %v722, 0
  %v889 = vsel %vm833, %v723, 0
  %v892 = vsel %vm833, %v724, 0
  %v895 = vsel %vm833, %v725, 0
  %v898 = vsel %vm833, %v726, 0
  %v901 = vsel %vm833, %v727, 0
  %v904 = vsel %vm833, %v728, 0
  %v907 = vsel %vm833, %v729, 0
  %v910 = vsel %vm833, %v730, 0
  %v913 = vsel %vm833, %v731, 0
  %v916 = vsel %vm833, %v732, 0
  %v919 = vsel %vm833, %v733, 0
  %v922 = vsel %vm833, %v734, 0
  %v925 = vsel %vm833, %v735, 0
  %v928 = vsel %vm833, %v736, 0
  %v931 = vsel %vm833, %v737, 0
  %v934 = vsel %vm833, %v738, 0
  %v937 = vsel %vm833, %v739, 0
  %v940 = vsel %vm833, %v740, 0
  %v943 = vsel %vm833, %v741, 0
  %v946 = vsel %vm833, %v742, 0
  %v949 = vsel %vm833, %v743, 0
  %v952 = vsel %vm833, %v744, 0
  %v955 = vsel %vm833, %v745, 0
  %v958 = vsel %vm833, %v746, 0
  %v961 = vsel %vm833, %v747, 0
  %v964 = vsel %vm833, %v748, 0
  %v967 = vsel %vm833, %v749, 0
  %v970 = vsel %vm833, %v750, 0
  %v973 = vsel %vm833, %v751, 0
  %v976 = vsel %vm833, %v752, 0
  %v979 = vsel %vm833, %v753, 0
  %v982 = vsel %vm833, %v754, 0
  %v985 = vsel %vm833, %v755, 0
  %v988 = vsel %vm833, %v756, 0
  %v991 = vsel %vm833, %v757, 0
  %v994 = vsel %vm833, %v758, 0
  %v997 = vsel %vm833, %v759, 0
  %v1000 = vsel %vm833, %v760, 0
  %v1003 = vsel %vm833, %v761, 0
  %v1006 = vsel %vm833, %v762, 0
  %v1009 = vsel %vm833, %v763, 0
  %v1012 = vsel %vm833, %v764, 0
  %v1015 = vsel %vm833, %v765, 0
  %v1018 = vsel %vm833, %v766, 0
  %v1021 = vsel %vm833, %v767, 0
  %v1024 = vsel %vm833, %v768, 0
  %v1027 = vsel %vm833, %v769, 0
  %v1030 = vsel %vm833, %v770, 0
  %v1033 = vsel %vm833, %v771, 0
  %v1036 = vsel %vm833, %v772, 0
  %v1039 = vsel %vm833, %v773, 0
  %v1042 = vsel %vm833, %v774, 0
  %v1045 = vsel %vm833, %v775, 0
  %v1048 = vsel %vm833, %v776, 0
  %v1051 = vsel %vm833, %v777, 0
  %v1054 = vsel %vm833, %v778, 0
  %v1057 = vsel %vm833, %v779, 0
  %v1060 = vsel %vm833, %v780, 0
  %v1063 = vsel %vm833, %v781, 0
  %v1066 = vsel %vm833, %v782, 0
  %v1069 = vsel %vm833, %v783, 0
  %v1072 = vsel %vm833, %v784, 0
  %v1075 = vsel %vm833, %v785, 0
  %v1078 = vsel %vm833, %v786, 0
  %v1081 = vsel %vm833, %v787, 0
  %v1084 = vsel %vm833, %v788, 0
  %v1087 = vsel %vm833, %v789, 0
  %v1090 = vsel %vm833, %v790, 0
  %v1093 = vsel %vm833, %v791, 0
  %v1096 = vsel %vm833, %v792, 0
  %v1099 = vsel %vm833, %v793, 0
  %v1102 = vsel %vm833, %v794, 0
  %v1105 = vsel %vm833, %v795, 0
  %v1108 = vsel %vm833, %v796, 0
  %v1111 = vsel %vm833, %v797, 0
  %v1114 = vsel %vm833, %v798, 0
  %v1117 = vsel %vm833, %v799, 0
  %v1120 = vsel %vm833, %v800, 0
  %v1123 = vsel %vm833, %v801, 0
  %v1126 = vsel %vm833, %v802, 0
  %v1129 = vsel %vm833, %v803, 0
  %v1132 = vsel %vm833, %v804, 0
  %v1135 = vsel %vm833, %v805, 0
  %v1138 = vsel %vm833, %v806, 0
  %v1141 = vsel %vm833, %v807, 0
  %v1144 = vsel %vm833, %v808, 0
  %v1147 = vsel %vm833, %v809, 0
  %v1150 = vsel %vm833, %v810, 0
  %v1153 = vsel %vm833, %v811, 0
  %v1156 = vsel %vm833, %v812, 0
  %v1159 = vsel %vm833, %v813, 0
  %v1162 = vsel %vm833, %v814, 0
  %v1165 = vsel %vm833, %v815, 0
  %v1168 = vsel %vm833, %v816, 0
  %v1171 = vsel %vm833, %v817, 0
  %vm1173 = vcmask 1041408
  %v1175 = vsel %vm1173, %v830, 0
  %1177 = vmatprep.subr.bf16.mxu0 0
  %1178 = vmatpush1.bf16.msra.mxu0 %v828
  %1179 = vmatprep.subr.bf16.mxu0 0
  %1180 = vmatpush1.bf16.msra.mxu0 %v829
  %1181 = vmatprep.subr.bf16.mxu0 0
  %1182 = vmatpush1.bf16.msra.mxu0 %v1175
  %1183 = vmatprep.subr.bf16.mxu0 0
  %1184 = vmatpush1.bf16.msra.mxu0 0
  %1185 = vmatprep.subr.bf16.mxu0 0
  %1186 = vmatpush1.bf16.msra.mxu0 0
  %1187 = vmatprep.subr.bf16.mxu0 0
  %1188 = vmatpush1.bf16.msra.mxu0 0
  %1189 = vmatprep.subr.bf16.mxu0 0
  %1190 = vmatpush1.bf16.msra.mxu0 0
  %1191 = vmatprep.subr.bf16.mxu0 0
  %1192 = vmatpush1.bf16.msra.mxu0 0
  %1193 = vmatprep.subr.bf16.mxu0 0
  %1194 = vmatpush1.bf16.msra.mxu0 0
  %1195 = vmatprep.subr.bf16.mxu0 0
  %1196 = vmatpush1.bf16.msra.mxu0 0
  %1197 = vmatprep.subr.bf16.mxu0 0
  %1198 = vmatpush1.bf16.msra.mxu0 0
  %1199 = vmatprep.subr.bf16.mxu0 0
  %1200 = vmatpush1.bf16.msra.mxu0 0
  %1201 = vmatprep.subr.bf16.mxu0 0
  %1202 = vmatpush1.bf16.msra.mxu0 0
  %1203 = vmatprep.subr.bf16.mxu0 0
  %1204 = vmatpush1.bf16.msra.mxu0 0
  %1205 = vmatprep.subr.bf16.mxu0 0
  %1206 = vmatpush1.bf16.msra.mxu0 0
  %1207 = vmatprep.subr.bf16.mxu0 0
  %1208 = vmatpush1.bf16.msra.mxu0 0
  %1209 = vmatprep.mubr.bf16.mxu0 0
  %1210 = vmatmul.mubr.bf16.gmra.mrb[0].mxu0 %v835
  %v1211 = vpop.f32.mrb[0].mxu0
  %v1212 = vadd.f32 %v251, %v1211
  %v1213 = vpop.f32.mrb[0].mxu0
  %v1214 = vpop.f32.mrb[0].mxu0
  %v1215 = vadd.f32 %v251, %v1214
  %v1216 = vpop.f32.mrb[0].mxu0
  %1217 = vmatprep.mubr.bf16.mxu0 0
  %1218 = vmatmul.mubr.bf16.gmra.mrb[0].mxu0 %v838
  %v1219 = vpop.f32.mrb[0].mxu0
  %v1220 = vadd.f32 %v251, %v1219
  %v1221 = vpop.f32.mrb[0].mxu0
  %v1222 = vpop.f32.mrb[0].mxu0
  %v1223 = vadd.f32 %v251, %v1222
  %v1224 = vpop.f32.mrb[0].mxu0
  %1225 = vmatprep.mubr.bf16.mxu0 0
  %1226 = vmatmul.mubr.bf16.gmra.mrb[0].mxu0 %v841
  %v1227 = vpop.f32.mrb[0].mxu0
  %v1228 = vadd.f32 %v251, %v1227
  %v1229 = vpop.f32.mrb[0].mxu0
  %v1230 = vpop.f32.mrb[0].mxu0
  %v1231 = vadd.f32 %v251, %v1230
  %v1232 = vpop.f32.mrb[0].mxu0
  %1233 = vmatprep.mubr.bf16.mxu0 0
  %1234 = vmatmul.mubr.bf16.gmra.mrb[0].mxu0 %v844
  %v1235 = vpop.f32.mrb[0].mxu0
  %v1236 = vadd.f32 %v251, %v1235
  %v1237 = vpop.f32.mrb[0].mxu0
  %v1238 = vpop.f32.mrb[0].mxu0
  %v1239 = vadd.f32 %v251, %v1238
  %v1240 = vpop.f32.mrb[0].mxu0
  %1241 = vmatprep.mubr.bf16.mxu0 0
  %1242 = vmatmul.mubr.bf16.gmra.mrb[0].mxu0 %v847
  %v1243 = vpop.f32.mrb[0].mxu0
  %v1244 = vadd.f32 %v251, %v1243
  %v1245 = vpop.f32.mrb[0].mxu0
  %v1246 = vpop.f32.mrb[0].mxu0
  %v1247 = vadd.f32 %v251, %v1246
  %v1248 = vpop.f32.mrb[0].mxu0
  %1249 = vmatprep.mubr.bf16.mxu0 0
  %1250 = vmatmul.mubr.bf16.gmra.mrb[0].mxu0 %v850
  %v1251 = vpop.f32.mrb[0].mxu0
  %v1252 = vadd.f32 %v251, %v1251
  %v1253 = vpop.f32.mrb[0].mxu0
  %v1254 = vpop.f32.mrb[0].mxu0
  %v1255 = vadd.f32 %v251, %v1254
  %v1256 = vpop.f32.mrb[0].mxu0
  %1257 = vmatprep.mubr.bf16.mxu0 0
  %1258 = vmatmul.mubr.bf16.gmra.mrb[0].mxu0 %v853
  %v1259 = vpop.f32.mrb[0].mxu0
  %v1260 = vadd.f32 %v251, %v1259
  %v1261 = vpop.f32.mrb[0].mxu0
  %v1262 = vpop.f32.mrb[0].mxu0
  %v1263 = vadd.f32 %v251, %v1262
  %v1264 = vpop.f32.mrb[0].mxu0
  %1265 = vmatprep.mubr.bf16.mxu0 0
  %1266 = vmatmul.mubr.bf16.gmra.mrb[0].mxu0 %v856
  %v1267 = vpop.f32.mrb[0].mxu0
  %v1268 = vadd.f32 %v251, %v1267
  %v1269 = vpop.f32.mrb[0].mxu0
  %v1270 = vpop.f32.mrb[0].mxu0
  %v1271 = vadd.f32 %v251, %v1270
  %v1272 = vpop.f32.mrb[0].mxu0
  %1273 = vmatprep.mubr.bf16.mxu0 0
  %1274 = vmatmul.mubr.bf16.gmra.mrb[0].mxu0 %v859
  %v1275 = vpop.f32.mrb[0].mxu0
  %v1276 = vadd.f32 %v251, %v1275
  %v1277 = vpop.f32.mrb[0].mxu0
  %v1278 = vpop.f32.mrb[0].mxu0
  %v1279 = vadd.f32 %v251, %v1278
  %v1280 = vpop.f32.mrb[0].mxu0
  %1281 = vmatprep.mubr.bf16.mxu0 0
  %1282 = vmatmul.mubr.bf16.gmra.mrb[0].mxu0 %v862
  %v1283 = vpop.f32.mrb[0].mxu0
  %v1284 = vadd.f32 %v251, %v1283
  %v1285 = vpop.f32.mrb[0].mxu0
  %v1286 = vpop.f32.mrb[0].mxu0
  %v1287 = vadd.f32 %v251, %v1286
  %v1288 = vpop.f32.mrb[0].mxu0
  %1289 = vmatprep.mubr.bf16.mxu0 0
  %1290 = vmatmul.mubr.bf16.gmra.mrb[0].mxu0 %v865
  %v1291 = vpop.f32.mrb[0].mxu0
  %v1292 = vadd.f32 %v251, %v1291
  %v1293 = vpop.f32.mrb[0].mxu0
  %v1294 = vpop.f32.mrb[0].mxu0
  %v1295 = vadd.f32 %v251, %v1294
  %v1296 = vpop.f32.mrb[0].mxu0
  %1297 = vmatprep.mubr.bf16.mxu0 0
  %1298 = vmatmul.mubr.bf16.gmra.mrb[0].mxu0 %v868
  %v1299 = vpop.f32.mrb[0].mxu0
  %v1300 = vadd.f32 %v251, %v1299
  %v1301 = vpop.f32.mrb[0].mxu0
  %v1302 = vpop.f32.mrb[0].mxu0
  %v1303 = vadd.f32 %v251, %v1302
  %v1304 = vpop.f32.mrb[0].mxu0
  %1305 = vmatprep.mubr.bf16.mxu0 0
  %1306 = vmatmul.mubr.bf16.gmra.mrb[0].mxu0 %v871
  %v1307 = vpop.f32.mrb[0].mxu0
  %v1308 = vadd.f32 %v251, %v1307
  %v1309 = vpop.f32.mrb[0].mxu0
  %v1310 = vpop.f32.mrb[0].mxu0
  %v1311 = vadd.f32 %v251, %v1310
  %v1312 = vpop.f32.mrb[0].mxu0
  %1313 = vmatprep.mubr.bf16.mxu0 0
  %1314 = vmatmul.mubr.bf16.gmra.mrb[0].mxu0 %v874
  %v1315 = vpop.f32.mrb[0].mxu0
  %v1316 = vadd.f32 %v251, %v1315
  %v1317 = vpop.f32.mrb[0].mxu0
  %v1318 = vpop.f32.mrb[0].mxu0
  %v1319 = vadd.f32 %v251, %v1318
  %v1320 = vpop.f32.mrb[0].mxu0
  %1321 = vmatprep.mubr.bf16.mxu0 0
  %1322 = vmatmul.mubr.bf16.gmra.mrb[0].mxu0 %v877
  %v1323 = vpop.f32.mrb[0].mxu0
  %v1324 = vadd.f32 %v251, %v1323
  %v1325 = vpop.f32.mrb[0].mxu0
  %v1326 = vpop.f32.mrb[0].mxu0
  %v1327 = vadd.f32 %v251, %v1326
  %v1328 = vpop.f32.mrb[0].mxu0
  %1329 = vmatprep.mubr.bf16.mxu0 0
  %1330 = vmatmul.mubr.bf16.gmra.mrb[0].mxu0 %v880
  %v1331 = vpop.f32.mrb[0].mxu0
  %v1332 = vadd.f32 %v251, %v1331
  %v1333 = vpop.f32.mrb[0].mxu0
  %v1334 = vpop.f32.mrb[0].mxu0
  %v1335 = vadd.f32 %v251, %v1334
  %v1336 = vpop.f32.mrb[0].mxu0
  %1337 = vmatprep.mubr.bf16.mxu0 0
  %1338 = vmatmul.mubr.bf16.gmra.mrb[0].mxu0 %v883
  %v1339 = vpop.f32.mrb[0].mxu0
  %v1340 = vadd.f32 %v251, %v1339
  %v1341 = vpop.f32.mrb[0].mxu0
  %v1342 = vpop.f32.mrb[0].mxu0
  %v1343 = vadd.f32 %v251, %v1342
  %v1344 = vpop.f32.mrb[0].mxu0
  %1345 = vmatprep.mubr.bf16.mxu0 0
  %1346 = vmatmul.mubr.bf16.gmra.mrb[0].mxu0 %v886
  %v1347 = vpop.f32.mrb[0].mxu0
  %v1348 = vadd.f32 %v251, %v1347
  %v1349 = vpop.f32.mrb[0].mxu0
  %v1350 = vpop.f32.mrb[0].mxu0
  %v1351 = vadd.f32 %v251, %v1350
  %v1352 = vpop.f32.mrb[0].mxu0
  %1353 = vmatprep.mubr.bf16.mxu0 0
  %1354 = vmatmul.mubr.bf16.gmra.mrb[0].mxu0 %v889
  %v1355 = vpop.f32.mrb[0].mxu0
  %v1356 = vadd.f32 %v251, %v1355
  %v1357 = vpop.f32.mrb[0].mxu0
  %v1358 = vpop.f32.mrb[0].mxu0
  %v1359 = vadd.f32 %v251, %v1358
  %v1360 = vpop.f32.mrb[0].mxu0
  %1361 = vmatprep.mubr.bf16.mxu0 0
  %1362 = vmatmul.mubr.bf16.gmra.mrb[0].mxu0 %v892
  %v1363 = vpop.f32.mrb[0].mxu0
  %v1364 = vadd.f32 %v251, %v1363
  %v1365 = vpop.f32.mrb[0].mxu0
  %v1366 = vpop.f32.mrb[0].mxu0
  %v1367 = vadd.f32 %v251, %v1366
  %v1368 = vpop.f32.mrb[0].mxu0
  %1369 = vmatprep.mubr.bf16.mxu0 0
  %1370 = vmatmul.mubr.bf16.gmra.mrb[0].mxu0 %v895
  %v1371 = vpop.f32.mrb[0].mxu0
  %v1372 = vadd.f32 %v251, %v1371
  %v1373 = vpop.f32.mrb[0].mxu0
  %v1374 = vpop.f32.mrb[0].mxu0
  %v1375 = vadd.f32 %v251, %v1374
  %v1376 = vpop.f32.mrb[0].mxu0
  %1377 = vmatprep.mubr.bf16.mxu0 0
  %1378 = vmatmul.mubr.bf16.gmra.mrb[0].mxu0 %v898
  %v1379 = vpop.f32.mrb[0].mxu0
  %v1380 = vadd.f32 %v251, %v1379
  %v1381 = vpop.f32.mrb[0].mxu0
  %v1382 = vpop.f32.mrb[0].mxu0
  %v1383 = vadd.f32 %v251, %v1382
  %v1384 = vpop.f32.mrb[0].mxu0
  %1385 = vmatprep.mubr.bf16.mxu0 0
  %1386 = vmatmul.mubr.bf16.gmra.mrb[0].mxu0 %v901
  %v1387 = vpop.f32.mrb[0].mxu0
  %v1388 = vadd.f32 %v251, %v1387
  %v1389 = vpop.f32.mrb[0].mxu0
  %v1390 = vpop.f32.mrb[0].mxu0
  %v1391 = vadd.f32 %v251, %v1390
  %v1392 = vpop.f32.mrb[0].mxu0
  %1393 = vmatprep.mubr.bf16.mxu0 0
  %1394 = vmatmul.mubr.bf16.gmra.mrb[0].mxu0 %v904
  %v1395 = vpop.f32.mrb[0].mxu0
  %v1396 = vadd.f32 %v251, %v1395
  %v1397 = vpop.f32.mrb[0].mxu0
  %v1398 = vpop.f32.mrb[0].mxu0
  %v1399 = vadd.f32 %v251, %v1398
  %v1400 = vpop.f32.mrb[0].mxu0
  %1401 = vmatprep.mubr.bf16.mxu0 0
  %1402 = vmatmul.mubr.bf16.gmra.mrb[0].mxu0 %v907
  %v1403 = vpop.f32.mrb[0].mxu0
  %v1404 = vadd.f32 %v251, %v1403
  %v1405 = vpop.f32.mrb[0].mxu0
  %v1406 = vpop.f32.mrb[0].mxu0
  %v1407 = vadd.f32 %v251, %v1406
  %v1408 = vpop.f32.mrb[0].mxu0
  %1409 = vmatprep.mubr.bf16.mxu0 0
  %1410 = vmatmul.mubr.bf16.gmra.mrb[0].mxu0 %v910
  %v1411 = vpop.f32.mrb[0].mxu0
  %v1412 = vadd.f32 %v251, %v1411
  %v1413 = vpop.f32.mrb[0].mxu0
  %v1414 = vpop.f32.mrb[0].mxu0
  %v1415 = vadd.f32 %v251, %v1414
  %v1416 = vpop.f32.mrb[0].mxu0
  %1417 = vmatprep.mubr.bf16.mxu0 0
  %1418 = vmatmul.mubr.bf16.gmra.mrb[0].mxu0 %v913
  %v1419 = vpop.f32.mrb[0].mxu0
  %v1420 = vadd.f32 %v251, %v1419
  %v1421 = vpop.f32.mrb[0].mxu0
  %v1422 = vpop.f32.mrb[0].mxu0
  %v1423 = vadd.f32 %v251, %v1422
  %v1424 = vpop.f32.mrb[0].mxu0
  %1425 = vmatprep.mubr.bf16.mxu0 0
  %1426 = vmatmul.mubr.bf16.gmra.mrb[0].mxu0 %v916
  %v1427 = vpop.f32.mrb[0].mxu0
  %v1428 = vadd.f32 %v251, %v1427
  %v1429 = vpop.f32.mrb[0].mxu0
  %v1430 = vpop.f32.mrb[0].mxu0
  %v1431 = vadd.f32 %v251, %v1430
  %v1432 = vpop.f32.mrb[0].mxu0
  %1433 = vmatprep.mubr.bf16.mxu0 0
  %1434 = vmatmul.mubr.bf16.gmra.mrb[0].mxu0 %v919
  %v1435 = vpop.f32.mrb[0].mxu0
  %v1436 = vadd.f32 %v251, %v1435
  %v1437 = vpop.f32.mrb[0].mxu0
  %v1438 = vpop.f32.mrb[0].mxu0
  %v1439 = vadd.f32 %v251, %v1438
  %v1440 = vpop.f32.mrb[0].mxu0
  %1441 = vmatprep.mubr.bf16.mxu0 0
  %1442 = vmatmul.mubr.bf16.gmra.mrb[0].mxu0 %v922
  %v1443 = vpop.f32.mrb[0].mxu0
  %v1444 = vadd.f32 %v251, %v1443
  %v1445 = vpop.f32.mrb[0].mxu0
  %v1446 = vpop.f32.mrb[0].mxu0
  %v1447 = vadd.f32 %v251, %v1446
  %v1448 = vpop.f32.mrb[0].mxu0
  %1449 = vmatprep.mubr.bf16.mxu0 0
  %1450 = vmatmul.mubr.bf16.gmra.mrb[0].mxu0 %v925
  %v1451 = vpop.f32.mrb[0].mxu0
  %v1452 = vadd.f32 %v251, %v1451
  %v1453 = vpop.f32.mrb[0].mxu0
  %v1454 = vpop.f32.mrb[0].mxu0
  %v1455 = vadd.f32 %v251, %v1454
  %v1456 = vpop.f32.mrb[0].mxu0
  %1457 = vmatprep.mubr.bf16.mxu0 0
  %1458 = vmatmul.mubr.bf16.gmra.mrb[0].mxu0 %v928
  %v1459 = vpop.f32.mrb[0].mxu0
  %v1460 = vadd.f32 %v251, %v1459
  %v1461 = vpop.f32.mrb[0].mxu0
  %v1462 = vpop.f32.mrb[0].mxu0
  %v1463 = vadd.f32 %v251, %v1462
  %v1464 = vpop.f32.mrb[0].mxu0
  %1465 = vmatprep.mubr.bf16.mxu0 0
  %1466 = vmatmul.mubr.bf16.gmra.mrb[0].mxu0 %v931
  %v1467 = vpop.f32.mrb[0].mxu0
  %v1468 = vadd.f32 %v251, %v1467
  %v1469 = vpop.f32.mrb[0].mxu0
  %v1470 = vpop.f32.mrb[0].mxu0
  %v1471 = vadd.f32 %v251, %v1470
  %v1472 = vpop.f32.mrb[0].mxu0
  %1473 = vmatprep.mubr.bf16.mxu0 0
  %1474 = vmatmul.mubr.bf16.gmra.mrb[0].mxu0 %v934
  %v1475 = vpop.f32.mrb[0].mxu0
  %v1476 = vadd.f32 %v251, %v1475
  %v1477 = vpop.f32.mrb[0].mxu0
  %v1478 = vpop.f32.mrb[0].mxu0
  %v1479 = vadd.f32 %v251, %v1478
  %v1480 = vpop.f32.mrb[0].mxu0
  %1481 = vmatprep.mubr.bf16.mxu0 0
  %1482 = vmatmul.mubr.bf16.gmra.mrb[0].mxu0 %v937
  %v1483 = vpop.f32.mrb[0].mxu0
  %v1484 = vadd.f32 %v251, %v1483
  %v1485 = vpop.f32.mrb[0].mxu0
  %v1486 = vpop.f32.mrb[0].mxu0
  %v1487 = vadd.f32 %v251, %v1486
  %v1488 = vpop.f32.mrb[0].mxu0
  %1489 = vmatprep.mubr.bf16.mxu0 0
  %1490 = vmatmul.mubr.bf16.gmra.mrb[0].mxu0 %v940
  %v1491 = vpop.f32.mrb[0].mxu0
  %v1492 = vadd.f32 %v251, %v1491
  %v1493 = vpop.f32.mrb[0].mxu0
  %v1494 = vpop.f32.mrb[0].mxu0
  %v1495 = vadd.f32 %v251, %v1494
  %v1496 = vpop.f32.mrb[0].mxu0
  %1497 = vmatprep.mubr.bf16.mxu0 0
  %1498 = vmatmul.mubr.bf16.gmra.mrb[0].mxu0 %v943
  %v1499 = vpop.f32.mrb[0].mxu0
  %v1500 = vadd.f32 %v251, %v1499
  %v1501 = vpop.f32.mrb[0].mxu0
  %v1502 = vpop.f32.mrb[0].mxu0
  %v1503 = vadd.f32 %v251, %v1502
  %v1504 = vpop.f32.mrb[0].mxu0
  %1505 = vmatprep.mubr.bf16.mxu0 0
  %1506 = vmatmul.mubr.bf16.gmra.mrb[0].mxu0 %v946
  %v1507 = vpop.f32.mrb[0].mxu0
  %v1508 = vadd.f32 %v251, %v1507
  %v1509 = vpop.f32.mrb[0].mxu0
  %v1510 = vpop.f32.mrb[0].mxu0
  %v1511 = vadd.f32 %v251, %v1510
  %v1512 = vpop.f32.mrb[0].mxu0
  %1513 = vmatprep.mubr.bf16.mxu0 0
  %1514 = vmatmul.mubr.bf16.gmra.mrb[0].mxu0 %v949
  %v1515 = vpop.f32.mrb[0].mxu0
  %v1516 = vadd.f32 %v251, %v1515
  %v1517 = vpop.f32.mrb[0].mxu0
  %v1518 = vpop.f32.mrb[0].mxu0
  %v1519 = vadd.f32 %v251, %v1518
  %v1520 = vpop.f32.mrb[0].mxu0
  %1521 = vmatprep.mubr.bf16.mxu0 0
  %1522 = vmatmul.mubr.bf16.gmra.mrb[0].mxu0 %v952
  %v1523 = vpop.f32.mrb[0].mxu0
  %v1524 = vadd.f32 %v251, %v1523
  %v1525 = vpop.f32.mrb[0].mxu0
  %v1526 = vpop.f32.mrb[0].mxu0
  %v1527 = vadd.f32 %v251, %v1526
  %v1528 = vpop.f32.mrb[0].mxu0
  %1529 = vmatprep.mubr.bf16.mxu0 0
  %1530 = vmatmul.mubr.bf16.gmra.mrb[0].mxu0 %v955
  %v1531 = vpop.f32.mrb[0].mxu0
  %v1532 = vadd.f32 %v251, %v1531
  %v1533 = vpop.f32.mrb[0].mxu0
  %v1534 = vpop.f32.mrb[0].mxu0
  %v1535 = vadd.f32 %v251, %v1534
  %v1536 = vpop.f32.mrb[0].mxu0
  %1537 = vmatprep.mubr.bf16.mxu0 0
  %1538 = vmatmul.mubr.bf16.gmra.mrb[0].mxu0 %v958
  %v1539 = vpop.f32.mrb[0].mxu0
  %v1540 = vadd.f32 %v251, %v1539
  %v1541 = vpop.f32.mrb[0].mxu0
  %v1542 = vpop.f32.mrb[0].mxu0
  %v1543 = vadd.f32 %v251, %v1542
  %v1544 = vpop.f32.mrb[0].mxu0
  %1545 = vmatprep.mubr.bf16.mxu0 0
  %1546 = vmatmul.mubr.bf16.gmra.mrb[0].mxu0 %v961
  %v1547 = vpop.f32.mrb[0].mxu0
  %v1548 = vadd.f32 %v251, %v1547
  %v1549 = vpop.f32.mrb[0].mxu0
  %v1550 = vpop.f32.mrb[0].mxu0
  %v1551 = vadd.f32 %v251, %v1550
  %v1552 = vpop.f32.mrb[0].mxu0
  %1553 = vmatprep.mubr.bf16.mxu0 0
  %1554 = vmatmul.mubr.bf16.gmra.mrb[0].mxu0 %v964
  %v1555 = vpop.f32.mrb[0].mxu0
  %v1556 = vadd.f32 %v251, %v1555
  %v1557 = vpop.f32.mrb[0].mxu0
  %v1558 = vpop.f32.mrb[0].mxu0
  %v1559 = vadd.f32 %v251, %v1558
  %v1560 = vpop.f32.mrb[0].mxu0
  %1561 = vmatprep.mubr.bf16.mxu0 0
  %1562 = vmatmul.mubr.bf16.gmra.mrb[0].mxu0 %v967
  %v1563 = vpop.f32.mrb[0].mxu0
  %v1564 = vadd.f32 %v251, %v1563
  %v1565 = vpop.f32.mrb[0].mxu0
  %v1566 = vpop.f32.mrb[0].mxu0
  %v1567 = vadd.f32 %v251, %v1566
  %v1568 = vpop.f32.mrb[0].mxu0
  %1569 = vmatprep.mubr.bf16.mxu0 0
  %1570 = vmatmul.mubr.bf16.gmra.mrb[0].mxu0 %v970
  %v1571 = vpop.f32.mrb[0].mxu0
  %v1572 = vadd.f32 %v251, %v1571
  %v1573 = vpop.f32.mrb[0].mxu0
  %v1574 = vpop.f32.mrb[0].mxu0
  %v1575 = vadd.f32 %v251, %v1574
  %v1576 = vpop.f32.mrb[0].mxu0
  %1577 = vmatprep.mubr.bf16.mxu0 0
  %1578 = vmatmul.mubr.bf16.gmra.mrb[0].mxu0 %v973
  %v1579 = vpop.f32.mrb[0].mxu0
  %v1580 = vadd.f32 %v251, %v1579
  %v1581 = vpop.f32.mrb[0].mxu0
  %v1582 = vpop.f32.mrb[0].mxu0
  %v1583 = vadd.f32 %v251, %v1582
  %v1584 = vpop.f32.mrb[0].mxu0
  %1585 = vmatprep.mubr.bf16.mxu0 0
  %1586 = vmatmul.mubr.bf16.gmra.mrb[0].mxu0 %v976
  %v1587 = vpop.f32.mrb[0].mxu0
  %v1588 = vadd.f32 %v251, %v1587
  %v1589 = vpop.f32.mrb[0].mxu0
  %v1590 = vpop.f32.mrb[0].mxu0
  %v1591 = vadd.f32 %v251, %v1590
  %v1592 = vpop.f32.mrb[0].mxu0
  %1593 = vmatprep.mubr.bf16.mxu0 0
  %1594 = vmatmul.mubr.bf16.gmra.mrb[0].mxu0 %v979
  %v1595 = vpop.f32.mrb[0].mxu0
  %v1596 = vadd.f32 %v251, %v1595
  %v1597 = vpop.f32.mrb[0].mxu0
  %v1598 = vpop.f32.mrb[0].mxu0
  %v1599 = vadd.f32 %v251, %v1598
  %v1600 = vpop.f32.mrb[0].mxu0
  %1601 = vmatprep.mubr.bf16.mxu0 0
  %1602 = vmatmul.mubr.bf16.gmra.mrb[0].mxu0 %v982
  %v1603 = vpop.f32.mrb[0].mxu0
  %v1604 = vadd.f32 %v251, %v1603
  %v1605 = vpop.f32.mrb[0].mxu0
  %v1606 = vpop.f32.mrb[0].mxu0
  %v1607 = vadd.f32 %v251, %v1606
  %v1608 = vpop.f32.mrb[0].mxu0
  %1609 = vmatprep.mubr.bf16.mxu0 0
  %1610 = vmatmul.mubr.bf16.gmra.mrb[0].mxu0 %v985
  %v1611 = vpop.f32.mrb[0].mxu0
  %v1612 = vadd.f32 %v251, %v1611
  %v1613 = vpop.f32.mrb[0].mxu0
  %v1614 = vpop.f32.mrb[0].mxu0
  %v1615 = vadd.f32 %v251, %v1614
  %v1616 = vpop.f32.mrb[0].mxu0
  %1617 = vmatprep.mubr.bf16.mxu0 0
  %1618 = vmatmul.mubr.bf16.gmra.mrb[0].mxu0 %v988
  %v1619 = vpop.f32.mrb[0].mxu0
  %v1620 = vadd.f32 %v251, %v1619
  %v1621 = vpop.f32.mrb[0].mxu0
  %v1622 = vpop.f32.mrb[0].mxu0
  %v1623 = vadd.f32 %v251, %v1622
  %v1624 = vpop.f32.mrb[0].mxu0
  %1625 = vmatprep.mubr.bf16.mxu0 0
  %1626 = vmatmul.mubr.bf16.gmra.mrb[0].mxu0 %v991
  %v1627 = vpop.f32.mrb[0].mxu0
  %v1628 = vadd.f32 %v251, %v1627
  %v1629 = vpop.f32.mrb[0].mxu0
  %v1630 = vpop.f32.mrb[0].mxu0
  %v1631 = vadd.f32 %v251, %v1630
  %v1632 = vpop.f32.mrb[0].mxu0
  %1633 = vmatprep.mubr.bf16.mxu0 0
  %1634 = vmatmul.mubr.bf16.gmra.mrb[0].mxu0 %v994
  %v1635 = vpop.f32.mrb[0].mxu0
  %v1636 = vadd.f32 %v251, %v1635
  %v1637 = vpop.f32.mrb[0].mxu0
  %v1638 = vpop.f32.mrb[0].mxu0
  %v1639 = vadd.f32 %v251, %v1638
  %v1640 = vpop.f32.mrb[0].mxu0
  %1641 = vmatprep.mubr.bf16.mxu0 0
  %1642 = vmatmul.mubr.bf16.gmra.mrb[0].mxu0 %v997
  %v1643 = vpop.f32.mrb[0].mxu0
  %v1644 = vadd.f32 %v251, %v1643
  %v1645 = vpop.f32.mrb[0].mxu0
  %v1646 = vpop.f32.mrb[0].mxu0
  %v1647 = vadd.f32 %v251, %v1646
  %v1648 = vpop.f32.mrb[0].mxu0
  %1649 = vmatprep.mubr.bf16.mxu0 0
  %1650 = vmatmul.mubr.bf16.gmra.mrb[0].mxu0 %v1000
  %v1651 = vpop.f32.mrb[0].mxu0
  %v1652 = vadd.f32 %v251, %v1651
  %v1653 = vpop.f32.mrb[0].mxu0
  %v1654 = vpop.f32.mrb[0].mxu0
  %v1655 = vadd.f32 %v251, %v1654
  %v1656 = vpop.f32.mrb[0].mxu0
  %1657 = vmatprep.mubr.bf16.mxu0 0
  %1658 = vmatmul.mubr.bf16.gmra.mrb[0].mxu0 %v1003
  %v1659 = vpop.f32.mrb[0].mxu0
  %v1660 = vadd.f32 %v251, %v1659
  %v1661 = vpop.f32.mrb[0].mxu0
  %v1662 = vpop.f32.mrb[0].mxu0
  %v1663 = vadd.f32 %v251, %v1662
  %v1664 = vpop.f32.mrb[0].mxu0
  %1665 = vmatprep.mubr.bf16.mxu0 0
  %1666 = vmatmul.mubr.bf16.gmra.mrb[0].mxu0 %v1006
  %v1667 = vpop.f32.mrb[0].mxu0
  %v1668 = vadd.f32 %v251, %v1667
  %v1669 = vpop.f32.mrb[0].mxu0
  %v1670 = vpop.f32.mrb[0].mxu0
  %v1671 = vadd.f32 %v251, %v1670
  %v1672 = vpop.f32.mrb[0].mxu0
  %1673 = vmatprep.mubr.bf16.mxu0 0
  %1674 = vmatmul.mubr.bf16.gmra.mrb[0].mxu0 %v1009
  %v1675 = vpop.f32.mrb[0].mxu0
  %v1676 = vadd.f32 %v251, %v1675
  %v1677 = vpop.f32.mrb[0].mxu0
  %v1678 = vpop.f32.mrb[0].mxu0
  %v1679 = vadd.f32 %v251, %v1678
  %v1680 = vpop.f32.mrb[0].mxu0
  %1681 = vmatprep.mubr.bf16.mxu0 0
  %1682 = vmatmul.mubr.bf16.gmra.mrb[0].mxu0 %v1012
  %v1683 = vpop.f32.mrb[0].mxu0
  %v1684 = vadd.f32 %v251, %v1683
  %v1685 = vpop.f32.mrb[0].mxu0
  %v1686 = vpop.f32.mrb[0].mxu0
  %v1687 = vadd.f32 %v251, %v1686
  %v1688 = vpop.f32.mrb[0].mxu0
  %1689 = vmatprep.mubr.bf16.mxu0 0
  %1690 = vmatmul.mubr.bf16.gmra.mrb[0].mxu0 %v1015
  %v1691 = vpop.f32.mrb[0].mxu0
  %v1692 = vadd.f32 %v251, %v1691
  %v1693 = vpop.f32.mrb[0].mxu0
  %v1694 = vpop.f32.mrb[0].mxu0
  %v1695 = vadd.f32 %v251, %v1694
  %v1696 = vpop.f32.mrb[0].mxu0
  %1697 = vmatprep.mubr.bf16.mxu0 0
  %1698 = vmatmul.mubr.bf16.gmra.mrb[0].mxu0 %v1018
  %v1699 = vpop.f32.mrb[0].mxu0
  %v1700 = vadd.f32 %v251, %v1699
  %v1701 = vpop.f32.mrb[0].mxu0
  %v1702 = vpop.f32.mrb[0].mxu0
  %v1703 = vadd.f32 %v251, %v1702
  %v1704 = vpop.f32.mrb[0].mxu0
  %1705 = vmatprep.mubr.bf16.mxu0 0
  %1706 = vmatmul.mubr.bf16.gmra.mrb[0].mxu0 %v1021
  %v1707 = vpop.f32.mrb[0].mxu0
  %v1708 = vadd.f32 %v251, %v1707
  %v1709 = vpop.f32.mrb[0].mxu0
  %v1710 = vpop.f32.mrb[0].mxu0
  %v1711 = vadd.f32 %v251, %v1710
  %v1712 = vpop.f32.mrb[0].mxu0
  %1713 = vmatprep.mubr.bf16.mxu0 0
  %1714 = vmatmul.mubr.bf16.gmra.mrb[0].mxu0 %v1024
  %v1715 = vpop.f32.mrb[0].mxu0
  %v1716 = vadd.f32 %v251, %v1715
  %v1717 = vpop.f32.mrb[0].mxu0
  %v1718 = vpop.f32.mrb[0].mxu0
  %v1719 = vadd.f32 %v251, %v1718
  %v1720 = vpop.f32.mrb[0].mxu0
  %1721 = vmatprep.mubr.bf16.mxu0 0
  %1722 = vmatmul.mubr.bf16.gmra.mrb[0].mxu0 %v1027
  %v1723 = vpop.f32.mrb[0].mxu0
  %v1724 = vadd.f32 %v251, %v1723
  %v1725 = vpop.f32.mrb[0].mxu0
  %v1726 = vpop.f32.mrb[0].mxu0
  %v1727 = vadd.f32 %v251, %v1726
  %v1728 = vpop.f32.mrb[0].mxu0
  %1729 = vmatprep.mubr.bf16.mxu0 0
  %1730 = vmatmul.mubr.bf16.gmra.mrb[0].mxu0 %v1030
  %v1731 = vpop.f32.mrb[0].mxu0
  %v1732 = vadd.f32 %v251, %v1731
  %v1733 = vpop.f32.mrb[0].mxu0
  %v1734 = vpop.f32.mrb[0].mxu0
  %v1735 = vadd.f32 %v251, %v1734
  %v1736 = vpop.f32.mrb[0].mxu0
  %1737 = vmatprep.mubr.bf16.mxu0 0
  %1738 = vmatmul.mubr.bf16.gmra.mrb[0].mxu0 %v1033
  %v1739 = vpop.f32.mrb[0].mxu0
  %v1740 = vadd.f32 %v251, %v1739
  %v1741 = vpop.f32.mrb[0].mxu0
  %v1742 = vpop.f32.mrb[0].mxu0
  %v1743 = vadd.f32 %v251, %v1742
  %v1744 = vpop.f32.mrb[0].mxu0
  %1745 = vmatprep.mubr.bf16.mxu0 0
  %1746 = vmatmul.mubr.bf16.gmra.mrb[0].mxu0 %v1036
  %v1747 = vpop.f32.mrb[0].mxu0
  %v1748 = vadd.f32 %v251, %v1747
  %v1749 = vpop.f32.mrb[0].mxu0
  %v1750 = vpop.f32.mrb[0].mxu0
  %v1751 = vadd.f32 %v251, %v1750
  %v1752 = vpop.f32.mrb[0].mxu0
  %1753 = vmatprep.mubr.bf16.mxu0 0
  %1754 = vmatmul.mubr.bf16.gmra.mrb[0].mxu0 %v1039
  %v1755 = vpop.f32.mrb[0].mxu0
  %v1756 = vadd.f32 %v251, %v1755
  %v1757 = vpop.f32.mrb[0].mxu0
  %v1758 = vpop.f32.mrb[0].mxu0
  %v1759 = vadd.f32 %v251, %v1758
  %v1760 = vpop.f32.mrb[0].mxu0
  %1761 = vmatprep.mubr.bf16.mxu0 0
  %1762 = vmatmul.mubr.bf16.gmra.mrb[0].mxu0 %v1042
  %v1763 = vpop.f32.mrb[0].mxu0
  %v1764 = vadd.f32 %v251, %v1763
  %v1765 = vpop.f32.mrb[0].mxu0
  %v1766 = vpop.f32.mrb[0].mxu0
  %v1767 = vadd.f32 %v251, %v1766
  %v1768 = vpop.f32.mrb[0].mxu0
  %1769 = vmatprep.mubr.bf16.mxu0 0
  %1770 = vmatmul.mubr.bf16.gmra.mrb[0].mxu0 %v1045
  %v1771 = vpop.f32.mrb[0].mxu0
  %v1772 = vadd.f32 %v251, %v1771
  %v1773 = vpop.f32.mrb[0].mxu0
  %v1774 = vpop.f32.mrb[0].mxu0
  %v1775 = vadd.f32 %v251, %v1774
  %v1776 = vpop.f32.mrb[0].mxu0
  %1777 = vmatprep.mubr.bf16.mxu0 0
  %1778 = vmatmul.mubr.bf16.gmra.mrb[0].mxu0 %v1048
  %v1779 = vpop.f32.mrb[0].mxu0
  %v1780 = vadd.f32 %v251, %v1779
  %v1781 = vpop.f32.mrb[0].mxu0
  %v1782 = vpop.f32.mrb[0].mxu0
  %v1783 = vadd.f32 %v251, %v1782
  %v1784 = vpop.f32.mrb[0].mxu0
  %1785 = vmatprep.mubr.bf16.mxu0 0
  %1786 = vmatmul.mubr.bf16.gmra.mrb[0].mxu0 %v1051
  %v1787 = vpop.f32.mrb[0].mxu0
  %v1788 = vadd.f32 %v251, %v1787
  %v1789 = vpop.f32.mrb[0].mxu0
  %v1790 = vpop.f32.mrb[0].mxu0
  %v1791 = vadd.f32 %v251, %v1790
  %v1792 = vpop.f32.mrb[0].mxu0
  %1793 = vmatprep.mubr.bf16.mxu0 0
  %1794 = vmatmul.mubr.bf16.gmra.mrb[0].mxu0 %v1054
  %v1795 = vpop.f32.mrb[0].mxu0
  %v1796 = vadd.f32 %v251, %v1795
  %v1797 = vpop.f32.mrb[0].mxu0
  %v1798 = vpop.f32.mrb[0].mxu0
  %v1799 = vadd.f32 %v251, %v1798
  %v1800 = vpop.f32.mrb[0].mxu0
  %1801 = vmatprep.mubr.bf16.mxu0 0
  %1802 = vmatmul.mubr.bf16.gmra.mrb[0].mxu0 %v1057
  %v1803 = vpop.f32.mrb[0].mxu0
  %v1804 = vadd.f32 %v251, %v1803
  %v1805 = vpop.f32.mrb[0].mxu0
  %v1806 = vpop.f32.mrb[0].mxu0
  %v1807 = vadd.f32 %v251, %v1806
  %v1808 = vpop.f32.mrb[0].mxu0
  %1809 = vmatprep.mubr.bf16.mxu0 0
  %1810 = vmatmul.mubr.bf16.gmra.mrb[0].mxu0 %v1060
  %v1811 = vpop.f32.mrb[0].mxu0
  %v1812 = vadd.f32 %v251, %v1811
  %v1813 = vpop.f32.mrb[0].mxu0
  %v1814 = vpop.f32.mrb[0].mxu0
  %v1815 = vadd.f32 %v251, %v1814
  %v1816 = vpop.f32.mrb[0].mxu0
  %1817 = vmatprep.mubr.bf16.mxu0 0
  %1818 = vmatmul.mubr.bf16.gmra.mrb[0].mxu0 %v1063
  %v1819 = vpop.f32.mrb[0].mxu0
  %v1820 = vadd.f32 %v251, %v1819
  %v1821 = vpop.f32.mrb[0].mxu0
  %v1822 = vpop.f32.mrb[0].mxu0
  %v1823 = vadd.f32 %v251, %v1822
  %v1824 = vpop.f32.mrb[0].mxu0
  %1825 = vmatprep.mubr.bf16.mxu0 0
  %1826 = vmatmul.mubr.bf16.gmra.mrb[0].mxu0 %v1066
  %v1827 = vpop.f32.mrb[0].mxu0
  %v1828 = vadd.f32 %v251, %v1827
  %v1829 = vpop.f32.mrb[0].mxu0
  %v1830 = vpop.f32.mrb[0].mxu0
  %v1831 = vadd.f32 %v251, %v1830
  %v1832 = vpop.f32.mrb[0].mxu0
  %1833 = vmatprep.mubr.bf16.mxu0 0
  %1834 = vmatmul.mubr.bf16.gmra.mrb[0].mxu0 %v1069
  %v1835 = vpop.f32.mrb[0].mxu0
  %v1836 = vadd.f32 %v251, %v1835
  %v1837 = vpop.f32.mrb[0].mxu0
  %v1838 = vpop.f32.mrb[0].mxu0
  %v1839 = vadd.f32 %v251, %v1838
  %v1840 = vpop.f32.mrb[0].mxu0
  %1841 = vmatprep.mubr.bf16.mxu0 0
  %1842 = vmatmul.mubr.bf16.gmra.mrb[0].mxu0 %v1072
  %v1843 = vpop.f32.mrb[0].mxu0
  %v1844 = vadd.f32 %v251, %v1843
  %v1845 = vpop.f32.mrb[0].mxu0
  %v1846 = vpop.f32.mrb[0].mxu0
  %v1847 = vadd.f32 %v251, %v1846
  %v1848 = vpop.f32.mrb[0].mxu0
  %1849 = vmatprep.mubr.bf16.mxu0 0
  %1850 = vmatmul.mubr.bf16.gmra.mrb[0].mxu0 %v1075
  %v1851 = vpop.f32.mrb[0].mxu0
  %v1852 = vadd.f32 %v251, %v1851
  %v1853 = vpop.f32.mrb[0].mxu0
  %v1854 = vpop.f32.mrb[0].mxu0
  %v1855 = vadd.f32 %v251, %v1854
  %v1856 = vpop.f32.mrb[0].mxu0
  %1857 = vmatprep.mubr.bf16.mxu0 0
  %1858 = vmatmul.mubr.bf16.gmra.mrb[0].mxu0 %v1078
  %v1859 = vpop.f32.mrb[0].mxu0
  %v1860 = vadd.f32 %v251, %v1859
  %v1861 = vpop.f32.mrb[0].mxu0
  %v1862 = vpop.f32.mrb[0].mxu0
  %v1863 = vadd.f32 %v251, %v1862
  %v1864 = vpop.f32.mrb[0].mxu0
  %1865 = vmatprep.mubr.bf16.mxu0 0
  %1866 = vmatmul.mubr.bf16.gmra.mrb[0].mxu0 %v1081
  %v1867 = vpop.f32.mrb[0].mxu0
  %v1868 = vadd.f32 %v251, %v1867
  %v1869 = vpop.f32.mrb[0].mxu0
  %v1870 = vpop.f32.mrb[0].mxu0
  %v1871 = vadd.f32 %v251, %v1870
  %v1872 = vpop.f32.mrb[0].mxu0
  %1873 = vmatprep.mubr.bf16.mxu0 0
  %1874 = vmatmul.mubr.bf16.gmra.mrb[0].mxu0 %v1084
  %v1875 = vpop.f32.mrb[0].mxu0
  %v1876 = vadd.f32 %v251, %v1875
  %v1877 = vpop.f32.mrb[0].mxu0
  %v1878 = vpop.f32.mrb[0].mxu0
  %v1879 = vadd.f32 %v251, %v1878
  %v1880 = vpop.f32.mrb[0].mxu0
  %1881 = vmatprep.mubr.bf16.mxu0 0
  %1882 = vmatmul.mubr.bf16.gmra.mrb[0].mxu0 %v1087
  %v1883 = vpop.f32.mrb[0].mxu0
  %v1884 = vadd.f32 %v251, %v1883
  %v1885 = vpop.f32.mrb[0].mxu0
  %v1886 = vpop.f32.mrb[0].mxu0
  %v1887 = vadd.f32 %v251, %v1886
  %v1888 = vpop.f32.mrb[0].mxu0
  %1889 = vmatprep.mubr.bf16.mxu0 0
  %1890 = vmatmul.mubr.bf16.gmra.mrb[0].mxu0 %v1090
  %v1891 = vpop.f32.mrb[0].mxu0
  %v1892 = vadd.f32 %v251, %v1891
  %v1893 = vpop.f32.mrb[0].mxu0
  %v1894 = vpop.f32.mrb[0].mxu0
  %v1895 = vadd.f32 %v251, %v1894
  %v1896 = vpop.f32.mrb[0].mxu0
  %1897 = vmatprep.mubr.bf16.mxu0 0
  %1898 = vmatmul.mubr.bf16.gmra.mrb[0].mxu0 %v1093
  %v1899 = vpop.f32.mrb[0].mxu0
  %v1900 = vadd.f32 %v251, %v1899
  %v1901 = vpop.f32.mrb[0].mxu0
  %v1902 = vpop.f32.mrb[0].mxu0
  %v1903 = vadd.f32 %v251, %v1902
  %v1904 = vpop.f32.mrb[0].mxu0
  %1905 = vmatprep.mubr.bf16.mxu0 0
  %1906 = vmatmul.mubr.bf16.gmra.mrb[0].mxu0 %v1096
  %v1907 = vpop.f32.mrb[0].mxu0
  %v1908 = vadd.f32 %v251, %v1907
  %v1909 = vpop.f32.mrb[0].mxu0
  %v1910 = vpop.f32.mrb[0].mxu0
  %v1911 = vadd.f32 %v251, %v1910
  %v1912 = vpop.f32.mrb[0].mxu0
  %1913 = vmatprep.mubr.bf16.mxu0 0
  %1914 = vmatmul.mubr.bf16.gmra.mrb[0].mxu0 %v1099
  %v1915 = vpop.f32.mrb[0].mxu0
  %v1916 = vadd.f32 %v251, %v1915
  %v1917 = vpop.f32.mrb[0].mxu0
  %v1918 = vpop.f32.mrb[0].mxu0
  %v1919 = vadd.f32 %v251, %v1918
  %v1920 = vpop.f32.mrb[0].mxu0
  %1921 = vmatprep.mubr.bf16.mxu0 0
  %1922 = vmatmul.mubr.bf16.gmra.mrb[0].mxu0 %v1102
  %v1923 = vpop.f32.mrb[0].mxu0
  %v1924 = vadd.f32 %v251, %v1923
  %v1925 = vpop.f32.mrb[0].mxu0
  %v1926 = vpop.f32.mrb[0].mxu0
  %v1927 = vadd.f32 %v251, %v1926
  %v1928 = vpop.f32.mrb[0].mxu0
  %1929 = vmatprep.mubr.bf16.mxu0 0
  %1930 = vmatmul.mubr.bf16.gmra.mrb[0].mxu0 %v1105
  %v1931 = vpop.f32.mrb[0].mxu0
  %v1932 = vadd.f32 %v251, %v1931
  %v1933 = vpop.f32.mrb[0].mxu0
  %v1934 = vpop.f32.mrb[0].mxu0
  %v1935 = vadd.f32 %v251, %v1934
  %v1936 = vpop.f32.mrb[0].mxu0
  %1937 = vmatprep.mubr.bf16.mxu0 0
  %1938 = vmatmul.mubr.bf16.gmra.mrb[0].mxu0 %v1108
  %v1939 = vpop.f32.mrb[0].mxu0
  %v1940 = vadd.f32 %v251, %v1939
  %v1941 = vpop.f32.mrb[0].mxu0
  %v1942 = vpop.f32.mrb[0].mxu0
  %v1943 = vadd.f32 %v251, %v1942
  %v1944 = vpop.f32.mrb[0].mxu0
  %1945 = vmatprep.mubr.bf16.mxu0 0
  %1946 = vmatmul.mubr.bf16.gmra.mrb[0].mxu0 %v1111
  %v1947 = vpop.f32.mrb[0].mxu0
  %v1948 = vadd.f32 %v251, %v1947
  %v1949 = vpop.f32.mrb[0].mxu0
  %v1950 = vpop.f32.mrb[0].mxu0
  %v1951 = vadd.f32 %v251, %v1950
  %v1952 = vpop.f32.mrb[0].mxu0
  %1953 = vmatprep.mubr.bf16.mxu0 0
  %1954 = vmatmul.mubr.bf16.gmra.mrb[0].mxu0 %v1114
  %v1955 = vpop.f32.mrb[0].mxu0
  %v1956 = vadd.f32 %v251, %v1955
  %v1957 = vpop.f32.mrb[0].mxu0
  %v1958 = vpop.f32.mrb[0].mxu0
  %v1959 = vadd.f32 %v251, %v1958
  %v1960 = vpop.f32.mrb[0].mxu0
  %1961 = vmatprep.mubr.bf16.mxu0 0
  %1962 = vmatmul.mubr.bf16.gmra.mrb[0].mxu0 %v1117
  %v1963 = vpop.f32.mrb[0].mxu0
  %v1964 = vadd.f32 %v251, %v1963
  %v1965 = vpop.f32.mrb[0].mxu0
  %v1966 = vpop.f32.mrb[0].mxu0
  %v1967 = vadd.f32 %v251, %v1966
  %v1968 = vpop.f32.mrb[0].mxu0
  %1969 = vmatprep.mubr.bf16.mxu0 0
  %1970 = vmatmul.mubr.bf16.gmra.mrb[0].mxu0 %v1120
  %v1971 = vpop.f32.mrb[0].mxu0
  %v1972 = vadd.f32 %v251, %v1971
  %v1973 = vpop.f32.mrb[0].mxu0
  %v1974 = vpop.f32.mrb[0].mxu0
  %v1975 = vadd.f32 %v251, %v1974
  %v1976 = vpop.f32.mrb[0].mxu0
  %1977 = vmatprep.mubr.bf16.mxu0 0
  %1978 = vmatmul.mubr.bf16.gmra.mrb[0].mxu0 %v1123
  %v1979 = vpop.f32.mrb[0].mxu0
  %v1980 = vadd.f32 %v251, %v1979
  %v1981 = vpop.f32.mrb[0].mxu0
  %v1982 = vpop.f32.mrb[0].mxu0
  %v1983 = vadd.f32 %v251, %v1982
  %v1984 = vpop.f32.mrb[0].mxu0
  %1985 = vmatprep.mubr.bf16.mxu0 0
  %1986 = vmatmul.mubr.bf16.gmra.mrb[0].mxu0 %v1126
  %v1987 = vpop.f32.mrb[0].mxu0
  %v1988 = vadd.f32 %v251, %v1987
  %v1989 = vpop.f32.mrb[0].mxu0
  %v1990 = vpop.f32.mrb[0].mxu0
  %v1991 = vadd.f32 %v251, %v1990
  %v1992 = vpop.f32.mrb[0].mxu0
  %1993 = vmatprep.mubr.bf16.mxu0 0
  %1994 = vmatmul.mubr.bf16.gmra.mrb[0].mxu0 %v1129
  %v1995 = vpop.f32.mrb[0].mxu0
  %v1996 = vadd.f32 %v251, %v1995
  %v1997 = vpop.f32.mrb[0].mxu0
  %v1998 = vpop.f32.mrb[0].mxu0
  %v1999 = vadd.f32 %v251, %v1998
  %v2000 = vpop.f32.mrb[0].mxu0
  %2001 = vmatprep.mubr.bf16.mxu0 0
  %2002 = vmatmul.mubr.bf16.gmra.mrb[0].mxu0 %v1132
  %v2003 = vpop.f32.mrb[0].mxu0
  %v2004 = vadd.f32 %v251, %v2003
  %v2005 = vpop.f32.mrb[0].mxu0
  %v2006 = vpop.f32.mrb[0].mxu0
  %v2007 = vadd.f32 %v251, %v2006
  %v2008 = vpop.f32.mrb[0].mxu0
  %2009 = vmatprep.mubr.bf16.mxu0 0
  %2010 = vmatmul.mubr.bf16.gmra.mrb[0].mxu0 %v1135
  %v2011 = vpop.f32.mrb[0].mxu0
  %v2012 = vadd.f32 %v251, %v2011
  %v2013 = vpop.f32.mrb[0].mxu0
  %v2014 = vpop.f32.mrb[0].mxu0
  %v2015 = vadd.f32 %v251, %v2014
  %v2016 = vpop.f32.mrb[0].mxu0
  %2017 = vmatprep.mubr.bf16.mxu0 0
  %2018 = vmatmul.mubr.bf16.gmra.mrb[0].mxu0 %v1138
  %v2019 = vpop.f32.mrb[0].mxu0
  %v2020 = vadd.f32 %v251, %v2019
  %v2021 = vpop.f32.mrb[0].mxu0
  %v2022 = vpop.f32.mrb[0].mxu0
  %v2023 = vadd.f32 %v251, %v2022
  %v2024 = vpop.f32.mrb[0].mxu0
  %2025 = vmatprep.mubr.bf16.mxu0 0
  %2026 = vmatmul.mubr.bf16.gmra.mrb[0].mxu0 %v1141
  %v2027 = vpop.f32.mrb[0].mxu0
  %v2028 = vadd.f32 %v251, %v2027
  %v2029 = vpop.f32.mrb[0].mxu0
  %v2030 = vpop.f32.mrb[0].mxu0
  %v2031 = vadd.f32 %v251, %v2030
  %v2032 = vpop.f32.mrb[0].mxu0
  %2033 = vmatprep.mubr.bf16.mxu0 0
  %2034 = vmatmul.mubr.bf16.gmra.mrb[0].mxu0 %v1144
  %v2035 = vpop.f32.mrb[0].mxu0
  %v2036 = vadd.f32 %v251, %v2035
  %v2037 = vpop.f32.mrb[0].mxu0
  %v2038 = vpop.f32.mrb[0].mxu0
  %v2039 = vadd.f32 %v251, %v2038
  %v2040 = vpop.f32.mrb[0].mxu0
  %2041 = vmatprep.mubr.bf16.mxu0 0
  %2042 = vmatmul.mubr.bf16.gmra.mrb[0].mxu0 %v1147
  %v2043 = vpop.f32.mrb[0].mxu0
  %v2044 = vadd.f32 %v251, %v2043
  %v2045 = vpop.f32.mrb[0].mxu0
  %v2046 = vpop.f32.mrb[0].mxu0
  %v2047 = vadd.f32 %v251, %v2046
  %v2048 = vpop.f32.mrb[0].mxu0
  %2049 = vmatprep.mubr.bf16.mxu0 0
  %2050 = vmatmul.mubr.bf16.gmra.mrb[0].mxu0 %v1150
  %v2051 = vpop.f32.mrb[0].mxu0
  %v2052 = vadd.f32 %v251, %v2051
  %v2053 = vpop.f32.mrb[0].mxu0
  %v2054 = vpop.f32.mrb[0].mxu0
  %v2055 = vadd.f32 %v251, %v2054
  %v2056 = vpop.f32.mrb[0].mxu0
  %2057 = vmatprep.mubr.bf16.mxu0 0
  %2058 = vmatmul.mubr.bf16.gmra.mrb[0].mxu0 %v1153
  %v2059 = vpop.f32.mrb[0].mxu0
  %v2060 = vadd.f32 %v251, %v2059
  %v2061 = vpop.f32.mrb[0].mxu0
  %v2062 = vpop.f32.mrb[0].mxu0
  %v2063 = vadd.f32 %v251, %v2062
  %v2064 = vpop.f32.mrb[0].mxu0
  %2065 = vmatprep.mubr.bf16.mxu0 0
  %2066 = vmatmul.mubr.bf16.gmra.mrb[0].mxu0 %v1156
  %v2067 = vpop.f32.mrb[0].mxu0
  %v2068 = vadd.f32 %v251, %v2067
  %v2069 = vpop.f32.mrb[0].mxu0
  %v2070 = vpop.f32.mrb[0].mxu0
  %v2071 = vadd.f32 %v251, %v2070
  %v2072 = vpop.f32.mrb[0].mxu0
  %2073 = vmatprep.mubr.bf16.mxu0 0
  %2074 = vmatmul.mubr.bf16.gmra.mrb[0].mxu0 %v1159
  %v2075 = vpop.f32.mrb[0].mxu0
  %v2076 = vadd.f32 %v251, %v2075
  %v2077 = vpop.f32.mrb[0].mxu0
  %v2078 = vpop.f32.mrb[0].mxu0
  %v2079 = vadd.f32 %v251, %v2078
  %v2080 = vpop.f32.mrb[0].mxu0
  %2081 = vmatprep.mubr.bf16.mxu0 0
  %2082 = vmatmul.mubr.bf16.gmra.mrb[0].mxu0 %v1162
  %v2083 = vpop.f32.mrb[0].mxu0
  %v2084 = vadd.f32 %v251, %v2083
  %v2085 = vpop.f32.mrb[0].mxu0
  %v2086 = vpop.f32.mrb[0].mxu0
  %v2087 = vadd.f32 %v251, %v2086
  %v2088 = vpop.f32.mrb[0].mxu0
  %2089 = vmatprep.mubr.bf16.mxu0 0
  %2090 = vmatmul.mubr.bf16.gmra.mrb[0].mxu0 %v1165
  %v2091 = vpop.f32.mrb[0].mxu0
  %v2092 = vadd.f32 %v251, %v2091
  %v2093 = vpop.f32.mrb[0].mxu0
  %v2094 = vpop.f32.mrb[0].mxu0
  %v2095 = vadd.f32 %v251, %v2094
  %v2096 = vpop.f32.mrb[0].mxu0
  %2097 = vmatprep.mubr.bf16.mxu0 0
  %2098 = vmatmul.mubr.bf16.gmra.mrb[0].mxu0 %v1168
  %v2099 = vpop.f32.mrb[0].mxu0
  %v2100 = vadd.f32 %v251, %v2099
  %v2101 = vpop.f32.mrb[0].mxu0
  %v2102 = vpop.f32.mrb[0].mxu0
  %v2103 = vadd.f32 %v251, %v2102
  %v2104 = vpop.f32.mrb[0].mxu0
  %2105 = vmatprep.mubr.bf16.mxu0 0
  %2106 = vmatmul.mubr.bf16.gmra.mrb[0].mxu0 %v1171
  %v2107 = vpop.f32.mrb[0].mxu0
  %v2108 = vadd.f32 %v251, %v2107
  %v2109 = vpop.f32.mrb[0].mxu0
  %v2110 = vpop.f32.mrb[0].mxu0
  %v2111 = vadd.f32 %v251, %v2110
  %v2112 = vpop.f32.mrb[0].mxu0
  %2113 = vdwg.mxu0
  %v2114 = vmax.f32 %v1212, 0.0
  %v2115 = vmax.f32 %v1215, 0.0
  %v2116 = vmax.f32 %v1220, 0.0
  %v2117 = vmax.f32 %v1223, 0.0
  %v2118 = vmax.f32 %v1228, 0.0
  %v2119 = vmax.f32 %v1231, 0.0
  %v2120 = vmax.f32 %v1236, 0.0
  %v2121 = vmax.f32 %v1239, 0.0
  %v2122 = vmax.f32 %v1244, 0.0
  %v2123 = vmax.f32 %v1247, 0.0
  %v2124 = vmax.f32 %v1252, 0.0
  %v2125 = vmax.f32 %v1255, 0.0
  %v2126 = vmax.f32 %v1260, 0.0
  %v2127 = vmax.f32 %v1263, 0.0
  %v2128 = vmax.f32 %v1268, 0.0
  %v2129 = vmax.f32 %v1271, 0.0
  %v2130 = vmax.f32 %v1276, 0.0
  %v2131 = vmax.f32 %v1279, 0.0
  %v2132 = vmax.f32 %v1284, 0.0
  %v2133 = vmax.f32 %v1287, 0.0
  %v2134 = vmax.f32 %v1292, 0.0
  %v2135 = vmax.f32 %v1295, 0.0
  %v2136 = vmax.f32 %v1300, 0.0
  %v2137 = vmax.f32 %v1303, 0.0
  %v2138 = vmax.f32 %v1308, 0.0
  %v2139 = vmax.f32 %v1311, 0.0
  %v2140 = vmax.f32 %v1316, 0.0
  %v2141 = vmax.f32 %v1319, 0.0
  %v2142 = vmax.f32 %v1324, 0.0
  %v2143 = vmax.f32 %v1327, 0.0
  %v2144 = vmax.f32 %v1332, 0.0
  %v2145 = vmax.f32 %v1335, 0.0
  %v2146 = vmax.f32 %v1340, 0.0
  %v2147 = vmax.f32 %v1343, 0.0
  %v2148 = vmax.f32 %v1348, 0.0
  %v2149 = vmax.f32 %v1351, 0.0
  %v2150 = vmax.f32 %v1356, 0.0
  %v2151 = vmax.f32 %v1359, 0.0
  %v2152 = vmax.f32 %v1364, 0.0
  %v2153 = vmax.f32 %v1367, 0.0
  %v2154 = vmax.f32 %v1372, 0.0
  %v2155 = vmax.f32 %v1375, 0.0
  %v2156 = vmax.f32 %v1380, 0.0
  %v2157 = vmax.f32 %v1383, 0.0
  %v2158 = vmax.f32 %v1388, 0.0
  %v2159 = vmax.f32 %v1391, 0.0
  %v2160 = vmax.f32 %v1396, 0.0
  %v2161 = vmax.f32 %v1399, 0.0
  %v2162 = vmax.f32 %v1404, 0.0
  %v2163 = vmax.f32 %v1407, 0.0
  %v2164 = vmax.f32 %v1412, 0.0
  %v2165 = vmax.f32 %v1415, 0.0
  %v2166 = vmax.f32 %v1420, 0.0
  %v2167 = vmax.f32 %v1423, 0.0
  %v2168 = vmax.f32 %v1428, 0.0
  %v2169 = vmax.f32 %v1431, 0.0
  %v2170 = vmax.f32 %v1436, 0.0
  %v2171 = vmax.f32 %v1439, 0.0
  %v2172 = vmax.f32 %v1444, 0.0
  %v2173 = vmax.f32 %v1447, 0.0
  %v2174 = vmax.f32 %v1452, 0.0
  %v2175 = vmax.f32 %v1455, 0.0
  %v2176 = vmax.f32 %v1460, 0.0
  %v2177 = vmax.f32 %v1463, 0.0
  %v2178 = vmax.f32 %v1468, 0.0
  %v2179 = vmax.f32 %v1471, 0.0
  %v2180 = vmax.f32 %v1476, 0.0
  %v2181 = vmax.f32 %v1479, 0.0
  %v2182 = vmax.f32 %v1484, 0.0
  %v2183 = vmax.f32 %v1487, 0.0
  %v2184 = vmax.f32 %v1492, 0.0
  %v2185 = vmax.f32 %v1495, 0.0
  %v2186 = vmax.f32 %v1500, 0.0
  %v2187 = vmax.f32 %v1503, 0.0
  %v2188 = vmax.f32 %v1508, 0.0
  %v2189 = vmax.f32 %v1511, 0.0
  %v2190 = vmax.f32 %v1516, 0.0
  %v2191 = vmax.f32 %v1519, 0.0
  %v2192 = vmax.f32 %v1524, 0.0
  %v2193 = vmax.f32 %v1527, 0.0
  %v2194 = vmax.f32 %v1532, 0.0
  %v2195 = vmax.f32 %v1535, 0.0
  %v2196 = vmax.f32 %v1540, 0.0
  %v2197 = vmax.f32 %v1543, 0.0
  %v2198 = vmax.f32 %v1548, 0.0
  %v2199 = vmax.f32 %v1551, 0.0
  %v2200 = vmax.f32 %v1556, 0.0
  %v2201 = vmax.f32 %v1559, 0.0
  %v2202 = vmax.f32 %v1564, 0.0
  %v2203 = vmax.f32 %v1567, 0.0
  %v2204 = vmax.f32 %v1572, 0.0
  %v2205 = vmax.f32 %v1575, 0.0
  %v2206 = vmax.f32 %v1580, 0.0
  %v2207 = vmax.f32 %v1583, 0.0
  %v2208 = vmax.f32 %v1588, 0.0
  %v2209 = vmax.f32 %v1591, 0.0
  %v2210 = vmax.f32 %v1596, 0.0
  %v2211 = vmax.f32 %v1599, 0.0
  %v2212 = vmax.f32 %v1604, 0.0
  %v2213 = vmax.f32 %v1607, 0.0
  %v2214 = vmax.f32 %v1612, 0.0
  %v2215 = vmax.f32 %v1615, 0.0
  %v2216 = vmax.f32 %v1620, 0.0
  %v2217 = vmax.f32 %v1623, 0.0
  %v2218 = vmax.f32 %v1628, 0.0
  %v2219 = vmax.f32 %v1631, 0.0
  %v2220 = vmax.f32 %v1636, 0.0
  %v2221 = vmax.f32 %v1639, 0.0
  %v2222 = vmax.f32 %v1644, 0.0
  %v2223 = vmax.f32 %v1647, 0.0
  %v2224 = vmax.f32 %v1652, 0.0
  %v2225 = vmax.f32 %v1655, 0.0
  %v2226 = vmax.f32 %v1660, 0.0
  %v2227 = vmax.f32 %v1663, 0.0
  %v2228 = vmax.f32 %v1668, 0.0
  %v2229 = vmax.f32 %v1671, 0.0
  %v2230 = vmax.f32 %v1676, 0.0
  %v2231 = vmax.f32 %v1679, 0.0
  %v2232 = vmax.f32 %v1684, 0.0
  %v2233 = vmax.f32 %v1687, 0.0
  %v2234 = vmax.f32 %v1692, 0.0
  %v2235 = vmax.f32 %v1695, 0.0
  %v2236 = vmax.f32 %v1700, 0.0
  %v2237 = vmax.f32 %v1703, 0.0
  %v2238 = vmax.f32 %v1708, 0.0
  %v2239 = vmax.f32 %v1711, 0.0
  %v2240 = vmax.f32 %v1716, 0.0
  %v2241 = vmax.f32 %v1719, 0.0
  %v2242 = vmax.f32 %v1724, 0.0
  %v2243 = vmax.f32 %v1727, 0.0
  %v2244 = vmax.f32 %v1732, 0.0
  %v2245 = vmax.f32 %v1735, 0.0
  %v2246 = vmax.f32 %v1740, 0.0
  %v2247 = vmax.f32 %v1743, 0.0
  %v2248 = vmax.f32 %v1748, 0.0
  %v2249 = vmax.f32 %v1751, 0.0
  %v2250 = vmax.f32 %v1756, 0.0
  %v2251 = vmax.f32 %v1759, 0.0
  %v2252 = vmax.f32 %v1764, 0.0
  %v2253 = vmax.f32 %v1767, 0.0
  %v2254 = vmax.f32 %v1772, 0.0
  %v2255 = vmax.f32 %v1775, 0.0
  %v2256 = vmax.f32 %v1780, 0.0
  %v2257 = vmax.f32 %v1783, 0.0
  %v2258 = vmax.f32 %v1788, 0.0
  %v2259 = vmax.f32 %v1791, 0.0
  %v2260 = vmax.f32 %v1796, 0.0
  %v2261 = vmax.f32 %v1799, 0.0
  %v2262 = vmax.f32 %v1804, 0.0
  %v2263 = vmax.f32 %v1807, 0.0
  %v2264 = vmax.f32 %v1812, 0.0
  %v2265 = vmax.f32 %v1815, 0.0
  %v2266 = vmax.f32 %v1820, 0.0
  %v2267 = vmax.f32 %v1823, 0.0
  %v2268 = vmax.f32 %v1828, 0.0
  %v2269 = vmax.f32 %v1831, 0.0
  %v2270 = vmax.f32 %v1836, 0.0
  %v2271 = vmax.f32 %v1839, 0.0
  %v2272 = vmax.f32 %v1844, 0.0
  %v2273 = vmax.f32 %v1847, 0.0
  %v2274 = vmax.f32 %v1852, 0.0
  %v2275 = vmax.f32 %v1855, 0.0
  %v2276 = vmax.f32 %v1860, 0.0
  %v2277 = vmax.f32 %v1863, 0.0
  %v2278 = vmax.f32 %v1868, 0.0
  %v2279 = vmax.f32 %v1871, 0.0
  %v2280 = vmax.f32 %v1876, 0.0
  %v2281 = vmax.f32 %v1879, 0.0
  %v2282 = vmax.f32 %v1884, 0.0
  %v2283 = vmax.f32 %v1887, 0.0
  %v2284 = vmax.f32 %v1892, 0.0
  %v2285 = vmax.f32 %v1895, 0.0
  %v2286 = vmax.f32 %v1900, 0.0
  %v2287 = vmax.f32 %v1903, 0.0
  %v2288 = vmax.f32 %v1908, 0.0
  %v2289 = vmax.f32 %v1911, 0.0
  %v2290 = vmax.f32 %v1916, 0.0
  %v2291 = vmax.f32 %v1919, 0.0
  %v2292 = vmax.f32 %v1924, 0.0
  %v2293 = vmax.f32 %v1927, 0.0
  %v2294 = vmax.f32 %v1932, 0.0
  %v2295 = vmax.f32 %v1935, 0.0
  %v2296 = vmax.f32 %v1940, 0.0
  %v2297 = vmax.f32 %v1943, 0.0
  %v2298 = vmax.f32 %v1948, 0.0
  %v2299 = vmax.f32 %v1951, 0.0
  %v2300 = vmax.f32 %v1956, 0.0
  %v2301 = vmax.f32 %v1959, 0.0
  %v2302 = vmax.f32 %v1964, 0.0
  %v2303 = vmax.f32 %v1967, 0.0
  %v2304 = vmax.f32 %v1972, 0.0
  %v2305 = vmax.f32 %v1975, 0.0
  %v2306 = vmax.f32 %v1980, 0.0
  %v2307 = vmax.f32 %v1983, 0.0
  %v2308 = vmax.f32 %v1988, 0.0
  %v2309 = vmax.f32 %v1991, 0.0
  %v2310 = vmax.f32 %v1996, 0.0
  %v2311 = vmax.f32 %v1999, 0.0
  %v2312 = vmax.f32 %v2004, 0.0
  %v2313 = vmax.f32 %v2007, 0.0
  %v2314 = vmax.f32 %v2012, 0.0
  %v2315 = vmax.f32 %v2015, 0.0
  %v2316 = vmax.f32 %v2020, 0.0
  %v2317 = vmax.f32 %v2023, 0.0
  %v2318 = vmax.f32 %v2028, 0.0
  %v2319 = vmax.f32 %v2031, 0.0
  %v2320 = vmax.f32 %v2036, 0.0
  %v2321 = vmax.f32 %v2039, 0.0
  %v2322 = vmax.f32 %v2044, 0.0
  %v2323 = vmax.f32 %v2047, 0.0
  %v2324 = vmax.f32 %v2052, 0.0
  %v2325 = vmax.f32 %v2055, 0.0
  %v2326 = vmax.f32 %v2060, 0.0
  %v2327 = vmax.f32 %v2063, 0.0
  %v2328 = vmax.f32 %v2068, 0.0
  %v2329 = vmax.f32 %v2071, 0.0
  %v2330 = vmax.f32 %v2076, 0.0
  %v2331 = vmax.f32 %v2079, 0.0
  %v2332 = vmax.f32 %v2084, 0.0
  %v2333 = vmax.f32 %v2087, 0.0
  %v2334 = vmax.f32 %v2092, 0.0
  %v2335 = vmax.f32 %v2095, 0.0
  %v2336 = vmax.f32 %v2100, 0.0
  %v2337 = vmax.f32 %v2103, 0.0
  %v2338 = vmax.f32 %v2108, 0.0
  %v2339 = vmax.f32 %v2111, 0.0
  %2340 = vrot.lane.b32.xlu0 %v2114, 64
  %v2341 = vpop.permute.xlu0 %2340
  %2342 = vrot.lane.b32.xlu0 %v2115, 64
  %v2343 = vpop.permute.xlu0 %2342
  %2344 = vrot.lane.b32.xlu0 %v2116, 64
  %v2345 = vpop.permute.xlu0 %2344
  %2346 = vrot.lane.b32.xlu0 %v2117, 64
  %v2347 = vpop.permute.xlu0 %2346
  %2348 = vrot.lane.b32.xlu0 %v2118, 64
  %v2349 = vpop.permute.xlu0 %2348
  %2350 = vrot.lane.b32.xlu0 %v2119, 64
  %v2351 = vpop.permute.xlu0 %2350
  %2352 = vrot.lane.b32.xlu0 %v2120, 64
  %v2353 = vpop.permute.xlu0 %2352
  %2354 = vrot.lane.b32.xlu0 %v2121, 64
  %v2355 = vpop.permute.xlu0 %2354
  %2356 = vrot.lane.b32.xlu0 %v2122, 64
  %v2357 = vpop.permute.xlu0 %2356
  %2358 = vrot.lane.b32.xlu0 %v2123, 64
  %v2359 = vpop.permute.xlu0 %2358
  %2360 = vrot.lane.b32.xlu0 %v2124, 64
  %v2361 = vpop.permute.xlu0 %2360
  %2362 = vrot.lane.b32.xlu0 %v2125, 64
  %v2363 = vpop.permute.xlu0 %2362
  %2364 = vrot.lane.b32.xlu0 %v2126, 64
  %v2365 = vpop.permute.xlu0 %2364
  %2366 = vrot.lane.b32.xlu0 %v2127, 64
  %v2367 = vpop.permute.xlu0 %2366
  %2368 = vrot.lane.b32.xlu0 %v2128, 64
  %v2369 = vpop.permute.xlu0 %2368
  %2370 = vrot.lane.b32.xlu0 %v2129, 64
  %v2371 = vpop.permute.xlu0 %2370
  %2372 = vrot.lane.b32.xlu0 %v2130, 64
  %v2373 = vpop.permute.xlu0 %2372
  %2374 = vrot.lane.b32.xlu0 %v2131, 64
  %v2375 = vpop.permute.xlu0 %2374
  %2376 = vrot.lane.b32.xlu0 %v2132, 64
  %v2377 = vpop.permute.xlu0 %2376
  %2378 = vrot.lane.b32.xlu0 %v2133, 64
  %v2379 = vpop.permute.xlu0 %2378
  %2380 = vrot.lane.b32.xlu0 %v2134, 64
  %v2381 = vpop.permute.xlu0 %2380
  %2382 = vrot.lane.b32.xlu0 %v2135, 64
  %v2383 = vpop.permute.xlu0 %2382
  %2384 = vrot.lane.b32.xlu0 %v2136, 64
  %v2385 = vpop.permute.xlu0 %2384
  %2386 = vrot.lane.b32.xlu0 %v2137, 64
  %v2387 = vpop.permute.xlu0 %2386
  %2388 = vrot.lane.b32.xlu0 %v2138, 64
  %v2389 = vpop.permute.xlu0 %2388
  %2390 = vrot.lane.b32.xlu0 %v2139, 64
  %v2391 = vpop.permute.xlu0 %2390
  %2392 = vrot.lane.b32.xlu0 %v2140, 64
  %v2393 = vpop.permute.xlu0 %2392
  %2394 = vrot.lane.b32.xlu0 %v2141, 64
  %v2395 = vpop.permute.xlu0 %2394
  %2396 = vrot.lane.b32.xlu0 %v2142, 64
  %v2397 = vpop.permute.xlu0 %2396
  %2398 = vrot.lane.b32.xlu0 %v2143, 64
  %v2399 = vpop.permute.xlu0 %2398
  %2400 = vrot.lane.b32.xlu0 %v2144, 64
  %v2401 = vpop.permute.xlu0 %2400
  %2402 = vrot.lane.b32.xlu0 %v2145, 64
  %v2403 = vpop.permute.xlu0 %2402
  %2404 = vrot.lane.b32.xlu0 %v2146, 64
  %v2405 = vpop.permute.xlu0 %2404
  %2406 = vrot.lane.b32.xlu0 %v2147, 64
  %v2407 = vpop.permute.xlu0 %2406
  %2408 = vrot.lane.b32.xlu0 %v2148, 64
  %v2409 = vpop.permute.xlu0 %2408
  %2410 = vrot.lane.b32.xlu0 %v2149, 64
  %v2411 = vpop.permute.xlu0 %2410
  %2412 = vrot.lane.b32.xlu0 %v2150, 64
  %v2413 = vpop.permute.xlu0 %2412
  %2414 = vrot.lane.b32.xlu0 %v2151, 64
  %v2415 = vpop.permute.xlu0 %2414
  %2416 = vrot.lane.b32.xlu0 %v2152, 64
  %v2417 = vpop.permute.xlu0 %2416
  %2418 = vrot.lane.b32.xlu0 %v2153, 64
  %v2419 = vpop.permute.xlu0 %2418
  %2420 = vrot.lane.b32.xlu0 %v2154, 64
  %v2421 = vpop.permute.xlu0 %2420
  %2422 = vrot.lane.b32.xlu0 %v2155, 64
  %v2423 = vpop.permute.xlu0 %2422
  %2424 = vrot.lane.b32.xlu0 %v2156, 64
  %v2425 = vpop.permute.xlu0 %2424
  %2426 = vrot.lane.b32.xlu0 %v2157, 64
  %v2427 = vpop.permute.xlu0 %2426
  %2428 = vrot.lane.b32.xlu0 %v2158, 64
  %v2429 = vpop.permute.xlu0 %2428
  %2430 = vrot.lane.b32.xlu0 %v2159, 64
  %v2431 = vpop.permute.xlu0 %2430
  %2432 = vrot.lane.b32.xlu0 %v2160, 64
  %v2433 = vpop.permute.xlu0 %2432
  %2434 = vrot.lane.b32.xlu0 %v2161, 64
  %v2435 = vpop.permute.xlu0 %2434
  %2436 = vrot.lane.b32.xlu0 %v2162, 64
  %v2437 = vpop.permute.xlu0 %2436
  %2438 = vrot.lane.b32.xlu0 %v2163, 64
  %v2439 = vpop.permute.xlu0 %2438
  %2440 = vrot.lane.b32.xlu0 %v2164, 64
  %v2441 = vpop.permute.xlu0 %2440
  %2442 = vrot.lane.b32.xlu0 %v2165, 64
  %v2443 = vpop.permute.xlu0 %2442
  %2444 = vrot.lane.b32.xlu0 %v2166, 64
  %v2445 = vpop.permute.xlu0 %2444
  %2446 = vrot.lane.b32.xlu0 %v2167, 64
  %v2447 = vpop.permute.xlu0 %2446
  %2448 = vrot.lane.b32.xlu0 %v2168, 64
  %v2449 = vpop.permute.xlu0 %2448
  %2450 = vrot.lane.b32.xlu0 %v2169, 64
  %v2451 = vpop.permute.xlu0 %2450
  %2452 = vrot.lane.b32.xlu0 %v2170, 64
  %v2453 = vpop.permute.xlu0 %2452
  %2454 = vrot.lane.b32.xlu0 %v2171, 64
  %v2455 = vpop.permute.xlu0 %2454
  %2456 = vrot.lane.b32.xlu0 %v2172, 64
  %v2457 = vpop.permute.xlu0 %2456
  %2458 = vrot.lane.b32.xlu0 %v2173, 64
  %v2459 = vpop.permute.xlu0 %2458
  %2460 = vrot.lane.b32.xlu0 %v2174, 64
  %v2461 = vpop.permute.xlu0 %2460
  %2462 = vrot.lane.b32.xlu0 %v2175, 64
  %v2463 = vpop.permute.xlu0 %2462
  %2464 = vrot.lane.b32.xlu0 %v2176, 64
  %v2465 = vpop.permute.xlu0 %2464
  %2466 = vrot.lane.b32.xlu0 %v2177, 64
  %v2467 = vpop.permute.xlu0 %2466
  %2468 = vrot.lane.b32.xlu0 %v2178, 64
  %v2469 = vpop.permute.xlu0 %2468
  %2470 = vrot.lane.b32.xlu0 %v2179, 64
  %v2471 = vpop.permute.xlu0 %2470
  %2472 = vrot.lane.b32.xlu0 %v2180, 64
  %v2473 = vpop.permute.xlu0 %2472
  %2474 = vrot.lane.b32.xlu0 %v2181, 64
  %v2475 = vpop.permute.xlu0 %2474
  %2476 = vrot.lane.b32.xlu0 %v2182, 64
  %v2477 = vpop.permute.xlu0 %2476
  %2478 = vrot.lane.b32.xlu0 %v2183, 64
  %v2479 = vpop.permute.xlu0 %2478
  %2480 = vrot.lane.b32.xlu0 %v2184, 64
  %v2481 = vpop.permute.xlu0 %2480
  %2482 = vrot.lane.b32.xlu0 %v2185, 64
  %v2483 = vpop.permute.xlu0 %2482
  %2484 = vrot.lane.b32.xlu0 %v2186, 64
  %v2485 = vpop.permute.xlu0 %2484
  %2486 = vrot.lane.b32.xlu0 %v2187, 64
  %v2487 = vpop.permute.xlu0 %2486
  %2488 = vrot.lane.b32.xlu0 %v2188, 64
  %v2489 = vpop.permute.xlu0 %2488
  %2490 = vrot.lane.b32.xlu0 %v2189, 64
  %v2491 = vpop.permute.xlu0 %2490
  %2492 = vrot.lane.b32.xlu0 %v2190, 64
  %v2493 = vpop.permute.xlu0 %2492
  %2494 = vrot.lane.b32.xlu0 %v2191, 64
  %v2495 = vpop.permute.xlu0 %2494
  %2496 = vrot.lane.b32.xlu0 %v2192, 64
  %v2497 = vpop.permute.xlu0 %2496
  %2498 = vrot.lane.b32.xlu0 %v2193, 64
  %v2499 = vpop.permute.xlu0 %2498
  %2500 = vrot.lane.b32.xlu0 %v2194, 64
  %v2501 = vpop.permute.xlu0 %2500
  %2502 = vrot.lane.b32.xlu0 %v2195, 64
  %v2503 = vpop.permute.xlu0 %2502
  %2504 = vrot.lane.b32.xlu0 %v2196, 64
  %v2505 = vpop.permute.xlu0 %2504
  %2506 = vrot.lane.b32.xlu0 %v2197, 64
  %v2507 = vpop.permute.xlu0 %2506
  %2508 = vrot.lane.b32.xlu0 %v2198, 64
  %v2509 = vpop.permute.xlu0 %2508
  %2510 = vrot.lane.b32.xlu0 %v2199, 64
  %v2511 = vpop.permute.xlu0 %2510
  %2512 = vrot.lane.b32.xlu0 %v2200, 64
  %v2513 = vpop.permute.xlu0 %2512
  %2514 = vrot.lane.b32.xlu0 %v2201, 64
  %v2515 = vpop.permute.xlu0 %2514
  %2516 = vrot.lane.b32.xlu0 %v2202, 64
  %v2517 = vpop.permute.xlu0 %2516
  %2518 = vrot.lane.b32.xlu0 %v2203, 64
  %v2519 = vpop.permute.xlu0 %2518
  %2520 = vrot.lane.b32.xlu0 %v2204, 64
  %v2521 = vpop.permute.xlu0 %2520
  %2522 = vrot.lane.b32.xlu0 %v2205, 64
  %v2523 = vpop.permute.xlu0 %2522
  %2524 = vrot.lane.b32.xlu0 %v2206, 64
  %v2525 = vpop.permute.xlu0 %2524
  %2526 = vrot.lane.b32.xlu0 %v2207, 64
  %v2527 = vpop.permute.xlu0 %2526
  %2528 = vrot.lane.b32.xlu0 %v2208, 64
  %v2529 = vpop.permute.xlu0 %2528
  %2530 = vrot.lane.b32.xlu0 %v2209, 64
  %v2531 = vpop.permute.xlu0 %2530
  %2532 = vrot.lane.b32.xlu0 %v2210, 64
  %v2533 = vpop.permute.xlu0 %2532
  %2534 = vrot.lane.b32.xlu0 %v2211, 64
  %v2535 = vpop.permute.xlu0 %2534
  %2536 = vrot.lane.b32.xlu0 %v2212, 64
  %v2537 = vpop.permute.xlu0 %2536
  %2538 = vrot.lane.b32.xlu0 %v2213, 64
  %v2539 = vpop.permute.xlu0 %2538
  %2540 = vrot.lane.b32.xlu0 %v2214, 64
  %v2541 = vpop.permute.xlu0 %2540
  %2542 = vrot.lane.b32.xlu0 %v2215, 64
  %v2543 = vpop.permute.xlu0 %2542
  %2544 = vrot.lane.b32.xlu0 %v2216, 64
  %v2545 = vpop.permute.xlu0 %2544
  %2546 = vrot.lane.b32.xlu0 %v2217, 64
  %v2547 = vpop.permute.xlu0 %2546
  %2548 = vrot.lane.b32.xlu0 %v2218, 64
  %v2549 = vpop.permute.xlu0 %2548
  %2550 = vrot.lane.b32.xlu0 %v2219, 64
  %v2551 = vpop.permute.xlu0 %2550
  %2552 = vrot.lane.b32.xlu0 %v2220, 64
  %v2553 = vpop.permute.xlu0 %2552
  %2554 = vrot.lane.b32.xlu0 %v2221, 64
  %v2555 = vpop.permute.xlu0 %2554
  %2556 = vrot.lane.b32.xlu0 %v2222, 64
  %v2557 = vpop.permute.xlu0 %2556
  %2558 = vrot.lane.b32.xlu0 %v2223, 64
  %v2559 = vpop.permute.xlu0 %2558
  %2560 = vrot.lane.b32.xlu0 %v2224, 64
  %v2561 = vpop.permute.xlu0 %2560
  %2562 = vrot.lane.b32.xlu0 %v2225, 64
  %v2563 = vpop.permute.xlu0 %2562
  %2564 = vrot.lane.b32.xlu0 %v2226, 64
  %v2565 = vpop.permute.xlu0 %2564
  %2566 = vrot.lane.b32.xlu0 %v2227, 64
  %v2567 = vpop.permute.xlu0 %2566
  %2568 = vrot.lane.b32.xlu0 %v2228, 64
  %v2569 = vpop.permute.xlu0 %2568
  %2570 = vrot.lane.b32.xlu0 %v2229, 64
  %v2571 = vpop.permute.xlu0 %2570
  %2572 = vrot.lane.b32.xlu0 %v2230, 64
  %v2573 = vpop.permute.xlu0 %2572
  %2574 = vrot.lane.b32.xlu0 %v2231, 64
  %v2575 = vpop.permute.xlu0 %2574
  %2576 = vrot.lane.b32.xlu0 %v2232, 64
  %v2577 = vpop.permute.xlu0 %2576
  %2578 = vrot.lane.b32.xlu0 %v2233, 64
  %v2579 = vpop.permute.xlu0 %2578
  %2580 = vrot.lane.b32.xlu0 %v2234, 64
  %v2581 = vpop.permute.xlu0 %2580
  %2582 = vrot.lane.b32.xlu0 %v2235, 64
  %v2583 = vpop.permute.xlu0 %2582
  %2584 = vrot.lane.b32.xlu0 %v2236, 64
  %v2585 = vpop.permute.xlu0 %2584
  %2586 = vrot.lane.b32.xlu0 %v2237, 64
  %v2587 = vpop.permute.xlu0 %2586
  %2588 = vrot.lane.b32.xlu0 %v2238, 64
  %v2589 = vpop.permute.xlu0 %2588
  %2590 = vrot.lane.b32.xlu0 %v2239, 64
  %v2591 = vpop.permute.xlu0 %2590
  %2592 = vrot.lane.b32.xlu0 %v2240, 64
  %v2593 = vpop.permute.xlu0 %2592
  %2594 = vrot.lane.b32.xlu0 %v2241, 64
  %v2595 = vpop.permute.xlu0 %2594
  %2596 = vrot.lane.b32.xlu0 %v2242, 64
  %v2597 = vpop.permute.xlu0 %2596
  %2598 = vrot.lane.b32.xlu0 %v2243, 64
  %v2599 = vpop.permute.xlu0 %2598
  %2600 = vrot.lane.b32.xlu0 %v2244, 64
  %v2601 = vpop.permute.xlu0 %2600
  %2602 = vrot.lane.b32.xlu0 %v2245, 64
  %v2603 = vpop.permute.xlu0 %2602
  %2604 = vrot.lane.b32.xlu0 %v2246, 64
  %v2605 = vpop.permute.xlu0 %2604
  %2606 = vrot.lane.b32.xlu0 %v2247, 64
  %v2607 = vpop.permute.xlu0 %2606
  %2608 = vrot.lane.b32.xlu0 %v2248, 64
  %v2609 = vpop.permute.xlu0 %2608
  %2610 = vrot.lane.b32.xlu0 %v2249, 64
  %v2611 = vpop.permute.xlu0 %2610
  %2612 = vrot.lane.b32.xlu0 %v2250, 64
  %v2613 = vpop.permute.xlu0 %2612
  %2614 = vrot.lane.b32.xlu0 %v2251, 64
  %v2615 = vpop.permute.xlu0 %2614
  %2616 = vrot.lane.b32.xlu0 %v2252, 64
  %v2617 = vpop.permute.xlu0 %2616
  %2618 = vrot.lane.b32.xlu0 %v2253, 64
  %v2619 = vpop.permute.xlu0 %2618
  %2620 = vrot.lane.b32.xlu0 %v2254, 64
  %v2621 = vpop.permute.xlu0 %2620
  %2622 = vrot.lane.b32.xlu0 %v2255, 64
  %v2623 = vpop.permute.xlu0 %2622
  %2624 = vrot.lane.b32.xlu0 %v2256, 64
  %v2625 = vpop.permute.xlu0 %2624
  %2626 = vrot.lane.b32.xlu0 %v2257, 64
  %v2627 = vpop.permute.xlu0 %2626
  %2628 = vrot.lane.b32.xlu0 %v2258, 64
  %v2629 = vpop.permute.xlu0 %2628
  %2630 = vrot.lane.b32.xlu0 %v2259, 64
  %v2631 = vpop.permute.xlu0 %2630
  %2632 = vrot.lane.b32.xlu0 %v2260, 64
  %v2633 = vpop.permute.xlu0 %2632
  %2634 = vrot.lane.b32.xlu0 %v2261, 64
  %v2635 = vpop.permute.xlu0 %2634
  %2636 = vrot.lane.b32.xlu0 %v2262, 64
  %v2637 = vpop.permute.xlu0 %2636
  %2638 = vrot.lane.b32.xlu0 %v2263, 64
  %v2639 = vpop.permute.xlu0 %2638
  %2640 = vrot.lane.b32.xlu0 %v2264, 64
  %v2641 = vpop.permute.xlu0 %2640
  %2642 = vrot.lane.b32.xlu0 %v2265, 64
  %v2643 = vpop.permute.xlu0 %2642
  %2644 = vrot.lane.b32.xlu0 %v2266, 64
  %v2645 = vpop.permute.xlu0 %2644
  %2646 = vrot.lane.b32.xlu0 %v2267, 64
  %v2647 = vpop.permute.xlu0 %2646
  %2648 = vrot.lane.b32.xlu0 %v2268, 64
  %v2649 = vpop.permute.xlu0 %2648
  %2650 = vrot.lane.b32.xlu0 %v2269, 64
  %v2651 = vpop.permute.xlu0 %2650
  %2652 = vrot.lane.b32.xlu0 %v2270, 64
  %v2653 = vpop.permute.xlu0 %2652
  %2654 = vrot.lane.b32.xlu0 %v2271, 64
  %v2655 = vpop.permute.xlu0 %2654
  %2656 = vrot.lane.b32.xlu0 %v2272, 64
  %v2657 = vpop.permute.xlu0 %2656
  %2658 = vrot.lane.b32.xlu0 %v2273, 64
  %v2659 = vpop.permute.xlu0 %2658
  %2660 = vrot.lane.b32.xlu0 %v2274, 64
  %v2661 = vpop.permute.xlu0 %2660
  %2662 = vrot.lane.b32.xlu0 %v2275, 64
  %v2663 = vpop.permute.xlu0 %2662
  %2664 = vrot.lane.b32.xlu0 %v2276, 64
  %v2665 = vpop.permute.xlu0 %2664
  %2666 = vrot.lane.b32.xlu0 %v2277, 64
  %v2667 = vpop.permute.xlu0 %2666
  %2668 = vrot.lane.b32.xlu0 %v2278, 64
  %v2669 = vpop.permute.xlu0 %2668
  %2670 = vrot.lane.b32.xlu0 %v2279, 64
  %v2671 = vpop.permute.xlu0 %2670
  %2672 = vrot.lane.b32.xlu0 %v2280, 64
  %v2673 = vpop.permute.xlu0 %2672
  %2674 = vrot.lane.b32.xlu0 %v2281, 64
  %v2675 = vpop.permute.xlu0 %2674
  %2676 = vrot.lane.b32.xlu0 %v2282, 64
  %v2677 = vpop.permute.xlu0 %2676
  %2678 = vrot.lane.b32.xlu0 %v2283, 64
  %v2679 = vpop.permute.xlu0 %2678
  %2680 = vrot.lane.b32.xlu0 %v2284, 64
  %v2681 = vpop.permute.xlu0 %2680
  %2682 = vrot.lane.b32.xlu0 %v2285, 64
  %v2683 = vpop.permute.xlu0 %2682
  %2684 = vrot.lane.b32.xlu0 %v2286, 64
  %v2685 = vpop.permute.xlu0 %2684
  %2686 = vrot.lane.b32.xlu0 %v2287, 64
  %v2687 = vpop.permute.xlu0 %2686
  %2688 = vrot.lane.b32.xlu0 %v2288, 64
  %v2689 = vpop.permute.xlu0 %2688
  %2690 = vrot.lane.b32.xlu0 %v2289, 64
  %v2691 = vpop.permute.xlu0 %2690
  %2692 = vrot.lane.b32.xlu0 %v2290, 64
  %v2693 = vpop.permute.xlu0 %2692
  %2694 = vrot.lane.b32.xlu0 %v2291, 64
  %v2695 = vpop.permute.xlu0 %2694
  %2696 = vrot.lane.b32.xlu0 %v2292, 64
  %v2697 = vpop.permute.xlu0 %2696
  %2698 = vrot.lane.b32.xlu0 %v2293, 64
  %v2699 = vpop.permute.xlu0 %2698
  %2700 = vrot.lane.b32.xlu0 %v2294, 64
  %v2701 = vpop.permute.xlu0 %2700
  %2702 = vrot.lane.b32.xlu0 %v2295, 64
  %v2703 = vpop.permute.xlu0 %2702
  %2704 = vrot.lane.b32.xlu0 %v2296, 64
  %v2705 = vpop.permute.xlu0 %2704
  %2706 = vrot.lane.b32.xlu0 %v2297, 64
  %v2707 = vpop.permute.xlu0 %2706
  %2708 = vrot.lane.b32.xlu0 %v2298, 64
  %v2709 = vpop.permute.xlu0 %2708
  %2710 = vrot.lane.b32.xlu0 %v2299, 64
  %v2711 = vpop.permute.xlu0 %2710
  %2712 = vrot.lane.b32.xlu0 %v2300, 64
  %v2713 = vpop.permute.xlu0 %2712
  %2714 = vrot.lane.b32.xlu0 %v2301, 64
  %v2715 = vpop.permute.xlu0 %2714
  %2716 = vrot.lane.b32.xlu0 %v2302, 64
  %v2717 = vpop.permute.xlu0 %2716
  %2718 = vrot.lane.b32.xlu0 %v2303, 64
  %v2719 = vpop.permute.xlu0 %2718
  %2720 = vrot.lane.b32.xlu0 %v2304, 64
  %v2721 = vpop.permute.xlu0 %2720
  %2722 = vrot.lane.b32.xlu0 %v2305, 64
  %v2723 = vpop.permute.xlu0 %2722
  %2724 = vrot.lane.b32.xlu0 %v2306, 64
  %v2725 = vpop.permute.xlu0 %2724
  %2726 = vrot.lane.b32.xlu0 %v2307, 64
  %v2727 = vpop.permute.xlu0 %2726
  %2728 = vrot.lane.b32.xlu0 %v2308, 64
  %v2729 = vpop.permute.xlu0 %2728
  %2730 = vrot.lane.b32.xlu0 %v2309, 64
  %v2731 = vpop.permute.xlu0 %2730
  %2732 = vrot.lane.b32.xlu0 %v2310, 64
  %v2733 = vpop.permute.xlu0 %2732
  %2734 = vrot.lane.b32.xlu0 %v2311, 64
  %v2735 = vpop.permute.xlu0 %2734
  %2736 = vrot.lane.b32.xlu0 %v2312, 64
  %v2737 = vpop.permute.xlu0 %2736
  %2738 = vrot.lane.b32.xlu0 %v2313, 64
  %v2739 = vpop.permute.xlu0 %2738
  %2740 = vrot.lane.b32.xlu0 %v2314, 64
  %v2741 = vpop.permute.xlu0 %2740
  %2742 = vrot.lane.b32.xlu0 %v2315, 64
  %v2743 = vpop.permute.xlu0 %2742
  %2744 = vrot.lane.b32.xlu0 %v2316, 64
  %v2745 = vpop.permute.xlu0 %2744
  %2746 = vrot.lane.b32.xlu0 %v2317, 64
  %v2747 = vpop.permute.xlu0 %2746
  %2748 = vrot.lane.b32.xlu0 %v2318, 64
  %v2749 = vpop.permute.xlu0 %2748
  %2750 = vrot.lane.b32.xlu0 %v2319, 64
  %v2751 = vpop.permute.xlu0 %2750
  %2752 = vrot.lane.b32.xlu0 %v2320, 64
  %v2753 = vpop.permute.xlu0 %2752
  %2754 = vrot.lane.b32.xlu0 %v2321, 64
  %v2755 = vpop.permute.xlu0 %2754
  %2756 = vrot.lane.b32.xlu0 %v2322, 64
  %v2757 = vpop.permute.xlu0 %2756
  %2758 = vrot.lane.b32.xlu0 %v2323, 64
  %v2759 = vpop.permute.xlu0 %2758
  %2760 = vrot.lane.b32.xlu0 %v2324, 64
  %v2761 = vpop.permute.xlu0 %2760
  %2762 = vrot.lane.b32.xlu0 %v2325, 64
  %v2763 = vpop.permute.xlu0 %2762
  %2764 = vrot.lane.b32.xlu0 %v2326, 64
  %v2765 = vpop.permute.xlu0 %2764
  %2766 = vrot.lane.b32.xlu0 %v2327, 64
  %v2767 = vpop.permute.xlu0 %2766
  %2768 = vrot.lane.b32.xlu0 %v2328, 64
  %v2769 = vpop.permute.xlu0 %2768
  %2770 = vrot.lane.b32.xlu0 %v2329, 64
  %v2771 = vpop.permute.xlu0 %2770
  %2772 = vrot.lane.b32.xlu0 %v2330, 64
  %v2773 = vpop.permute.xlu0 %2772
  %2774 = vrot.lane.b32.xlu0 %v2331, 64
  %v2775 = vpop.permute.xlu0 %2774
  %2776 = vrot.lane.b32.xlu0 %v2332, 64
  %v2777 = vpop.permute.xlu0 %2776
  %2778 = vrot.lane.b32.xlu0 %v2333, 64
  %v2779 = vpop.permute.xlu0 %2778
  %2780 = vrot.lane.b32.xlu0 %v2334, 64
  %v2781 = vpop.permute.xlu0 %2780
  %2782 = vrot.lane.b32.xlu0 %v2335, 64
  %v2783 = vpop.permute.xlu0 %2782
  %2784 = vrot.lane.b32.xlu0 %v2336, 64
  %v2785 = vpop.permute.xlu0 %2784
  %2786 = vrot.lane.b32.xlu0 %v2337, 64
  %v2787 = vpop.permute.xlu0 %2786
  %2788 = vrot.lane.b32.xlu0 %v2338, 64
  %v2789 = vpop.permute.xlu0 %2788
  %2790 = vrot.lane.b32.xlu0 %v2339, 64
  %v2791 = vpop.permute.xlu0 %2790
  %v2792 = vmax.f32 %v2114, %v2341
  %v2793 = vmax.f32 %v2115, %v2343
  %v2794 = vmax.f32 %v2116, %v2345
  %v2795 = vmax.f32 %v2117, %v2347
  %v2796 = vmax.f32 %v2118, %v2349
  %v2797 = vmax.f32 %v2119, %v2351
  %v2798 = vmax.f32 %v2120, %v2353
  %v2799 = vmax.f32 %v2121, %v2355
  %v2800 = vmax.f32 %v2122, %v2357
  %v2801 = vmax.f32 %v2123, %v2359
  %v2802 = vmax.f32 %v2124, %v2361
  %v2803 = vmax.f32 %v2125, %v2363
  %v2804 = vmax.f32 %v2126, %v2365
  %v2805 = vmax.f32 %v2127, %v2367
  %v2806 = vmax.f32 %v2128, %v2369
  %v2807 = vmax.f32 %v2129, %v2371
  %v2808 = vmax.f32 %v2130, %v2373
  %v2809 = vmax.f32 %v2131, %v2375
  %v2810 = vmax.f32 %v2132, %v2377
  %v2811 = vmax.f32 %v2133, %v2379
  %v2812 = vmax.f32 %v2134, %v2381
  %v2813 = vmax.f32 %v2135, %v2383
  %v2814 = vmax.f32 %v2136, %v2385
  %v2815 = vmax.f32 %v2137, %v2387
  %v2816 = vmax.f32 %v2138, %v2389
  %v2817 = vmax.f32 %v2139, %v2391
  %v2818 = vmax.f32 %v2140, %v2393
  %v2819 = vmax.f32 %v2141, %v2395
  %v2820 = vmax.f32 %v2142, %v2397
  %v2821 = vmax.f32 %v2143, %v2399
  %v2822 = vmax.f32 %v2144, %v2401
  %v2823 = vmax.f32 %v2145, %v2403
  %v2824 = vmax.f32 %v2146, %v2405
  %v2825 = vmax.f32 %v2147, %v2407
  %v2826 = vmax.f32 %v2148, %v2409
  %v2827 = vmax.f32 %v2149, %v2411
  %v2828 = vmax.f32 %v2150, %v2413
  %v2829 = vmax.f32 %v2151, %v2415
  %v2830 = vmax.f32 %v2152, %v2417
  %v2831 = vmax.f32 %v2153, %v2419
  %v2832 = vmax.f32 %v2154, %v2421
  %v2833 = vmax.f32 %v2155, %v2423
  %v2834 = vmax.f32 %v2156, %v2425
  %v2835 = vmax.f32 %v2157, %v2427
  %v2836 = vmax.f32 %v2158, %v2429
  %v2837 = vmax.f32 %v2159, %v2431
  %v2838 = vmax.f32 %v2160, %v2433
  %v2839 = vmax.f32 %v2161, %v2435
  %v2840 = vmax.f32 %v2162, %v2437
  %v2841 = vmax.f32 %v2163, %v2439
  %v2842 = vmax.f32 %v2164, %v2441
  %v2843 = vmax.f32 %v2165, %v2443
  %v2844 = vmax.f32 %v2166, %v2445
  %v2845 = vmax.f32 %v2167, %v2447
  %v2846 = vmax.f32 %v2168, %v2449
  %v2847 = vmax.f32 %v2169, %v2451
  %v2848 = vmax.f32 %v2170, %v2453
  %v2849 = vmax.f32 %v2171, %v2455
  %v2850 = vmax.f32 %v2172, %v2457
  %v2851 = vmax.f32 %v2173, %v2459
  %v2852 = vmax.f32 %v2174, %v2461
  %v2853 = vmax.f32 %v2175, %v2463
  %v2854 = vmax.f32 %v2176, %v2465
  %v2855 = vmax.f32 %v2177, %v2467
  %v2856 = vmax.f32 %v2178, %v2469
  %v2857 = vmax.f32 %v2179, %v2471
  %v2858 = vmax.f32 %v2180, %v2473
  %v2859 = vmax.f32 %v2181, %v2475
  %v2860 = vmax.f32 %v2182, %v2477
  %v2861 = vmax.f32 %v2183, %v2479
  %v2862 = vmax.f32 %v2184, %v2481
  %v2863 = vmax.f32 %v2185, %v2483
  %v2864 = vmax.f32 %v2186, %v2485
  %v2865 = vmax.f32 %v2187, %v2487
  %v2866 = vmax.f32 %v2188, %v2489
  %v2867 = vmax.f32 %v2189, %v2491
  %v2868 = vmax.f32 %v2190, %v2493
  %v2869 = vmax.f32 %v2191, %v2495
  %v2870 = vmax.f32 %v2192, %v2497
  %v2871 = vmax.f32 %v2193, %v2499
  %v2872 = vmax.f32 %v2194, %v2501
  %v2873 = vmax.f32 %v2195, %v2503
  %v2874 = vmax.f32 %v2196, %v2505
  %v2875 = vmax.f32 %v2197, %v2507
  %v2876 = vmax.f32 %v2198, %v2509
  %v2877 = vmax.f32 %v2199, %v2511
  %v2878 = vmax.f32 %v2200, %v2513
  %v2879 = vmax.f32 %v2201, %v2515
  %v2880 = vmax.f32 %v2202, %v2517
  %v2881 = vmax.f32 %v2203, %v2519
  %v2882 = vmax.f32 %v2204, %v2521
  %v2883 = vmax.f32 %v2205, %v2523
  %v2884 = vmax.f32 %v2206, %v2525
  %v2885 = vmax.f32 %v2207, %v2527
  %v2886 = vmax.f32 %v2208, %v2529
  %v2887 = vmax.f32 %v2209, %v2531
  %v2888 = vmax.f32 %v2210, %v2533
  %v2889 = vmax.f32 %v2211, %v2535
  %v2890 = vmax.f32 %v2212, %v2537
  %v2891 = vmax.f32 %v2213, %v2539
  %v2892 = vmax.f32 %v2214, %v2541
  %v2893 = vmax.f32 %v2215, %v2543
  %v2894 = vmax.f32 %v2216, %v2545
  %v2895 = vmax.f32 %v2217, %v2547
  %v2896 = vmax.f32 %v2218, %v2549
  %v2897 = vmax.f32 %v2219, %v2551
  %v2898 = vmax.f32 %v2220, %v2553
  %v2899 = vmax.f32 %v2221, %v2555
  %v2900 = vmax.f32 %v2222, %v2557
  %v2901 = vmax.f32 %v2223, %v2559
  %v2902 = vmax.f32 %v2224, %v2561
  %v2903 = vmax.f32 %v2225, %v2563
  %v2904 = vmax.f32 %v2226, %v2565
  %v2905 = vmax.f32 %v2227, %v2567
  %v2906 = vmax.f32 %v2228, %v2569
  %v2907 = vmax.f32 %v2229, %v2571
  %v2908 = vmax.f32 %v2230, %v2573
  %v2909 = vmax.f32 %v2231, %v2575
  %v2910 = vmax.f32 %v2232, %v2577
  %v2911 = vmax.f32 %v2233, %v2579
  %v2912 = vmax.f32 %v2234, %v2581
  %v2913 = vmax.f32 %v2235, %v2583
  %v2914 = vmax.f32 %v2236, %v2585
  %v2915 = vmax.f32 %v2237, %v2587
  %v2916 = vmax.f32 %v2238, %v2589
  %v2917 = vmax.f32 %v2239, %v2591
  %v2918 = vmax.f32 %v2240, %v2593
  %v2919 = vmax.f32 %v2241, %v2595
  %v2920 = vmax.f32 %v2242, %v2597
  %v2921 = vmax.f32 %v2243, %v2599
  %v2922 = vmax.f32 %v2244, %v2601
  %v2923 = vmax.f32 %v2245, %v2603
  %v2924 = vmax.f32 %v2246, %v2605
  %v2925 = vmax.f32 %v2247, %v2607
  %v2926 = vmax.f32 %v2248, %v2609
  %v2927 = vmax.f32 %v2249, %v2611
  %v2928 = vmax.f32 %v2250, %v2613
  %v2929 = vmax.f32 %v2251, %v2615
  %v2930 = vmax.f32 %v2252, %v2617
  %v2931 = vmax.f32 %v2253, %v2619
  %v2932 = vmax.f32 %v2254, %v2621
  %v2933 = vmax.f32 %v2255, %v2623
  %v2934 = vmax.f32 %v2256, %v2625
  %v2935 = vmax.f32 %v2257, %v2627
  %v2936 = vmax.f32 %v2258, %v2629
  %v2937 = vmax.f32 %v2259, %v2631
  %v2938 = vmax.f32 %v2260, %v2633
  %v2939 = vmax.f32 %v2261, %v2635
  %v2940 = vmax.f32 %v2262, %v2637
  %v2941 = vmax.f32 %v2263, %v2639
  %v2942 = vmax.f32 %v2264, %v2641
  %v2943 = vmax.f32 %v2265, %v2643
  %v2944 = vmax.f32 %v2266, %v2645
  %v2945 = vmax.f32 %v2267, %v2647
  %v2946 = vmax.f32 %v2268, %v2649
  %v2947 = vmax.f32 %v2269, %v2651
  %v2948 = vmax.f32 %v2270, %v2653
  %v2949 = vmax.f32 %v2271, %v2655
  %v2950 = vmax.f32 %v2272, %v2657
  %v2951 = vmax.f32 %v2273, %v2659
  %v2952 = vmax.f32 %v2274, %v2661
  %v2953 = vmax.f32 %v2275, %v2663
  %v2954 = vmax.f32 %v2276, %v2665
  %v2955 = vmax.f32 %v2277, %v2667
  %v2956 = vmax.f32 %v2278, %v2669
  %v2957 = vmax.f32 %v2279, %v2671
  %v2958 = vmax.f32 %v2280, %v2673
  %v2959 = vmax.f32 %v2281, %v2675
  %v2960 = vmax.f32 %v2282, %v2677
  %v2961 = vmax.f32 %v2283, %v2679
  %v2962 = vmax.f32 %v2284, %v2681
  %v2963 = vmax.f32 %v2285, %v2683
  %v2964 = vmax.f32 %v2286, %v2685
  %v2965 = vmax.f32 %v2287, %v2687
  %v2966 = vmax.f32 %v2288, %v2689
  %v2967 = vmax.f32 %v2289, %v2691
  %v2968 = vmax.f32 %v2290, %v2693
  %v2969 = vmax.f32 %v2291, %v2695
  %v2970 = vmax.f32 %v2292, %v2697
  %v2971 = vmax.f32 %v2293, %v2699
  %v2972 = vmax.f32 %v2294, %v2701
  %v2973 = vmax.f32 %v2295, %v2703
  %v2974 = vmax.f32 %v2296, %v2705
  %v2975 = vmax.f32 %v2297, %v2707
  %v2976 = vmax.f32 %v2298, %v2709
  %v2977 = vmax.f32 %v2299, %v2711
  %v2978 = vmax.f32 %v2300, %v2713
  %v2979 = vmax.f32 %v2301, %v2715
  %v2980 = vmax.f32 %v2302, %v2717
  %v2981 = vmax.f32 %v2303, %v2719
  %v2982 = vmax.f32 %v2304, %v2721
  %v2983 = vmax.f32 %v2305, %v2723
  %v2984 = vmax.f32 %v2306, %v2725
  %v2985 = vmax.f32 %v2307, %v2727
  %v2986 = vmax.f32 %v2308, %v2729
  %v2987 = vmax.f32 %v2309, %v2731
  %v2988 = vmax.f32 %v2310, %v2733
  %v2989 = vmax.f32 %v2311, %v2735
  %v2990 = vmax.f32 %v2312, %v2737
  %v2991 = vmax.f32 %v2313, %v2739
  %v2992 = vmax.f32 %v2314, %v2741
  %v2993 = vmax.f32 %v2315, %v2743
  %v2994 = vmax.f32 %v2316, %v2745
  %v2995 = vmax.f32 %v2317, %v2747
  %v2996 = vmax.f32 %v2318, %v2749
  %v2997 = vmax.f32 %v2319, %v2751
  %v2998 = vmax.f32 %v2320, %v2753
  %v2999 = vmax.f32 %v2321, %v2755
  %v3000 = vmax.f32 %v2322, %v2757
  %v3001 = vmax.f32 %v2323, %v2759
  %v3002 = vmax.f32 %v2324, %v2761
  %v3003 = vmax.f32 %v2325, %v2763
  %v3004 = vmax.f32 %v2326, %v2765
  %v3005 = vmax.f32 %v2327, %v2767
  %v3006 = vmax.f32 %v2328, %v2769
  %v3007 = vmax.f32 %v2329, %v2771
  %v3008 = vmax.f32 %v2330, %v2773
  %v3009 = vmax.f32 %v2331, %v2775
  %v3010 = vmax.f32 %v2332, %v2777
  %v3011 = vmax.f32 %v2333, %v2779
  %v3012 = vmax.f32 %v2334, %v2781
  %v3013 = vmax.f32 %v2335, %v2783
  %v3014 = vmax.f32 %v2336, %v2785
  %v3015 = vmax.f32 %v2337, %v2787
  %v3016 = vmax.f32 %v2338, %v2789
  %v3017 = vmax.f32 %v2339, %v2791
  %3018 = vrot.lane.b32.xlu0 %v2792, 32
  %v3019 = vpop.permute.xlu0 %3018
  %3020 = vrot.lane.b32.xlu0 %v2793, 32
  %v3021 = vpop.permute.xlu0 %3020
  %3022 = vrot.lane.b32.xlu0 %v2794, 32
  %v3023 = vpop.permute.xlu0 %3022
  %3024 = vrot.lane.b32.xlu0 %v2795, 32
  %v3025 = vpop.permute.xlu0 %3024
  %3026 = vrot.lane.b32.xlu0 %v2796, 32
  %v3027 = vpop.permute.xlu0 %3026
  %3028 = vrot.lane.b32.xlu0 %v2797, 32
  %v3029 = vpop.permute.xlu0 %3028
  %3030 = vrot.lane.b32.xlu0 %v2798, 32
  %v3031 = vpop.permute.xlu0 %3030
  %3032 = vrot.lane.b32.xlu0 %v2799, 32
  %v3033 = vpop.permute.xlu0 %3032
  %3034 = vrot.lane.b32.xlu0 %v2800, 32
  %v3035 = vpop.permute.xlu0 %3034
  %3036 = vrot.lane.b32.xlu0 %v2801, 32
  %v3037 = vpop.permute.xlu0 %3036
  %3038 = vrot.lane.b32.xlu0 %v2802, 32
  %v3039 = vpop.permute.xlu0 %3038
  %3040 = vrot.lane.b32.xlu0 %v2803, 32
  %v3041 = vpop.permute.xlu0 %3040
  %3042 = vrot.lane.b32.xlu0 %v2804, 32
  %v3043 = vpop.permute.xlu0 %3042
  %3044 = vrot.lane.b32.xlu0 %v2805, 32
  %v3045 = vpop.permute.xlu0 %3044
  %3046 = vrot.lane.b32.xlu0 %v2806, 32
  %v3047 = vpop.permute.xlu0 %3046
  %3048 = vrot.lane.b32.xlu0 %v2807, 32
  %v3049 = vpop.permute.xlu0 %3048
  %3050 = vrot.lane.b32.xlu0 %v2808, 32
  %v3051 = vpop.permute.xlu0 %3050
  %3052 = vrot.lane.b32.xlu0 %v2809, 32
  %v3053 = vpop.permute.xlu0 %3052
  %3054 = vrot.lane.b32.xlu0 %v2810, 32
  %v3055 = vpop.permute.xlu0 %3054
  %3056 = vrot.lane.b32.xlu0 %v2811, 32
  %v3057 = vpop.permute.xlu0 %3056
  %3058 = vrot.lane.b32.xlu0 %v2812, 32
  %v3059 = vpop.permute.xlu0 %3058
  %3060 = vrot.lane.b32.xlu0 %v2813, 32
  %v3061 = vpop.permute.xlu0 %3060
  %3062 = vrot.lane.b32.xlu0 %v2814, 32
  %v3063 = vpop.permute.xlu0 %3062
  %3064 = vrot.lane.b32.xlu0 %v2815, 32
  %v3065 = vpop.permute.xlu0 %3064
  %3066 = vrot.lane.b32.xlu0 %v2816, 32
  %v3067 = vpop.permute.xlu0 %3066
  %3068 = vrot.lane.b32.xlu0 %v2817, 32
  %v3069 = vpop.permute.xlu0 %3068
  %3070 = vrot.lane.b32.xlu0 %v2818, 32
  %v3071 = vpop.permute.xlu0 %3070
  %3072 = vrot.lane.b32.xlu0 %v2819, 32
  %v3073 = vpop.permute.xlu0 %3072
  %3074 = vrot.lane.b32.xlu0 %v2820, 32
  %v3075 = vpop.permute.xlu0 %3074
  %3076 = vrot.lane.b32.xlu0 %v2821, 32
  %v3077 = vpop.permute.xlu0 %3076
  %3078 = vrot.lane.b32.xlu0 %v2822, 32
  %v3079 = vpop.permute.xlu0 %3078
  %3080 = vrot.lane.b32.xlu0 %v2823, 32
  %v3081 = vpop.permute.xlu0 %3080
  %3082 = vrot.lane.b32.xlu0 %v2824, 32
  %v3083 = vpop.permute.xlu0 %3082
  %3084 = vrot.lane.b32.xlu0 %v2825, 32
  %v3085 = vpop.permute.xlu0 %3084
  %3086 = vrot.lane.b32.xlu0 %v2826, 32
  %v3087 = vpop.permute.xlu0 %3086
  %3088 = vrot.lane.b32.xlu0 %v2827, 32
  %v3089 = vpop.permute.xlu0 %3088
  %3090 = vrot.lane.b32.xlu0 %v2828, 32
  %v3091 = vpop.permute.xlu0 %3090
  %3092 = vrot.lane.b32.xlu0 %v2829, 32
  %v3093 = vpop.permute.xlu0 %3092
  %3094 = vrot.lane.b32.xlu0 %v2830, 32
  %v3095 = vpop.permute.xlu0 %3094
  %3096 = vrot.lane.b32.xlu0 %v2831, 32
  %v3097 = vpop.permute.xlu0 %3096
  %3098 = vrot.lane.b32.xlu0 %v2832, 32
  %v3099 = vpop.permute.xlu0 %3098
  %3100 = vrot.lane.b32.xlu0 %v2833, 32
  %v3101 = vpop.permute.xlu0 %3100
  %3102 = vrot.lane.b32.xlu0 %v2834, 32
  %v3103 = vpop.permute.xlu0 %3102
  %3104 = vrot.lane.b32.xlu0 %v2835, 32
  %v3105 = vpop.permute.xlu0 %3104
  %3106 = vrot.lane.b32.xlu0 %v2836, 32
  %v3107 = vpop.permute.xlu0 %3106
  %3108 = vrot.lane.b32.xlu0 %v2837, 32
  %v3109 = vpop.permute.xlu0 %3108
  %3110 = vrot.lane.b32.xlu0 %v2838, 32
  %v3111 = vpop.permute.xlu0 %3110
  %3112 = vrot.lane.b32.xlu0 %v2839, 32
  %v3113 = vpop.permute.xlu0 %3112
  %3114 = vrot.lane.b32.xlu0 %v2840, 32
  %v3115 = vpop.permute.xlu0 %3114
  %3116 = vrot.lane.b32.xlu0 %v2841, 32
  %v3117 = vpop.permute.xlu0 %3116
  %3118 = vrot.lane.b32.xlu0 %v2842, 32
  %v3119 = vpop.permute.xlu0 %3118
  %3120 = vrot.lane.b32.xlu0 %v2843, 32
  %v3121 = vpop.permute.xlu0 %3120
  %3122 = vrot.lane.b32.xlu0 %v2844, 32
  %v3123 = vpop.permute.xlu0 %3122
  %3124 = vrot.lane.b32.xlu0 %v2845, 32
  %v3125 = vpop.permute.xlu0 %3124
  %3126 = vrot.lane.b32.xlu0 %v2846, 32
  %v3127 = vpop.permute.xlu0 %3126
  %3128 = vrot.lane.b32.xlu0 %v2847, 32
  %v3129 = vpop.permute.xlu0 %3128
  %3130 = vrot.lane.b32.xlu0 %v2848, 32
  %v3131 = vpop.permute.xlu0 %3130
  %3132 = vrot.lane.b32.xlu0 %v2849, 32
  %v3133 = vpop.permute.xlu0 %3132
  %3134 = vrot.lane.b32.xlu0 %v2850, 32
  %v3135 = vpop.permute.xlu0 %3134
  %3136 = vrot.lane.b32.xlu0 %v2851, 32
  %v3137 = vpop.permute.xlu0 %3136
  %3138 = vrot.lane.b32.xlu0 %v2852, 32
  %v3139 = vpop.permute.xlu0 %3138
  %3140 = vrot.lane.b32.xlu0 %v2853, 32
  %v3141 = vpop.permute.xlu0 %3140
  %3142 = vrot.lane.b32.xlu0 %v2854, 32
  %v3143 = vpop.permute.xlu0 %3142
  %3144 = vrot.lane.b32.xlu0 %v2855, 32
  %v3145 = vpop.permute.xlu0 %3144
  %3146 = vrot.lane.b32.xlu0 %v2856, 32
  %v3147 = vpop.permute.xlu0 %3146
  %3148 = vrot.lane.b32.xlu0 %v2857, 32
  %v3149 = vpop.permute.xlu0 %3148
  %3150 = vrot.lane.b32.xlu0 %v2858, 32
  %v3151 = vpop.permute.xlu0 %3150
  %3152 = vrot.lane.b32.xlu0 %v2859, 32
  %v3153 = vpop.permute.xlu0 %3152
  %3154 = vrot.lane.b32.xlu0 %v2860, 32
  %v3155 = vpop.permute.xlu0 %3154
  %3156 = vrot.lane.b32.xlu0 %v2861, 32
  %v3157 = vpop.permute.xlu0 %3156
  %3158 = vrot.lane.b32.xlu0 %v2862, 32
  %v3159 = vpop.permute.xlu0 %3158
  %3160 = vrot.lane.b32.xlu0 %v2863, 32
  %v3161 = vpop.permute.xlu0 %3160
  %3162 = vrot.lane.b32.xlu0 %v2864, 32
  %v3163 = vpop.permute.xlu0 %3162
  %3164 = vrot.lane.b32.xlu0 %v2865, 32
  %v3165 = vpop.permute.xlu0 %3164
  %3166 = vrot.lane.b32.xlu0 %v2866, 32
  %v3167 = vpop.permute.xlu0 %3166
  %3168 = vrot.lane.b32.xlu0 %v2867, 32
  %v3169 = vpop.permute.xlu0 %3168
  %3170 = vrot.lane.b32.xlu0 %v2868, 32
  %v3171 = vpop.permute.xlu0 %3170
  %3172 = vrot.lane.b32.xlu0 %v2869, 32
  %v3173 = vpop.permute.xlu0 %3172
  %3174 = vrot.lane.b32.xlu0 %v2870, 32
  %v3175 = vpop.permute.xlu0 %3174
  %3176 = vrot.lane.b32.xlu0 %v2871, 32
  %v3177 = vpop.permute.xlu0 %3176
  %3178 = vrot.lane.b32.xlu0 %v2872, 32
  %v3179 = vpop.permute.xlu0 %3178
  %3180 = vrot.lane.b32.xlu0 %v2873, 32
  %v3181 = vpop.permute.xlu0 %3180
  %3182 = vrot.lane.b32.xlu0 %v2874, 32
  %v3183 = vpop.permute.xlu0 %3182
  %3184 = vrot.lane.b32.xlu0 %v2875, 32
  %v3185 = vpop.permute.xlu0 %3184
  %3186 = vrot.lane.b32.xlu0 %v2876, 32
  %v3187 = vpop.permute.xlu0 %3186
  %3188 = vrot.lane.b32.xlu0 %v2877, 32
  %v3189 = vpop.permute.xlu0 %3188
  %3190 = vrot.lane.b32.xlu0 %v2878, 32
  %v3191 = vpop.permute.xlu0 %3190
  %3192 = vrot.lane.b32.xlu0 %v2879, 32
  %v3193 = vpop.permute.xlu0 %3192
  %3194 = vrot.lane.b32.xlu0 %v2880, 32
  %v3195 = vpop.permute.xlu0 %3194
  %3196 = vrot.lane.b32.xlu0 %v2881, 32
  %v3197 = vpop.permute.xlu0 %3196
  %3198 = vrot.lane.b32.xlu0 %v2882, 32
  %v3199 = vpop.permute.xlu0 %3198
  %3200 = vrot.lane.b32.xlu0 %v2883, 32
  %v3201 = vpop.permute.xlu0 %3200
  %3202 = vrot.lane.b32.xlu0 %v2884, 32
  %v3203 = vpop.permute.xlu0 %3202
  %3204 = vrot.lane.b32.xlu0 %v2885, 32
  %v3205 = vpop.permute.xlu0 %3204
  %3206 = vrot.lane.b32.xlu0 %v2886, 32
  %v3207 = vpop.permute.xlu0 %3206
  %3208 = vrot.lane.b32.xlu0 %v2887, 32
  %v3209 = vpop.permute.xlu0 %3208
  %3210 = vrot.lane.b32.xlu0 %v2888, 32
  %v3211 = vpop.permute.xlu0 %3210
  %3212 = vrot.lane.b32.xlu0 %v2889, 32
  %v3213 = vpop.permute.xlu0 %3212
  %3214 = vrot.lane.b32.xlu0 %v2890, 32
  %v3215 = vpop.permute.xlu0 %3214
  %3216 = vrot.lane.b32.xlu0 %v2891, 32
  %v3217 = vpop.permute.xlu0 %3216
  %3218 = vrot.lane.b32.xlu0 %v2892, 32
  %v3219 = vpop.permute.xlu0 %3218
  %3220 = vrot.lane.b32.xlu0 %v2893, 32
  %v3221 = vpop.permute.xlu0 %3220
  %3222 = vrot.lane.b32.xlu0 %v2894, 32
  %v3223 = vpop.permute.xlu0 %3222
  %3224 = vrot.lane.b32.xlu0 %v2895, 32
  %v3225 = vpop.permute.xlu0 %3224
  %3226 = vrot.lane.b32.xlu0 %v2896, 32
  %v3227 = vpop.permute.xlu0 %3226
  %3228 = vrot.lane.b32.xlu0 %v2897, 32
  %v3229 = vpop.permute.xlu0 %3228
  %3230 = vrot.lane.b32.xlu0 %v2898, 32
  %v3231 = vpop.permute.xlu0 %3230
  %3232 = vrot.lane.b32.xlu0 %v2899, 32
  %v3233 = vpop.permute.xlu0 %3232
  %3234 = vrot.lane.b32.xlu0 %v2900, 32
  %v3235 = vpop.permute.xlu0 %3234
  %3236 = vrot.lane.b32.xlu0 %v2901, 32
  %v3237 = vpop.permute.xlu0 %3236
  %3238 = vrot.lane.b32.xlu0 %v2902, 32
  %v3239 = vpop.permute.xlu0 %3238
  %3240 = vrot.lane.b32.xlu0 %v2903, 32
  %v3241 = vpop.permute.xlu0 %3240
  %3242 = vrot.lane.b32.xlu0 %v2904, 32
  %v3243 = vpop.permute.xlu0 %3242
  %3244 = vrot.lane.b32.xlu0 %v2905, 32
  %v3245 = vpop.permute.xlu0 %3244
  %3246 = vrot.lane.b32.xlu0 %v2906, 32
  %v3247 = vpop.permute.xlu0 %3246
  %3248 = vrot.lane.b32.xlu0 %v2907, 32
  %v3249 = vpop.permute.xlu0 %3248
  %3250 = vrot.lane.b32.xlu0 %v2908, 32
  %v3251 = vpop.permute.xlu0 %3250
  %3252 = vrot.lane.b32.xlu0 %v2909, 32
  %v3253 = vpop.permute.xlu0 %3252
  %3254 = vrot.lane.b32.xlu0 %v2910, 32
  %v3255 = vpop.permute.xlu0 %3254
  %3256 = vrot.lane.b32.xlu0 %v2911, 32
  %v3257 = vpop.permute.xlu0 %3256
  %3258 = vrot.lane.b32.xlu0 %v2912, 32
  %v3259 = vpop.permute.xlu0 %3258
  %3260 = vrot.lane.b32.xlu0 %v2913, 32
  %v3261 = vpop.permute.xlu0 %3260
  %3262 = vrot.lane.b32.xlu0 %v2914, 32
  %v3263 = vpop.permute.xlu0 %3262
  %3264 = vrot.lane.b32.xlu0 %v2915, 32
  %v3265 = vpop.permute.xlu0 %3264
  %3266 = vrot.lane.b32.xlu0 %v2916, 32
  %v3267 = vpop.permute.xlu0 %3266
  %3268 = vrot.lane.b32.xlu0 %v2917, 32
  %v3269 = vpop.permute.xlu0 %3268
  %3270 = vrot.lane.b32.xlu0 %v2918, 32
  %v3271 = vpop.permute.xlu0 %3270
  %3272 = vrot.lane.b32.xlu0 %v2919, 32
  %v3273 = vpop.permute.xlu0 %3272
  %3274 = vrot.lane.b32.xlu0 %v2920, 32
  %v3275 = vpop.permute.xlu0 %3274
  %3276 = vrot.lane.b32.xlu0 %v2921, 32
  %v3277 = vpop.permute.xlu0 %3276
  %3278 = vrot.lane.b32.xlu0 %v2922, 32
  %v3279 = vpop.permute.xlu0 %3278
  %3280 = vrot.lane.b32.xlu0 %v2923, 32
  %v3281 = vpop.permute.xlu0 %3280
  %3282 = vrot.lane.b32.xlu0 %v2924, 32
  %v3283 = vpop.permute.xlu0 %3282
  %3284 = vrot.lane.b32.xlu0 %v2925, 32
  %v3285 = vpop.permute.xlu0 %3284
  %3286 = vrot.lane.b32.xlu0 %v2926, 32
  %v3287 = vpop.permute.xlu0 %3286
  %3288 = vrot.lane.b32.xlu0 %v2927, 32
  %v3289 = vpop.permute.xlu0 %3288
  %3290 = vrot.lane.b32.xlu0 %v2928, 32
  %v3291 = vpop.permute.xlu0 %3290
  %3292 = vrot.lane.b32.xlu0 %v2929, 32
  %v3293 = vpop.permute.xlu0 %3292
  %3294 = vrot.lane.b32.xlu0 %v2930, 32
  %v3295 = vpop.permute.xlu0 %3294
  %3296 = vrot.lane.b32.xlu0 %v2931, 32
  %v3297 = vpop.permute.xlu0 %3296
  %3298 = vrot.lane.b32.xlu0 %v2932, 32
  %v3299 = vpop.permute.xlu0 %3298
  %3300 = vrot.lane.b32.xlu0 %v2933, 32
  %v3301 = vpop.permute.xlu0 %3300
  %3302 = vrot.lane.b32.xlu0 %v2934, 32
  %v3303 = vpop.permute.xlu0 %3302
  %3304 = vrot.lane.b32.xlu0 %v2935, 32
  %v3305 = vpop.permute.xlu0 %3304
  %3306 = vrot.lane.b32.xlu0 %v2936, 32
  %v3307 = vpop.permute.xlu0 %3306
  %3308 = vrot.lane.b32.xlu0 %v2937, 32
  %v3309 = vpop.permute.xlu0 %3308
  %3310 = vrot.lane.b32.xlu0 %v2938, 32
  %v3311 = vpop.permute.xlu0 %3310
  %3312 = vrot.lane.b32.xlu0 %v2939, 32
  %v3313 = vpop.permute.xlu0 %3312
  %3314 = vrot.lane.b32.xlu0 %v2940, 32
  %v3315 = vpop.permute.xlu0 %3314
  %3316 = vrot.lane.b32.xlu0 %v2941, 32
  %v3317 = vpop.permute.xlu0 %3316
  %3318 = vrot.lane.b32.xlu0 %v2942, 32
  %v3319 = vpop.permute.xlu0 %3318
  %3320 = vrot.lane.b32.xlu0 %v2943, 32
  %v3321 = vpop.permute.xlu0 %3320
  %3322 = vrot.lane.b32.xlu0 %v2944, 32
  %v3323 = vpop.permute.xlu0 %3322
  %3324 = vrot.lane.b32.xlu0 %v2945, 32
  %v3325 = vpop.permute.xlu0 %3324
  %3326 = vrot.lane.b32.xlu0 %v2946, 32
  %v3327 = vpop.permute.xlu0 %3326
  %3328 = vrot.lane.b32.xlu0 %v2947, 32
  %v3329 = vpop.permute.xlu0 %3328
  %3330 = vrot.lane.b32.xlu0 %v2948, 32
  %v3331 = vpop.permute.xlu0 %3330
  %3332 = vrot.lane.b32.xlu0 %v2949, 32
  %v3333 = vpop.permute.xlu0 %3332
  %3334 = vrot.lane.b32.xlu0 %v2950, 32
  %v3335 = vpop.permute.xlu0 %3334
  %3336 = vrot.lane.b32.xlu0 %v2951, 32
  %v3337 = vpop.permute.xlu0 %3336
  %3338 = vrot.lane.b32.xlu0 %v2952, 32
  %v3339 = vpop.permute.xlu0 %3338
  %3340 = vrot.lane.b32.xlu0 %v2953, 32
  %v3341 = vpop.permute.xlu0 %3340
  %3342 = vrot.lane.b32.xlu0 %v2954, 32
  %v3343 = vpop.permute.xlu0 %3342
  %3344 = vrot.lane.b32.xlu0 %v2955, 32
  %v3345 = vpop.permute.xlu0 %3344
  %3346 = vrot.lane.b32.xlu0 %v2956, 32
  %v3347 = vpop.permute.xlu0 %3346
  %3348 = vrot.lane.b32.xlu0 %v2957, 32
  %v3349 = vpop.permute.xlu0 %3348
  %3350 = vrot.lane.b32.xlu0 %v2958, 32
  %v3351 = vpop.permute.xlu0 %3350
  %3352 = vrot.lane.b32.xlu0 %v2959, 32
  %v3353 = vpop.permute.xlu0 %3352
  %3354 = vrot.lane.b32.xlu0 %v2960, 32
  %v3355 = vpop.permute.xlu0 %3354
  %3356 = vrot.lane.b32.xlu0 %v2961, 32
  %v3357 = vpop.permute.xlu0 %3356
  %3358 = vrot.lane.b32.xlu0 %v2962, 32
  %v3359 = vpop.permute.xlu0 %3358
  %3360 = vrot.lane.b32.xlu0 %v2963, 32
  %v3361 = vpop.permute.xlu0 %3360
  %3362 = vrot.lane.b32.xlu0 %v2964, 32
  %v3363 = vpop.permute.xlu0 %3362
  %3364 = vrot.lane.b32.xlu0 %v2965, 32
  %v3365 = vpop.permute.xlu0 %3364
  %3366 = vrot.lane.b32.xlu0 %v2966, 32
  %v3367 = vpop.permute.xlu0 %3366
  %3368 = vrot.lane.b32.xlu0 %v2967, 32
  %v3369 = vpop.permute.xlu0 %3368
  %3370 = vrot.lane.b32.xlu0 %v2968, 32
  %v3371 = vpop.permute.xlu0 %3370
  %3372 = vrot.lane.b32.xlu0 %v2969, 32
  %v3373 = vpop.permute.xlu0 %3372
  %3374 = vrot.lane.b32.xlu0 %v2970, 32
  %v3375 = vpop.permute.xlu0 %3374
  %3376 = vrot.lane.b32.xlu0 %v2971, 32
  %v3377 = vpop.permute.xlu0 %3376
  %3378 = vrot.lane.b32.xlu0 %v2972, 32
  %v3379 = vpop.permute.xlu0 %3378
  %3380 = vrot.lane.b32.xlu0 %v2973, 32
  %v3381 = vpop.permute.xlu0 %3380
  %3382 = vrot.lane.b32.xlu0 %v2974, 32
  %v3383 = vpop.permute.xlu0 %3382
  %3384 = vrot.lane.b32.xlu0 %v2975, 32
  %v3385 = vpop.permute.xlu0 %3384
  %3386 = vrot.lane.b32.xlu0 %v2976, 32
  %v3387 = vpop.permute.xlu0 %3386
  %3388 = vrot.lane.b32.xlu0 %v2977, 32
  %v3389 = vpop.permute.xlu0 %3388
  %3390 = vrot.lane.b32.xlu0 %v2978, 32
  %v3391 = vpop.permute.xlu0 %3390
  %3392 = vrot.lane.b32.xlu0 %v2979, 32
  %v3393 = vpop.permute.xlu0 %3392
  %3394 = vrot.lane.b32.xlu0 %v2980, 32
  %v3395 = vpop.permute.xlu0 %3394
  %3396 = vrot.lane.b32.xlu0 %v2981, 32
  %v3397 = vpop.permute.xlu0 %3396
  %3398 = vrot.lane.b32.xlu0 %v2982, 32
  %v3399 = vpop.permute.xlu0 %3398
  %3400 = vrot.lane.b32.xlu0 %v2983, 32
  %v3401 = vpop.permute.xlu0 %3400
  %3402 = vrot.lane.b32.xlu0 %v2984, 32
  %v3403 = vpop.permute.xlu0 %3402
  %3404 = vrot.lane.b32.xlu0 %v2985, 32
  %v3405 = vpop.permute.xlu0 %3404
  %3406 = vrot.lane.b32.xlu0 %v2986, 32
  %v3407 = vpop.permute.xlu0 %3406
  %3408 = vrot.lane.b32.xlu0 %v2987, 32
  %v3409 = vpop.permute.xlu0 %3408
  %3410 = vrot.lane.b32.xlu0 %v2988, 32
  %v3411 = vpop.permute.xlu0 %3410
  %3412 = vrot.lane.b32.xlu0 %v2989, 32
  %v3413 = vpop.permute.xlu0 %3412
  %3414 = vrot.lane.b32.xlu0 %v2990, 32
  %v3415 = vpop.permute.xlu0 %3414
  %3416 = vrot.lane.b32.xlu0 %v2991, 32
  %v3417 = vpop.permute.xlu0 %3416
  %3418 = vrot.lane.b32.xlu0 %v2992, 32
  %v3419 = vpop.permute.xlu0 %3418
  %3420 = vrot.lane.b32.xlu0 %v2993, 32
  %v3421 = vpop.permute.xlu0 %3420
  %3422 = vrot.lane.b32.xlu0 %v2994, 32
  %v3423 = vpop.permute.xlu0 %3422
  %3424 = vrot.lane.b32.xlu0 %v2995, 32
  %v3425 = vpop.permute.xlu0 %3424
  %3426 = vrot.lane.b32.xlu0 %v2996, 32
  %v3427 = vpop.permute.xlu0 %3426
  %3428 = vrot.lane.b32.xlu0 %v2997, 32
  %v3429 = vpop.permute.xlu0 %3428
  %3430 = vrot.lane.b32.xlu0 %v2998, 32
  %v3431 = vpop.permute.xlu0 %3430
  %3432 = vrot.lane.b32.xlu0 %v2999, 32
  %v3433 = vpop.permute.xlu0 %3432
  %3434 = vrot.lane.b32.xlu0 %v3000, 32
  %v3435 = vpop.permute.xlu0 %3434
  %3436 = vrot.lane.b32.xlu0 %v3001, 32
  %v3437 = vpop.permute.xlu0 %3436
  %3438 = vrot.lane.b32.xlu0 %v3002, 32
  %v3439 = vpop.permute.xlu0 %3438
  %3440 = vrot.lane.b32.xlu0 %v3003, 32
  %v3441 = vpop.permute.xlu0 %3440
  %3442 = vrot.lane.b32.xlu0 %v3004, 32
  %v3443 = vpop.permute.xlu0 %3442
  %3444 = vrot.lane.b32.xlu0 %v3005, 32
  %v3445 = vpop.permute.xlu0 %3444
  %3446 = vrot.lane.b32.xlu0 %v3006, 32
  %v3447 = vpop.permute.xlu0 %3446
  %3448 = vrot.lane.b32.xlu0 %v3007, 32
  %v3449 = vpop.permute.xlu0 %3448
  %3450 = vrot.lane.b32.xlu0 %v3008, 32
  %v3451 = vpop.permute.xlu0 %3450
  %3452 = vrot.lane.b32.xlu0 %v3009, 32
  %v3453 = vpop.permute.xlu0 %3452
  %3454 = vrot.lane.b32.xlu0 %v3010, 32
  %v3455 = vpop.permute.xlu0 %3454
  %3456 = vrot.lane.b32.xlu0 %v3011, 32
  %v3457 = vpop.permute.xlu0 %3456
  %3458 = vrot.lane.b32.xlu0 %v3012, 32
  %v3459 = vpop.permute.xlu0 %3458
  %3460 = vrot.lane.b32.xlu0 %v3013, 32
  %v3461 = vpop.permute.xlu0 %3460
  %3462 = vrot.lane.b32.xlu0 %v3014, 32
  %v3463 = vpop.permute.xlu0 %3462
  %3464 = vrot.lane.b32.xlu0 %v3015, 32
  %v3465 = vpop.permute.xlu0 %3464
  %3466 = vrot.lane.b32.xlu0 %v3016, 32
  %v3467 = vpop.permute.xlu0 %3466
  %3468 = vrot.lane.b32.xlu0 %v3017, 32
  %v3469 = vpop.permute.xlu0 %3468
  %v3470 = vmax.f32 %v2792, %v3019
  %v3471 = vmax.f32 %v2793, %v3021
  %v3472 = vmax.f32 %v2794, %v3023
  %v3473 = vmax.f32 %v2795, %v3025
  %v3474 = vmax.f32 %v2796, %v3027
  %v3475 = vmax.f32 %v2797, %v3029
  %v3476 = vmax.f32 %v2798, %v3031
  %v3477 = vmax.f32 %v2799, %v3033
  %v3478 = vmax.f32 %v2800, %v3035
  %v3479 = vmax.f32 %v2801, %v3037
  %v3480 = vmax.f32 %v2802, %v3039
  %v3481 = vmax.f32 %v2803, %v3041
  %v3482 = vmax.f32 %v2804, %v3043
  %v3483 = vmax.f32 %v2805, %v3045
  %v3484 = vmax.f32 %v2806, %v3047
  %v3485 = vmax.f32 %v2807, %v3049
  %v3486 = vmax.f32 %v2808, %v3051
  %v3487 = vmax.f32 %v2809, %v3053
  %v3488 = vmax.f32 %v2810, %v3055
  %v3489 = vmax.f32 %v2811, %v3057
  %v3490 = vmax.f32 %v2812, %v3059
  %v3491 = vmax.f32 %v2813, %v3061
  %v3492 = vmax.f32 %v2814, %v3063
  %v3493 = vmax.f32 %v2815, %v3065
  %v3494 = vmax.f32 %v2816, %v3067
  %v3495 = vmax.f32 %v2817, %v3069
  %v3496 = vmax.f32 %v2818, %v3071
  %v3497 = vmax.f32 %v2819, %v3073
  %v3498 = vmax.f32 %v2820, %v3075
  %v3499 = vmax.f32 %v2821, %v3077
  %v3500 = vmax.f32 %v2822, %v3079
  %v3501 = vmax.f32 %v2823, %v3081
  %v3502 = vmax.f32 %v2824, %v3083
  %v3503 = vmax.f32 %v2825, %v3085
  %v3504 = vmax.f32 %v2826, %v3087
  %v3505 = vmax.f32 %v2827, %v3089
  %v3506 = vmax.f32 %v2828, %v3091
  %v3507 = vmax.f32 %v2829, %v3093
  %v3508 = vmax.f32 %v2830, %v3095
  %v3509 = vmax.f32 %v2831, %v3097
  %v3510 = vmax.f32 %v2832, %v3099
  %v3511 = vmax.f32 %v2833, %v3101
  %v3512 = vmax.f32 %v2834, %v3103
  %v3513 = vmax.f32 %v2835, %v3105
  %v3514 = vmax.f32 %v2836, %v3107
  %v3515 = vmax.f32 %v2837, %v3109
  %v3516 = vmax.f32 %v2838, %v3111
  %v3517 = vmax.f32 %v2839, %v3113
  %v3518 = vmax.f32 %v2840, %v3115
  %v3519 = vmax.f32 %v2841, %v3117
  %v3520 = vmax.f32 %v2842, %v3119
  %v3521 = vmax.f32 %v2843, %v3121
  %v3522 = vmax.f32 %v2844, %v3123
  %v3523 = vmax.f32 %v2845, %v3125
  %v3524 = vmax.f32 %v2846, %v3127
  %v3525 = vmax.f32 %v2847, %v3129
  %v3526 = vmax.f32 %v2848, %v3131
  %v3527 = vmax.f32 %v2849, %v3133
  %v3528 = vmax.f32 %v2850, %v3135
  %v3529 = vmax.f32 %v2851, %v3137
  %v3530 = vmax.f32 %v2852, %v3139
  %v3531 = vmax.f32 %v2853, %v3141
  %v3532 = vmax.f32 %v2854, %v3143
  %v3533 = vmax.f32 %v2855, %v3145
  %v3534 = vmax.f32 %v2856, %v3147
  %v3535 = vmax.f32 %v2857, %v3149
  %v3536 = vmax.f32 %v2858, %v3151
  %v3537 = vmax.f32 %v2859, %v3153
  %v3538 = vmax.f32 %v2860, %v3155
  %v3539 = vmax.f32 %v2861, %v3157
  %v3540 = vmax.f32 %v2862, %v3159
  %v3541 = vmax.f32 %v2863, %v3161
  %v3542 = vmax.f32 %v2864, %v3163
  %v3543 = vmax.f32 %v2865, %v3165
  %v3544 = vmax.f32 %v2866, %v3167
  %v3545 = vmax.f32 %v2867, %v3169
  %v3546 = vmax.f32 %v2868, %v3171
  %v3547 = vmax.f32 %v2869, %v3173
  %v3548 = vmax.f32 %v2870, %v3175
  %v3549 = vmax.f32 %v2871, %v3177
  %v3550 = vmax.f32 %v2872, %v3179
  %v3551 = vmax.f32 %v2873, %v3181
  %v3552 = vmax.f32 %v2874, %v3183
  %v3553 = vmax.f32 %v2875, %v3185
  %v3554 = vmax.f32 %v2876, %v3187
  %v3555 = vmax.f32 %v2877, %v3189
  %v3556 = vmax.f32 %v2878, %v3191
  %v3557 = vmax.f32 %v2879, %v3193
  %v3558 = vmax.f32 %v2880, %v3195
  %v3559 = vmax.f32 %v2881, %v3197
  %v3560 = vmax.f32 %v2882, %v3199
  %v3561 = vmax.f32 %v2883, %v3201
  %v3562 = vmax.f32 %v2884, %v3203
  %v3563 = vmax.f32 %v2885, %v3205
  %v3564 = vmax.f32 %v2886, %v3207
  %v3565 = vmax.f32 %v2887, %v3209
  %v3566 = vmax.f32 %v2888, %v3211
  %v3567 = vmax.f32 %v2889, %v3213
  %v3568 = vmax.f32 %v2890, %v3215
  %v3569 = vmax.f32 %v2891, %v3217
  %v3570 = vmax.f32 %v2892, %v3219
  %v3571 = vmax.f32 %v2893, %v3221
  %v3572 = vmax.f32 %v2894, %v3223
  %v3573 = vmax.f32 %v2895, %v3225
  %v3574 = vmax.f32 %v2896, %v3227
  %v3575 = vmax.f32 %v2897, %v3229
  %v3576 = vmax.f32 %v2898, %v3231
  %v3577 = vmax.f32 %v2899, %v3233
  %v3578 = vmax.f32 %v2900, %v3235
  %v3579 = vmax.f32 %v2901, %v3237
  %v3580 = vmax.f32 %v2902, %v3239
  %v3581 = vmax.f32 %v2903, %v3241
  %v3582 = vmax.f32 %v2904, %v3243
  %v3583 = vmax.f32 %v2905, %v3245
  %v3584 = vmax.f32 %v2906, %v3247
  %v3585 = vmax.f32 %v2907, %v3249
  %v3586 = vmax.f32 %v2908, %v3251
  %v3587 = vmax.f32 %v2909, %v3253
  %v3588 = vmax.f32 %v2910, %v3255
  %v3589 = vmax.f32 %v2911, %v3257
  %v3590 = vmax.f32 %v2912, %v3259
  %v3591 = vmax.f32 %v2913, %v3261
  %v3592 = vmax.f32 %v2914, %v3263
  %v3593 = vmax.f32 %v2915, %v3265
  %v3594 = vmax.f32 %v2916, %v3267
  %v3595 = vmax.f32 %v2917, %v3269
  %v3596 = vmax.f32 %v2918, %v3271
  %v3597 = vmax.f32 %v2919, %v3273
  %v3598 = vmax.f32 %v2920, %v3275
  %v3599 = vmax.f32 %v2921, %v3277
  %v3600 = vmax.f32 %v2922, %v3279
  %v3601 = vmax.f32 %v2923, %v3281
  %v3602 = vmax.f32 %v2924, %v3283
  %v3603 = vmax.f32 %v2925, %v3285
  %v3604 = vmax.f32 %v2926, %v3287
  %v3605 = vmax.f32 %v2927, %v3289
  %v3606 = vmax.f32 %v2928, %v3291
  %v3607 = vmax.f32 %v2929, %v3293
  %v3608 = vmax.f32 %v2930, %v3295
  %v3609 = vmax.f32 %v2931, %v3297
  %v3610 = vmax.f32 %v2932, %v3299
  %v3611 = vmax.f32 %v2933, %v3301
  %v3612 = vmax.f32 %v2934, %v3303
  %v3613 = vmax.f32 %v2935, %v3305
  %v3614 = vmax.f32 %v2936, %v3307
  %v3615 = vmax.f32 %v2937, %v3309
  %v3616 = vmax.f32 %v2938, %v3311
  %v3617 = vmax.f32 %v2939, %v3313
  %v3618 = vmax.f32 %v2940, %v3315
  %v3619 = vmax.f32 %v2941, %v3317
  %v3620 = vmax.f32 %v2942, %v3319
  %v3621 = vmax.f32 %v2943, %v3321
  %v3622 = vmax.f32 %v2944, %v3323
  %v3623 = vmax.f32 %v2945, %v3325
  %v3624 = vmax.f32 %v2946, %v3327
  %v3625 = vmax.f32 %v2947, %v3329
  %v3626 = vmax.f32 %v2948, %v3331
  %v3627 = vmax.f32 %v2949, %v3333
  %v3628 = vmax.f32 %v2950, %v3335
  %v3629 = vmax.f32 %v2951, %v3337
  %v3630 = vmax.f32 %v2952, %v3339
  %v3631 = vmax.f32 %v2953, %v3341
  %v3632 = vmax.f32 %v2954, %v3343
  %v3633 = vmax.f32 %v2955, %v3345
  %v3634 = vmax.f32 %v2956, %v3347
  %v3635 = vmax.f32 %v2957, %v3349
  %v3636 = vmax.f32 %v2958, %v3351
  %v3637 = vmax.f32 %v2959, %v3353
  %v3638 = vmax.f32 %v2960, %v3355
  %v3639 = vmax.f32 %v2961, %v3357
  %v3640 = vmax.f32 %v2962, %v3359
  %v3641 = vmax.f32 %v2963, %v3361
  %v3642 = vmax.f32 %v2964, %v3363
  %v3643 = vmax.f32 %v2965, %v3365
  %v3644 = vmax.f32 %v2966, %v3367
  %v3645 = vmax.f32 %v2967, %v3369
  %v3646 = vmax.f32 %v2968, %v3371
  %v3647 = vmax.f32 %v2969, %v3373
  %v3648 = vmax.f32 %v2970, %v3375
  %v3649 = vmax.f32 %v2971, %v3377
  %v3650 = vmax.f32 %v2972, %v3379
  %v3651 = vmax.f32 %v2973, %v3381
  %v3652 = vmax.f32 %v2974, %v3383
  %v3653 = vmax.f32 %v2975, %v3385
  %v3654 = vmax.f32 %v2976, %v3387
  %v3655 = vmax.f32 %v2977, %v3389
  %v3656 = vmax.f32 %v2978, %v3391
  %v3657 = vmax.f32 %v2979, %v3393
  %v3658 = vmax.f32 %v2980, %v3395
  %v3659 = vmax.f32 %v2981, %v3397
  %v3660 = vmax.f32 %v2982, %v3399
  %v3661 = vmax.f32 %v2983, %v3401
  %v3662 = vmax.f32 %v2984, %v3403
  %v3663 = vmax.f32 %v2985, %v3405
  %v3664 = vmax.f32 %v2986, %v3407
  %v3665 = vmax.f32 %v2987, %v3409
  %v3666 = vmax.f32 %v2988, %v3411
  %v3667 = vmax.f32 %v2989, %v3413
  %v3668 = vmax.f32 %v2990, %v3415
  %v3669 = vmax.f32 %v2991, %v3417
  %v3670 = vmax.f32 %v2992, %v3419
  %v3671 = vmax.f32 %v2993, %v3421
  %v3672 = vmax.f32 %v2994, %v3423
  %v3673 = vmax.f32 %v2995, %v3425
  %v3674 = vmax.f32 %v2996, %v3427
  %v3675 = vmax.f32 %v2997, %v3429
  %v3676 = vmax.f32 %v2998, %v3431
  %v3677 = vmax.f32 %v2999, %v3433
  %v3678 = vmax.f32 %v3000, %v3435
  %v3679 = vmax.f32 %v3001, %v3437
  %v3680 = vmax.f32 %v3002, %v3439
  %v3681 = vmax.f32 %v3003, %v3441
  %v3682 = vmax.f32 %v3004, %v3443
  %v3683 = vmax.f32 %v3005, %v3445
  %v3684 = vmax.f32 %v3006, %v3447
  %v3685 = vmax.f32 %v3007, %v3449
  %v3686 = vmax.f32 %v3008, %v3451
  %v3687 = vmax.f32 %v3009, %v3453
  %v3688 = vmax.f32 %v3010, %v3455
  %v3689 = vmax.f32 %v3011, %v3457
  %v3690 = vmax.f32 %v3012, %v3459
  %v3691 = vmax.f32 %v3013, %v3461
  %v3692 = vmax.f32 %v3014, %v3463
  %v3693 = vmax.f32 %v3015, %v3465
  %v3694 = vmax.f32 %v3016, %v3467
  %v3695 = vmax.f32 %v3017, %v3469
  %v3696 = vpack.c.bf16 %v3471, %v3470
  %v3697 = vpack.c.bf16 %v3473, %v3472
  %v3698 = vpack.c.bf16 %v3475, %v3474
  %v3699 = vpack.c.bf16 %v3477, %v3476
  %v3700 = vpack.c.bf16 %v3479, %v3478
  %v3701 = vpack.c.bf16 %v3481, %v3480
  %v3702 = vpack.c.bf16 %v3483, %v3482
  %v3703 = vpack.c.bf16 %v3485, %v3484
  %v3704 = vpack.c.bf16 %v3487, %v3486
  %v3705 = vpack.c.bf16 %v3489, %v3488
  %v3706 = vpack.c.bf16 %v3491, %v3490
  %v3707 = vpack.c.bf16 %v3493, %v3492
  %v3708 = vpack.c.bf16 %v3495, %v3494
  %v3709 = vpack.c.bf16 %v3497, %v3496
  %v3710 = vpack.c.bf16 %v3499, %v3498
  %v3711 = vpack.c.bf16 %v3501, %v3500
  %v3712 = vpack.c.bf16 %v3503, %v3502
  %v3713 = vpack.c.bf16 %v3505, %v3504
  %v3714 = vpack.c.bf16 %v3507, %v3506
  %v3715 = vpack.c.bf16 %v3509, %v3508
  %v3716 = vpack.c.bf16 %v3511, %v3510
  %v3717 = vpack.c.bf16 %v3513, %v3512
  %v3718 = vpack.c.bf16 %v3515, %v3514
  %v3719 = vpack.c.bf16 %v3517, %v3516
  %v3720 = vpack.c.bf16 %v3519, %v3518
  %v3721 = vpack.c.bf16 %v3521, %v3520
  %v3722 = vpack.c.bf16 %v3523, %v3522
  %v3723 = vpack.c.bf16 %v3525, %v3524
  %v3724 = vpack.c.bf16 %v3527, %v3526
  %v3725 = vpack.c.bf16 %v3529, %v3528
  %v3726 = vpack.c.bf16 %v3531, %v3530
  %v3727 = vpack.c.bf16 %v3533, %v3532
  %v3728 = vpack.c.bf16 %v3535, %v3534
  %v3729 = vpack.c.bf16 %v3537, %v3536
  %v3730 = vpack.c.bf16 %v3539, %v3538
  %v3731 = vpack.c.bf16 %v3541, %v3540
  %v3732 = vpack.c.bf16 %v3543, %v3542
  %v3733 = vpack.c.bf16 %v3545, %v3544
  %v3734 = vpack.c.bf16 %v3547, %v3546
  %v3735 = vpack.c.bf16 %v3549, %v3548
  %v3736 = vpack.c.bf16 %v3551, %v3550
  %v3737 = vpack.c.bf16 %v3553, %v3552
  %v3738 = vpack.c.bf16 %v3555, %v3554
  %v3739 = vpack.c.bf16 %v3557, %v3556
  %v3740 = vpack.c.bf16 %v3559, %v3558
  %v3741 = vpack.c.bf16 %v3561, %v3560
  %v3742 = vpack.c.bf16 %v3563, %v3562
  %v3743 = vpack.c.bf16 %v3565, %v3564
  %v3744 = vpack.c.bf16 %v3567, %v3566
  %v3745 = vpack.c.bf16 %v3569, %v3568
  %v3746 = vpack.c.bf16 %v3571, %v3570
  %v3747 = vpack.c.bf16 %v3573, %v3572
  %v3748 = vpack.c.bf16 %v3575, %v3574
  %v3749 = vpack.c.bf16 %v3577, %v3576
  %v3750 = vpack.c.bf16 %v3579, %v3578
  %v3751 = vpack.c.bf16 %v3581, %v3580
  %v3752 = vpack.c.bf16 %v3583, %v3582
  %v3753 = vpack.c.bf16 %v3585, %v3584
  %v3754 = vpack.c.bf16 %v3587, %v3586
  %v3755 = vpack.c.bf16 %v3589, %v3588
  %v3756 = vpack.c.bf16 %v3591, %v3590
  %v3757 = vpack.c.bf16 %v3593, %v3592
  %v3758 = vpack.c.bf16 %v3595, %v3594
  %v3759 = vpack.c.bf16 %v3597, %v3596
  %v3760 = vpack.c.bf16 %v3599, %v3598
  %v3761 = vpack.c.bf16 %v3601, %v3600
  %v3762 = vpack.c.bf16 %v3603, %v3602
  %v3763 = vpack.c.bf16 %v3605, %v3604
  %v3764 = vpack.c.bf16 %v3607, %v3606
  %v3765 = vpack.c.bf16 %v3609, %v3608
  %v3766 = vpack.c.bf16 %v3611, %v3610
  %v3767 = vpack.c.bf16 %v3613, %v3612
  %v3768 = vpack.c.bf16 %v3615, %v3614
  %v3769 = vpack.c.bf16 %v3617, %v3616
  %v3770 = vpack.c.bf16 %v3619, %v3618
  %v3771 = vpack.c.bf16 %v3621, %v3620
  %v3772 = vpack.c.bf16 %v3623, %v3622
  %v3773 = vpack.c.bf16 %v3625, %v3624
  %v3774 = vpack.c.bf16 %v3627, %v3626
  %v3775 = vpack.c.bf16 %v3629, %v3628
  %v3776 = vpack.c.bf16 %v3631, %v3630
  %v3777 = vpack.c.bf16 %v3633, %v3632
  %v3778 = vpack.c.bf16 %v3635, %v3634
  %v3779 = vpack.c.bf16 %v3637, %v3636
  %v3780 = vpack.c.bf16 %v3639, %v3638
  %v3781 = vpack.c.bf16 %v3641, %v3640
  %v3782 = vpack.c.bf16 %v3643, %v3642
  %v3783 = vpack.c.bf16 %v3645, %v3644
  %v3784 = vpack.c.bf16 %v3647, %v3646
  %v3785 = vpack.c.bf16 %v3649, %v3648
  %v3786 = vpack.c.bf16 %v3651, %v3650
  %v3787 = vpack.c.bf16 %v3653, %v3652
  %v3788 = vpack.c.bf16 %v3655, %v3654
  %v3789 = vpack.c.bf16 %v3657, %v3656
  %v3790 = vpack.c.bf16 %v3659, %v3658
  %v3791 = vpack.c.bf16 %v3661, %v3660
  %v3792 = vpack.c.bf16 %v3663, %v3662
  %v3793 = vpack.c.bf16 %v3665, %v3664
  %v3794 = vpack.c.bf16 %v3667, %v3666
  %v3795 = vpack.c.bf16 %v3669, %v3668
  %v3796 = vpack.c.bf16 %v3671, %v3670
  %v3797 = vpack.c.bf16 %v3673, %v3672
  %v3798 = vpack.c.bf16 %v3675, %v3674
  %v3799 = vpack.c.bf16 %v3677, %v3676
  %v3800 = vpack.c.bf16 %v3679, %v3678
  %v3801 = vpack.c.bf16 %v3681, %v3680
  %v3802 = vpack.c.bf16 %v3683, %v3682
  %v3803 = vpack.c.bf16 %v3685, %v3684
  %v3804 = vpack.c.bf16 %v3687, %v3686
  %v3805 = vpack.c.bf16 %v3689, %v3688
  %v3806 = vpack.c.bf16 %v3691, %v3690
  %v3807 = vpack.c.bf16 %v3693, %v3692
  %v3808 = vpack.c.bf16 %v3695, %v3694
  %v3922 = vunpack.c.l.b16 %v3696
  %v3923 = vunpack.c.h.b16 %v3696
  %v3924 = vunpack.c.l.b16 %v3697
  %v3925 = vunpack.c.h.b16 %v3697
  %v3926 = vunpack.c.l.b16 %v3698
  %v3927 = vunpack.c.h.b16 %v3698
  %v3928 = vunpack.c.l.b16 %v3699
  %v3929 = vunpack.c.h.b16 %v3699
  %v3930 = vunpack.c.l.b16 %v3700
  %v3931 = vunpack.c.h.b16 %v3700
  %v3932 = vunpack.c.l.b16 %v3701
  %v3933 = vunpack.c.h.b16 %v3701
  %v3934 = vunpack.c.l.b16 %v3702
  %v3935 = vunpack.c.h.b16 %v3702
  %v3936 = vunpack.c.l.b16 %v3703
  %v3937 = vunpack.c.h.b16 %v3703
  %v3938 = vunpack.c.l.b16 %v3704
  %v3939 = vunpack.c.h.b16 %v3704
  %v3940 = vunpack.c.l.b16 %v3705
  %v3941 = vunpack.c.h.b16 %v3705
  %v3942 = vunpack.c.l.b16 %v3706
  %v3943 = vunpack.c.h.b16 %v3706
  %v3944 = vunpack.c.l.b16 %v3707
  %v3945 = vunpack.c.h.b16 %v3707
  %v3946 = vunpack.c.l.b16 %v3708
  %v3947 = vunpack.c.h.b16 %v3708
  %v3948 = vunpack.c.l.b16 %v3709
  %v3949 = vunpack.c.h.b16 %v3709
  %v3950 = vunpack.c.l.b16 %v3710
  %v3951 = vunpack.c.h.b16 %v3710
  %v3952 = vunpack.c.l.b16 %v3711
  %v3953 = vunpack.c.h.b16 %v3711
  %v3954 = vunpack.c.l.b16 %v3712
  %v3955 = vunpack.c.h.b16 %v3712
  %v3956 = vunpack.c.l.b16 %v3713
  %v3957 = vunpack.c.h.b16 %v3713
  %v3958 = vunpack.c.l.b16 %v3714
  %v3959 = vunpack.c.h.b16 %v3714
  %v3960 = vunpack.c.l.b16 %v3715
  %v3961 = vunpack.c.h.b16 %v3715
  %v3962 = vunpack.c.l.b16 %v3716
  %v3963 = vunpack.c.h.b16 %v3716
  %v3964 = vunpack.c.l.b16 %v3717
  %v3965 = vunpack.c.h.b16 %v3717
  %v3966 = vunpack.c.l.b16 %v3718
  %v3967 = vunpack.c.h.b16 %v3718
  %v3968 = vunpack.c.l.b16 %v3719
  %v3969 = vunpack.c.h.b16 %v3719
  %v3970 = vunpack.c.l.b16 %v3720
  %v3971 = vunpack.c.h.b16 %v3720
  %v3972 = vunpack.c.l.b16 %v3721
  %v3973 = vunpack.c.h.b16 %v3721
  %v3974 = vunpack.c.l.b16 %v3722
  %v3975 = vunpack.c.h.b16 %v3722
  %v3976 = vunpack.c.l.b16 %v3723
  %v3977 = vunpack.c.h.b16 %v3723
  %v3978 = vunpack.c.l.b16 %v3724
  %v3979 = vunpack.c.h.b16 %v3724
  %v3980 = vunpack.c.l.b16 %v3725
  %v3981 = vunpack.c.h.b16 %v3725
  %v3982 = vunpack.c.l.b16 %v3726
  %v3983 = vunpack.c.h.b16 %v3726
  %v3984 = vunpack.c.l.b16 %v3727
  %v3985 = vunpack.c.h.b16 %v3727
  %v3986 = vunpack.c.l.b16 %v3728
  %v3987 = vunpack.c.h.b16 %v3728
  %v3988 = vunpack.c.l.b16 %v3729
  %v3989 = vunpack.c.h.b16 %v3729
  %v3990 = vunpack.c.l.b16 %v3730
  %v3991 = vunpack.c.h.b16 %v3730
  %v3992 = vunpack.c.l.b16 %v3731
  %v3993 = vunpack.c.h.b16 %v3731
  %v3994 = vunpack.c.l.b16 %v3732
  %v3995 = vunpack.c.h.b16 %v3732
  %v3996 = vunpack.c.l.b16 %v3733
  %v3997 = vunpack.c.h.b16 %v3733
  %v3998 = vunpack.c.l.b16 %v3734
  %v3999 = vunpack.c.h.b16 %v3734
  %v4000 = vunpack.c.l.b16 %v3735
  %v4001 = vunpack.c.h.b16 %v3735
  %v4002 = vunpack.c.l.b16 %v3736
  %v4003 = vunpack.c.h.b16 %v3736
  %v4004 = vunpack.c.l.b16 %v3737
  %v4005 = vunpack.c.h.b16 %v3737
  %v4006 = vunpack.c.l.b16 %v3738
  %v4007 = vunpack.c.h.b16 %v3738
  %v4008 = vunpack.c.l.b16 %v3739
  %v4009 = vunpack.c.h.b16 %v3739
  %v4010 = vunpack.c.l.b16 %v3740
  %v4011 = vunpack.c.h.b16 %v3740
  %v4012 = vunpack.c.l.b16 %v3741
  %v4013 = vunpack.c.h.b16 %v3741
  %v4014 = vunpack.c.l.b16 %v3742
  %v4015 = vunpack.c.h.b16 %v3742
  %v4016 = vunpack.c.l.b16 %v3743
  %v4017 = vunpack.c.h.b16 %v3743
  %v4018 = vunpack.c.l.b16 %v3744
  %v4019 = vunpack.c.h.b16 %v3744
  %v4020 = vunpack.c.l.b16 %v3745
  %v4021 = vunpack.c.h.b16 %v3745
  %v4022 = vunpack.c.l.b16 %v3746
  %v4023 = vunpack.c.h.b16 %v3746
  %v4024 = vunpack.c.l.b16 %v3747
  %v4025 = vunpack.c.h.b16 %v3747
  %v4026 = vunpack.c.l.b16 %v3748
  %v4027 = vunpack.c.h.b16 %v3748
  %v4028 = vunpack.c.l.b16 %v3749
  %v4029 = vunpack.c.h.b16 %v3749
  %v4030 = vunpack.c.l.b16 %v3750
  %v4031 = vunpack.c.h.b16 %v3750
  %v4032 = vunpack.c.l.b16 %v3751
  %v4033 = vunpack.c.h.b16 %v3751
  %v4034 = vunpack.c.l.b16 %v3752
  %v4035 = vunpack.c.h.b16 %v3752
  %v4036 = vunpack.c.l.b16 %v3753
  %v4037 = vunpack.c.h.b16 %v3753
  %v4038 = vunpack.c.l.b16 %v3754
  %v4039 = vunpack.c.h.b16 %v3754
  %v4040 = vunpack.c.l.b16 %v3755
  %v4041 = vunpack.c.h.b16 %v3755
  %v4042 = vunpack.c.l.b16 %v3756
  %v4043 = vunpack.c.h.b16 %v3756
  %v4044 = vunpack.c.l.b16 %v3757
  %v4045 = vunpack.c.h.b16 %v3757
  %v4046 = vunpack.c.l.b16 %v3758
  %v4047 = vunpack.c.h.b16 %v3758
  %v4048 = vunpack.c.l.b16 %v3759
  %v4049 = vunpack.c.h.b16 %v3759
  %v4050 = vunpack.c.l.b16 %v3760
  %v4051 = vunpack.c.h.b16 %v3760
  %v4052 = vunpack.c.l.b16 %v3761
  %v4053 = vunpack.c.h.b16 %v3761
  %v4054 = vunpack.c.l.b16 %v3762
  %v4055 = vunpack.c.h.b16 %v3762
  %v4056 = vunpack.c.l.b16 %v3763
  %v4057 = vunpack.c.h.b16 %v3763
  %v4058 = vunpack.c.l.b16 %v3764
  %v4059 = vunpack.c.h.b16 %v3764
  %v4060 = vunpack.c.l.b16 %v3765
  %v4061 = vunpack.c.h.b16 %v3765
  %v4062 = vunpack.c.l.b16 %v3766
  %v4063 = vunpack.c.h.b16 %v3766
  %v4064 = vunpack.c.l.b16 %v3767
  %v4065 = vunpack.c.h.b16 %v3767
  %v4066 = vunpack.c.l.b16 %v3768
  %v4067 = vunpack.c.h.b16 %v3768
  %v4068 = vunpack.c.l.b16 %v3769
  %v4069 = vunpack.c.h.b16 %v3769
  %v4070 = vunpack.c.l.b16 %v3770
  %v4071 = vunpack.c.h.b16 %v3770
  %v4072 = vunpack.c.l.b16 %v3771
  %v4073 = vunpack.c.h.b16 %v3771
  %v4074 = vunpack.c.l.b16 %v3772
  %v4075 = vunpack.c.h.b16 %v3772
  %v4076 = vunpack.c.l.b16 %v3773
  %v4077 = vunpack.c.h.b16 %v3773
  %v4078 = vunpack.c.l.b16 %v3774
  %v4079 = vunpack.c.h.b16 %v3774
  %v4080 = vunpack.c.l.b16 %v3775
  %v4081 = vunpack.c.h.b16 %v3775
  %v4082 = vunpack.c.l.b16 %v3776
  %v4083 = vunpack.c.h.b16 %v3776
  %v4084 = vunpack.c.l.b16 %v3777
  %v4085 = vunpack.c.h.b16 %v3777
  %v4086 = vunpack.c.l.b16 %v3778
  %v4087 = vunpack.c.h.b16 %v3778
  %v4088 = vunpack.c.l.b16 %v3779
  %v4089 = vunpack.c.h.b16 %v3779
  %v4090 = vunpack.c.l.b16 %v3780
  %v4091 = vunpack.c.h.b16 %v3780
  %v4092 = vunpack.c.l.b16 %v3781
  %v4093 = vunpack.c.h.b16 %v3781
  %v4094 = vunpack.c.l.b16 %v3782
  %v4095 = vunpack.c.h.b16 %v3782
  %v4096 = vunpack.c.l.b16 %v3783
  %v4097 = vunpack.c.h.b16 %v3783
  %v4098 = vunpack.c.l.b16 %v3784
  %v4099 = vunpack.c.h.b16 %v3784
  %v4100 = vunpack.c.l.b16 %v3785
  %v4101 = vunpack.c.h.b16 %v3785
  %v4102 = vunpack.c.l.b16 %v3786
  %v4103 = vunpack.c.h.b16 %v3786
  %v4104 = vunpack.c.l.b16 %v3787
  %v4105 = vunpack.c.h.b16 %v3787
  %v4106 = vunpack.c.l.b16 %v3788
  %v4107 = vunpack.c.h.b16 %v3788
  %v4108 = vunpack.c.l.b16 %v3789
  %v4109 = vunpack.c.h.b16 %v3789
  %v4110 = vunpack.c.l.b16 %v3790
  %v4111 = vunpack.c.h.b16 %v3790
  %v4112 = vunpack.c.l.b16 %v3791
  %v4113 = vunpack.c.h.b16 %v3791
  %v4114 = vunpack.c.l.b16 %v3792
  %v4115 = vunpack.c.h.b16 %v3792
  %v4116 = vunpack.c.l.b16 %v3793
  %v4117 = vunpack.c.h.b16 %v3793
  %v4118 = vunpack.c.l.b16 %v3794
  %v4119 = vunpack.c.h.b16 %v3794
  %v4120 = vunpack.c.l.b16 %v3795
  %v4121 = vunpack.c.h.b16 %v3795
  %v4122 = vunpack.c.l.b16 %v3796
  %v4123 = vunpack.c.h.b16 %v3796
  %v4124 = vunpack.c.l.b16 %v3797
  %v4125 = vunpack.c.h.b16 %v3797
  %v4126 = vunpack.c.l.b16 %v3798
  %v4127 = vunpack.c.h.b16 %v3798
  %v4128 = vunpack.c.l.b16 %v3799
  %v4129 = vunpack.c.h.b16 %v3799
  %v4130 = vunpack.c.l.b16 %v3800
  %v4131 = vunpack.c.h.b16 %v3800
  %v4132 = vunpack.c.l.b16 %v3801
  %v4133 = vunpack.c.h.b16 %v3801
  %v4134 = vunpack.c.l.b16 %v3802
  %v4135 = vunpack.c.h.b16 %v3802
  %v4136 = vunpack.c.l.b16 %v3803
  %v4137 = vunpack.c.h.b16 %v3803
  %v4138 = vunpack.c.l.b16 %v3804
  %v4139 = vunpack.c.h.b16 %v3804
  %v4140 = vunpack.c.l.b16 %v3805
  %v4141 = vunpack.c.h.b16 %v3805
  %v4142 = vunpack.c.l.b16 %v3806
  %v4143 = vunpack.c.h.b16 %v3806
  %v4144 = vunpack.c.l.b16 %v3807
  %v4145 = vunpack.c.h.b16 %v3807
  %v4146 = vunpack.c.l.b16 %v3808
  %v4147 = vunpack.c.h.b16 %v3808
  %v4148 = vpack.c.b16 %v3922, %v3922
  %v4149 = vpack.c.b16 %v3923, %v3923
  %v4150 = vpack.c.b16 %v3924, %v3924
  %v4151 = vpack.c.b16 %v3925, %v3925
  %v4152 = vpack.c.b16 %v3926, %v3926
  %v4153 = vpack.c.b16 %v3927, %v3927
  %v4154 = vpack.c.b16 %v3928, %v3928
  %v4155 = vpack.c.b16 %v3929, %v3929
  %v4156 = vpack.c.b16 %v3930, %v3930
  %v4157 = vpack.c.b16 %v3931, %v3931
  %v4158 = vpack.c.b16 %v3932, %v3932
  %v4159 = vpack.c.b16 %v3933, %v3933
  %v4160 = vpack.c.b16 %v3934, %v3934
  %v4161 = vpack.c.b16 %v3935, %v3935
  %v4162 = vpack.c.b16 %v3936, %v3936
  %v4163 = vpack.c.b16 %v3937, %v3937
  %v4164 = vpack.c.b16 %v3938, %v3938
  %v4165 = vpack.c.b16 %v3939, %v3939
  %v4166 = vpack.c.b16 %v3940, %v3940
  %v4167 = vpack.c.b16 %v3941, %v3941
  %v4168 = vpack.c.b16 %v3942, %v3942
  %v4169 = vpack.c.b16 %v3943, %v3943
  %v4170 = vpack.c.b16 %v3944, %v3944
  %v4171 = vpack.c.b16 %v3945, %v3945
  %v4172 = vpack.c.b16 %v3946, %v3946
  %v4173 = vpack.c.b16 %v3947, %v3947
  %v4174 = vpack.c.b16 %v3948, %v3948
  %v4175 = vpack.c.b16 %v3949, %v3949
  %v4176 = vpack.c.b16 %v3950, %v3950
  %v4177 = vpack.c.b16 %v3951, %v3951
  %v4178 = vpack.c.b16 %v3952, %v3952
  %v4179 = vpack.c.b16 %v3953, %v3953
  %v4180 = vpack.c.b16 %v3954, %v3954
  %v4181 = vpack.c.b16 %v3955, %v3955
  %v4182 = vpack.c.b16 %v3956, %v3956
  %v4183 = vpack.c.b16 %v3957, %v3957
  %v4184 = vpack.c.b16 %v3958, %v3958
  %v4185 = vpack.c.b16 %v3959, %v3959
  %v4186 = vpack.c.b16 %v3960, %v3960
  %v4187 = vpack.c.b16 %v3961, %v3961
  %v4188 = vpack.c.b16 %v3962, %v3962
  %v4189 = vpack.c.b16 %v3963, %v3963
  %v4190 = vpack.c.b16 %v3964, %v3964
  %v4191 = vpack.c.b16 %v3965, %v3965
  %v4192 = vpack.c.b16 %v3966, %v3966
  %v4193 = vpack.c.b16 %v3967, %v3967
  %v4194 = vpack.c.b16 %v3968, %v3968
  %v4195 = vpack.c.b16 %v3969, %v3969
  %v4196 = vpack.c.b16 %v3970, %v3970
  %v4197 = vpack.c.b16 %v3971, %v3971
  %v4198 = vpack.c.b16 %v3972, %v3972
  %v4199 = vpack.c.b16 %v3973, %v3973
  %v4200 = vpack.c.b16 %v3974, %v3974
  %v4201 = vpack.c.b16 %v3975, %v3975
  %v4202 = vpack.c.b16 %v3976, %v3976
  %v4203 = vpack.c.b16 %v3977, %v3977
  %v4204 = vpack.c.b16 %v3978, %v3978
  %v4205 = vpack.c.b16 %v3979, %v3979
  %v4206 = vpack.c.b16 %v3980, %v3980
  %v4207 = vpack.c.b16 %v3981, %v3981
  %v4208 = vpack.c.b16 %v3982, %v3982
  %v4209 = vpack.c.b16 %v3983, %v3983
  %v4210 = vpack.c.b16 %v3984, %v3984
  %v4211 = vpack.c.b16 %v3985, %v3985
  %v4212 = vpack.c.b16 %v3986, %v3986
  %v4213 = vpack.c.b16 %v3987, %v3987
  %v4214 = vpack.c.b16 %v3988, %v3988
  %v4215 = vpack.c.b16 %v3989, %v3989
  %v4216 = vpack.c.b16 %v3990, %v3990
  %v4217 = vpack.c.b16 %v3991, %v3991
  %v4218 = vpack.c.b16 %v3992, %v3992
  %v4219 = vpack.c.b16 %v3993, %v3993
  %v4220 = vpack.c.b16 %v3994, %v3994
  %v4221 = vpack.c.b16 %v3995, %v3995
  %v4222 = vpack.c.b16 %v3996, %v3996
  %v4223 = vpack.c.b16 %v3997, %v3997
  %v4224 = vpack.c.b16 %v3998, %v3998
  %v4225 = vpack.c.b16 %v3999, %v3999
  %v4226 = vpack.c.b16 %v4000, %v4000
  %v4227 = vpack.c.b16 %v4001, %v4001
  %v4228 = vpack.c.b16 %v4002, %v4002
  %v4229 = vpack.c.b16 %v4003, %v4003
  %v4230 = vpack.c.b16 %v4004, %v4004
  %v4231 = vpack.c.b16 %v4005, %v4005
  %v4232 = vpack.c.b16 %v4006, %v4006
  %v4233 = vpack.c.b16 %v4007, %v4007
  %v4234 = vpack.c.b16 %v4008, %v4008
  %v4235 = vpack.c.b16 %v4009, %v4009
  %v4236 = vpack.c.b16 %v4010, %v4010
  %v4237 = vpack.c.b16 %v4011, %v4011
  %v4238 = vpack.c.b16 %v4012, %v4012
  %v4239 = vpack.c.b16 %v4013, %v4013
  %v4240 = vpack.c.b16 %v4014, %v4014
  %v4241 = vpack.c.b16 %v4015, %v4015
  %v4242 = vpack.c.b16 %v4016, %v4016
  %v4243 = vpack.c.b16 %v4017, %v4017
  %v4244 = vpack.c.b16 %v4018, %v4018
  %v4245 = vpack.c.b16 %v4019, %v4019
  %v4246 = vpack.c.b16 %v4020, %v4020
  %v4247 = vpack.c.b16 %v4021, %v4021
  %v4248 = vpack.c.b16 %v4022, %v4022
  %v4249 = vpack.c.b16 %v4023, %v4023
  %v4250 = vpack.c.b16 %v4024, %v4024
  %v4251 = vpack.c.b16 %v4025, %v4025
  %v4252 = vpack.c.b16 %v4026, %v4026
  %v4253 = vpack.c.b16 %v4027, %v4027
  %v4254 = vpack.c.b16 %v4028, %v4028
  %v4255 = vpack.c.b16 %v4029, %v4029
  %v4256 = vpack.c.b16 %v4030, %v4030
  %v4257 = vpack.c.b16 %v4031, %v4031
  %v4258 = vpack.c.b16 %v4032, %v4032
  %v4259 = vpack.c.b16 %v4033, %v4033
  %v4260 = vpack.c.b16 %v4034, %v4034
  %v4261 = vpack.c.b16 %v4035, %v4035
  %v4262 = vpack.c.b16 %v4036, %v4036
  %v4263 = vpack.c.b16 %v4037, %v4037
  %v4264 = vpack.c.b16 %v4038, %v4038
  %v4265 = vpack.c.b16 %v4039, %v4039
  %v4266 = vpack.c.b16 %v4040, %v4040
  %v4267 = vpack.c.b16 %v4041, %v4041
  %v4268 = vpack.c.b16 %v4042, %v4042
  %v4269 = vpack.c.b16 %v4043, %v4043
  %v4270 = vpack.c.b16 %v4044, %v4044
  %v4271 = vpack.c.b16 %v4045, %v4045
  %v4272 = vpack.c.b16 %v4046, %v4046
  %v4273 = vpack.c.b16 %v4047, %v4047
  %v4274 = vpack.c.b16 %v4048, %v4048
  %v4275 = vpack.c.b16 %v4049, %v4049
  %v4276 = vpack.c.b16 %v4050, %v4050
  %v4277 = vpack.c.b16 %v4051, %v4051
  %v4278 = vpack.c.b16 %v4052, %v4052
  %v4279 = vpack.c.b16 %v4053, %v4053
  %v4280 = vpack.c.b16 %v4054, %v4054
  %v4281 = vpack.c.b16 %v4055, %v4055
  %v4282 = vpack.c.b16 %v4056, %v4056
  %v4283 = vpack.c.b16 %v4057, %v4057
  %v4284 = vpack.c.b16 %v4058, %v4058
  %v4285 = vpack.c.b16 %v4059, %v4059
  %v4286 = vpack.c.b16 %v4060, %v4060
  %v4287 = vpack.c.b16 %v4061, %v4061
  %v4288 = vpack.c.b16 %v4062, %v4062
  %v4289 = vpack.c.b16 %v4063, %v4063
  %v4290 = vpack.c.b16 %v4064, %v4064
  %v4291 = vpack.c.b16 %v4065, %v4065
  %v4292 = vpack.c.b16 %v4066, %v4066
  %v4293 = vpack.c.b16 %v4067, %v4067
  %v4294 = vpack.c.b16 %v4068, %v4068
  %v4295 = vpack.c.b16 %v4069, %v4069
  %v4296 = vpack.c.b16 %v4070, %v4070
  %v4297 = vpack.c.b16 %v4071, %v4071
  %v4298 = vpack.c.b16 %v4072, %v4072
  %v4299 = vpack.c.b16 %v4073, %v4073
  %v4300 = vpack.c.b16 %v4074, %v4074
  %v4301 = vpack.c.b16 %v4075, %v4075
  %v4302 = vpack.c.b16 %v4076, %v4076
  %v4303 = vpack.c.b16 %v4077, %v4077
  %v4304 = vpack.c.b16 %v4078, %v4078
  %v4305 = vpack.c.b16 %v4079, %v4079
  %v4306 = vpack.c.b16 %v4080, %v4080
  %v4307 = vpack.c.b16 %v4081, %v4081
  %v4308 = vpack.c.b16 %v4082, %v4082
  %v4309 = vpack.c.b16 %v4083, %v4083
  %v4310 = vpack.c.b16 %v4084, %v4084
  %v4311 = vpack.c.b16 %v4085, %v4085
  %v4312 = vpack.c.b16 %v4086, %v4086
  %v4313 = vpack.c.b16 %v4087, %v4087
  %v4314 = vpack.c.b16 %v4088, %v4088
  %v4315 = vpack.c.b16 %v4089, %v4089
  %v4316 = vpack.c.b16 %v4090, %v4090
  %v4317 = vpack.c.b16 %v4091, %v4091
  %v4318 = vpack.c.b16 %v4092, %v4092
  %v4319 = vpack.c.b16 %v4093, %v4093
  %v4320 = vpack.c.b16 %v4094, %v4094
  %v4321 = vpack.c.b16 %v4095, %v4095
  %v4322 = vpack.c.b16 %v4096, %v4096
  %v4323 = vpack.c.b16 %v4097, %v4097
  %v4324 = vpack.c.b16 %v4098, %v4098
  %v4325 = vpack.c.b16 %v4099, %v4099
  %v4326 = vpack.c.b16 %v4100, %v4100
  %v4327 = vpack.c.b16 %v4101, %v4101
  %v4328 = vpack.c.b16 %v4102, %v4102
  %v4329 = vpack.c.b16 %v4103, %v4103
  %v4330 = vpack.c.b16 %v4104, %v4104
  %v4331 = vpack.c.b16 %v4105, %v4105
  %v4332 = vpack.c.b16 %v4106, %v4106
  %v4333 = vpack.c.b16 %v4107, %v4107
  %v4334 = vpack.c.b16 %v4108, %v4108
  %v4335 = vpack.c.b16 %v4109, %v4109
  %v4336 = vpack.c.b16 %v4110, %v4110
  %v4337 = vpack.c.b16 %v4111, %v4111
  %v4338 = vpack.c.b16 %v4112, %v4112
  %v4339 = vpack.c.b16 %v4113, %v4113
  %v4340 = vpack.c.b16 %v4114, %v4114
  %v4341 = vpack.c.b16 %v4115, %v4115
  %v4342 = vpack.c.b16 %v4116, %v4116
  %v4343 = vpack.c.b16 %v4117, %v4117
  %v4344 = vpack.c.b16 %v4118, %v4118
  %v4345 = vpack.c.b16 %v4119, %v4119
  %v4346 = vpack.c.b16 %v4120, %v4120
  %v4347 = vpack.c.b16 %v4121, %v4121
  %v4348 = vpack.c.b16 %v4122, %v4122
  %v4349 = vpack.c.b16 %v4123, %v4123
  %v4350 = vpack.c.b16 %v4124, %v4124
  %v4351 = vpack.c.b16 %v4125, %v4125
  %v4352 = vpack.c.b16 %v4126, %v4126
  %v4353 = vpack.c.b16 %v4127, %v4127
  %v4354 = vpack.c.b16 %v4128, %v4128
  %v4355 = vpack.c.b16 %v4129, %v4129
  %v4356 = vpack.c.b16 %v4130, %v4130
  %v4357 = vpack.c.b16 %v4131, %v4131
  %v4358 = vpack.c.b16 %v4132, %v4132
  %v4359 = vpack.c.b16 %v4133, %v4133
  %v4360 = vpack.c.b16 %v4134, %v4134
  %v4361 = vpack.c.b16 %v4135, %v4135
  %v4362 = vpack.c.b16 %v4136, %v4136
  %v4363 = vpack.c.b16 %v4137, %v4137
  %v4364 = vpack.c.b16 %v4138, %v4138
  %v4365 = vpack.c.b16 %v4139, %v4139
  %v4366 = vpack.c.b16 %v4140, %v4140
  %v4367 = vpack.c.b16 %v4141, %v4141
  %v4368 = vpack.c.b16 %v4142, %v4142
  %v4369 = vpack.c.b16 %v4143, %v4143
  %v4370 = vpack.c.b16 %v4144, %v4144
  %v4371 = vpack.c.b16 %v4145, %v4145
  %v4372 = vpack.c.b16 %v4146, %v4146
  %v4373 = vpack.c.b16 %v4147, %v4147
  %vm4600 = vcmask 257024
  %4601 = vst.msk [vmem:[%s3] sm:$0xf] %vm4600, %v4148
  %4602 = vst.msk [vmem:[%s3 + $0x4] sm:$0xf] %vm4600, %v4149
  %4603 = vst.msk [vmem:[%s3 + $0x8] sm:$0xf] %vm4600, %v4150
  %4604 = vst.msk [vmem:[%s3 + $0xc] sm:$0xf] %vm4600, %v4151
  %4605 = vst.msk [vmem:[%s3 + $0x10] sm:$0xf] %vm4600, %v4152
  %4606 = vst.msk [vmem:[%s3 + $0x14] sm:$0xf] %vm4600, %v4153
  %4607 = vst.msk [vmem:[%s3 + $0x18] sm:$0xf] %vm4600, %v4154
  %4608 = vst.msk [vmem:[%s3 + $0x1c] sm:$0xf] %vm4600, %v4155
  %4609 = vst.msk [vmem:[%s3 + $0x20] sm:$0xf] %vm4600, %v4156
  %4610 = vst.msk [vmem:[%s3 + $0x24] sm:$0xf] %vm4600, %v4157
  %4611 = vst.msk [vmem:[%s3 + $0x28] sm:$0xf] %vm4600, %v4158
  %4612 = vst.msk [vmem:[%s3 + $0x2c] sm:$0xf] %vm4600, %v4159
  %4613 = vst.msk [vmem:[%s3 + $0x30] sm:$0xf] %vm4600, %v4160
  %4614 = vst.msk [vmem:[%s3 + $0x34] sm:$0xf] %vm4600, %v4161
  %4615 = vst.msk [vmem:[%s3 + $0x38] sm:$0xf] %vm4600, %v4162
  %4616 = vst.msk [vmem:[%s3 + $0x3c] sm:$0xf] %vm4600, %v4163
  %4617 = vst.msk [vmem:[%s3 + $0x40] sm:$0xf] %vm4600, %v4164
  %4618 = vst.msk [vmem:[%s3 + $0x44] sm:$0xf] %vm4600, %v4165
  %4619 = vst.msk [vmem:[%s3 + $0x48] sm:$0xf] %vm4600, %v4166
  %4620 = vst.msk [vmem:[%s3 + $0x4c] sm:$0xf] %vm4600, %v4167
  %4621 = vst.msk [vmem:[%s3 + $0x50] sm:$0xf] %vm4600, %v4168
  %4622 = vst.msk [vmem:[%s3 + $0x54] sm:$0xf] %vm4600, %v4169
  %4623 = vst.msk [vmem:[%s3 + $0x58] sm:$0xf] %vm4600, %v4170
  %4624 = vst.msk [vmem:[%s3 + $0x5c] sm:$0xf] %vm4600, %v4171
  %4625 = vst.msk [vmem:[%s3 + $0x60] sm:$0xf] %vm4600, %v4172
  %4626 = vst.msk [vmem:[%s3 + $0x64] sm:$0xf] %vm4600, %v4173
  %4627 = vst.msk [vmem:[%s3 + $0x68] sm:$0xf] %vm4600, %v4174
  %4628 = vst.msk [vmem:[%s3 + $0x6c] sm:$0xf] %vm4600, %v4175
  %4629 = vst.msk [vmem:[%s3 + $0x70] sm:$0xf] %vm4600, %v4176
  %4630 = vst.msk [vmem:[%s3 + $0x74] sm:$0xf] %vm4600, %v4177
  %4631 = vst.msk [vmem:[%s3 + $0x78] sm:$0xf] %vm4600, %v4178
  %4632 = vst.msk [vmem:[%s3 + $0x7c] sm:$0xf] %vm4600, %v4179
  %4633 = vst.msk [vmem:[%s3 + $0x80] sm:$0xf] %vm4600, %v4180
  %4634 = vst.msk [vmem:[%s3 + $0x84] sm:$0xf] %vm4600, %v4181
  %4635 = vst.msk [vmem:[%s3 + $0x88] sm:$0xf] %vm4600, %v4182
  %4636 = vst.msk [vmem:[%s3 + $0x8c] sm:$0xf] %vm4600, %v4183
  %4637 = vst.msk [vmem:[%s3 + $0x90] sm:$0xf] %vm4600, %v4184
  %4638 = vst.msk [vmem:[%s3 + $0x94] sm:$0xf] %vm4600, %v4185
  %4639 = vst.msk [vmem:[%s3 + $0x98] sm:$0xf] %vm4600, %v4186
  %4640 = vst.msk [vmem:[%s3 + $0x9c] sm:$0xf] %vm4600, %v4187
  %4641 = vst.msk [vmem:[%s3 + $0xa0] sm:$0xf] %vm4600, %v4188
  %4642 = vst.msk [vmem:[%s3 + $0xa4] sm:$0xf] %vm4600, %v4189
  %4643 = vst.msk [vmem:[%s3 + $0xa8] sm:$0xf] %vm4600, %v4190
  %4644 = vst.msk [vmem:[%s3 + $0xac] sm:$0xf] %vm4600, %v4191
  %4645 = vst.msk [vmem:[%s3 + $0xb0] sm:$0xf] %vm4600, %v4192
  %4646 = vst.msk [vmem:[%s3 + $0xb4] sm:$0xf] %vm4600, %v4193
  %4647 = vst.msk [vmem:[%s3 + $0xb8] sm:$0xf] %vm4600, %v4194
  %4648 = vst.msk [vmem:[%s3 + $0xbc] sm:$0xf] %vm4600, %v4195
  %4649 = vst.msk [vmem:[%s3 + $0xc0] sm:$0xf] %vm4600, %v4196
  %4650 = vst.msk [vmem:[%s3 + $0xc4] sm:$0xf] %vm4600, %v4197
  %4651 = vst.msk [vmem:[%s3 + $0xc8] sm:$0xf] %vm4600, %v4198
  %4652 = vst.msk [vmem:[%s3 + $0xcc] sm:$0xf] %vm4600, %v4199
  %4653 = vst.msk [vmem:[%s3 + $0xd0] sm:$0xf] %vm4600, %v4200
  %4654 = vst.msk [vmem:[%s3 + $0xd4] sm:$0xf] %vm4600, %v4201
  %4655 = vst.msk [vmem:[%s3 + $0xd8] sm:$0xf] %vm4600, %v4202
  %4656 = vst.msk [vmem:[%s3 + $0xdc] sm:$0xf] %vm4600, %v4203
  %4657 = vst.msk [vmem:[%s3 + $0xe0] sm:$0xf] %vm4600, %v4204
  %4658 = vst.msk [vmem:[%s3 + $0xe4] sm:$0xf] %vm4600, %v4205
  %4659 = vst.msk [vmem:[%s3 + $0xe8] sm:$0xf] %vm4600, %v4206
  %4660 = vst.msk [vmem:[%s3 + $0xec] sm:$0xf] %vm4600, %v4207
  %4661 = vst.msk [vmem:[%s3 + $0xf0] sm:$0xf] %vm4600, %v4208
  %4662 = vst.msk [vmem:[%s3 + $0xf4] sm:$0xf] %vm4600, %v4209
  %4663 = vst.msk [vmem:[%s3 + $0xf8] sm:$0xf] %vm4600, %v4210
  %4664 = vst.msk [vmem:[%s3 + $0xfc] sm:$0xf] %vm4600, %v4211
  %4665 = vst.msk [vmem:[%s3 + $0x100] sm:$0xf] %vm4600, %v4212
  %4666 = vst.msk [vmem:[%s3 + $0x104] sm:$0xf] %vm4600, %v4213
  %4667 = vst.msk [vmem:[%s3 + $0x108] sm:$0xf] %vm4600, %v4214
  %4668 = vst.msk [vmem:[%s3 + $0x10c] sm:$0xf] %vm4600, %v4215
  %4669 = vst.msk [vmem:[%s3 + $0x110] sm:$0xf] %vm4600, %v4216
  %4670 = vst.msk [vmem:[%s3 + $0x114] sm:$0xf] %vm4600, %v4217
  %4671 = vst.msk [vmem:[%s3 + $0x118] sm:$0xf] %vm4600, %v4218
  %4672 = vst.msk [vmem:[%s3 + $0x11c] sm:$0xf] %vm4600, %v4219
  %4673 = vst.msk [vmem:[%s3 + $0x120] sm:$0xf] %vm4600, %v4220
  %4674 = vst.msk [vmem:[%s3 + $0x124] sm:$0xf] %vm4600, %v4221
  %4675 = vst.msk [vmem:[%s3 + $0x128] sm:$0xf] %vm4600, %v4222
  %4676 = vst.msk [vmem:[%s3 + $0x12c] sm:$0xf] %vm4600, %v4223
  %4677 = vst.msk [vmem:[%s3 + $0x130] sm:$0xf] %vm4600, %v4224
  %4678 = vst.msk [vmem:[%s3 + $0x134] sm:$0xf] %vm4600, %v4225
  %4679 = vst.msk [vmem:[%s3 + $0x138] sm:$0xf] %vm4600, %v4226
  %4680 = vst.msk [vmem:[%s3 + $0x13c] sm:$0xf] %vm4600, %v4227
  %4681 = vst.msk [vmem:[%s3 + $0x140] sm:$0xf] %vm4600, %v4228
  %4682 = vst.msk [vmem:[%s3 + $0x144] sm:$0xf] %vm4600, %v4229
  %4683 = vst.msk [vmem:[%s3 + $0x148] sm:$0xf] %vm4600, %v4230
  %4684 = vst.msk [vmem:[%s3 + $0x14c] sm:$0xf] %vm4600, %v4231
  %4685 = vst.msk [vmem:[%s3 + $0x150] sm:$0xf] %vm4600, %v4232
  %4686 = vst.msk [vmem:[%s3 + $0x154] sm:$0xf] %vm4600, %v4233
  %4687 = vst.msk [vmem:[%s3 + $0x158] sm:$0xf] %vm4600, %v4234
  %4688 = vst.msk [vmem:[%s3 + $0x15c] sm:$0xf] %vm4600, %v4235
  %4689 = vst.msk [vmem:[%s3 + $0x160] sm:$0xf] %vm4600, %v4236
  %4690 = vst.msk [vmem:[%s3 + $0x164] sm:$0xf] %vm4600, %v4237
  %4691 = vst.msk [vmem:[%s3 + $0x168] sm:$0xf] %vm4600, %v4238
  %4692 = vst.msk [vmem:[%s3 + $0x16c] sm:$0xf] %vm4600, %v4239
  %4693 = vst.msk [vmem:[%s3 + $0x170] sm:$0xf] %vm4600, %v4240
  %4694 = vst.msk [vmem:[%s3 + $0x174] sm:$0xf] %vm4600, %v4241
  %4695 = vst.msk [vmem:[%s3 + $0x178] sm:$0xf] %vm4600, %v4242
  %4696 = vst.msk [vmem:[%s3 + $0x17c] sm:$0xf] %vm4600, %v4243
  %4697 = vst.msk [vmem:[%s3 + $0x180] sm:$0xf] %vm4600, %v4244
  %4698 = vst.msk [vmem:[%s3 + $0x184] sm:$0xf] %vm4600, %v4245
  %4699 = vst.msk [vmem:[%s3 + $0x188] sm:$0xf] %vm4600, %v4246
  %4700 = vst.msk [vmem:[%s3 + $0x18c] sm:$0xf] %vm4600, %v4247
  %4701 = vst.msk [vmem:[%s3 + $0x190] sm:$0xf] %vm4600, %v4248
  %4702 = vst.msk [vmem:[%s3 + $0x194] sm:$0xf] %vm4600, %v4249
  %4703 = vst.msk [vmem:[%s3 + $0x198] sm:$0xf] %vm4600, %v4250
  %4704 = vst.msk [vmem:[%s3 + $0x19c] sm:$0xf] %vm4600, %v4251
  %4705 = vst.msk [vmem:[%s3 + $0x1a0] sm:$0xf] %vm4600, %v4252
  %4706 = vst.msk [vmem:[%s3 + $0x1a4] sm:$0xf] %vm4600, %v4253
  %4707 = vst.msk [vmem:[%s3 + $0x1a8] sm:$0xf] %vm4600, %v4254
  %4708 = vst.msk [vmem:[%s3 + $0x1ac] sm:$0xf] %vm4600, %v4255
  %4709 = vst.msk [vmem:[%s3 + $0x1b0] sm:$0xf] %vm4600, %v4256
  %4710 = vst.msk [vmem:[%s3 + $0x1b4] sm:$0xf] %vm4600, %v4257
  %4711 = vst.msk [vmem:[%s3 + $0x1b8] sm:$0xf] %vm4600, %v4258
  %4712 = vst.msk [vmem:[%s3 + $0x1bc] sm:$0xf] %vm4600, %v4259
  %4713 = vst.msk [vmem:[%s3 + $0x1c0] sm:$0xf] %vm4600, %v4260
  %4714 = vst.msk [vmem:[%s3 + $0x1c4] sm:$0xf] %vm4600, %v4261
  %4715 = vst.msk [vmem:[%s3 + $0x1c8] sm:$0xf] %vm4600, %v4262
  %4716 = vst.msk [vmem:[%s3 + $0x1cc] sm:$0xf] %vm4600, %v4263
  %4717 = vst.msk [vmem:[%s3 + $0x1d0] sm:$0xf] %vm4600, %v4264
  %4718 = vst.msk [vmem:[%s3 + $0x1d4] sm:$0xf] %vm4600, %v4265
  %4719 = vst.msk [vmem:[%s3 + $0x1d8] sm:$0xf] %vm4600, %v4266
  %4720 = vst.msk [vmem:[%s3 + $0x1dc] sm:$0xf] %vm4600, %v4267
  %4721 = vst.msk [vmem:[%s3 + $0x1e0] sm:$0xf] %vm4600, %v4268
  %4722 = vst.msk [vmem:[%s3 + $0x1e4] sm:$0xf] %vm4600, %v4269
  %4723 = vst.msk [vmem:[%s3 + $0x1e8] sm:$0xf] %vm4600, %v4270
  %4724 = vst.msk [vmem:[%s3 + $0x1ec] sm:$0xf] %vm4600, %v4271
  %4725 = vst.msk [vmem:[%s3 + $0x1f0] sm:$0xf] %vm4600, %v4272
  %4726 = vst.msk [vmem:[%s3 + $0x1f4] sm:$0xf] %vm4600, %v4273
  %4727 = vst.msk [vmem:[%s3 + $0x1f8] sm:$0xf] %vm4600, %v4274
  %4728 = vst.msk [vmem:[%s3 + $0x1fc] sm:$0xf] %vm4600, %v4275
  %4729 = vst.msk [vmem:[%s3 + $0x200] sm:$0xf] %vm4600, %v4276
  %4730 = vst.msk [vmem:[%s3 + $0x204] sm:$0xf] %vm4600, %v4277
  %4731 = vst.msk [vmem:[%s3 + $0x208] sm:$0xf] %vm4600, %v4278
  %4732 = vst.msk [vmem:[%s3 + $0x20c] sm:$0xf] %vm4600, %v4279
  %4733 = vst.msk [vmem:[%s3 + $0x210] sm:$0xf] %vm4600, %v4280
  %4734 = vst.msk [vmem:[%s3 + $0x214] sm:$0xf] %vm4600, %v4281
  %4735 = vst.msk [vmem:[%s3 + $0x218] sm:$0xf] %vm4600, %v4282
  %4736 = vst.msk [vmem:[%s3 + $0x21c] sm:$0xf] %vm4600, %v4283
  %4737 = vst.msk [vmem:[%s3 + $0x220] sm:$0xf] %vm4600, %v4284
  %4738 = vst.msk [vmem:[%s3 + $0x224] sm:$0xf] %vm4600, %v4285
  %4739 = vst.msk [vmem:[%s3 + $0x228] sm:$0xf] %vm4600, %v4286
  %4740 = vst.msk [vmem:[%s3 + $0x22c] sm:$0xf] %vm4600, %v4287
  %4741 = vst.msk [vmem:[%s3 + $0x230] sm:$0xf] %vm4600, %v4288
  %4742 = vst.msk [vmem:[%s3 + $0x234] sm:$0xf] %vm4600, %v4289
  %4743 = vst.msk [vmem:[%s3 + $0x238] sm:$0xf] %vm4600, %v4290
  %4744 = vst.msk [vmem:[%s3 + $0x23c] sm:$0xf] %vm4600, %v4291
  %4745 = vst.msk [vmem:[%s3 + $0x240] sm:$0xf] %vm4600, %v4292
  %4746 = vst.msk [vmem:[%s3 + $0x244] sm:$0xf] %vm4600, %v4293
  %4747 = vst.msk [vmem:[%s3 + $0x248] sm:$0xf] %vm4600, %v4294
  %4748 = vst.msk [vmem:[%s3 + $0x24c] sm:$0xf] %vm4600, %v4295
  %4749 = vst.msk [vmem:[%s3 + $0x250] sm:$0xf] %vm4600, %v4296
  %4750 = vst.msk [vmem:[%s3 + $0x254] sm:$0xf] %vm4600, %v4297
  %4751 = vst.msk [vmem:[%s3 + $0x258] sm:$0xf] %vm4600, %v4298
  %4752 = vst.msk [vmem:[%s3 + $0x25c] sm:$0xf] %vm4600, %v4299
  %4753 = vst.msk [vmem:[%s3 + $0x260] sm:$0xf] %vm4600, %v4300
  %4754 = vst.msk [vmem:[%s3 + $0x264] sm:$0xf] %vm4600, %v4301
  %4755 = vst.msk [vmem:[%s3 + $0x268] sm:$0xf] %vm4600, %v4302
  %4756 = vst.msk [vmem:[%s3 + $0x26c] sm:$0xf] %vm4600, %v4303
  %4757 = vst.msk [vmem:[%s3 + $0x270] sm:$0xf] %vm4600, %v4304
  %4758 = vst.msk [vmem:[%s3 + $0x274] sm:$0xf] %vm4600, %v4305
  %4759 = vst.msk [vmem:[%s3 + $0x278] sm:$0xf] %vm4600, %v4306
  %4760 = vst.msk [vmem:[%s3 + $0x27c] sm:$0xf] %vm4600, %v4307
  %4761 = vst.msk [vmem:[%s3 + $0x280] sm:$0xf] %vm4600, %v4308
  %4762 = vst.msk [vmem:[%s3 + $0x284] sm:$0xf] %vm4600, %v4309
  %4763 = vst.msk [vmem:[%s3 + $0x288] sm:$0xf] %vm4600, %v4310
  %4764 = vst.msk [vmem:[%s3 + $0x28c] sm:$0xf] %vm4600, %v4311
  %4765 = vst.msk [vmem:[%s3 + $0x290] sm:$0xf] %vm4600, %v4312
  %4766 = vst.msk [vmem:[%s3 + $0x294] sm:$0xf] %vm4600, %v4313
  %4767 = vst.msk [vmem:[%s3 + $0x298] sm:$0xf] %vm4600, %v4314
  %4768 = vst.msk [vmem:[%s3 + $0x29c] sm:$0xf] %vm4600, %v4315
  %4769 = vst.msk [vmem:[%s3 + $0x2a0] sm:$0xf] %vm4600, %v4316
  %4770 = vst.msk [vmem:[%s3 + $0x2a4] sm:$0xf] %vm4600, %v4317
  %4771 = vst.msk [vmem:[%s3 + $0x2a8] sm:$0xf] %vm4600, %v4318
  %4772 = vst.msk [vmem:[%s3 + $0x2ac] sm:$0xf] %vm4600, %v4319
  %4773 = vst.msk [vmem:[%s3 + $0x2b0] sm:$0xf] %vm4600, %v4320
  %4774 = vst.msk [vmem:[%s3 + $0x2b4] sm:$0xf] %vm4600, %v4321
  %4775 = vst.msk [vmem:[%s3 + $0x2b8] sm:$0xf] %vm4600, %v4322
  %4776 = vst.msk [vmem:[%s3 + $0x2bc] sm:$0xf] %vm4600, %v4323
  %4777 = vst.msk [vmem:[%s3 + $0x2c0] sm:$0xf] %vm4600, %v4324
  %4778 = vst.msk [vmem:[%s3 + $0x2c4] sm:$0xf] %vm4600, %v4325
  %4779 = vst.msk [vmem:[%s3 + $0x2c8] sm:$0xf] %vm4600, %v4326
  %4780 = vst.msk [vmem:[%s3 + $0x2cc] sm:$0xf] %vm4600, %v4327
  %4781 = vst.msk [vmem:[%s3 + $0x2d0] sm:$0xf] %vm4600, %v4328
  %4782 = vst.msk [vmem:[%s3 + $0x2d4] sm:$0xf] %vm4600, %v4329
  %4783 = vst.msk [vmem:[%s3 + $0x2d8] sm:$0xf] %vm4600, %v4330
  %4784 = vst.msk [vmem:[%s3 + $0x2dc] sm:$0xf] %vm4600, %v4331
  %4785 = vst.msk [vmem:[%s3 + $0x2e0] sm:$0xf] %vm4600, %v4332
  %4786 = vst.msk [vmem:[%s3 + $0x2e4] sm:$0xf] %vm4600, %v4333
  %4787 = vst.msk [vmem:[%s3 + $0x2e8] sm:$0xf] %vm4600, %v4334
  %4788 = vst.msk [vmem:[%s3 + $0x2ec] sm:$0xf] %vm4600, %v4335
  %4789 = vst.msk [vmem:[%s3 + $0x2f0] sm:$0xf] %vm4600, %v4336
  %4790 = vst.msk [vmem:[%s3 + $0x2f4] sm:$0xf] %vm4600, %v4337
  %4791 = vst.msk [vmem:[%s3 + $0x2f8] sm:$0xf] %vm4600, %v4338
  %4792 = vst.msk [vmem:[%s3 + $0x2fc] sm:$0xf] %vm4600, %v4339
  %4793 = vst.msk [vmem:[%s3 + $0x300] sm:$0xf] %vm4600, %v4340
  %4794 = vst.msk [vmem:[%s3 + $0x304] sm:$0xf] %vm4600, %v4341
  %4795 = vst.msk [vmem:[%s3 + $0x308] sm:$0xf] %vm4600, %v4342
  %4796 = vst.msk [vmem:[%s3 + $0x30c] sm:$0xf] %vm4600, %v4343
  %4797 = vst.msk [vmem:[%s3 + $0x310] sm:$0xf] %vm4600, %v4344
  %4798 = vst.msk [vmem:[%s3 + $0x314] sm:$0xf] %vm4600, %v4345
  %4799 = vst.msk [vmem:[%s3 + $0x318] sm:$0xf] %vm4600, %v4346
  %4800 = vst.msk [vmem:[%s3 + $0x31c] sm:$0xf] %vm4600, %v4347
  %4801 = vst.msk [vmem:[%s3 + $0x320] sm:$0xf] %vm4600, %v4348
  %4802 = vst.msk [vmem:[%s3 + $0x324] sm:$0xf] %vm4600, %v4349
  %4803 = vst.msk [vmem:[%s3 + $0x328] sm:$0xf] %vm4600, %v4350
  %4804 = vst.msk [vmem:[%s3 + $0x32c] sm:$0xf] %vm4600, %v4351
  %4805 = vst.msk [vmem:[%s3 + $0x330] sm:$0xf] %vm4600, %v4352
  %4806 = vst.msk [vmem:[%s3 + $0x334] sm:$0xf] %vm4600, %v4353
  %4807 = vst.msk [vmem:[%s3 + $0x338] sm:$0xf] %vm4600, %v4354
  %4808 = vst.msk [vmem:[%s3 + $0x33c] sm:$0xf] %vm4600, %v4355
  %4809 = vst.msk [vmem:[%s3 + $0x340] sm:$0xf] %vm4600, %v4356
  %4810 = vst.msk [vmem:[%s3 + $0x344] sm:$0xf] %vm4600, %v4357
  %4811 = vst.msk [vmem:[%s3 + $0x348] sm:$0xf] %vm4600, %v4358
  %4812 = vst.msk [vmem:[%s3 + $0x34c] sm:$0xf] %vm4600, %v4359
  %4813 = vst.msk [vmem:[%s3 + $0x350] sm:$0xf] %vm4600, %v4360
  %4814 = vst.msk [vmem:[%s3 + $0x354] sm:$0xf] %vm4600, %v4361
  %4815 = vst.msk [vmem:[%s3 + $0x358] sm:$0xf] %vm4600, %v4362
  %4816 = vst.msk [vmem:[%s3 + $0x35c] sm:$0xf] %vm4600, %v4363
  %4817 = vst.msk [vmem:[%s3 + $0x360] sm:$0xf] %vm4600, %v4364
  %4818 = vst.msk [vmem:[%s3 + $0x364] sm:$0xf] %vm4600, %v4365
  %4819 = vst.msk [vmem:[%s3 + $0x368] sm:$0xf] %vm4600, %v4366
  %4820 = vst.msk [vmem:[%s3 + $0x36c] sm:$0xf] %vm4600, %v4367
  %4821 = vst.msk [vmem:[%s3 + $0x370] sm:$0xf] %vm4600, %v4368
  %4822 = vst.msk [vmem:[%s3 + $0x374] sm:$0xf] %vm4600, %v4369
  %4823 = vst.msk [vmem:[%s3 + $0x378] sm:$0xf] %vm4600, %v4370
  %4824 = vst.msk [vmem:[%s3 + $0x37c] sm:$0xf] %vm4600, %v4371
  %4825 = vst.msk [vmem:[%s3 + $0x380] sm:$0xf] %vm4600, %v4372
  %4826 = vst.msk [vmem:[%s3 + $0x384] sm:$0xf] %vm4600, %v4373
  // Predicated region
  $region14: #{forward.4} parent=0 // pred_check
    _
  $region15: #{forward.4} parent=0 // pred_check_branch
    %4828 = sbr.rel (0) target = $region17
  $region16: #{forward.4} parent=0 // pred_region
    _
  $region17: #{forward.4} parent=0 // pred_fallthru
    _
  // Predicated region
  $region18: #{forward.4} parent=0 // pred_check
    _
  $region19: #{forward.4} parent=0 // pred_check_branch
    %4830 = sbr.rel (0) target = $region21
  $region20: #{forward.4} parent=0 // pred_region
    _
  $region21: #{forward.4} parent=0 // pred_fallthru
    _

// kernel: forward.5
$region0: #{forward.5}
  #allocation0 [shape = 'u32[]', space=smem, size = 0x4, offset = 0x4, fixed_abs, tag = 'smem constant byte address 0x4 - core index']
  #allocation1 [shape = 'u32[144,128]{1,0:T(1,128)}', space=vmem, size = 0x12000, scoped, tag = 'internal scratch']
  %s0 = inlined_call_operand.vmem [shape: bf16[4,400,288], index: 0, kind: input, shape index: {}]
  %s1 = inlined_call_operand.vmem [shape: bf16[288,64], index: 1, kind: input, shape index: {}]
  %s2 = inlined_call_operand.vmem [shape: f32[1,64], index: 2, kind: input, shape index: {}]
  %s3 = inlined_call_operand.vmem [shape: bf16[400,64], index: 3, kind: output, shape index: {}]
  %s4 = sld [smem:[#allocation0]]
  $region22: #{forward.5} parent=0
    _
  %s6 = ssub.s32 1, %s4
  %s7 = scalar_select 0, %s6, %s4
  // Predicated region
  $region2: #{forward.5} parent=0 // pred_check
    _
  $region3: #{forward.5} parent=0 // pred_check_branch
    %9 = sbr.rel (0) target = $region5
  $region4: #{forward.5} parent=0 // pred_region
    _
  $region5: #{forward.5} parent=0 // pred_fallthru
    _
  // Predicated region
  $region6: #{forward.5} parent=0 // pred_check
    _
  $region7: #{forward.5} parent=0 // pred_check_branch
    %11 = sbr.rel (0) target = $region9
  $region8: #{forward.5} parent=0 // pred_region
    _
  $region9: #{forward.5} parent=0 // pred_fallthru
    _
  // Predicated region
  $region10: #{forward.5} parent=0 // pred_check
    _
  $region11: #{forward.5} parent=0 // pred_check_branch
    %13 = sbr.rel (0) target = $region13
  $region12: #{forward.5} parent=0 // pred_region
    _
  $region13: #{forward.5} parent=0 // pred_fallthru
    _
  %v15 = vld [vmem:[%s0] sm:$0xff]
  %v16 = vld [vmem:[%s0 + $0x8] sm:$0xf]
  %v17 = vld [vmem:[%s0 + $0xc] sm:$0xff]
  %v18 = vld [vmem:[%s0 + $0x14] sm:$0xf]
  %v19 = vld [vmem:[%s0 + $0x18] sm:$0xff]
  %v20 = vld [vmem:[%s0 + $0x20] sm:$0xf]
  %v21 = vld [vmem:[%s0 + $0x24] sm:$0xff]
  %v22 = vld [vmem:[%s0 + $0x2c] sm:$0xf]
  %v23 = vld [vmem:[%s0 + $0x30] sm:$0xff]
  %v24 = vld [vmem:[%s0 + $0x38] sm:$0xf]
  %v25 = vld [vmem:[%s0 + $0x3c] sm:$0xff]
  %v26 = vld [vmem:[%s0 + $0x44] sm:$0xf]
  %v27 = vld [vmem:[%s0 + $0x48] sm:$0xff]
  %v28 = vld [vmem:[%s0 + $0x50] sm:$0xf]
  %v29 = vld [vmem:[%s0 + $0x54] sm:$0xff]
  %v30 = vld [vmem:[%s0 + $0x5c] sm:$0xf]
  %v31 = vld [vmem:[%s0 + $0x60] sm:$0xff]
  %v32 = vld [vmem:[%s0 + $0x68] sm:$0xf]
  %v33 = vld [vmem:[%s0 + $0x6c] sm:$0xff]
  %v34 = vld [vmem:[%s0 + $0x74] sm:$0xf]
  %v35 = vld [vmem:[%s0 + $0x78] sm:$0xff]
  %v36 = vld [vmem:[%s0 + $0x80] sm:$0xf]
  %v37 = vld [vmem:[%s0 + $0x84] sm:$0xff]
  %v38 = vld [vmem:[%s0 + $0x8c] sm:$0xf]
  %v39 = vld [vmem:[%s0 + $0x90] sm:$0xff]
  %v40 = vld [vmem:[%s0 + $0x98] sm:$0xf]
  %v41 = vld [vmem:[%s0 + $0x9c] sm:$0xff]
  %v42 = vld [vmem:[%s0 + $0xa4] sm:$0xf]
  %v43 = vld [vmem:[%s0 + $0xa8] sm:$0xff]
  %v44 = vld [vmem:[%s0 + $0xb0] sm:$0xf]
  %v45 = vld [vmem:[%s0 + $0xb4] sm:$0xff]
  %v46 = vld [vmem:[%s0 + $0xbc] sm:$0xf]
  %v47 = vld [vmem:[%s0 + $0xc0] sm:$0xff]
  %v48 = vld [vmem:[%s0 + $0xc8] sm:$0xf]
  %v49 = vld [vmem:[%s0 + $0xcc] sm:$0xff]
  %v50 = vld [vmem:[%s0 + $0xd4] sm:$0xf]
  %v51 = vld [vmem:[%s0 + $0xd8] sm:$0xff]
  %v52 = vld [vmem:[%s0 + $0xe0] sm:$0xf]
  %v53 = vld [vmem:[%s0 + $0xe4] sm:$0xff]
  %v54 = vld [vmem:[%s0 + $0xec] sm:$0xf]
  %v55 = vld [vmem:[%s0 + $0xf0] sm:$0xff]
  %v56 = vld [vmem:[%s0 + $0xf8] sm:$0xf]
  %v57 = vld [vmem:[%s0 + $0xfc] sm:$0xff]
  %v58 = vld [vmem:[%s0 + $0x104] sm:$0xf]
  %v59 = vld [vmem:[%s0 + $0x108] sm:$0xff]
  %v60 = vld [vmem:[%s0 + $0x110] sm:$0xf]
  %v61 = vld [vmem:[%s0 + $0x114] sm:$0xff]
  %v62 = vld [vmem:[%s0 + $0x11c] sm:$0xf]
  %v63 = vld [vmem:[%s0 + $0x120] sm:$0xff]
  %v64 = vld [vmem:[%s0 + $0x128] sm:$0xf]
  %v65 = vld [vmem:[%s0 + $0x12c] sm:$0xff]
  %v66 = vld [vmem:[%s0 + $0x134] sm:$0xf]
  %v67 = vld [vmem:[%s0 + $0x138] sm:$0xff]
  %v68 = vld [vmem:[%s0 + $0x140] sm:$0xf]
  %v69 = vld [vmem:[%s0 + $0x144] sm:$0xff]
  %v70 = vld [vmem:[%s0 + $0x14c] sm:$0xf]
  %v71 = vld [vmem:[%s0 + $0x150] sm:$0xff]
  %v72 = vld [vmem:[%s0 + $0x158] sm:$0xf]
  %v73 = vld [vmem:[%s0 + $0x15c] sm:$0xff]
  %v74 = vld [vmem:[%s0 + $0x164] sm:$0xf]
  %v75 = vld [vmem:[%s0 + $0x168] sm:$0xff]
  %v76 = vld [vmem:[%s0 + $0x170] sm:$0xf]
  %v77 = vld [vmem:[%s0 + $0x174] sm:$0xff]
  %v78 = vld [vmem:[%s0 + $0x17c] sm:$0xf]
  %v79 = vld [vmem:[%s0 + $0x180] sm:$0xff]
  %v80 = vld [vmem:[%s0 + $0x188] sm:$0xf]
  %v81 = vld [vmem:[%s0 + $0x18c] sm:$0xff]
  %v82 = vld [vmem:[%s0 + $0x194] sm:$0xf]
  %v83 = vld [vmem:[%s0 + $0x198] sm:$0xff]
  %v84 = vld [vmem:[%s0 + $0x1a0] sm:$0xf]
  %v85 = vld [vmem:[%s0 + $0x1a4] sm:$0xff]
  %v86 = vld [vmem:[%s0 + $0x1ac] sm:$0xf]
  %v87 = vld [vmem:[%s0 + $0x1b0] sm:$0xff]
  %v88 = vld [vmem:[%s0 + $0x1b8] sm:$0xf]
  %v89 = vld [vmem:[%s0 + $0x1bc] sm:$0xff]
  %v90 = vld [vmem:[%s0 + $0x1c4] sm:$0xf]
  %v91 = vld [vmem:[%s0 + $0x1c8] sm:$0xff]
  %v92 = vld [vmem:[%s0 + $0x1d0] sm:$0xf]
  %v93 = vld [vmem:[%s0 + $0x1d4] sm:$0xff]
  %v94 = vld [vmem:[%s0 + $0x1dc] sm:$0xf]
  %v95 = vld [vmem:[%s0 + $0x1e0] sm:$0xff]
  %v96 = vld [vmem:[%s0 + $0x1e8] sm:$0xf]
  %v97 = vld [vmem:[%s0 + $0x1ec] sm:$0xff]
  %v98 = vld [vmem:[%s0 + $0x1f4] sm:$0xf]
  %v99 = vld [vmem:[%s0 + $0x1f8] sm:$0xff]
  %v100 = vld [vmem:[%s0 + $0x200] sm:$0xf]
  %v101 = vld [vmem:[%s0 + $0x204] sm:$0xff]
  %v102 = vld [vmem:[%s0 + $0x20c] sm:$0xf]
  %v103 = vld [vmem:[%s0 + $0x210] sm:$0xff]
  %v104 = vld [vmem:[%s0 + $0x218] sm:$0xf]
  %v105 = vld [vmem:[%s0 + $0x21c] sm:$0xff]
  %v106 = vld [vmem:[%s0 + $0x224] sm:$0xf]
  %v107 = vld [vmem:[%s0 + $0x228] sm:$0xff]
  %v108 = vld [vmem:[%s0 + $0x230] sm:$0xf]
  %v109 = vld [vmem:[%s0 + $0x234] sm:$0xff]
  %v110 = vld [vmem:[%s0 + $0x23c] sm:$0xf]
  %v111 = vld [vmem:[%s0 + $0x240] sm:$0xff]
  %v112 = vld [vmem:[%s0 + $0x248] sm:$0xf]
  %v113 = vld [vmem:[%s0 + $0x24c] sm:$0xff]
  %v114 = vld [vmem:[%s0 + $0x254] sm:$0xf]
  %v115 = vld [vmem:[%s0 + $0x258] sm:$0xff]
  %v116 = vld [vmem:[%s0 + $0x260] sm:$0xf]
  %v117 = vld [vmem:[%s0 + $0x264] sm:$0xff]
  %v118 = vld [vmem:[%s0 + $0x26c] sm:$0xf]
  %v119 = vld [vmem:[%s0 + $0x270] sm:$0xff]
  %v120 = vld [vmem:[%s0 + $0x278] sm:$0xf]
  %v121 = vld [vmem:[%s0 + $0x27c] sm:$0xff]
  %v122 = vld [vmem:[%s0 + $0x284] sm:$0xf]
  %v123 = vld [vmem:[%s0 + $0x288] sm:$0xff]
  %v124 = vld [vmem:[%s0 + $0x290] sm:$0xf]
  %v125 = vld [vmem:[%s0 + $0x294] sm:$0xff]
  %v126 = vld [vmem:[%s0 + $0x29c] sm:$0xf]
  %v127 = vld [vmem:[%s0 + $0x2a0] sm:$0xff]
  %v128 = vld [vmem:[%s0 + $0x2a8] sm:$0xf]
  %v129 = vld [vmem:[%s0 + $0x2ac] sm:$0xff]
  %v130 = vld [vmem:[%s0 + $0x2b4] sm:$0xf]
  %v131 = vld [vmem:[%s0 + $0x2b8] sm:$0xff]
  %v132 = vld [vmem:[%s0 + $0x2c0] sm:$0xf]
  %v133 = vld [vmem:[%s0 + $0x2c4] sm:$0xff]
  %v134 = vld [vmem:[%s0 + $0x2cc] sm:$0xf]
  %v135 = vld [vmem:[%s0 + $0x2d0] sm:$0xff]
  %v136 = vld [vmem:[%s0 + $0x2d8] sm:$0xf]
  %v137 = vld [vmem:[%s0 + $0x2dc] sm:$0xff]
  %v138 = vld [vmem:[%s0 + $0x2e4] sm:$0xf]
  %v139 = vld [vmem:[%s0 + $0x2e8] sm:$0xff]
  %v140 = vld [vmem:[%s0 + $0x2f0] sm:$0xf]
  %v141 = vld [vmem:[%s0 + $0x2f4] sm:$0xff]
  %v142 = vld [vmem:[%s0 + $0x2fc] sm:$0xf]
  %v143 = vld [vmem:[%s0 + $0x300] sm:$0xff]
  %v144 = vld [vmem:[%s0 + $0x308] sm:$0xf]
  %v145 = vld [vmem:[%s0 + $0x30c] sm:$0xff]
  %v146 = vld [vmem:[%s0 + $0x314] sm:$0xf]
  %v147 = vld [vmem:[%s0 + $0x318] sm:$0xff]
  %v148 = vld [vmem:[%s0 + $0x320] sm:$0xf]
  %v149 = vld [vmem:[%s0 + $0x324] sm:$0xff]
  %v150 = vld [vmem:[%s0 + $0x32c] sm:$0xf]
  %v151 = vld [vmem:[%s0 + $0x330] sm:$0xff]
  %v152 = vld [vmem:[%s0 + $0x338] sm:$0xf]
  %v153 = vld [vmem:[%s0 + $0x33c] sm:$0xff]
  %v154 = vld [vmem:[%s0 + $0x344] sm:$0xf]
  %v155 = vld [vmem:[%s0 + $0x348] sm:$0xff]
  %v156 = vld [vmem:[%s0 + $0x350] sm:$0xf]
  %v157 = vld [vmem:[%s0 + $0x354] sm:$0xff]
  %v158 = vld [vmem:[%s0 + $0x35c] sm:$0xf]
  %v159 = vld [vmem:[%s0 + $0x360] sm:$0xff]
  %v160 = vld [vmem:[%s0 + $0x368] sm:$0xf]
  %v161 = vld [vmem:[%s0 + $0x36c] sm:$0xff]
  %v162 = vld [vmem:[%s0 + $0x374] sm:$0xf]
  %v163 = vld [vmem:[%s0 + $0x378] sm:$0xff]
  %v164 = vld [vmem:[%s0 + $0x380] sm:$0xf]
  %v165 = vld [vmem:[%s0 + $0x384] sm:$0xff]
  %v166 = vld [vmem:[%s0 + $0x38c] sm:$0xf]
  %v167 = vld [vmem:[%s0 + $0x390] sm:$0xff]
  %v168 = vld [vmem:[%s0 + $0x398] sm:$0xf]
  %v169 = vld [vmem:[%s0 + $0x39c] sm:$0xff]
  %v170 = vld [vmem:[%s0 + $0x3a4] sm:$0xf]
  %v171 = vld [vmem:[%s0 + $0x3a8] sm:$0xff]
  %v172 = vld [vmem:[%s0 + $0x3b0] sm:$0xf]
  %v173 = vld [vmem:[%s0 + $0x3b4] sm:$0xff]
  %v174 = vld [vmem:[%s0 + $0x3bc] sm:$0xf]
  %v175 = vld [vmem:[%s0 + $0x3c0] sm:$0xff]
  %v176 = vld [vmem:[%s0 + $0x3c8] sm:$0xf]
  %v177 = vld [vmem:[%s0 + $0x3cc] sm:$0xff]
  %v178 = vld [vmem:[%s0 + $0x3d4] sm:$0xf]
  %v179 = vld [vmem:[%s0 + $0x3d8] sm:$0xff]
  %v180 = vld [vmem:[%s0 + $0x3e0] sm:$0xf]
  %v181 = vld [vmem:[%s0 + $0x3e4] sm:$0xff]
  %v182 = vld [vmem:[%s0 + $0x3ec] sm:$0xf]
  %v183 = vld [vmem:[%s0 + $0x3f0] sm:$0xff]
  %v184 = vld [vmem:[%s0 + $0x3f8] sm:$0xf]
  %v185 = vld [vmem:[%s0 + $0x3fc] sm:$0xff]
  %v186 = vld [vmem:[%s0 + $0x404] sm:$0xf]
  %v187 = vld [vmem:[%s0 + $0x408] sm:$0xff]
  %v188 = vld [vmem:[%s0 + $0x410] sm:$0xf]
  %v189 = vld [vmem:[%s0 + $0x414] sm:$0xff]
  %v190 = vld [vmem:[%s0 + $0x41c] sm:$0xf]
  %v191 = vld [vmem:[%s0 + $0x420] sm:$0xff]
  %v192 = vld [vmem:[%s0 + $0x428] sm:$0xf]
  %v193 = vld [vmem:[%s0 + $0x42c] sm:$0xff]
  %v194 = vld [vmem:[%s0 + $0x434] sm:$0xf]
  %v195 = vld [vmem:[%s0 + $0x438] sm:$0xff]
  %v196 = vld [vmem:[%s0 + $0x440] sm:$0xf]
  %v197 = vld [vmem:[%s0 + $0x444] sm:$0xff]
  %v198 = vld [vmem:[%s0 + $0x44c] sm:$0xf]
  %v199 = vld [vmem:[%s0 + $0x450] sm:$0xff]
  %v200 = vld [vmem:[%s0 + $0x458] sm:$0xf]
  %v201 = vld [vmem:[%s0 + $0x45c] sm:$0xff]
  %v202 = vld [vmem:[%s0 + $0x464] sm:$0xf]
  %v203 = vld [vmem:[%s0 + $0x468] sm:$0xff]
  %v204 = vld [vmem:[%s0 + $0x470] sm:$0xf]
  %v205 = vld [vmem:[%s0 + $0x474] sm:$0xff]
  %v206 = vld [vmem:[%s0 + $0x47c] sm:$0xf]
  %v207 = vld [vmem:[%s0 + $0x480] sm:$0xff]
  %v208 = vld [vmem:[%s0 + $0x488] sm:$0xf]
  %v209 = vld [vmem:[%s0 + $0x48c] sm:$0xff]
  %v210 = vld [vmem:[%s0 + $0x494] sm:$0xf]
  %v211 = vld [vmem:[%s0 + $0x498] sm:$0xff]
  %v212 = vld [vmem:[%s0 + $0x4a0] sm:$0xf]
  %v213 = vld [vmem:[%s0 + $0x4a4] sm:$0xff]
  %v214 = vld [vmem:[%s0 + $0x4ac] sm:$0xf]
  %v215 = vld [vmem:[%s0 + $0x4b0] sm:$0xff]
  %v216 = vld [vmem:[%s0 + $0x4b8] sm:$0xf]
  %v217 = vld [vmem:[%s0 + $0x4bc] sm:$0xff]
  %v218 = vld [vmem:[%s0 + $0x4c4] sm:$0xf]
  %v219 = vld [vmem:[%s0 + $0x4c8] sm:$0xff]
  %v220 = vld [vmem:[%s0 + $0x4d0] sm:$0xf]
  %v221 = vld [vmem:[%s0 + $0x4d4] sm:$0xff]
  %v222 = vld [vmem:[%s0 + $0x4dc] sm:$0xf]
  %v223 = vld [vmem:[%s0 + $0x4e0] sm:$0xff]
  %v224 = vld [vmem:[%s0 + $0x4e8] sm:$0xf]
  %v225 = vld [vmem:[%s0 + $0x4ec] sm:$0xff]
  %v226 = vld [vmem:[%s0 + $0x4f4] sm:$0xf]
  %v227 = vld [vmem:[%s0 + $0x4f8] sm:$0xff]
  %v228 = vld [vmem:[%s0 + $0x500] sm:$0xf]
  %v229 = vld [vmem:[%s0 + $0x504] sm:$0xff]
  %v230 = vld [vmem:[%s0 + $0x50c] sm:$0xf]
  %v231 = vld [vmem:[%s0 + $0x510] sm:$0xff]
  %v232 = vld [vmem:[%s0 + $0x518] sm:$0xf]
  %v233 = vld [vmem:[%s0 + $0x51c] sm:$0xff]
  %v234 = vld [vmem:[%s0 + $0x524] sm:$0xf]
  %v235 = vld [vmem:[%s0 + $0x528] sm:$0xff]
  %v236 = vld [vmem:[%s0 + $0x530] sm:$0xf]
  %v237 = vld [vmem:[%s0 + $0x534] sm:$0xff]
  %v238 = vld [vmem:[%s0 + $0x53c] sm:$0xf]
  %v239 = vld [vmem:[%s0 + $0x540] sm:$0xff]
  %v240 = vld [vmem:[%s0 + $0x548] sm:$0xf]
  %v241 = vld [vmem:[%s0 + $0x54c] sm:$0xff]
  %v242 = vld [vmem:[%s0 + $0x554] sm:$0xf]
  %v243 = vld [vmem:[%s0 + $0x558] sm:$0xff]
  %v244 = vld [vmem:[%s0 + $0x560] sm:$0xf]
  %v245 = vld [vmem:[%s0 + $0x564] sm:$0xff]
  %v246 = vld [vmem:[%s0 + $0x56c] sm:$0xf]
  %v247 = vld [vmem:[%s0 + $0x570] sm:$0xff]
  %v248 = vld [vmem:[%s0 + $0x578] sm:$0xf]
  %v249 = vld [vmem:[%s0 + $0x57c] sm:$0xff]
  %v250 = vld [vmem:[%s0 + $0x584] sm:$0xf]
  %v251 = vld [vmem:[%s0 + $0x588] sm:$0xff]
  %v252 = vld [vmem:[%s0 + $0x590] sm:$0xf]
  %v253 = vld [vmem:[%s0 + $0x594] sm:$0xff]
  %v254 = vld [vmem:[%s0 + $0x59c] sm:$0xf]
  %v255 = vld [vmem:[%s0 + $0x5a0] sm:$0xff]
  %v256 = vld [vmem:[%s0 + $0x5a8] sm:$0xf]
  %v257 = vld [vmem:[%s0 + $0x5ac] sm:$0xff]
  %v258 = vld [vmem:[%s0 + $0x5b4] sm:$0xf]
  %v259 = vld [vmem:[%s0 + $0x5b8] sm:$0xff]
  %v260 = vld [vmem:[%s0 + $0x5c0] sm:$0xf]
  %v261 = vld [vmem:[%s0 + $0x5c4] sm:$0xff]
  %v262 = vld [vmem:[%s0 + $0x5cc] sm:$0xf]
  %v263 = vld [vmem:[%s0 + $0x5d0] sm:$0xff]
  %v264 = vld [vmem:[%s0 + $0x5d8] sm:$0xf]
  %v265 = vld [vmem:[%s0 + $0x5dc] sm:$0xff]
  %v266 = vld [vmem:[%s0 + $0x5e4] sm:$0xf]
  %v267 = vld [vmem:[%s0 + $0x5e8] sm:$0xff]
  %v268 = vld [vmem:[%s0 + $0x5f0] sm:$0xf]
  %v269 = vld [vmem:[%s0 + $0x5f4] sm:$0xff]
  %v270 = vld [vmem:[%s0 + $0x5fc] sm:$0xf]
  %v271 = vld [vmem:[%s0 + $0x600] sm:$0xff]
  %v272 = vld [vmem:[%s0 + $0x608] sm:$0xf]
  %v273 = vld [vmem:[%s0 + $0x60c] sm:$0xff]
  %v274 = vld [vmem:[%s0 + $0x614] sm:$0xf]
  %v275 = vld [vmem:[%s0 + $0x618] sm:$0xff]
  %v276 = vld [vmem:[%s0 + $0x620] sm:$0xf]
  %v277 = vld [vmem:[%s0 + $0x624] sm:$0xff]
  %v278 = vld [vmem:[%s0 + $0x62c] sm:$0xf]
  %v279 = vld [vmem:[%s0 + $0x630] sm:$0xff]
  %v280 = vld [vmem:[%s0 + $0x638] sm:$0xf]
  %v281 = vld [vmem:[%s0 + $0x63c] sm:$0xff]
  %v282 = vld [vmem:[%s0 + $0x644] sm:$0xf]
  %v283 = vld [vmem:[%s0 + $0x648] sm:$0xff]
  %v284 = vld [vmem:[%s0 + $0x650] sm:$0xf]
  %v285 = vld [vmem:[%s0 + $0x654] sm:$0xff]
  %v286 = vld [vmem:[%s0 + $0x65c] sm:$0xf]
  %v287 = vld [vmem:[%s0 + $0x660] sm:$0xff]
  %v288 = vld [vmem:[%s0 + $0x668] sm:$0xf]
  %v289 = vld [vmem:[%s0 + $0x66c] sm:$0xff]
  %v290 = vld [vmem:[%s0 + $0x674] sm:$0xf]
  %v291 = vld [vmem:[%s0 + $0x678] sm:$0xff]
  %v292 = vld [vmem:[%s0 + $0x680] sm:$0xf]
  %v293 = vld [vmem:[%s0 + $0x684] sm:$0xff]
  %v294 = vld [vmem:[%s0 + $0x68c] sm:$0xf]
  %v295 = vld [vmem:[%s0 + $0x690] sm:$0xff]
  %v296 = vld [vmem:[%s0 + $0x698] sm:$0xf]
  %v297 = vld [vmem:[%s0 + $0x69c] sm:$0xff]
  %v298 = vld [vmem:[%s0 + $0x6a4] sm:$0xf]
  %v299 = vld [vmem:[%s0 + $0x6a8] sm:$0xff]
  %v300 = vld [vmem:[%s0 + $0x6b0] sm:$0xf]
  %v301 = vld [vmem:[%s0 + $0x6b4] sm:$0xff]
  %v302 = vld [vmem:[%s0 + $0x6bc] sm:$0xf]
  %v303 = vld [vmem:[%s0 + $0x6c0] sm:$0xff]
  %v304 = vld [vmem:[%s0 + $0x6c8] sm:$0xf]
  %v305 = vld [vmem:[%s0 + $0x6cc] sm:$0xff]
  %v306 = vld [vmem:[%s0 + $0x6d4] sm:$0xf]
  %v307 = vld [vmem:[%s0 + $0x6d8] sm:$0xff]
  %v308 = vld [vmem:[%s0 + $0x6e0] sm:$0xf]
  %v309 = vld [vmem:[%s0 + $0x6e4] sm:$0xff]
  %v310 = vld [vmem:[%s0 + $0x6ec] sm:$0xf]
  %v311 = vld [vmem:[%s0 + $0x6f0] sm:$0xff]
  %v312 = vld [vmem:[%s0 + $0x6f8] sm:$0xf]
  %v313 = vld [vmem:[%s0 + $0x6fc] sm:$0xff]
  %v314 = vld [vmem:[%s0 + $0x704] sm:$0xf]
  %v315 = vld [vmem:[%s0 + $0x708] sm:$0xff]
  %v316 = vld [vmem:[%s0 + $0x710] sm:$0xf]
  %v317 = vld [vmem:[%s0 + $0x714] sm:$0xff]
  %v318 = vld [vmem:[%s0 + $0x71c] sm:$0xf]
  %v319 = vld [vmem:[%s0 + $0x720] sm:$0xff]
  %v320 = vld [vmem:[%s0 + $0x728] sm:$0xf]
  %v321 = vld [vmem:[%s0 + $0x72c] sm:$0xff]
  %v322 = vld [vmem:[%s0 + $0x734] sm:$0xf]
  %v323 = vld [vmem:[%s0 + $0x738] sm:$0xff]
  %v324 = vld [vmem:[%s0 + $0x740] sm:$0xf]
  %v325 = vld [vmem:[%s0 + $0x744] sm:$0xff]
  %v326 = vld [vmem:[%s0 + $0x74c] sm:$0xf]
  %v327 = vld [vmem:[%s0 + $0x750] sm:$0xff]
  %v328 = vld [vmem:[%s0 + $0x758] sm:$0xf]
  %v329 = vld [vmem:[%s0 + $0x75c] sm:$0xff]
  %v330 = vld [vmem:[%s0 + $0x764] sm:$0xf]
  %v331 = vld [vmem:[%s0 + $0x768] sm:$0xff]
  %v332 = vld [vmem:[%s0 + $0x770] sm:$0xf]
  %v333 = vld [vmem:[%s0 + $0x774] sm:$0xff]
  %v334 = vld [vmem:[%s0 + $0x77c] sm:$0xf]
  %v335 = vld [vmem:[%s0 + $0x780] sm:$0xff]
  %v336 = vld [vmem:[%s0 + $0x788] sm:$0xf]
  %v337 = vld [vmem:[%s0 + $0x78c] sm:$0xff]
  %v338 = vld [vmem:[%s0 + $0x794] sm:$0xf]
  %v339 = vld [vmem:[%s0 + $0x798] sm:$0xff]
  %v340 = vld [vmem:[%s0 + $0x7a0] sm:$0xf]
  %v341 = vld [vmem:[%s0 + $0x7a4] sm:$0xff]
  %v342 = vld [vmem:[%s0 + $0x7ac] sm:$0xf]
  %v343 = vld [vmem:[%s0 + $0x7b0] sm:$0xff]
  %v344 = vld [vmem:[%s0 + $0x7b8] sm:$0xf]
  %v345 = vld [vmem:[%s0 + $0x7bc] sm:$0xff]
  %v346 = vld [vmem:[%s0 + $0x7c4] sm:$0xf]
  %v347 = vld [vmem:[%s0 + $0x7c8] sm:$0xff]
  %v348 = vld [vmem:[%s0 + $0x7d0] sm:$0xf]
  %v349 = vld [vmem:[%s0 + $0x7d4] sm:$0xff]
  %v350 = vld [vmem:[%s0 + $0x7dc] sm:$0xf]
  %v351 = vld [vmem:[%s0 + $0x7e0] sm:$0xff]
  %v352 = vld [vmem:[%s0 + $0x7e8] sm:$0xf]
  %v353 = vld [vmem:[%s0 + $0x7ec] sm:$0xff]
  %v354 = vld [vmem:[%s0 + $0x7f4] sm:$0xf]
  %v355 = vld [vmem:[%s0 + $0x7f8] sm:$0xff]
  %v356 = vld [vmem:[%s0 + $0x800] sm:$0xf]
  %v357 = vld [vmem:[%s0 + $0x804] sm:$0xff]
  %v358 = vld [vmem:[%s0 + $0x80c] sm:$0xf]
  %v359 = vld [vmem:[%s0 + $0x810] sm:$0xff]
  %v360 = vld [vmem:[%s0 + $0x818] sm:$0xf]
  %v361 = vld [vmem:[%s0 + $0x81c] sm:$0xff]
  %v362 = vld [vmem:[%s0 + $0x824] sm:$0xf]
  %v363 = vld [vmem:[%s0 + $0x828] sm:$0xff]
  %v364 = vld [vmem:[%s0 + $0x830] sm:$0xf]
  %v365 = vld [vmem:[%s0 + $0x834] sm:$0xff]
  %v366 = vld [vmem:[%s0 + $0x83c] sm:$0xf]
  %v367 = vld [vmem:[%s0 + $0x840] sm:$0xff]
  %v368 = vld [vmem:[%s0 + $0x848] sm:$0xf]
  %v369 = vld [vmem:[%s0 + $0x84c] sm:$0xff]
  %v370 = vld [vmem:[%s0 + $0x854] sm:$0xf]
  %v371 = vld [vmem:[%s0 + $0x858] sm:$0xff]
  %v372 = vld [vmem:[%s0 + $0x860] sm:$0xf]
  %v373 = vld [vmem:[%s0 + $0x864] sm:$0xff]
  %v374 = vld [vmem:[%s0 + $0x86c] sm:$0xf]
  %v375 = vld [vmem:[%s0 + $0x870] sm:$0xff]
  %v376 = vld [vmem:[%s0 + $0x878] sm:$0xf]
  %v377 = vld [vmem:[%s0 + $0x87c] sm:$0xff]
  %v378 = vld [vmem:[%s0 + $0x884] sm:$0xf]
  %v379 = vld [vmem:[%s0 + $0x888] sm:$0xff]
  %v380 = vld [vmem:[%s0 + $0x890] sm:$0xf]
  %v381 = vld [vmem:[%s0 + $0x894] sm:$0xff]
  %v382 = vld [vmem:[%s0 + $0x89c] sm:$0xf]
  %v383 = vld [vmem:[%s0 + $0x8a0] sm:$0xff]
  %v384 = vld [vmem:[%s0 + $0x8a8] sm:$0xf]
  %v385 = vld [vmem:[%s0 + $0x8ac] sm:$0xff]
  %v386 = vld [vmem:[%s0 + $0x8b4] sm:$0xf]
  %v387 = vld [vmem:[%s0 + $0x8b8] sm:$0xff]
  %v388 = vld [vmem:[%s0 + $0x8c0] sm:$0xf]
  %v389 = vld [vmem:[%s0 + $0x8c4] sm:$0xff]
  %v390 = vld [vmem:[%s0 + $0x8cc] sm:$0xf]
  %v391 = vld [vmem:[%s0 + $0x8d0] sm:$0xff]
  %v392 = vld [vmem:[%s0 + $0x8d8] sm:$0xf]
  %v393 = vld [vmem:[%s0 + $0x8dc] sm:$0xff]
  %v394 = vld [vmem:[%s0 + $0x8e4] sm:$0xf]
  %v395 = vld [vmem:[%s0 + $0x8e8] sm:$0xff]
  %v396 = vld [vmem:[%s0 + $0x8f0] sm:$0xf]
  %v397 = vld [vmem:[%s0 + $0x8f4] sm:$0xff]
  %v398 = vld [vmem:[%s0 + $0x8fc] sm:$0xf]
  %v399 = vld [vmem:[%s0 + $0x900] sm:$0xff]
  %v400 = vld [vmem:[%s0 + $0x908] sm:$0xf]
  %v401 = vld [vmem:[%s0 + $0x90c] sm:$0xff]
  %v402 = vld [vmem:[%s0 + $0x914] sm:$0xf]
  %v403 = vld [vmem:[%s0 + $0x918] sm:$0xff]
  %v404 = vld [vmem:[%s0 + $0x920] sm:$0xf]
  %v405 = vld [vmem:[%s0 + $0x924] sm:$0xff]
  %v406 = vld [vmem:[%s0 + $0x92c] sm:$0xf]
  %v407 = vld [vmem:[%s0 + $0x930] sm:$0xff]
  %v408 = vld [vmem:[%s0 + $0x938] sm:$0xf]
  %v409 = vld [vmem:[%s0 + $0x93c] sm:$0xff]
  %v410 = vld [vmem:[%s0 + $0x944] sm:$0xf]
  %v411 = vld [vmem:[%s0 + $0x948] sm:$0xff]
  %v412 = vld [vmem:[%s0 + $0x950] sm:$0xf]
  %v413 = vld [vmem:[%s0 + $0x954] sm:$0xff]
  %v414 = vld [vmem:[%s0 + $0x95c] sm:$0xf]
  %v415 = vld [vmem:[%s1] sm:$0xf]
  %v416 = vld [vmem:[%s1 + $0x4] sm:$0xf]
  %v417 = vld [vmem:[%s1 + $0x8] sm:$0xf]
  %v418 = vld [vmem:[%s1 + $0xc] sm:$0xf]
  %v419 = vld [vmem:[%s1 + $0x10] sm:$0xf]
  %v420 = vld [vmem:[%s1 + $0x14] sm:$0xf]
  %v421 = vld [vmem:[%s1 + $0x18] sm:$0xf]
  %v422 = vld [vmem:[%s1 + $0x1c] sm:$0xf]
  %v423 = vld [vmem:[%s1 + $0x20] sm:$0xf]
  %v424 = vld [vmem:[%s1 + $0x24] sm:$0xf]
  %v425 = vld [vmem:[%s1 + $0x28] sm:$0xf]
  %v426 = vld [vmem:[%s1 + $0x2c] sm:$0xf]
  %v427 = vld [vmem:[%s1 + $0x30] sm:$0xf]
  %v428 = vld [vmem:[%s1 + $0x34] sm:$0xf]
  %v429 = vld [vmem:[%s1 + $0x38] sm:$0xf]
  %v430 = vld [vmem:[%s1 + $0x3c] sm:$0xf]
  %v431 = vld [vmem:[%s1 + $0x40] sm:$0xf]
  %v432 = vld [vmem:[%s1 + $0x44] sm:$0xf]
  %v433 = vld [vmem:[%s1 + $0x48] sm:$0xf]
  %v434 = vld [vmem:[%s1 + $0x4c] sm:$0xf]
  %v435 = vld [vmem:[%s1 + $0x50] sm:$0xf]
  %v436 = vld [vmem:[%s1 + $0x54] sm:$0xf]
  %v437 = vld [vmem:[%s1 + $0x58] sm:$0xf]
  %v438 = vld [vmem:[%s1 + $0x5c] sm:$0xf]
  %v439 = vld [vmem:[%s1 + $0x60] sm:$0xf]
  %v440 = vld [vmem:[%s1 + $0x64] sm:$0xf]
  %v441 = vld [vmem:[%s1 + $0x68] sm:$0xf]
  %v442 = vld [vmem:[%s1 + $0x6c] sm:$0xf]
  %v443 = vld [vmem:[%s1 + $0x70] sm:$0xf]
  %v444 = vld [vmem:[%s1 + $0x74] sm:$0xf]
  %v445 = vld [vmem:[%s1 + $0x78] sm:$0xf]
  %v446 = vld [vmem:[%s1 + $0x7c] sm:$0xf]
  %v447 = vld [vmem:[%s1 + $0x80] sm:$0xf]
  %v448 = vld [vmem:[%s1 + $0x84] sm:$0xf]
  %v449 = vld [vmem:[%s1 + $0x88] sm:$0xf]
  %v450 = vld [vmem:[%s1 + $0x8c] sm:$0xf]
  %v451 = vld [vmem:[%s2] sm:$0x1]
  %v453 = vlaneseq
  %v454 = vshrl.u32 %v453, 7
  %v455 = vsub.s32 0, %v454
  %v456 = vrot.slane %v451, %v455
  %v858 = vunpack.c.l.b16 %v15
  %v859 = vunpack.c.h.b16 %v15
  %v860 = vunpack.c.l.b16 %v16
  %v861 = vunpack.c.l.b16 %v17
  %v862 = vunpack.c.h.b16 %v17
  %v863 = vunpack.c.l.b16 %v18
  %v864 = vunpack.c.l.b16 %v19
  %v865 = vunpack.c.h.b16 %v19
  %v866 = vunpack.c.l.b16 %v20
  %v867 = vunpack.c.l.b16 %v21
  %v868 = vunpack.c.h.b16 %v21
  %v869 = vunpack.c.l.b16 %v22
  %v870 = vunpack.c.l.b16 %v23
  %v871 = vunpack.c.h.b16 %v23
  %v872 = vunpack.c.l.b16 %v24
  %v873 = vunpack.c.l.b16 %v25
  %v874 = vunpack.c.h.b16 %v25
  %v875 = vunpack.c.l.b16 %v26
  %v876 = vunpack.c.l.b16 %v27
  %v877 = vunpack.c.h.b16 %v27
  %v878 = vunpack.c.l.b16 %v28
  %v879 = vunpack.c.l.b16 %v29
  %v880 = vunpack.c.h.b16 %v29
  %v881 = vunpack.c.l.b16 %v30
  %v882 = vunpack.c.l.b16 %v31
  %v883 = vunpack.c.h.b16 %v31
  %v884 = vunpack.c.l.b16 %v32
  %v885 = vunpack.c.l.b16 %v33
  %v886 = vunpack.c.h.b16 %v33
  %v887 = vunpack.c.l.b16 %v34
  %v888 = vunpack.c.l.b16 %v35
  %v889 = vunpack.c.h.b16 %v35
  %v890 = vunpack.c.l.b16 %v36
  %v891 = vunpack.c.l.b16 %v37
  %v892 = vunpack.c.h.b16 %v37
  %v893 = vunpack.c.l.b16 %v38
  %v894 = vunpack.c.l.b16 %v39
  %v895 = vunpack.c.h.b16 %v39
  %v896 = vunpack.c.l.b16 %v40
  %v897 = vunpack.c.l.b16 %v41
  %v898 = vunpack.c.h.b16 %v41
  %v899 = vunpack.c.l.b16 %v42
  %v900 = vunpack.c.l.b16 %v43
  %v901 = vunpack.c.h.b16 %v43
  %v902 = vunpack.c.l.b16 %v44
  %v903 = vunpack.c.l.b16 %v45
  %v904 = vunpack.c.h.b16 %v45
  %v905 = vunpack.c.l.b16 %v46
  %v906 = vunpack.c.l.b16 %v47
  %v907 = vunpack.c.h.b16 %v47
  %v908 = vunpack.c.l.b16 %v48
  %v909 = vunpack.c.l.b16 %v49
  %v910 = vunpack.c.h.b16 %v49
  %v911 = vunpack.c.l.b16 %v50
  %v912 = vunpack.c.l.b16 %v51
  %v913 = vunpack.c.h.b16 %v51
  %v914 = vunpack.c.l.b16 %v52
  %v915 = vunpack.c.l.b16 %v53
  %v916 = vunpack.c.h.b16 %v53
  %v917 = vunpack.c.l.b16 %v54
  %v918 = vunpack.c.l.b16 %v55
  %v919 = vunpack.c.h.b16 %v55
  %v920 = vunpack.c.l.b16 %v56
  %v921 = vunpack.c.l.b16 %v57
  %v922 = vunpack.c.h.b16 %v57
  %v923 = vunpack.c.l.b16 %v58
  %v924 = vunpack.c.l.b16 %v59
  %v925 = vunpack.c.h.b16 %v59
  %v926 = vunpack.c.l.b16 %v60
  %v927 = vunpack.c.l.b16 %v61
  %v928 = vunpack.c.h.b16 %v61
  %v929 = vunpack.c.l.b16 %v62
  %v930 = vunpack.c.l.b16 %v63
  %v931 = vunpack.c.h.b16 %v63
  %v932 = vunpack.c.l.b16 %v64
  %v933 = vunpack.c.l.b16 %v65
  %v934 = vunpack.c.h.b16 %v65
  %v935 = vunpack.c.l.b16 %v66
  %v936 = vunpack.c.l.b16 %v67
  %v937 = vunpack.c.h.b16 %v67
  %v938 = vunpack.c.l.b16 %v68
  %v939 = vunpack.c.l.b16 %v69
  %v940 = vunpack.c.h.b16 %v69
  %v941 = vunpack.c.l.b16 %v70
  %v942 = vunpack.c.l.b16 %v71
  %v943 = vunpack.c.h.b16 %v71
  %v944 = vunpack.c.l.b16 %v72
  %v945 = vunpack.c.l.b16 %v73
  %v946 = vunpack.c.h.b16 %v73
  %v947 = vunpack.c.l.b16 %v74
  %v948 = vunpack.c.l.b16 %v75
  %v949 = vunpack.c.h.b16 %v75
  %v950 = vunpack.c.l.b16 %v76
  %v951 = vunpack.c.l.b16 %v77
  %v952 = vunpack.c.h.b16 %v77
  %v953 = vunpack.c.l.b16 %v78
  %v954 = vunpack.c.l.b16 %v79
  %v955 = vunpack.c.h.b16 %v79
  %v956 = vunpack.c.l.b16 %v80
  %v957 = vunpack.c.l.b16 %v81
  %v958 = vunpack.c.h.b16 %v81
  %v959 = vunpack.c.l.b16 %v82
  %v960 = vunpack.c.l.b16 %v83
  %v961 = vunpack.c.h.b16 %v83
  %v962 = vunpack.c.l.b16 %v84
  %v963 = vunpack.c.l.b16 %v85
  %v964 = vunpack.c.h.b16 %v85
  %v965 = vunpack.c.l.b16 %v86
  %v966 = vunpack.c.l.b16 %v87
  %v967 = vunpack.c.h.b16 %v87
  %v968 = vunpack.c.l.b16 %v88
  %v969 = vunpack.c.l.b16 %v89
  %v970 = vunpack.c.h.b16 %v89
  %v971 = vunpack.c.l.b16 %v90
  %v972 = vunpack.c.l.b16 %v91
  %v973 = vunpack.c.h.b16 %v91
  %v974 = vunpack.c.l.b16 %v92
  %v975 = vunpack.c.l.b16 %v93
  %v976 = vunpack.c.h.b16 %v93
  %v977 = vunpack.c.l.b16 %v94
  %v978 = vunpack.c.l.b16 %v95
  %v979 = vunpack.c.h.b16 %v95
  %v980 = vunpack.c.l.b16 %v96
  %v981 = vunpack.c.l.b16 %v97
  %v982 = vunpack.c.h.b16 %v97
  %v983 = vunpack.c.l.b16 %v98
  %v984 = vunpack.c.l.b16 %v99
  %v985 = vunpack.c.h.b16 %v99
  %v986 = vunpack.c.l.b16 %v100
  %v987 = vunpack.c.l.b16 %v101
  %v988 = vunpack.c.h.b16 %v101
  %v989 = vunpack.c.l.b16 %v102
  %v990 = vunpack.c.l.b16 %v103
  %v991 = vunpack.c.h.b16 %v103
  %v992 = vunpack.c.l.b16 %v104
  %v993 = vunpack.c.l.b16 %v105
  %v994 = vunpack.c.h.b16 %v105
  %v995 = vunpack.c.l.b16 %v106
  %v996 = vunpack.c.l.b16 %v107
  %v997 = vunpack.c.h.b16 %v107
  %v998 = vunpack.c.l.b16 %v108
  %v999 = vunpack.c.l.b16 %v109
  %v1000 = vunpack.c.h.b16 %v109
  %v1001 = vunpack.c.l.b16 %v110
  %v1002 = vunpack.c.l.b16 %v111
  %v1003 = vunpack.c.h.b16 %v111
  %v1004 = vunpack.c.l.b16 %v112
  %v1005 = vunpack.c.l.b16 %v113
  %v1006 = vunpack.c.h.b16 %v113
  %v1007 = vunpack.c.l.b16 %v114
  %v1008 = vunpack.c.l.b16 %v115
  %v1009 = vunpack.c.h.b16 %v115
  %v1010 = vunpack.c.l.b16 %v116
  %v1011 = vunpack.c.l.b16 %v117
  %v1012 = vunpack.c.h.b16 %v117
  %v1013 = vunpack.c.l.b16 %v118
  %v1014 = vunpack.c.l.b16 %v119
  %v1015 = vunpack.c.h.b16 %v119
  %v1016 = vunpack.c.l.b16 %v120
  %v1017 = vunpack.c.l.b16 %v121
  %v1018 = vunpack.c.h.b16 %v121
  %v1019 = vunpack.c.l.b16 %v122
  %v1020 = vunpack.c.l.b16 %v123
  %v1021 = vunpack.c.h.b16 %v123
  %v1022 = vunpack.c.l.b16 %v124
  %v1023 = vunpack.c.l.b16 %v125
  %v1024 = vunpack.c.h.b16 %v125
  %v1025 = vunpack.c.l.b16 %v126
  %v1026 = vunpack.c.l.b16 %v127
  %v1027 = vunpack.c.h.b16 %v127
  %v1028 = vunpack.c.l.b16 %v128
  %v1029 = vunpack.c.l.b16 %v129
  %v1030 = vunpack.c.h.b16 %v129
  %v1031 = vunpack.c.l.b16 %v130
  %v1032 = vunpack.c.l.b16 %v131
  %v1033 = vunpack.c.h.b16 %v131
  %v1034 = vunpack.c.l.b16 %v132
  %v1035 = vunpack.c.l.b16 %v133
  %v1036 = vunpack.c.h.b16 %v133
  %v1037 = vunpack.c.l.b16 %v134
  %v1038 = vunpack.c.l.b16 %v135
  %v1039 = vunpack.c.h.b16 %v135
  %v1040 = vunpack.c.l.b16 %v136
  %v1041 = vunpack.c.l.b16 %v137
  %v1042 = vunpack.c.h.b16 %v137
  %v1043 = vunpack.c.l.b16 %v138
  %v1044 = vunpack.c.l.b16 %v139
  %v1045 = vunpack.c.h.b16 %v139
  %v1046 = vunpack.c.l.b16 %v140
  %v1047 = vunpack.c.l.b16 %v141
  %v1048 = vunpack.c.h.b16 %v141
  %v1049 = vunpack.c.l.b16 %v142
  %v1050 = vunpack.c.l.b16 %v143
  %v1051 = vunpack.c.h.b16 %v143
  %v1052 = vunpack.c.l.b16 %v144
  %v1053 = vunpack.c.l.b16 %v145
  %v1054 = vunpack.c.h.b16 %v145
  %v1055 = vunpack.c.l.b16 %v146
  %v1056 = vunpack.c.l.b16 %v147
  %v1057 = vunpack.c.h.b16 %v147
  %v1058 = vunpack.c.l.b16 %v148
  %v1059 = vunpack.c.l.b16 %v149
  %v1060 = vunpack.c.h.b16 %v149
  %v1061 = vunpack.c.l.b16 %v150
  %v1062 = vunpack.c.l.b16 %v151
  %v1063 = vunpack.c.h.b16 %v151
  %v1064 = vunpack.c.l.b16 %v152
  %v1065 = vunpack.c.l.b16 %v153
  %v1066 = vunpack.c.h.b16 %v153
  %v1067 = vunpack.c.l.b16 %v154
  %v1068 = vunpack.c.l.b16 %v155
  %v1069 = vunpack.c.h.b16 %v155
  %v1070 = vunpack.c.l.b16 %v156
  %v1071 = vunpack.c.l.b16 %v157
  %v1072 = vunpack.c.h.b16 %v157
  %v1073 = vunpack.c.l.b16 %v158
  %v1074 = vunpack.c.l.b16 %v159
  %v1075 = vunpack.c.h.b16 %v159
  %v1076 = vunpack.c.l.b16 %v160
  %v1077 = vunpack.c.l.b16 %v161
  %v1078 = vunpack.c.h.b16 %v161
  %v1079 = vunpack.c.l.b16 %v162
  %v1080 = vunpack.c.l.b16 %v163
  %v1081 = vunpack.c.h.b16 %v163
  %v1082 = vunpack.c.l.b16 %v164
  %v1083 = vunpack.c.l.b16 %v165
  %v1084 = vunpack.c.h.b16 %v165
  %v1085 = vunpack.c.l.b16 %v166
  %v1086 = vunpack.c.l.b16 %v167
  %v1087 = vunpack.c.h.b16 %v167
  %v1088 = vunpack.c.l.b16 %v168
  %v1089 = vunpack.c.l.b16 %v169
  %v1090 = vunpack.c.h.b16 %v169
  %v1091 = vunpack.c.l.b16 %v170
  %v1092 = vunpack.c.l.b16 %v171
  %v1093 = vunpack.c.h.b16 %v171
  %v1094 = vunpack.c.l.b16 %v172
  %v1095 = vunpack.c.l.b16 %v173
  %v1096 = vunpack.c.h.b16 %v173
  %v1097 = vunpack.c.l.b16 %v174
  %v1098 = vunpack.c.l.b16 %v175
  %v1099 = vunpack.c.h.b16 %v175
  %v1100 = vunpack.c.l.b16 %v176
  %v1101 = vunpack.c.l.b16 %v177
  %v1102 = vunpack.c.h.b16 %v177
  %v1103 = vunpack.c.l.b16 %v178
  %v1104 = vunpack.c.l.b16 %v179
  %v1105 = vunpack.c.h.b16 %v179
  %v1106 = vunpack.c.l.b16 %v180
  %v1107 = vunpack.c.l.b16 %v181
  %v1108 = vunpack.c.h.b16 %v181
  %v1109 = vunpack.c.l.b16 %v182
  %v1110 = vunpack.c.l.b16 %v183
  %v1111 = vunpack.c.h.b16 %v183
  %v1112 = vunpack.c.l.b16 %v184
  %v1113 = vunpack.c.l.b16 %v185
  %v1114 = vunpack.c.h.b16 %v185
  %v1115 = vunpack.c.l.b16 %v186
  %v1116 = vunpack.c.l.b16 %v187
  %v1117 = vunpack.c.h.b16 %v187
  %v1118 = vunpack.c.l.b16 %v188
  %v1119 = vunpack.c.l.b16 %v189
  %v1120 = vunpack.c.h.b16 %v189
  %v1121 = vunpack.c.l.b16 %v190
  %v1122 = vunpack.c.l.b16 %v191
  %v1123 = vunpack.c.h.b16 %v191
  %v1124 = vunpack.c.l.b16 %v192
  %v1125 = vunpack.c.l.b16 %v193
  %v1126 = vunpack.c.h.b16 %v193
  %v1127 = vunpack.c.l.b16 %v194
  %v1128 = vunpack.c.l.b16 %v195
  %v1129 = vunpack.c.h.b16 %v195
  %v1130 = vunpack.c.l.b16 %v196
  %v1131 = vunpack.c.l.b16 %v197
  %v1132 = vunpack.c.h.b16 %v197
  %v1133 = vunpack.c.l.b16 %v198
  %v1134 = vunpack.c.l.b16 %v199
  %v1135 = vunpack.c.h.b16 %v199
  %v1136 = vunpack.c.l.b16 %v200
  %v1137 = vunpack.c.l.b16 %v201
  %v1138 = vunpack.c.h.b16 %v201
  %v1139 = vunpack.c.l.b16 %v202
  %v1140 = vunpack.c.l.b16 %v203
  %v1141 = vunpack.c.h.b16 %v203
  %v1142 = vunpack.c.l.b16 %v204
  %v1143 = vunpack.c.l.b16 %v205
  %v1144 = vunpack.c.h.b16 %v205
  %v1145 = vunpack.c.l.b16 %v206
  %v1146 = vunpack.c.l.b16 %v207
  %v1147 = vunpack.c.h.b16 %v207
  %v1148 = vunpack.c.l.b16 %v208
  %v1149 = vunpack.c.l.b16 %v209
  %v1150 = vunpack.c.h.b16 %v209
  %v1151 = vunpack.c.l.b16 %v210
  %v1152 = vunpack.c.l.b16 %v211
  %v1153 = vunpack.c.h.b16 %v211
  %v1154 = vunpack.c.l.b16 %v212
  %v1155 = vunpack.c.l.b16 %v213
  %v1156 = vunpack.c.h.b16 %v213
  %v1157 = vunpack.c.l.b16 %v214
  %v1158 = vunpack.c.l.b16 %v215
  %v1159 = vunpack.c.h.b16 %v215
  %v1160 = vunpack.c.l.b16 %v216
  %v1161 = vunpack.c.l.b16 %v217
  %v1162 = vunpack.c.h.b16 %v217
  %v1163 = vunpack.c.l.b16 %v218
  %v1164 = vunpack.c.l.b16 %v219
  %v1165 = vunpack.c.h.b16 %v219
  %v1166 = vunpack.c.l.b16 %v220
  %v1167 = vunpack.c.l.b16 %v221
  %v1168 = vunpack.c.h.b16 %v221
  %v1169 = vunpack.c.l.b16 %v222
  %v1170 = vunpack.c.l.b16 %v223
  %v1171 = vunpack.c.h.b16 %v223
  %v1172 = vunpack.c.l.b16 %v224
  %v1173 = vunpack.c.l.b16 %v225
  %v1174 = vunpack.c.h.b16 %v225
  %v1175 = vunpack.c.l.b16 %v226
  %v1176 = vunpack.c.l.b16 %v227
  %v1177 = vunpack.c.h.b16 %v227
  %v1178 = vunpack.c.l.b16 %v228
  %v1179 = vunpack.c.l.b16 %v229
  %v1180 = vunpack.c.h.b16 %v229
  %v1181 = vunpack.c.l.b16 %v230
  %v1182 = vunpack.c.l.b16 %v231
  %v1183 = vunpack.c.h.b16 %v231
  %v1184 = vunpack.c.l.b16 %v232
  %v1185 = vunpack.c.l.b16 %v233
  %v1186 = vunpack.c.h.b16 %v233
  %v1187 = vunpack.c.l.b16 %v234
  %v1188 = vunpack.c.l.b16 %v235
  %v1189 = vunpack.c.h.b16 %v235
  %v1190 = vunpack.c.l.b16 %v236
  %v1191 = vunpack.c.l.b16 %v237
  %v1192 = vunpack.c.h.b16 %v237
  %v1193 = vunpack.c.l.b16 %v238
  %v1194 = vunpack.c.l.b16 %v239
  %v1195 = vunpack.c.h.b16 %v239
  %v1196 = vunpack.c.l.b16 %v240
  %v1197 = vunpack.c.l.b16 %v241
  %v1198 = vunpack.c.h.b16 %v241
  %v1199 = vunpack.c.l.b16 %v242
  %v1200 = vunpack.c.l.b16 %v243
  %v1201 = vunpack.c.h.b16 %v243
  %v1202 = vunpack.c.l.b16 %v244
  %v1203 = vunpack.c.l.b16 %v245
  %v1204 = vunpack.c.h.b16 %v245
  %v1205 = vunpack.c.l.b16 %v246
  %v1206 = vunpack.c.l.b16 %v247
  %v1207 = vunpack.c.h.b16 %v247
  %v1208 = vunpack.c.l.b16 %v248
  %v1209 = vunpack.c.l.b16 %v249
  %v1210 = vunpack.c.h.b16 %v249
  %v1211 = vunpack.c.l.b16 %v250
  %v1212 = vunpack.c.l.b16 %v251
  %v1213 = vunpack.c.h.b16 %v251
  %v1214 = vunpack.c.l.b16 %v252
  %v1215 = vunpack.c.l.b16 %v253
  %v1216 = vunpack.c.h.b16 %v253
  %v1217 = vunpack.c.l.b16 %v254
  %v1218 = vunpack.c.l.b16 %v255
  %v1219 = vunpack.c.h.b16 %v255
  %v1220 = vunpack.c.l.b16 %v256
  %v1221 = vunpack.c.l.b16 %v257
  %v1222 = vunpack.c.h.b16 %v257
  %v1223 = vunpack.c.l.b16 %v258
  %v1224 = vunpack.c.l.b16 %v259
  %v1225 = vunpack.c.h.b16 %v259
  %v1226 = vunpack.c.l.b16 %v260
  %v1227 = vunpack.c.l.b16 %v261
  %v1228 = vunpack.c.h.b16 %v261
  %v1229 = vunpack.c.l.b16 %v262
  %v1230 = vunpack.c.l.b16 %v263
  %v1231 = vunpack.c.h.b16 %v263
  %v1232 = vunpack.c.l.b16 %v264
  %v1233 = vunpack.c.l.b16 %v265
  %v1234 = vunpack.c.h.b16 %v265
  %v1235 = vunpack.c.l.b16 %v266
  %v1236 = vunpack.c.l.b16 %v267
  %v1237 = vunpack.c.h.b16 %v267
  %v1238 = vunpack.c.l.b16 %v268
  %v1239 = vunpack.c.l.b16 %v269
  %v1240 = vunpack.c.h.b16 %v269
  %v1241 = vunpack.c.l.b16 %v270
  %v1242 = vunpack.c.l.b16 %v271
  %v1243 = vunpack.c.h.b16 %v271
  %v1244 = vunpack.c.l.b16 %v272
  %v1245 = vunpack.c.l.b16 %v273
  %v1246 = vunpack.c.h.b16 %v273
  %v1247 = vunpack.c.l.b16 %v274
  %v1248 = vunpack.c.l.b16 %v275
  %v1249 = vunpack.c.h.b16 %v275
  %v1250 = vunpack.c.l.b16 %v276
  %v1251 = vunpack.c.l.b16 %v277
  %v1252 = vunpack.c.h.b16 %v277
  %v1253 = vunpack.c.l.b16 %v278
  %v1254 = vunpack.c.l.b16 %v279
  %v1255 = vunpack.c.h.b16 %v279
  %v1256 = vunpack.c.l.b16 %v280
  %v1257 = vunpack.c.l.b16 %v281
  %v1258 = vunpack.c.h.b16 %v281
  %v1259 = vunpack.c.l.b16 %v282
  %v1260 = vunpack.c.l.b16 %v283
  %v1261 = vunpack.c.h.b16 %v283
  %v1262 = vunpack.c.l.b16 %v284
  %v1263 = vunpack.c.l.b16 %v285
  %v1264 = vunpack.c.h.b16 %v285
  %v1265 = vunpack.c.l.b16 %v286
  %v1266 = vunpack.c.l.b16 %v287
  %v1267 = vunpack.c.h.b16 %v287
  %v1268 = vunpack.c.l.b16 %v288
  %v1269 = vunpack.c.l.b16 %v289
  %v1270 = vunpack.c.h.b16 %v289
  %v1271 = vunpack.c.l.b16 %v290
  %v1272 = vunpack.c.l.b16 %v291
  %v1273 = vunpack.c.h.b16 %v291
  %v1274 = vunpack.c.l.b16 %v292
  %v1275 = vunpack.c.l.b16 %v293
  %v1276 = vunpack.c.h.b16 %v293
  %v1277 = vunpack.c.l.b16 %v294
  %v1278 = vunpack.c.l.b16 %v295
  %v1279 = vunpack.c.h.b16 %v295
  %v1280 = vunpack.c.l.b16 %v296
  %v1281 = vunpack.c.l.b16 %v297
  %v1282 = vunpack.c.h.b16 %v297
  %v1283 = vunpack.c.l.b16 %v298
  %v1284 = vunpack.c.l.b16 %v299
  %v1285 = vunpack.c.h.b16 %v299
  %v1286 = vunpack.c.l.b16 %v300
  %v1287 = vunpack.c.l.b16 %v301
  %v1288 = vunpack.c.h.b16 %v301
  %v1289 = vunpack.c.l.b16 %v302
  %v1290 = vunpack.c.l.b16 %v303
  %v1291 = vunpack.c.h.b16 %v303
  %v1292 = vunpack.c.l.b16 %v304
  %v1293 = vunpack.c.l.b16 %v305
  %v1294 = vunpack.c.h.b16 %v305
  %v1295 = vunpack.c.l.b16 %v306
  %v1296 = vunpack.c.l.b16 %v307
  %v1297 = vunpack.c.h.b16 %v307
  %v1298 = vunpack.c.l.b16 %v308
  %v1299 = vunpack.c.l.b16 %v309
  %v1300 = vunpack.c.h.b16 %v309
  %v1301 = vunpack.c.l.b16 %v310
  %v1302 = vunpack.c.l.b16 %v311
  %v1303 = vunpack.c.h.b16 %v311
  %v1304 = vunpack.c.l.b16 %v312
  %v1305 = vunpack.c.l.b16 %v313
  %v1306 = vunpack.c.h.b16 %v313
  %v1307 = vunpack.c.l.b16 %v314
  %v1308 = vunpack.c.l.b16 %v315
  %v1309 = vunpack.c.h.b16 %v315
  %v1310 = vunpack.c.l.b16 %v316
  %v1311 = vunpack.c.l.b16 %v317
  %v1312 = vunpack.c.h.b16 %v317
  %v1313 = vunpack.c.l.b16 %v318
  %v1314 = vunpack.c.l.b16 %v319
  %v1315 = vunpack.c.h.b16 %v319
  %v1316 = vunpack.c.l.b16 %v320
  %v1317 = vunpack.c.l.b16 %v321
  %v1318 = vunpack.c.h.b16 %v321
  %v1319 = vunpack.c.l.b16 %v322
  %v1320 = vunpack.c.l.b16 %v323
  %v1321 = vunpack.c.h.b16 %v323
  %v1322 = vunpack.c.l.b16 %v324
  %v1323 = vunpack.c.l.b16 %v325
  %v1324 = vunpack.c.h.b16 %v325
  %v1325 = vunpack.c.l.b16 %v326
  %v1326 = vunpack.c.l.b16 %v327
  %v1327 = vunpack.c.h.b16 %v327
  %v1328 = vunpack.c.l.b16 %v328
  %v1329 = vunpack.c.l.b16 %v329
  %v1330 = vunpack.c.h.b16 %v329
  %v1331 = vunpack.c.l.b16 %v330
  %v1332 = vunpack.c.l.b16 %v331
  %v1333 = vunpack.c.h.b16 %v331
  %v1334 = vunpack.c.l.b16 %v332
  %v1335 = vunpack.c.l.b16 %v333
  %v1336 = vunpack.c.h.b16 %v333
  %v1337 = vunpack.c.l.b16 %v334
  %v1338 = vunpack.c.l.b16 %v335
  %v1339 = vunpack.c.h.b16 %v335
  %v1340 = vunpack.c.l.b16 %v336
  %v1341 = vunpack.c.l.b16 %v337
  %v1342 = vunpack.c.h.b16 %v337
  %v1343 = vunpack.c.l.b16 %v338
  %v1344 = vunpack.c.l.b16 %v339
  %v1345 = vunpack.c.h.b16 %v339
  %v1346 = vunpack.c.l.b16 %v340
  %v1347 = vunpack.c.l.b16 %v341
  %v1348 = vunpack.c.h.b16 %v341
  %v1349 = vunpack.c.l.b16 %v342
  %v1350 = vunpack.c.l.b16 %v343
  %v1351 = vunpack.c.h.b16 %v343
  %v1352 = vunpack.c.l.b16 %v344
  %v1353 = vunpack.c.l.b16 %v345
  %v1354 = vunpack.c.h.b16 %v345
  %v1355 = vunpack.c.l.b16 %v346
  %v1356 = vunpack.c.l.b16 %v347
  %v1357 = vunpack.c.h.b16 %v347
  %v1358 = vunpack.c.l.b16 %v348
  %v1359 = vunpack.c.l.b16 %v349
  %v1360 = vunpack.c.h.b16 %v349
  %v1361 = vunpack.c.l.b16 %v350
  %v1362 = vunpack.c.l.b16 %v351
  %v1363 = vunpack.c.h.b16 %v351
  %v1364 = vunpack.c.l.b16 %v352
  %v1365 = vunpack.c.l.b16 %v353
  %v1366 = vunpack.c.h.b16 %v353
  %v1367 = vunpack.c.l.b16 %v354
  %v1368 = vunpack.c.l.b16 %v355
  %v1369 = vunpack.c.h.b16 %v355
  %v1370 = vunpack.c.l.b16 %v356
  %v1371 = vunpack.c.l.b16 %v357
  %v1372 = vunpack.c.h.b16 %v357
  %v1373 = vunpack.c.l.b16 %v358
  %v1374 = vunpack.c.l.b16 %v359
  %v1375 = vunpack.c.h.b16 %v359
  %v1376 = vunpack.c.l.b16 %v360
  %v1377 = vunpack.c.l.b16 %v361
  %v1378 = vunpack.c.h.b16 %v361
  %v1379 = vunpack.c.l.b16 %v362
  %v1380 = vunpack.c.l.b16 %v363
  %v1381 = vunpack.c.h.b16 %v363
  %v1382 = vunpack.c.l.b16 %v364
  %v1383 = vunpack.c.l.b16 %v365
  %v1384 = vunpack.c.h.b16 %v365
  %v1385 = vunpack.c.l.b16 %v366
  %v1386 = vunpack.c.l.b16 %v367
  %v1387 = vunpack.c.h.b16 %v367
  %v1388 = vunpack.c.l.b16 %v368
  %v1389 = vunpack.c.l.b16 %v369
  %v1390 = vunpack.c.h.b16 %v369
  %v1391 = vunpack.c.l.b16 %v370
  %v1392 = vunpack.c.l.b16 %v371
  %v1393 = vunpack.c.h.b16 %v371
  %v1394 = vunpack.c.l.b16 %v372
  %v1395 = vunpack.c.l.b16 %v373
  %v1396 = vunpack.c.h.b16 %v373
  %v1397 = vunpack.c.l.b16 %v374
  %v1398 = vunpack.c.l.b16 %v375
  %v1399 = vunpack.c.h.b16 %v375
  %v1400 = vunpack.c.l.b16 %v376
  %v1401 = vunpack.c.l.b16 %v377
  %v1402 = vunpack.c.h.b16 %v377
  %v1403 = vunpack.c.l.b16 %v378
  %v1404 = vunpack.c.l.b16 %v379
  %v1405 = vunpack.c.h.b16 %v379
  %v1406 = vunpack.c.l.b16 %v380
  %v1407 = vunpack.c.l.b16 %v381
  %v1408 = vunpack.c.h.b16 %v381
  %v1409 = vunpack.c.l.b16 %v382
  %v1410 = vunpack.c.l.b16 %v383
  %v1411 = vunpack.c.h.b16 %v383
  %v1412 = vunpack.c.l.b16 %v384
  %v1413 = vunpack.c.l.b16 %v385
  %v1414 = vunpack.c.h.b16 %v385
  %v1415 = vunpack.c.l.b16 %v386
  %v1416 = vunpack.c.l.b16 %v387
  %v1417 = vunpack.c.h.b16 %v387
  %v1418 = vunpack.c.l.b16 %v388
  %v1419 = vunpack.c.l.b16 %v389
  %v1420 = vunpack.c.h.b16 %v389
  %v1421 = vunpack.c.l.b16 %v390
  %v1422 = vunpack.c.l.b16 %v391
  %v1423 = vunpack.c.h.b16 %v391
  %v1424 = vunpack.c.l.b16 %v392
  %v1425 = vunpack.c.l.b16 %v393
  %v1426 = vunpack.c.h.b16 %v393
  %v1427 = vunpack.c.l.b16 %v394
  %v1428 = vunpack.c.l.b16 %v395
  %v1429 = vunpack.c.h.b16 %v395
  %v1430 = vunpack.c.l.b16 %v396
  %v1431 = vunpack.c.l.b16 %v397
  %v1432 = vunpack.c.h.b16 %v397
  %v1433 = vunpack.c.l.b16 %v398
  %v1434 = vunpack.c.l.b16 %v399
  %v1435 = vunpack.c.h.b16 %v399
  %v1436 = vunpack.c.l.b16 %v400
  %v1437 = vunpack.c.l.b16 %v401
  %v1438 = vunpack.c.h.b16 %v401
  %v1439 = vunpack.c.l.b16 %v402
  %v1440 = vunpack.c.l.b16 %v403
  %v1441 = vunpack.c.h.b16 %v403
  %v1442 = vunpack.c.l.b16 %v404
  %v1443 = vunpack.c.l.b16 %v405
  %v1444 = vunpack.c.h.b16 %v405
  %v1445 = vunpack.c.l.b16 %v406
  %v1446 = vunpack.c.l.b16 %v407
  %v1447 = vunpack.c.h.b16 %v407
  %v1448 = vunpack.c.l.b16 %v408
  %v1449 = vunpack.c.l.b16 %v409
  %v1450 = vunpack.c.h.b16 %v409
  %v1451 = vunpack.c.l.b16 %v410
  %v1452 = vunpack.c.l.b16 %v411
  %v1453 = vunpack.c.h.b16 %v411
  %v1454 = vunpack.c.l.b16 %v412
  %v1455 = vunpack.c.l.b16 %v413
  %v1456 = vunpack.c.h.b16 %v413
  %v1457 = vunpack.c.l.b16 %v414
  %v1458 = vpack.c.b16 %v861, %v858
  %v1459 = vpack.c.b16 %v862, %v859
  %v1460 = vpack.c.b16 %v863, %v860
  %v1461 = vpack.c.b16 %v867, %v864
  %v1462 = vpack.c.b16 %v868, %v865
  %v1463 = vpack.c.b16 %v869, %v866
  %v1464 = vpack.c.b16 %v873, %v870
  %v1465 = vpack.c.b16 %v874, %v871
  %v1466 = vpack.c.b16 %v875, %v872
  %v1467 = vpack.c.b16 %v879, %v876
  %v1468 = vpack.c.b16 %v880, %v877
  %v1469 = vpack.c.b16 %v881, %v878
  %v1470 = vpack.c.b16 %v885, %v882
  %v1471 = vpack.c.b16 %v886, %v883
  %v1472 = vpack.c.b16 %v887, %v884
  %v1473 = vpack.c.b16 %v891, %v888
  %v1474 = vpack.c.b16 %v892, %v889
  %v1475 = vpack.c.b16 %v893, %v890
  %v1476 = vpack.c.b16 %v897, %v894
  %v1477 = vpack.c.b16 %v898, %v895
  %v1478 = vpack.c.b16 %v899, %v896
  %v1479 = vpack.c.b16 %v903, %v900
  %v1480 = vpack.c.b16 %v904, %v901
  %v1481 = vpack.c.b16 %v905, %v902
  %v1482 = vpack.c.b16 %v909, %v906
  %v1483 = vpack.c.b16 %v910, %v907
  %v1484 = vpack.c.b16 %v911, %v908
  %v1485 = vpack.c.b16 %v915, %v912
  %v1486 = vpack.c.b16 %v916, %v913
  %v1487 = vpack.c.b16 %v917, %v914
  %v1488 = vpack.c.b16 %v921, %v918
  %v1489 = vpack.c.b16 %v922, %v919
  %v1490 = vpack.c.b16 %v923, %v920
  %v1491 = vpack.c.b16 %v927, %v924
  %v1492 = vpack.c.b16 %v928, %v925
  %v1493 = vpack.c.b16 %v929, %v926
  %v1494 = vpack.c.b16 %v933, %v930
  %v1495 = vpack.c.b16 %v934, %v931
  %v1496 = vpack.c.b16 %v935, %v932
  %v1497 = vpack.c.b16 %v939, %v936
  %v1498 = vpack.c.b16 %v940, %v937
  %v1499 = vpack.c.b16 %v941, %v938
  %v1500 = vpack.c.b16 %v945, %v942
  %v1501 = vpack.c.b16 %v946, %v943
  %v1502 = vpack.c.b16 %v947, %v944
  %v1503 = vpack.c.b16 %v951, %v948
  %v1504 = vpack.c.b16 %v952, %v949
  %v1505 = vpack.c.b16 %v953, %v950
  %v1506 = vpack.c.b16 %v957, %v954
  %v1507 = vpack.c.b16 %v958, %v955
  %v1508 = vpack.c.b16 %v959, %v956
  %v1509 = vpack.c.b16 %v963, %v960
  %v1510 = vpack.c.b16 %v964, %v961
  %v1511 = vpack.c.b16 %v965, %v962
  %v1512 = vpack.c.b16 %v969, %v966
  %v1513 = vpack.c.b16 %v970, %v967
  %v1514 = vpack.c.b16 %v971, %v968
  %v1515 = vpack.c.b16 %v975, %v972
  %v1516 = vpack.c.b16 %v976, %v973
  %v1517 = vpack.c.b16 %v977, %v974
  %v1518 = vpack.c.b16 %v981, %v978
  %v1519 = vpack.c.b16 %v982, %v979
  %v1520 = vpack.c.b16 %v983, %v980
  %v1521 = vpack.c.b16 %v987, %v984
  %v1522 = vpack.c.b16 %v988, %v985
  %v1523 = vpack.c.b16 %v989, %v986
  %v1524 = vpack.c.b16 %v993, %v990
  %v1525 = vpack.c.b16 %v994, %v991
  %v1526 = vpack.c.b16 %v995, %v992
  %v1527 = vpack.c.b16 %v999, %v996
  %v1528 = vpack.c.b16 %v1000, %v997
  %v1529 = vpack.c.b16 %v1001, %v998
  %v1530 = vpack.c.b16 %v1005, %v1002
  %v1531 = vpack.c.b16 %v1006, %v1003
  %v1532 = vpack.c.b16 %v1007, %v1004
  %v1533 = vpack.c.b16 %v1011, %v1008
  %v1534 = vpack.c.b16 %v1012, %v1009
  %v1535 = vpack.c.b16 %v1013, %v1010
  %v1536 = vpack.c.b16 %v1017, %v1014
  %v1537 = vpack.c.b16 %v1018, %v1015
  %v1538 = vpack.c.b16 %v1019, %v1016
  %v1539 = vpack.c.b16 %v1023, %v1020
  %v1540 = vpack.c.b16 %v1024, %v1021
  %v1541 = vpack.c.b16 %v1025, %v1022
  %v1542 = vpack.c.b16 %v1029, %v1026
  %v1543 = vpack.c.b16 %v1030, %v1027
  %v1544 = vpack.c.b16 %v1031, %v1028
  %v1545 = vpack.c.b16 %v1035, %v1032
  %v1546 = vpack.c.b16 %v1036, %v1033
  %v1547 = vpack.c.b16 %v1037, %v1034
  %v1548 = vpack.c.b16 %v1041, %v1038
  %v1549 = vpack.c.b16 %v1042, %v1039
  %v1550 = vpack.c.b16 %v1043, %v1040
  %v1551 = vpack.c.b16 %v1047, %v1044
  %v1552 = vpack.c.b16 %v1048, %v1045
  %v1553 = vpack.c.b16 %v1049, %v1046
  %v1554 = vpack.c.b16 %v1053, %v1050
  %v1555 = vpack.c.b16 %v1054, %v1051
  %v1556 = vpack.c.b16 %v1055, %v1052
  %v1557 = vpack.c.b16 %v1059, %v1056
  %v1558 = vpack.c.b16 %v1060, %v1057
  %v1559 = vpack.c.b16 %v1061, %v1058
  %v1560 = vpack.c.b16 %v1065, %v1062
  %v1561 = vpack.c.b16 %v1066, %v1063
  %v1562 = vpack.c.b16 %v1067, %v1064
  %v1563 = vpack.c.b16 %v1071, %v1068
  %v1564 = vpack.c.b16 %v1072, %v1069
  %v1565 = vpack.c.b16 %v1073, %v1070
  %v1566 = vpack.c.b16 %v1077, %v1074
  %v1567 = vpack.c.b16 %v1078, %v1075
  %v1568 = vpack.c.b16 %v1079, %v1076
  %v1569 = vpack.c.b16 %v1083, %v1080
  %v1570 = vpack.c.b16 %v1084, %v1081
  %v1571 = vpack.c.b16 %v1085, %v1082
  %v1572 = vpack.c.b16 %v1089, %v1086
  %v1573 = vpack.c.b16 %v1090, %v1087
  %v1574 = vpack.c.b16 %v1091, %v1088
  %v1575 = vpack.c.b16 %v1095, %v1092
  %v1576 = vpack.c.b16 %v1096, %v1093
  %v1577 = vpack.c.b16 %v1097, %v1094
  %v1578 = vpack.c.b16 %v1101, %v1098
  %v1579 = vpack.c.b16 %v1102, %v1099
  %v1580 = vpack.c.b16 %v1103, %v1100
  %v1581 = vpack.c.b16 %v1107, %v1104
  %v1582 = vpack.c.b16 %v1108, %v1105
  %v1583 = vpack.c.b16 %v1109, %v1106
  %v1584 = vpack.c.b16 %v1113, %v1110
  %v1585 = vpack.c.b16 %v1114, %v1111
  %v1586 = vpack.c.b16 %v1115, %v1112
  %v1587 = vpack.c.b16 %v1119, %v1116
  %v1588 = vpack.c.b16 %v1120, %v1117
  %v1589 = vpack.c.b16 %v1121, %v1118
  %v1590 = vpack.c.b16 %v1125, %v1122
  %v1591 = vpack.c.b16 %v1126, %v1123
  %v1592 = vpack.c.b16 %v1127, %v1124
  %v1593 = vpack.c.b16 %v1131, %v1128
  %v1594 = vpack.c.b16 %v1132, %v1129
  %v1595 = vpack.c.b16 %v1133, %v1130
  %v1596 = vpack.c.b16 %v1137, %v1134
  %v1597 = vpack.c.b16 %v1138, %v1135
  %v1598 = vpack.c.b16 %v1139, %v1136
  %v1599 = vpack.c.b16 %v1143, %v1140
  %v1600 = vpack.c.b16 %v1144, %v1141
  %v1601 = vpack.c.b16 %v1145, %v1142
  %v1602 = vpack.c.b16 %v1149, %v1146
  %v1603 = vpack.c.b16 %v1150, %v1147
  %v1604 = vpack.c.b16 %v1151, %v1148
  %v1605 = vpack.c.b16 %v1155, %v1152
  %v1606 = vpack.c.b16 %v1156, %v1153
  %v1607 = vpack.c.b16 %v1157, %v1154
  %v1608 = vpack.c.b16 %v1161, %v1158
  %v1609 = vpack.c.b16 %v1162, %v1159
  %v1610 = vpack.c.b16 %v1163, %v1160
  %v1611 = vpack.c.b16 %v1167, %v1164
  %v1612 = vpack.c.b16 %v1168, %v1165
  %v1613 = vpack.c.b16 %v1169, %v1166
  %v1614 = vpack.c.b16 %v1173, %v1170
  %v1615 = vpack.c.b16 %v1174, %v1171
  %v1616 = vpack.c.b16 %v1175, %v1172
  %v1617 = vpack.c.b16 %v1179, %v1176
  %v1618 = vpack.c.b16 %v1180, %v1177
  %v1619 = vpack.c.b16 %v1181, %v1178
  %v1620 = vpack.c.b16 %v1185, %v1182
  %v1621 = vpack.c.b16 %v1186, %v1183
  %v1622 = vpack.c.b16 %v1187, %v1184
  %v1623 = vpack.c.b16 %v1191, %v1188
  %v1624 = vpack.c.b16 %v1192, %v1189
  %v1625 = vpack.c.b16 %v1193, %v1190
  %v1626 = vpack.c.b16 %v1197, %v1194
  %v1627 = vpack.c.b16 %v1198, %v1195
  %v1628 = vpack.c.b16 %v1199, %v1196
  %v1629 = vpack.c.b16 %v1203, %v1200
  %v1630 = vpack.c.b16 %v1204, %v1201
  %v1631 = vpack.c.b16 %v1205, %v1202
  %v1632 = vpack.c.b16 %v1209, %v1206
  %v1633 = vpack.c.b16 %v1210, %v1207
  %v1634 = vpack.c.b16 %v1211, %v1208
  %v1635 = vpack.c.b16 %v1215, %v1212
  %v1636 = vpack.c.b16 %v1216, %v1213
  %v1637 = vpack.c.b16 %v1217, %v1214
  %v1638 = vpack.c.b16 %v1221, %v1218
  %v1639 = vpack.c.b16 %v1222, %v1219
  %v1640 = vpack.c.b16 %v1223, %v1220
  %v1641 = vpack.c.b16 %v1227, %v1224
  %v1642 = vpack.c.b16 %v1228, %v1225
  %v1643 = vpack.c.b16 %v1229, %v1226
  %v1644 = vpack.c.b16 %v1233, %v1230
  %v1645 = vpack.c.b16 %v1234, %v1231
  %v1646 = vpack.c.b16 %v1235, %v1232
  %v1647 = vpack.c.b16 %v1239, %v1236
  %v1648 = vpack.c.b16 %v1240, %v1237
  %v1649 = vpack.c.b16 %v1241, %v1238
  %v1650 = vpack.c.b16 %v1245, %v1242
  %v1651 = vpack.c.b16 %v1246, %v1243
  %v1652 = vpack.c.b16 %v1247, %v1244
  %v1653 = vpack.c.b16 %v1251, %v1248
  %v1654 = vpack.c.b16 %v1252, %v1249
  %v1655 = vpack.c.b16 %v1253, %v1250
  %v1656 = vpack.c.b16 %v1257, %v1254
  %v1657 = vpack.c.b16 %v1258, %v1255
  %v1658 = vpack.c.b16 %v1259, %v1256
  %v1659 = vpack.c.b16 %v1263, %v1260
  %v1660 = vpack.c.b16 %v1264, %v1261
  %v1661 = vpack.c.b16 %v1265, %v1262
  %v1662 = vpack.c.b16 %v1269, %v1266
  %v1663 = vpack.c.b16 %v1270, %v1267
  %v1664 = vpack.c.b16 %v1271, %v1268
  %v1665 = vpack.c.b16 %v1275, %v1272
  %v1666 = vpack.c.b16 %v1276, %v1273
  %v1667 = vpack.c.b16 %v1277, %v1274
  %v1668 = vpack.c.b16 %v1281, %v1278
  %v1669 = vpack.c.b16 %v1282, %v1279
  %v1670 = vpack.c.b16 %v1283, %v1280
  %v1671 = vpack.c.b16 %v1287, %v1284
  %v1672 = vpack.c.b16 %v1288, %v1285
  %v1673 = vpack.c.b16 %v1289, %v1286
  %v1674 = vpack.c.b16 %v1293, %v1290
  %v1675 = vpack.c.b16 %v1294, %v1291
  %v1676 = vpack.c.b16 %v1295, %v1292
  %v1677 = vpack.c.b16 %v1299, %v1296
  %v1678 = vpack.c.b16 %v1300, %v1297
  %v1679 = vpack.c.b16 %v1301, %v1298
  %v1680 = vpack.c.b16 %v1305, %v1302
  %v1681 = vpack.c.b16 %v1306, %v1303
  %v1682 = vpack.c.b16 %v1307, %v1304
  %v1683 = vpack.c.b16 %v1311, %v1308
  %v1684 = vpack.c.b16 %v1312, %v1309
  %v1685 = vpack.c.b16 %v1313, %v1310
  %v1686 = vpack.c.b16 %v1317, %v1314
  %v1687 = vpack.c.b16 %v1318, %v1315
  %v1688 = vpack.c.b16 %v1319, %v1316
  %v1689 = vpack.c.b16 %v1323, %v1320
  %v1690 = vpack.c.b16 %v1324, %v1321
  %v1691 = vpack.c.b16 %v1325, %v1322
  %v1692 = vpack.c.b16 %v1329, %v1326
  %v1693 = vpack.c.b16 %v1330, %v1327
  %v1694 = vpack.c.b16 %v1331, %v1328
  %v1695 = vpack.c.b16 %v1335, %v1332
  %v1696 = vpack.c.b16 %v1336, %v1333
  %v1697 = vpack.c.b16 %v1337, %v1334
  %v1698 = vpack.c.b16 %v1341, %v1338
  %v1699 = vpack.c.b16 %v1342, %v1339
  %v1700 = vpack.c.b16 %v1343, %v1340
  %v1701 = vpack.c.b16 %v1347, %v1344
  %v1702 = vpack.c.b16 %v1348, %v1345
  %v1703 = vpack.c.b16 %v1349, %v1346
  %v1704 = vpack.c.b16 %v1353, %v1350
  %v1705 = vpack.c.b16 %v1354, %v1351
  %v1706 = vpack.c.b16 %v1355, %v1352
  %v1707 = vpack.c.b16 %v1359, %v1356
  %v1708 = vpack.c.b16 %v1360, %v1357
  %v1709 = vpack.c.b16 %v1361, %v1358
  %v1710 = vpack.c.b16 %v1365, %v1362
  %v1711 = vpack.c.b16 %v1366, %v1363
  %v1712 = vpack.c.b16 %v1367, %v1364
  %v1713 = vpack.c.b16 %v1371, %v1368
  %v1714 = vpack.c.b16 %v1372, %v1369
  %v1715 = vpack.c.b16 %v1373, %v1370
  %v1716 = vpack.c.b16 %v1377, %v1374
  %v1717 = vpack.c.b16 %v1378, %v1375
  %v1718 = vpack.c.b16 %v1379, %v1376
  %v1719 = vpack.c.b16 %v1383, %v1380
  %v1720 = vpack.c.b16 %v1384, %v1381
  %v1721 = vpack.c.b16 %v1385, %v1382
  %v1722 = vpack.c.b16 %v1389, %v1386
  %v1723 = vpack.c.b16 %v1390, %v1387
  %v1724 = vpack.c.b16 %v1391, %v1388
  %v1725 = vpack.c.b16 %v1395, %v1392
  %v1726 = vpack.c.b16 %v1396, %v1393
  %v1727 = vpack.c.b16 %v1397, %v1394
  %v1728 = vpack.c.b16 %v1401, %v1398
  %v1729 = vpack.c.b16 %v1402, %v1399
  %v1730 = vpack.c.b16 %v1403, %v1400
  %v1731 = vpack.c.b16 %v1407, %v1404
  %v1732 = vpack.c.b16 %v1408, %v1405
  %v1733 = vpack.c.b16 %v1409, %v1406
  %v1734 = vpack.c.b16 %v1413, %v1410
  %v1735 = vpack.c.b16 %v1414, %v1411
  %v1736 = vpack.c.b16 %v1415, %v1412
  %v1737 = vpack.c.b16 %v1419, %v1416
  %v1738 = vpack.c.b16 %v1420, %v1417
  %v1739 = vpack.c.b16 %v1421, %v1418
  %v1740 = vpack.c.b16 %v1425, %v1422
  %v1741 = vpack.c.b16 %v1426, %v1423
  %v1742 = vpack.c.b16 %v1427, %v1424
  %v1743 = vpack.c.b16 %v1431, %v1428
  %v1744 = vpack.c.b16 %v1432, %v1429
  %v1745 = vpack.c.b16 %v1433, %v1430
  %v1746 = vpack.c.b16 %v1437, %v1434
  %v1747 = vpack.c.b16 %v1438, %v1435
  %v1748 = vpack.c.b16 %v1439, %v1436
  %v1749 = vpack.c.b16 %v1443, %v1440
  %v1750 = vpack.c.b16 %v1444, %v1441
  %v1751 = vpack.c.b16 %v1445, %v1442
  %v1752 = vpack.c.b16 %v1449, %v1446
  %v1753 = vpack.c.b16 %v1450, %v1447
  %v1754 = vpack.c.b16 %v1451, %v1448
  %v1755 = vpack.c.b16 %v1455, %v1452
  %v1756 = vpack.c.b16 %v1456, %v1453
  %v1757 = vpack.c.b16 %v1457, %v1454
  %v1994 = vunpack.c.l.b16 %v415
  %v1995 = vunpack.c.l.b16 %v416
  %v1996 = vunpack.c.l.b16 %v417
  %v1997 = vunpack.c.l.b16 %v418
  %v1998 = vunpack.c.l.b16 %v419
  %v1999 = vunpack.c.l.b16 %v420
  %v2000 = vunpack.c.l.b16 %v421
  %v2001 = vunpack.c.l.b16 %v422
  %v2002 = vunpack.c.l.b16 %v423
  %v2003 = vunpack.c.l.b16 %v424
  %v2004 = vunpack.c.l.b16 %v425
  %v2005 = vunpack.c.l.b16 %v426
  %v2006 = vunpack.c.l.b16 %v427
  %v2007 = vunpack.c.l.b16 %v428
  %v2008 = vunpack.c.l.b16 %v429
  %v2009 = vunpack.c.l.b16 %v430
  %v2010 = vunpack.c.l.b16 %v431
  %v2011 = vunpack.c.l.b16 %v432
  %v2012 = vunpack.c.l.b16 %v433
  %v2013 = vunpack.c.l.b16 %v434
  %v2014 = vunpack.c.l.b16 %v435
  %v2015 = vunpack.c.l.b16 %v436
  %v2016 = vunpack.c.l.b16 %v437
  %v2017 = vunpack.c.l.b16 %v438
  %v2018 = vunpack.c.l.b16 %v439
  %v2019 = vunpack.c.l.b16 %v440
  %v2020 = vunpack.c.l.b16 %v441
  %v2021 = vunpack.c.l.b16 %v442
  %v2022 = vunpack.c.l.b16 %v443
  %v2023 = vunpack.c.l.b16 %v444
  %v2024 = vunpack.c.l.b16 %v445
  %v2025 = vunpack.c.l.b16 %v446
  %v2026 = vunpack.c.l.b16 %v447
  %v2027 = vunpack.c.l.b16 %v448
  %v2028 = vunpack.c.l.b16 %v449
  %v2029 = vunpack.c.l.b16 %v450
  %v2030 = vpack.c.b16 %v1995, %v1994
  %v2031 = vpack.c.b16 %v1997, %v1996
  %v2032 = vpack.c.b16 %v1999, %v1998
  %v2033 = vpack.c.b16 %v2001, %v2000
  %v2034 = vpack.c.b16 %v2003, %v2002
  %v2035 = vpack.c.b16 %v2005, %v2004
  %v2036 = vpack.c.b16 %v2007, %v2006
  %v2037 = vpack.c.b16 %v2009, %v2008
  %v2038 = vpack.c.b16 %v2011, %v2010
  %v2039 = vpack.c.b16 %v2013, %v2012
  %v2040 = vpack.c.b16 %v2015, %v2014
  %v2041 = vpack.c.b16 %v2017, %v2016
  %v2042 = vpack.c.b16 %v2019, %v2018
  %v2043 = vpack.c.b16 %v2021, %v2020
  %v2044 = vpack.c.b16 %v2023, %v2022
  %v2045 = vpack.c.b16 %v2025, %v2024
  %v2046 = vpack.c.b16 %v2027, %v2026
  %v2047 = vpack.c.b16 %v2029, %v2028
  %vm2066 = vcmask 261120
  %v2068 = vsel %vm2066, %v1460, 0
  %v2071 = vsel %vm2066, %v1463, 0
  %v2074 = vsel %vm2066, %v1466, 0
  %v2077 = vsel %vm2066, %v1469, 0
  %v2080 = vsel %vm2066, %v1472, 0
  %v2083 = vsel %vm2066, %v1475, 0
  %v2086 = vsel %vm2066, %v1478, 0
  %v2089 = vsel %vm2066, %v1481, 0
  %v2092 = vsel %vm2066, %v1484, 0
  %v2095 = vsel %vm2066, %v1487, 0
  %v2098 = vsel %vm2066, %v1490, 0
  %v2101 = vsel %vm2066, %v1493, 0
  %v2104 = vsel %vm2066, %v1496, 0
  %v2107 = vsel %vm2066, %v1499, 0
  %v2110 = vsel %vm2066, %v1502, 0
  %v2113 = vsel %vm2066, %v1505, 0
  %v2116 = vsel %vm2066, %v1508, 0
  %v2119 = vsel %vm2066, %v1511, 0
  %v2122 = vsel %vm2066, %v1514, 0
  %v2125 = vsel %vm2066, %v1517, 0
  %v2128 = vsel %vm2066, %v1520, 0
  %v2131 = vsel %vm2066, %v1523, 0
  %v2134 = vsel %vm2066, %v1526, 0
  %v2137 = vsel %vm2066, %v1529, 0
  %v2140 = vsel %vm2066, %v1532, 0
  %v2143 = vsel %vm2066, %v1535, 0
  %v2146 = vsel %vm2066, %v1538, 0
  %v2149 = vsel %vm2066, %v1541, 0
  %v2152 = vsel %vm2066, %v1544, 0
  %v2155 = vsel %vm2066, %v1547, 0
  %v2158 = vsel %vm2066, %v1550, 0
  %v2161 = vsel %vm2066, %v1553, 0
  %v2164 = vsel %vm2066, %v1556, 0
  %v2167 = vsel %vm2066, %v1559, 0
  %v2170 = vsel %vm2066, %v1562, 0
  %v2173 = vsel %vm2066, %v1565, 0
  %v2176 = vsel %vm2066, %v1568, 0
  %v2179 = vsel %vm2066, %v1571, 0
  %v2182 = vsel %vm2066, %v1574, 0
  %v2185 = vsel %vm2066, %v1577, 0
  %v2188 = vsel %vm2066, %v1580, 0
  %v2191 = vsel %vm2066, %v1583, 0
  %v2194 = vsel %vm2066, %v1586, 0
  %v2197 = vsel %vm2066, %v1589, 0
  %v2200 = vsel %vm2066, %v1592, 0
  %v2203 = vsel %vm2066, %v1595, 0
  %v2206 = vsel %vm2066, %v1598, 0
  %v2209 = vsel %vm2066, %v1601, 0
  %v2212 = vsel %vm2066, %v1604, 0
  %v2215 = vsel %vm2066, %v1607, 0
  %v2218 = vsel %vm2066, %v1610, 0
  %v2221 = vsel %vm2066, %v1613, 0
  %v2224 = vsel %vm2066, %v1616, 0
  %v2227 = vsel %vm2066, %v1619, 0
  %v2230 = vsel %vm2066, %v1622, 0
  %v2233 = vsel %vm2066, %v1625, 0
  %v2236 = vsel %vm2066, %v1628, 0
  %v2239 = vsel %vm2066, %v1631, 0
  %v2242 = vsel %vm2066, %v1634, 0
  %v2245 = vsel %vm2066, %v1637, 0
  %v2248 = vsel %vm2066, %v1640, 0
  %v2251 = vsel %vm2066, %v1643, 0
  %v2254 = vsel %vm2066, %v1646, 0
  %v2257 = vsel %vm2066, %v1649, 0
  %v2260 = vsel %vm2066, %v1652, 0
  %v2263 = vsel %vm2066, %v1655, 0
  %v2266 = vsel %vm2066, %v1658, 0
  %v2269 = vsel %vm2066, %v1661, 0
  %v2272 = vsel %vm2066, %v1664, 0
  %v2275 = vsel %vm2066, %v1667, 0
  %v2278 = vsel %vm2066, %v1670, 0
  %v2281 = vsel %vm2066, %v1673, 0
  %v2284 = vsel %vm2066, %v1676, 0
  %v2287 = vsel %vm2066, %v1679, 0
  %v2290 = vsel %vm2066, %v1682, 0
  %v2293 = vsel %vm2066, %v1685, 0
  %v2296 = vsel %vm2066, %v1688, 0
  %v2299 = vsel %vm2066, %v1691, 0
  %v2302 = vsel %vm2066, %v1694, 0
  %v2305 = vsel %vm2066, %v1697, 0
  %v2308 = vsel %vm2066, %v1700, 0
  %v2311 = vsel %vm2066, %v1703, 0
  %v2314 = vsel %vm2066, %v1706, 0
  %v2317 = vsel %vm2066, %v1709, 0
  %v2320 = vsel %vm2066, %v1712, 0
  %v2323 = vsel %vm2066, %v1715, 0
  %v2326 = vsel %vm2066, %v1718, 0
  %v2329 = vsel %vm2066, %v1721, 0
  %v2332 = vsel %vm2066, %v1724, 0
  %v2335 = vsel %vm2066, %v1727, 0
  %v2338 = vsel %vm2066, %v1730, 0
  %v2341 = vsel %vm2066, %v1733, 0
  %v2344 = vsel %vm2066, %v1736, 0
  %v2347 = vsel %vm2066, %v1739, 0
  %v2350 = vsel %vm2066, %v1742, 0
  %v2353 = vsel %vm2066, %v1745, 0
  %v2356 = vsel %vm2066, %v1748, 0
  %v2359 = vsel %vm2066, %v1751, 0
  %v2362 = vsel %vm2066, %v1754, 0
  %v2365 = vsel %vm2066, %v1757, 0
  %2367 = vmatprep.subr.bf16.mxu0 0
  %2368 = vmatpush1.bf16.msra.mxu0 %v2030
  %2369 = vmatprep.subr.bf16.mxu0 0
  %2370 = vmatpush1.bf16.msra.mxu0 %v2031
  %2371 = vmatprep.subr.bf16.mxu0 0
  %2372 = vmatpush1.bf16.msra.mxu0 %v2032
  %2373 = vmatprep.subr.bf16.mxu0 0
  %2374 = vmatpush1.bf16.msra.mxu0 %v2033
  %2375 = vmatprep.subr.bf16.mxu0 0
  %2376 = vmatpush1.bf16.msra.mxu0 %v2034
  %2377 = vmatprep.subr.bf16.mxu0 0
  %2378 = vmatpush1.bf16.msra.mxu0 %v2035
  %2379 = vmatprep.subr.bf16.mxu0 0
  %2380 = vmatpush1.bf16.msra.mxu0 %v2036
  %2381 = vmatprep.subr.bf16.mxu0 0
  %2382 = vmatpush1.bf16.msra.mxu0 %v2037
  %2383 = vmatprep.subr.bf16.mxu0 0
  %2384 = vmatpush1.bf16.msra.mxu0 %v2038
  %2385 = vmatprep.subr.bf16.mxu0 0
  %2386 = vmatpush1.bf16.msra.mxu0 %v2039
  %2387 = vmatprep.subr.bf16.mxu0 0
  %2388 = vmatpush1.bf16.msra.mxu0 %v2040
  %2389 = vmatprep.subr.bf16.mxu0 0
  %2390 = vmatpush1.bf16.msra.mxu0 %v2041
  %2391 = vmatprep.subr.bf16.mxu0 0
  %2392 = vmatpush1.bf16.msra.mxu0 %v2042
  %2393 = vmatprep.subr.bf16.mxu0 0
  %2394 = vmatpush1.bf16.msra.mxu0 %v2043
  %2395 = vmatprep.subr.bf16.mxu0 0
  %2396 = vmatpush1.bf16.msra.mxu0 %v2044
  %2397 = vmatprep.subr.bf16.mxu0 0
  %2398 = vmatpush1.bf16.msra.mxu0 %v2045
  %2399 = vmatprep.mubr.bf16.mxu0 %v1459
  %2400 = vmatmul.mubr.bf16.gmra.mrb[0].mxu0 %v1458
  %v2401 = vpop.f32.mrb[0].mxu0
  %v2402 = vadd.f32 %v456, %v2401
  %v2403 = vpop.f32.mrb[0].mxu0
  %v2404 = vpop.f32.mrb[0].mxu0
  %v2405 = vadd.f32 %v456, %v2404
  %v2406 = vpop.f32.mrb[0].mxu0
  %2407 = vmatprep.mubr.bf16.mxu0 %v1462
  %2408 = vmatmul.mubr.bf16.gmra.mrb[0].mxu0 %v1461
  %v2409 = vpop.f32.mrb[0].mxu0
  %v2410 = vadd.f32 %v456, %v2409
  %v2411 = vpop.f32.mrb[0].mxu0
  %v2412 = vpop.f32.mrb[0].mxu0
  %v2413 = vadd.f32 %v456, %v2412
  %v2414 = vpop.f32.mrb[0].mxu0
  %2415 = vmatprep.mubr.bf16.mxu0 %v1465
  %2416 = vmatmul.mubr.bf16.gmra.mrb[0].mxu0 %v1464
  %v2417 = vpop.f32.mrb[0].mxu0
  %v2418 = vadd.f32 %v456, %v2417
  %v2419 = vpop.f32.mrb[0].mxu0
  %v2420 = vpop.f32.mrb[0].mxu0
  %v2421 = vadd.f32 %v456, %v2420
  %v2422 = vpop.f32.mrb[0].mxu0
  %2423 = vmatprep.mubr.bf16.mxu0 %v1468
  %2424 = vmatmul.mubr.bf16.gmra.mrb[0].mxu0 %v1467
  %v2425 = vpop.f32.mrb[0].mxu0
  %v2426 = vadd.f32 %v456, %v2425
  %v2427 = vpop.f32.mrb[0].mxu0
  %v2428 = vpop.f32.mrb[0].mxu0
  %v2429 = vadd.f32 %v456, %v2428
  %v2430 = vpop.f32.mrb[0].mxu0
  %2431 = vmatprep.mubr.bf16.mxu0 %v1471
  %2432 = vmatmul.mubr.bf16.gmra.mrb[0].mxu0 %v1470
  %v2433 = vpop.f32.mrb[0].mxu0
  %v2434 = vadd.f32 %v456, %v2433
  %v2435 = vpop.f32.mrb[0].mxu0
  %v2436 = vpop.f32.mrb[0].mxu0
  %v2437 = vadd.f32 %v456, %v2436
  %v2438 = vpop.f32.mrb[0].mxu0
  %2439 = vmatprep.mubr.bf16.mxu0 %v1474
  %2440 = vmatmul.mubr.bf16.gmra.mrb[0].mxu0 %v1473
  %v2441 = vpop.f32.mrb[0].mxu0
  %v2442 = vadd.f32 %v456, %v2441
  %v2443 = vpop.f32.mrb[0].mxu0
  %v2444 = vpop.f32.mrb[0].mxu0
  %v2445 = vadd.f32 %v456, %v2444
  %v2446 = vpop.f32.mrb[0].mxu0
  %2447 = vmatprep.mubr.bf16.mxu0 %v1477
  %2448 = vmatmul.mubr.bf16.gmra.mrb[0].mxu0 %v1476
  %v2449 = vpop.f32.mrb[0].mxu0
  %v2450 = vadd.f32 %v456, %v2449
  %v2451 = vpop.f32.mrb[0].mxu0
  %v2452 = vpop.f32.mrb[0].mxu0
  %v2453 = vadd.f32 %v456, %v2452
  %v2454 = vpop.f32.mrb[0].mxu0
  %2455 = vmatprep.mubr.bf16.mxu0 %v1480
  %2456 = vmatmul.mubr.bf16.gmra.mrb[0].mxu0 %v1479
  %v2457 = vpop.f32.mrb[0].mxu0
  %v2458 = vadd.f32 %v456, %v2457
  %v2459 = vpop.f32.mrb[0].mxu0
  %v2460 = vpop.f32.mrb[0].mxu0
  %v2461 = vadd.f32 %v456, %v2460
  %v2462 = vpop.f32.mrb[0].mxu0
  %2463 = vmatprep.mubr.bf16.mxu0 %v1483
  %2464 = vmatmul.mubr.bf16.gmra.mrb[0].mxu0 %v1482
  %v2465 = vpop.f32.mrb[0].mxu0
  %v2466 = vadd.f32 %v456, %v2465
  %v2467 = vpop.f32.mrb[0].mxu0
  %v2468 = vpop.f32.mrb[0].mxu0
  %v2469 = vadd.f32 %v456, %v2468
  %v2470 = vpop.f32.mrb[0].mxu0
  %2471 = vmatprep.mubr.bf16.mxu0 %v1486
  %2472 = vmatmul.mubr.bf16.gmra.mrb[0].mxu0 %v1485
  %v2473 = vpop.f32.mrb[0].mxu0
  %v2474 = vadd.f32 %v456, %v2473
  %v2475 = vpop.f32.mrb[0].mxu0
  %v2476 = vpop.f32.mrb[0].mxu0
  %v2477 = vadd.f32 %v456, %v2476
  %v2478 = vpop.f32.mrb[0].mxu0
  %2479 = vmatprep.mubr.bf16.mxu0 %v1489
  %2480 = vmatmul.mubr.bf16.gmra.mrb[0].mxu0 %v1488
  %v2481 = vpop.f32.mrb[0].mxu0
  %v2482 = vadd.f32 %v456, %v2481
  %v2483 = vpop.f32.mrb[0].mxu0
  %v2484 = vpop.f32.mrb[0].mxu0
  %v2485 = vadd.f32 %v456, %v2484
  %v2486 = vpop.f32.mrb[0].mxu0
  %2487 = vmatprep.mubr.bf16.mxu0 %v1492
  %2488 = vmatmul.mubr.bf16.gmra.mrb[0].mxu0 %v1491
  %v2489 = vpop.f32.mrb[0].mxu0
  %v2490 = vadd.f32 %v456, %v2489
  %v2491 = vpop.f32.mrb[0].mxu0
  %v2492 = vpop.f32.mrb[0].mxu0
  %v2493 = vadd.f32 %v456, %v2492
  %v2494 = vpop.f32.mrb[0].mxu0
  %2495 = vmatprep.mubr.bf16.mxu0 %v1495
  %2496 = vmatmul.mubr.bf16.gmra.mrb[0].mxu0 %v1494
  %v2497 = vpop.f32.mrb[0].mxu0
  %v2498 = vadd.f32 %v456, %v2497
  %v2499 = vpop.f32.mrb[0].mxu0
  %v2500 = vpop.f32.mrb[0].mxu0
  %v2501 = vadd.f32 %v456, %v2500
  %v2502 = vpop.f32.mrb[0].mxu0
  %2503 = vmatprep.mubr.bf16.mxu0 %v1498
  %2504 = vmatmul.mubr.bf16.gmra.mrb[0].mxu0 %v1497
  %v2505 = vpop.f32.mrb[0].mxu0
  %v2506 = vadd.f32 %v456, %v2505
  %v2507 = vpop.f32.mrb[0].mxu0
  %v2508 = vpop.f32.mrb[0].mxu0
  %v2509 = vadd.f32 %v456, %v2508
  %v2510 = vpop.f32.mrb[0].mxu0
  %2511 = vmatprep.mubr.bf16.mxu0 %v1501
  %2512 = vmatmul.mubr.bf16.gmra.mrb[0].mxu0 %v1500
  %v2513 = vpop.f32.mrb[0].mxu0
  %v2514 = vadd.f32 %v456, %v2513
  %v2515 = vpop.f32.mrb[0].mxu0
  %v2516 = vpop.f32.mrb[0].mxu0
  %v2517 = vadd.f32 %v456, %v2516
  %v2518 = vpop.f32.mrb[0].mxu0
  %2519 = vmatprep.mubr.bf16.mxu0 %v1504
  %2520 = vmatmul.mubr.bf16.gmra.mrb[0].mxu0 %v1503
  %v2521 = vpop.f32.mrb[0].mxu0
  %v2522 = vadd.f32 %v456, %v2521
  %v2523 = vpop.f32.mrb[0].mxu0
  %v2524 = vpop.f32.mrb[0].mxu0
  %v2525 = vadd.f32 %v456, %v2524
  %v2526 = vpop.f32.mrb[0].mxu0
  %2527 = vmatprep.mubr.bf16.mxu0 %v1507
  %2528 = vmatmul.mubr.bf16.gmra.mrb[0].mxu0 %v1506
  %v2529 = vpop.f32.mrb[0].mxu0
  %v2530 = vadd.f32 %v456, %v2529
  %v2531 = vpop.f32.mrb[0].mxu0
  %v2532 = vpop.f32.mrb[0].mxu0
  %v2533 = vadd.f32 %v456, %v2532
  %v2534 = vpop.f32.mrb[0].mxu0
  %2535 = vmatprep.mubr.bf16.mxu0 %v1510
  %2536 = vmatmul.mubr.bf16.gmra.mrb[0].mxu0 %v1509
  %v2537 = vpop.f32.mrb[0].mxu0
  %v2538 = vadd.f32 %v456, %v2537
  %v2539 = vpop.f32.mrb[0].mxu0
  %v2540 = vpop.f32.mrb[0].mxu0
  %v2541 = vadd.f32 %v456, %v2540
  %v2542 = vpop.f32.mrb[0].mxu0
  %2543 = vmatprep.mubr.bf16.mxu0 %v1513
  %2544 = vmatmul.mubr.bf16.gmra.mrb[0].mxu0 %v1512
  %v2545 = vpop.f32.mrb[0].mxu0
  %v2546 = vadd.f32 %v456, %v2545
  %v2547 = vpop.f32.mrb[0].mxu0
  %v2548 = vpop.f32.mrb[0].mxu0
  %v2549 = vadd.f32 %v456, %v2548
  %v2550 = vpop.f32.mrb[0].mxu0
  %2551 = vmatprep.mubr.bf16.mxu0 %v1516
  %2552 = vmatmul.mubr.bf16.gmra.mrb[0].mxu0 %v1515
  %v2553 = vpop.f32.mrb[0].mxu0
  %v2554 = vadd.f32 %v456, %v2553
  %v2555 = vpop.f32.mrb[0].mxu0
  %v2556 = vpop.f32.mrb[0].mxu0
  %v2557 = vadd.f32 %v456, %v2556
  %v2558 = vpop.f32.mrb[0].mxu0
  %2559 = vmatprep.mubr.bf16.mxu0 %v1519
  %2560 = vmatmul.mubr.bf16.gmra.mrb[0].mxu0 %v1518
  %v2561 = vpop.f32.mrb[0].mxu0
  %v2562 = vadd.f32 %v456, %v2561
  %v2563 = vpop.f32.mrb[0].mxu0
  %v2564 = vpop.f32.mrb[0].mxu0
  %v2565 = vadd.f32 %v456, %v2564
  %v2566 = vpop.f32.mrb[0].mxu0
  %2567 = vmatprep.mubr.bf16.mxu0 %v1522
  %2568 = vmatmul.mubr.bf16.gmra.mrb[0].mxu0 %v1521
  %v2569 = vpop.f32.mrb[0].mxu0
  %v2570 = vadd.f32 %v456, %v2569
  %v2571 = vpop.f32.mrb[0].mxu0
  %v2572 = vpop.f32.mrb[0].mxu0
  %v2573 = vadd.f32 %v456, %v2572
  %v2574 = vpop.f32.mrb[0].mxu0
  %2575 = vmatprep.mubr.bf16.mxu0 %v1525
  %2576 = vmatmul.mubr.bf16.gmra.mrb[0].mxu0 %v1524
  %v2577 = vpop.f32.mrb[0].mxu0
  %v2578 = vadd.f32 %v456, %v2577
  %v2579 = vpop.f32.mrb[0].mxu0
  %v2580 = vpop.f32.mrb[0].mxu0
  %v2581 = vadd.f32 %v456, %v2580
  %v2582 = vpop.f32.mrb[0].mxu0
  %2583 = vmatprep.mubr.bf16.mxu0 %v1528
  %2584 = vmatmul.mubr.bf16.gmra.mrb[0].mxu0 %v1527
  %v2585 = vpop.f32.mrb[0].mxu0
  %v2586 = vadd.f32 %v456, %v2585
  %v2587 = vpop.f32.mrb[0].mxu0
  %v2588 = vpop.f32.mrb[0].mxu0
  %v2589 = vadd.f32 %v456, %v2588
  %v2590 = vpop.f32.mrb[0].mxu0
  %2591 = vmatprep.mubr.bf16.mxu0 %v1531
  %2592 = vmatmul.mubr.bf16.gmra.mrb[0].mxu0 %v1530
  %v2593 = vpop.f32.mrb[0].mxu0
  %v2594 = vadd.f32 %v456, %v2593
  %v2595 = vpop.f32.mrb[0].mxu0
  %v2596 = vpop.f32.mrb[0].mxu0
  %v2597 = vadd.f32 %v456, %v2596
  %v2598 = vpop.f32.mrb[0].mxu0
  %2599 = vmatprep.mubr.bf16.mxu0 %v1534
  %2600 = vmatmul.mubr.bf16.gmra.mrb[0].mxu0 %v1533
  %v2601 = vpop.f32.mrb[0].mxu0
  %v2602 = vadd.f32 %v456, %v2601
  %v2603 = vpop.f32.mrb[0].mxu0
  %v2604 = vpop.f32.mrb[0].mxu0
  %v2605 = vadd.f32 %v456, %v2604
  %v2606 = vpop.f32.mrb[0].mxu0
  %2607 = vmatprep.mubr.bf16.mxu0 %v1537
  %2608 = vmatmul.mubr.bf16.gmra.mrb[0].mxu0 %v1536
  %v2609 = vpop.f32.mrb[0].mxu0
  %v2610 = vadd.f32 %v456, %v2609
  %v2611 = vpop.f32.mrb[0].mxu0
  %v2612 = vpop.f32.mrb[0].mxu0
  %v2613 = vadd.f32 %v456, %v2612
  %v2614 = vpop.f32.mrb[0].mxu0
  %2615 = vmatprep.mubr.bf16.mxu0 %v1540
  %2616 = vmatmul.mubr.bf16.gmra.mrb[0].mxu0 %v1539
  %v2617 = vpop.f32.mrb[0].mxu0
  %v2618 = vadd.f32 %v456, %v2617
  %v2619 = vpop.f32.mrb[0].mxu0
  %v2620 = vpop.f32.mrb[0].mxu0
  %v2621 = vadd.f32 %v456, %v2620
  %v2622 = vpop.f32.mrb[0].mxu0
  %2623 = vmatprep.mubr.bf16.mxu0 %v1543
  %2624 = vmatmul.mubr.bf16.gmra.mrb[0].mxu0 %v1542
  %v2625 = vpop.f32.mrb[0].mxu0
  %v2626 = vadd.f32 %v456, %v2625
  %v2627 = vpop.f32.mrb[0].mxu0
  %v2628 = vpop.f32.mrb[0].mxu0
  %v2629 = vadd.f32 %v456, %v2628
  %v2630 = vpop.f32.mrb[0].mxu0
  %2631 = vmatprep.mubr.bf16.mxu0 %v1546
  %2632 = vmatmul.mubr.bf16.gmra.mrb[0].mxu0 %v1545
  %v2633 = vpop.f32.mrb[0].mxu0
  %v2634 = vadd.f32 %v456, %v2633
  %v2635 = vpop.f32.mrb[0].mxu0
  %v2636 = vpop.f32.mrb[0].mxu0
  %v2637 = vadd.f32 %v456, %v2636
  %v2638 = vpop.f32.mrb[0].mxu0
  %2639 = vmatprep.mubr.bf16.mxu0 %v1549
  %2640 = vmatmul.mubr.bf16.gmra.mrb[0].mxu0 %v1548
  %v2641 = vpop.f32.mrb[0].mxu0
  %v2642 = vadd.f32 %v456, %v2641
  %v2643 = vpop.f32.mrb[0].mxu0
  %v2644 = vpop.f32.mrb[0].mxu0
  %v2645 = vadd.f32 %v456, %v2644
  %v2646 = vpop.f32.mrb[0].mxu0
  %2647 = vmatprep.mubr.bf16.mxu0 %v1552
  %2648 = vmatmul.mubr.bf16.gmra.mrb[0].mxu0 %v1551
  %v2649 = vpop.f32.mrb[0].mxu0
  %v2650 = vadd.f32 %v456, %v2649
  %v2651 = vpop.f32.mrb[0].mxu0
  %v2652 = vpop.f32.mrb[0].mxu0
  %v2653 = vadd.f32 %v456, %v2652
  %v2654 = vpop.f32.mrb[0].mxu0
  %2655 = vmatprep.mubr.bf16.mxu0 %v1555
  %2656 = vmatmul.mubr.bf16.gmra.mrb[0].mxu0 %v1554
  %v2657 = vpop.f32.mrb[0].mxu0
  %v2658 = vadd.f32 %v456, %v2657
  %v2659 = vpop.f32.mrb[0].mxu0
  %v2660 = vpop.f32.mrb[0].mxu0
  %v2661 = vadd.f32 %v456, %v2660
  %v2662 = vpop.f32.mrb[0].mxu0
  %2663 = vmatprep.mubr.bf16.mxu0 %v1558
  %2664 = vmatmul.mubr.bf16.gmra.mrb[0].mxu0 %v1557
  %v2665 = vpop.f32.mrb[0].mxu0
  %v2666 = vadd.f32 %v456, %v2665
  %v2667 = vpop.f32.mrb[0].mxu0
  %v2668 = vpop.f32.mrb[0].mxu0
  %v2669 = vadd.f32 %v456, %v2668
  %v2670 = vpop.f32.mrb[0].mxu0
  %2671 = vmatprep.mubr.bf16.mxu0 %v1561
  %2672 = vmatmul.mubr.bf16.gmra.mrb[0].mxu0 %v1560
  %v2673 = vpop.f32.mrb[0].mxu0
  %v2674 = vadd.f32 %v456, %v2673
  %v2675 = vpop.f32.mrb[0].mxu0
  %v2676 = vpop.f32.mrb[0].mxu0
  %v2677 = vadd.f32 %v456, %v2676
  %v2678 = vpop.f32.mrb[0].mxu0
  %2679 = vmatprep.mubr.bf16.mxu0 %v1564
  %2680 = vmatmul.mubr.bf16.gmra.mrb[0].mxu0 %v1563
  %v2681 = vpop.f32.mrb[0].mxu0
  %v2682 = vadd.f32 %v456, %v2681
  %v2683 = vpop.f32.mrb[0].mxu0
  %v2684 = vpop.f32.mrb[0].mxu0
  %v2685 = vadd.f32 %v456, %v2684
  %v2686 = vpop.f32.mrb[0].mxu0
  %2687 = vmatprep.mubr.bf16.mxu0 %v1567
  %2688 = vmatmul.mubr.bf16.gmra.mrb[0].mxu0 %v1566
  %v2689 = vpop.f32.mrb[0].mxu0
  %v2690 = vadd.f32 %v456, %v2689
  %v2691 = vpop.f32.mrb[0].mxu0
  %v2692 = vpop.f32.mrb[0].mxu0
  %v2693 = vadd.f32 %v456, %v2692
  %v2694 = vpop.f32.mrb[0].mxu0
  %2695 = vmatprep.mubr.bf16.mxu0 %v1570
  %2696 = vmatmul.mubr.bf16.gmra.mrb[0].mxu0 %v1569
  %v2697 = vpop.f32.mrb[0].mxu0
  %v2698 = vadd.f32 %v456, %v2697
  %v2699 = vpop.f32.mrb[0].mxu0
  %v2700 = vpop.f32.mrb[0].mxu0
  %v2701 = vadd.f32 %v456, %v2700
  %v2702 = vpop.f32.mrb[0].mxu0
  %2703 = vmatprep.mubr.bf16.mxu0 %v1573
  %2704 = vmatmul.mubr.bf16.gmra.mrb[0].mxu0 %v1572
  %v2705 = vpop.f32.mrb[0].mxu0
  %v2706 = vadd.f32 %v456, %v2705
  %v2707 = vpop.f32.mrb[0].mxu0
  %v2708 = vpop.f32.mrb[0].mxu0
  %v2709 = vadd.f32 %v456, %v2708
  %v2710 = vpop.f32.mrb[0].mxu0
  %2711 = vmatprep.mubr.bf16.mxu0 %v1576
  %2712 = vmatmul.mubr.bf16.gmra.mrb[0].mxu0 %v1575
  %v2713 = vpop.f32.mrb[0].mxu0
  %v2714 = vadd.f32 %v456, %v2713
  %v2715 = vpop.f32.mrb[0].mxu0
  %v2716 = vpop.f32.mrb[0].mxu0
  %v2717 = vadd.f32 %v456, %v2716
  %v2718 = vpop.f32.mrb[0].mxu0
  %2719 = vmatprep.mubr.bf16.mxu0 %v1579
  %2720 = vmatmul.mubr.bf16.gmra.mrb[0].mxu0 %v1578
  %v2721 = vpop.f32.mrb[0].mxu0
  %v2722 = vadd.f32 %v456, %v2721
  %v2723 = vpop.f32.mrb[0].mxu0
  %v2724 = vpop.f32.mrb[0].mxu0
  %v2725 = vadd.f32 %v456, %v2724
  %v2726 = vpop.f32.mrb[0].mxu0
  %2727 = vmatprep.mubr.bf16.mxu0 %v1582
  %2728 = vmatmul.mubr.bf16.gmra.mrb[0].mxu0 %v1581
  %v2729 = vpop.f32.mrb[0].mxu0
  %v2730 = vadd.f32 %v456, %v2729
  %v2731 = vpop.f32.mrb[0].mxu0
  %v2732 = vpop.f32.mrb[0].mxu0
  %v2733 = vadd.f32 %v456, %v2732
  %v2734 = vpop.f32.mrb[0].mxu0
  %2735 = vmatprep.mubr.bf16.mxu0 %v1585
  %2736 = vmatmul.mubr.bf16.gmra.mrb[0].mxu0 %v1584
  %v2737 = vpop.f32.mrb[0].mxu0
  %v2738 = vadd.f32 %v456, %v2737
  %v2739 = vpop.f32.mrb[0].mxu0
  %v2740 = vpop.f32.mrb[0].mxu0
  %v2741 = vadd.f32 %v456, %v2740
  %v2742 = vpop.f32.mrb[0].mxu0
  %2743 = vmatprep.mubr.bf16.mxu0 %v1588
  %2744 = vmatmul.mubr.bf16.gmra.mrb[0].mxu0 %v1587
  %v2745 = vpop.f32.mrb[0].mxu0
  %v2746 = vadd.f32 %v456, %v2745
  %v2747 = vpop.f32.mrb[0].mxu0
  %v2748 = vpop.f32.mrb[0].mxu0
  %v2749 = vadd.f32 %v456, %v2748
  %v2750 = vpop.f32.mrb[0].mxu0
  %2751 = vmatprep.mubr.bf16.mxu0 %v1591
  %2752 = vmatmul.mubr.bf16.gmra.mrb[0].mxu0 %v1590
  %v2753 = vpop.f32.mrb[0].mxu0
  %v2754 = vadd.f32 %v456, %v2753
  %v2755 = vpop.f32.mrb[0].mxu0
  %v2756 = vpop.f32.mrb[0].mxu0
  %v2757 = vadd.f32 %v456, %v2756
  %v2758 = vpop.f32.mrb[0].mxu0
  %2759 = vmatprep.mubr.bf16.mxu0 %v1594
  %2760 = vmatmul.mubr.bf16.gmra.mrb[0].mxu0 %v1593
  %v2761 = vpop.f32.mrb[0].mxu0
  %v2762 = vadd.f32 %v456, %v2761
  %v2763 = vpop.f32.mrb[0].mxu0
  %v2764 = vpop.f32.mrb[0].mxu0
  %v2765 = vadd.f32 %v456, %v2764
  %v2766 = vpop.f32.mrb[0].mxu0
  %2767 = vmatprep.mubr.bf16.mxu0 %v1597
  %2768 = vmatmul.mubr.bf16.gmra.mrb[0].mxu0 %v1596
  %v2769 = vpop.f32.mrb[0].mxu0
  %v2770 = vadd.f32 %v456, %v2769
  %v2771 = vpop.f32.mrb[0].mxu0
  %v2772 = vpop.f32.mrb[0].mxu0
  %v2773 = vadd.f32 %v456, %v2772
  %v2774 = vpop.f32.mrb[0].mxu0
  %2775 = vmatprep.mubr.bf16.mxu0 %v1600
  %2776 = vmatmul.mubr.bf16.gmra.mrb[0].mxu0 %v1599
  %v2777 = vpop.f32.mrb[0].mxu0
  %v2778 = vadd.f32 %v456, %v2777
  %v2779 = vpop.f32.mrb[0].mxu0
  %v2780 = vpop.f32.mrb[0].mxu0
  %v2781 = vadd.f32 %v456, %v2780
  %v2782 = vpop.f32.mrb[0].mxu0
  %2783 = vmatprep.mubr.bf16.mxu0 %v1603
  %2784 = vmatmul.mubr.bf16.gmra.mrb[0].mxu0 %v1602
  %v2785 = vpop.f32.mrb[0].mxu0
  %v2786 = vadd.f32 %v456, %v2785
  %v2787 = vpop.f32.mrb[0].mxu0
  %v2788 = vpop.f32.mrb[0].mxu0
  %v2789 = vadd.f32 %v456, %v2788
  %v2790 = vpop.f32.mrb[0].mxu0
  %2791 = vmatprep.mubr.bf16.mxu0 %v1606
  %2792 = vmatmul.mubr.bf16.gmra.mrb[0].mxu0 %v1605
  %v2793 = vpop.f32.mrb[0].mxu0
  %v2794 = vadd.f32 %v456, %v2793
  %v2795 = vpop.f32.mrb[0].mxu0
  %v2796 = vpop.f32.mrb[0].mxu0
  %v2797 = vadd.f32 %v456, %v2796
  %v2798 = vpop.f32.mrb[0].mxu0
  %2799 = vmatprep.mubr.bf16.mxu0 %v1609
  %2800 = vmatmul.mubr.bf16.gmra.mrb[0].mxu0 %v1608
  %v2801 = vpop.f32.mrb[0].mxu0
  %v2802 = vadd.f32 %v456, %v2801
  %v2803 = vpop.f32.mrb[0].mxu0
  %v2804 = vpop.f32.mrb[0].mxu0
  %v2805 = vadd.f32 %v456, %v2804
  %v2806 = vpop.f32.mrb[0].mxu0
  %2807 = vmatprep.mubr.bf16.mxu0 %v1612
  %2808 = vmatmul.mubr.bf16.gmra.mrb[0].mxu0 %v1611
  %v2809 = vpop.f32.mrb[0].mxu0
  %v2810 = vadd.f32 %v456, %v2809
  %v2811 = vpop.f32.mrb[0].mxu0
  %v2812 = vpop.f32.mrb[0].mxu0
  %v2813 = vadd.f32 %v456, %v2812
  %v2814 = vpop.f32.mrb[0].mxu0
  %2815 = vmatprep.mubr.bf16.mxu0 %v1615
  %2816 = vmatmul.mubr.bf16.gmra.mrb[0].mxu0 %v1614
  %v2817 = vpop.f32.mrb[0].mxu0
  %v2818 = vadd.f32 %v456, %v2817
  %v2819 = vpop.f32.mrb[0].mxu0
  %v2820 = vpop.f32.mrb[0].mxu0
  %v2821 = vadd.f32 %v456, %v2820
  %v2822 = vpop.f32.mrb[0].mxu0
  %2823 = vmatprep.mubr.bf16.mxu0 %v1618
  %2824 = vmatmul.mubr.bf16.gmra.mrb[0].mxu0 %v1617
  %v2825 = vpop.f32.mrb[0].mxu0
  %v2826 = vadd.f32 %v456, %v2825
  %v2827 = vpop.f32.mrb[0].mxu0
  %v2828 = vpop.f32.mrb[0].mxu0
  %v2829 = vadd.f32 %v456, %v2828
  %v2830 = vpop.f32.mrb[0].mxu0
  %2831 = vmatprep.mubr.bf16.mxu0 %v1621
  %2832 = vmatmul.mubr.bf16.gmra.mrb[0].mxu0 %v1620
  %v2833 = vpop.f32.mrb[0].mxu0
  %v2834 = vadd.f32 %v456, %v2833
  %v2835 = vpop.f32.mrb[0].mxu0
  %v2836 = vpop.f32.mrb[0].mxu0
  %v2837 = vadd.f32 %v456, %v2836
  %v2838 = vpop.f32.mrb[0].mxu0
  %2839 = vmatprep.mubr.bf16.mxu0 %v1624
  %2840 = vmatmul.mubr.bf16.gmra.mrb[0].mxu0 %v1623
  %v2841 = vpop.f32.mrb[0].mxu0
  %v2842 = vadd.f32 %v456, %v2841
  %v2843 = vpop.f32.mrb[0].mxu0
  %v2844 = vpop.f32.mrb[0].mxu0
  %v2845 = vadd.f32 %v456, %v2844
  %v2846 = vpop.f32.mrb[0].mxu0
  %2847 = vmatprep.mubr.bf16.mxu0 %v1627
  %2848 = vmatmul.mubr.bf16.gmra.mrb[0].mxu0 %v1626
  %v2849 = vpop.f32.mrb[0].mxu0
  %v2850 = vadd.f32 %v456, %v2849
  %v2851 = vpop.f32.mrb[0].mxu0
  %v2852 = vpop.f32.mrb[0].mxu0
  %v2853 = vadd.f32 %v456, %v2852
  %v2854 = vpop.f32.mrb[0].mxu0
  %2855 = vmatprep.mubr.bf16.mxu0 %v1630
  %2856 = vmatmul.mubr.bf16.gmra.mrb[0].mxu0 %v1629
  %v2857 = vpop.f32.mrb[0].mxu0
  %v2858 = vadd.f32 %v456, %v2857
  %v2859 = vpop.f32.mrb[0].mxu0
  %v2860 = vpop.f32.mrb[0].mxu0
  %v2861 = vadd.f32 %v456, %v2860
  %v2862 = vpop.f32.mrb[0].mxu0
  %2863 = vmatprep.mubr.bf16.mxu0 %v1633
  %2864 = vmatmul.mubr.bf16.gmra.mrb[0].mxu0 %v1632
  %v2865 = vpop.f32.mrb[0].mxu0
  %v2866 = vadd.f32 %v456, %v2865
  %v2867 = vpop.f32.mrb[0].mxu0
  %v2868 = vpop.f32.mrb[0].mxu0
  %v2869 = vadd.f32 %v456, %v2868
  %v2870 = vpop.f32.mrb[0].mxu0
  %2871 = vmatprep.mubr.bf16.mxu0 %v1636
  %2872 = vmatmul.mubr.bf16.gmra.mrb[0].mxu0 %v1635
  %v2873 = vpop.f32.mrb[0].mxu0
  %v2874 = vadd.f32 %v456, %v2873
  %v2875 = vpop.f32.mrb[0].mxu0
  %v2876 = vpop.f32.mrb[0].mxu0
  %v2877 = vadd.f32 %v456, %v2876
  %v2878 = vpop.f32.mrb[0].mxu0
  %2879 = vmatprep.mubr.bf16.mxu0 %v1639
  %2880 = vmatmul.mubr.bf16.gmra.mrb[0].mxu0 %v1638
  %v2881 = vpop.f32.mrb[0].mxu0
  %v2882 = vadd.f32 %v456, %v2881
  %v2883 = vpop.f32.mrb[0].mxu0
  %v2884 = vpop.f32.mrb[0].mxu0
  %v2885 = vadd.f32 %v456, %v2884
  %v2886 = vpop.f32.mrb[0].mxu0
  %2887 = vmatprep.mubr.bf16.mxu0 %v1642
  %2888 = vmatmul.mubr.bf16.gmra.mrb[0].mxu0 %v1641
  %v2889 = vpop.f32.mrb[0].mxu0
  %v2890 = vadd.f32 %v456, %v2889
  %v2891 = vpop.f32.mrb[0].mxu0
  %v2892 = vpop.f32.mrb[0].mxu0
  %v2893 = vadd.f32 %v456, %v2892
  %v2894 = vpop.f32.mrb[0].mxu0
  %2895 = vmatprep.mubr.bf16.mxu0 %v1645
  %2896 = vmatmul.mubr.bf16.gmra.mrb[0].mxu0 %v1644
  %v2897 = vpop.f32.mrb[0].mxu0
  %v2898 = vadd.f32 %v456, %v2897
  %v2899 = vpop.f32.mrb[0].mxu0
  %v2900 = vpop.f32.mrb[0].mxu0
  %v2901 = vadd.f32 %v456, %v2900
  %v2902 = vpop.f32.mrb[0].mxu0
  %2903 = vmatprep.mubr.bf16.mxu0 %v1648
  %2904 = vmatmul.mubr.bf16.gmra.mrb[0].mxu0 %v1647
  %v2905 = vpop.f32.mrb[0].mxu0
  %v2906 = vadd.f32 %v456, %v2905
  %v2907 = vpop.f32.mrb[0].mxu0
  %v2908 = vpop.f32.mrb[0].mxu0
  %v2909 = vadd.f32 %v456, %v2908
  %v2910 = vpop.f32.mrb[0].mxu0
  %2911 = vmatprep.mubr.bf16.mxu0 %v1651
  %2912 = vmatmul.mubr.bf16.gmra.mrb[0].mxu0 %v1650
  %v2913 = vpop.f32.mrb[0].mxu0
  %v2914 = vadd.f32 %v456, %v2913
  %v2915 = vpop.f32.mrb[0].mxu0
  %v2916 = vpop.f32.mrb[0].mxu0
  %v2917 = vadd.f32 %v456, %v2916
  %v2918 = vpop.f32.mrb[0].mxu0
  %2919 = vmatprep.mubr.bf16.mxu0 %v1654
  %2920 = vmatmul.mubr.bf16.gmra.mrb[0].mxu0 %v1653
  %v2921 = vpop.f32.mrb[0].mxu0
  %v2922 = vadd.f32 %v456, %v2921
  %v2923 = vpop.f32.mrb[0].mxu0
  %v2924 = vpop.f32.mrb[0].mxu0
  %v2925 = vadd.f32 %v456, %v2924
  %v2926 = vpop.f32.mrb[0].mxu0
  %2927 = vmatprep.mubr.bf16.mxu0 %v1657
  %2928 = vmatmul.mubr.bf16.gmra.mrb[0].mxu0 %v1656
  %v2929 = vpop.f32.mrb[0].mxu0
  %v2930 = vadd.f32 %v456, %v2929
  %v2931 = vpop.f32.mrb[0].mxu0
  %v2932 = vpop.f32.mrb[0].mxu0
  %v2933 = vadd.f32 %v456, %v2932
  %v2934 = vpop.f32.mrb[0].mxu0
  %2935 = vmatprep.mubr.bf16.mxu0 %v1660
  %2936 = vmatmul.mubr.bf16.gmra.mrb[0].mxu0 %v1659
  %v2937 = vpop.f32.mrb[0].mxu0
  %v2938 = vadd.f32 %v456, %v2937
  %v2939 = vpop.f32.mrb[0].mxu0
  %v2940 = vpop.f32.mrb[0].mxu0
  %v2941 = vadd.f32 %v456, %v2940
  %v2942 = vpop.f32.mrb[0].mxu0
  %2943 = vmatprep.mubr.bf16.mxu0 %v1663
  %2944 = vmatmul.mubr.bf16.gmra.mrb[0].mxu0 %v1662
  %v2945 = vpop.f32.mrb[0].mxu0
  %v2946 = vadd.f32 %v456, %v2945
  %v2947 = vpop.f32.mrb[0].mxu0
  %v2948 = vpop.f32.mrb[0].mxu0
  %v2949 = vadd.f32 %v456, %v2948
  %v2950 = vpop.f32.mrb[0].mxu0
  %2951 = vmatprep.mubr.bf16.mxu0 %v1666
  %2952 = vmatmul.mubr.bf16.gmra.mrb[0].mxu0 %v1665
  %v2953 = vpop.f32.mrb[0].mxu0
  %v2954 = vadd.f32 %v456, %v2953
  %v2955 = vpop.f32.mrb[0].mxu0
  %v2956 = vpop.f32.mrb[0].mxu0
  %v2957 = vadd.f32 %v456, %v2956
  %v2958 = vpop.f32.mrb[0].mxu0
  %2959 = vmatprep.mubr.bf16.mxu0 %v1669
  %2960 = vmatmul.mubr.bf16.gmra.mrb[0].mxu0 %v1668
  %v2961 = vpop.f32.mrb[0].mxu0
  %v2962 = vadd.f32 %v456, %v2961
  %v2963 = vpop.f32.mrb[0].mxu0
  %v2964 = vpop.f32.mrb[0].mxu0
  %v2965 = vadd.f32 %v456, %v2964
  %v2966 = vpop.f32.mrb[0].mxu0
  %2967 = vmatprep.mubr.bf16.mxu0 %v1672
  %2968 = vmatmul.mubr.bf16.gmra.mrb[0].mxu0 %v1671
  %v2969 = vpop.f32.mrb[0].mxu0
  %v2970 = vadd.f32 %v456, %v2969
  %v2971 = vpop.f32.mrb[0].mxu0
  %v2972 = vpop.f32.mrb[0].mxu0
  %v2973 = vadd.f32 %v456, %v2972
  %v2974 = vpop.f32.mrb[0].mxu0
  %2975 = vmatprep.mubr.bf16.mxu0 %v1675
  %2976 = vmatmul.mubr.bf16.gmra.mrb[0].mxu0 %v1674
  %v2977 = vpop.f32.mrb[0].mxu0
  %v2978 = vadd.f32 %v456, %v2977
  %v2979 = vpop.f32.mrb[0].mxu0
  %v2980 = vpop.f32.mrb[0].mxu0
  %v2981 = vadd.f32 %v456, %v2980
  %v2982 = vpop.f32.mrb[0].mxu0
  %2983 = vmatprep.mubr.bf16.mxu0 %v1678
  %2984 = vmatmul.mubr.bf16.gmra.mrb[0].mxu0 %v1677
  %v2985 = vpop.f32.mrb[0].mxu0
  %v2986 = vadd.f32 %v456, %v2985
  %v2987 = vpop.f32.mrb[0].mxu0
  %v2988 = vpop.f32.mrb[0].mxu0
  %v2989 = vadd.f32 %v456, %v2988
  %v2990 = vpop.f32.mrb[0].mxu0
  %2991 = vmatprep.mubr.bf16.mxu0 %v1681
  %2992 = vmatmul.mubr.bf16.gmra.mrb[0].mxu0 %v1680
  %v2993 = vpop.f32.mrb[0].mxu0
  %v2994 = vadd.f32 %v456, %v2993
  %v2995 = vpop.f32.mrb[0].mxu0
  %v2996 = vpop.f32.mrb[0].mxu0
  %v2997 = vadd.f32 %v456, %v2996
  %v2998 = vpop.f32.mrb[0].mxu0
  %2999 = vmatprep.mubr.bf16.mxu0 %v1684
  %3000 = vmatmul.mubr.bf16.gmra.mrb[0].mxu0 %v1683
  %v3001 = vpop.f32.mrb[0].mxu0
  %v3002 = vadd.f32 %v456, %v3001
  %v3003 = vpop.f32.mrb[0].mxu0
  %v3004 = vpop.f32.mrb[0].mxu0
  %v3005 = vadd.f32 %v456, %v3004
  %v3006 = vpop.f32.mrb[0].mxu0
  %3007 = vmatprep.mubr.bf16.mxu0 %v1687
  %3008 = vmatmul.mubr.bf16.gmra.mrb[0].mxu0 %v1686
  %v3009 = vpop.f32.mrb[0].mxu0
  %v3010 = vadd.f32 %v456, %v3009
  %v3011 = vpop.f32.mrb[0].mxu0
  %v3012 = vpop.f32.mrb[0].mxu0
  %v3013 = vadd.f32 %v456, %v3012
  %v3014 = vpop.f32.mrb[0].mxu0
  %3015 = vmatprep.mubr.bf16.mxu0 %v1690
  %3016 = vmatmul.mubr.bf16.gmra.mrb[0].mxu0 %v1689
  %v3017 = vpop.f32.mrb[0].mxu0
  %v3018 = vadd.f32 %v456, %v3017
  %v3019 = vpop.f32.mrb[0].mxu0
  %v3020 = vpop.f32.mrb[0].mxu0
  %v3021 = vadd.f32 %v456, %v3020
  %v3022 = vpop.f32.mrb[0].mxu0
  %3023 = vmatprep.mubr.bf16.mxu0 %v1693
  %3024 = vmatmul.mubr.bf16.gmra.mrb[0].mxu0 %v1692
  %v3025 = vpop.f32.mrb[0].mxu0
  %v3026 = vadd.f32 %v456, %v3025
  %v3027 = vpop.f32.mrb[0].mxu0
  %v3028 = vpop.f32.mrb[0].mxu0
  %v3029 = vadd.f32 %v456, %v3028
  %v3030 = vpop.f32.mrb[0].mxu0
  %3031 = vmatprep.mubr.bf16.mxu0 %v1696
  %3032 = vmatmul.mubr.bf16.gmra.mrb[0].mxu0 %v1695
  %v3033 = vpop.f32.mrb[0].mxu0
  %v3034 = vadd.f32 %v456, %v3033
  %v3035 = vpop.f32.mrb[0].mxu0
  %v3036 = vpop.f32.mrb[0].mxu0
  %v3037 = vadd.f32 %v456, %v3036
  %v3038 = vpop.f32.mrb[0].mxu0
  %3039 = vmatprep.mubr.bf16.mxu0 %v1699
  %3040 = vmatmul.mubr.bf16.gmra.mrb[0].mxu0 %v1698
  %v3041 = vpop.f32.mrb[0].mxu0
  %v3042 = vadd.f32 %v456, %v3041
  %v3043 = vpop.f32.mrb[0].mxu0
  %v3044 = vpop.f32.mrb[0].mxu0
  %v3045 = vadd.f32 %v456, %v3044
  %v3046 = vpop.f32.mrb[0].mxu0
  %3047 = vmatprep.mubr.bf16.mxu0 %v1702
  %3048 = vmatmul.mubr.bf16.gmra.mrb[0].mxu0 %v1701
  %v3049 = vpop.f32.mrb[0].mxu0
  %v3050 = vadd.f32 %v456, %v3049
  %v3051 = vpop.f32.mrb[0].mxu0
  %v3052 = vpop.f32.mrb[0].mxu0
  %v3053 = vadd.f32 %v456, %v3052
  %v3054 = vpop.f32.mrb[0].mxu0
  %3055 = vmatprep.mubr.bf16.mxu0 %v1705
  %3056 = vmatmul.mubr.bf16.gmra.mrb[0].mxu0 %v1704
  %v3057 = vpop.f32.mrb[0].mxu0
  %v3058 = vadd.f32 %v456, %v3057
  %v3059 = vpop.f32.mrb[0].mxu0
  %v3060 = vpop.f32.mrb[0].mxu0
  %v3061 = vadd.f32 %v456, %v3060
  %v3062 = vpop.f32.mrb[0].mxu0
  %3063 = vmatprep.mubr.bf16.mxu0 %v1708
  %3064 = vmatmul.mubr.bf16.gmra.mrb[0].mxu0 %v1707
  %v3065 = vpop.f32.mrb[0].mxu0
  %v3066 = vadd.f32 %v456, %v3065
  %v3067 = vpop.f32.mrb[0].mxu0
  %v3068 = vpop.f32.mrb[0].mxu0
  %v3069 = vadd.f32 %v456, %v3068
  %v3070 = vpop.f32.mrb[0].mxu0
  %3071 = vmatprep.mubr.bf16.mxu0 %v1711
  %3072 = vmatmul.mubr.bf16.gmra.mrb[0].mxu0 %v1710
  %v3073 = vpop.f32.mrb[0].mxu0
  %v3074 = vadd.f32 %v456, %v3073
  %v3075 = vpop.f32.mrb[0].mxu0
  %v3076 = vpop.f32.mrb[0].mxu0
  %v3077 = vadd.f32 %v456, %v3076
  %v3078 = vpop.f32.mrb[0].mxu0
  %3079 = vmatprep.mubr.bf16.mxu0 %v1714
  %3080 = vmatmul.mubr.bf16.gmra.mrb[0].mxu0 %v1713
  %v3081 = vpop.f32.mrb[0].mxu0
  %v3082 = vadd.f32 %v456, %v3081
  %v3083 = vpop.f32.mrb[0].mxu0
  %v3084 = vpop.f32.mrb[0].mxu0
  %v3085 = vadd.f32 %v456, %v3084
  %v3086 = vpop.f32.mrb[0].mxu0
  %3087 = vmatprep.mubr.bf16.mxu0 %v1717
  %3088 = vmatmul.mubr.bf16.gmra.mrb[0].mxu0 %v1716
  %v3089 = vpop.f32.mrb[0].mxu0
  %v3090 = vadd.f32 %v456, %v3089
  %v3091 = vpop.f32.mrb[0].mxu0
  %v3092 = vpop.f32.mrb[0].mxu0
  %v3093 = vadd.f32 %v456, %v3092
  %v3094 = vpop.f32.mrb[0].mxu0
  %3095 = vmatprep.mubr.bf16.mxu0 %v1720
  %3096 = vmatmul.mubr.bf16.gmra.mrb[0].mxu0 %v1719
  %v3097 = vpop.f32.mrb[0].mxu0
  %v3098 = vadd.f32 %v456, %v3097
  %v3099 = vpop.f32.mrb[0].mxu0
  %v3100 = vpop.f32.mrb[0].mxu0
  %v3101 = vadd.f32 %v456, %v3100
  %v3102 = vpop.f32.mrb[0].mxu0
  %3103 = vmatprep.mubr.bf16.mxu0 %v1723
  %3104 = vmatmul.mubr.bf16.gmra.mrb[0].mxu0 %v1722
  %v3105 = vpop.f32.mrb[0].mxu0
  %v3106 = vadd.f32 %v456, %v3105
  %v3107 = vpop.f32.mrb[0].mxu0
  %v3108 = vpop.f32.mrb[0].mxu0
  %v3109 = vadd.f32 %v456, %v3108
  %v3110 = vpop.f32.mrb[0].mxu0
  %3111 = vmatprep.mubr.bf16.mxu0 %v1726
  %3112 = vmatmul.mubr.bf16.gmra.mrb[0].mxu0 %v1725
  %v3113 = vpop.f32.mrb[0].mxu0
  %v3114 = vadd.f32 %v456, %v3113
  %v3115 = vpop.f32.mrb[0].mxu0
  %v3116 = vpop.f32.mrb[0].mxu0
  %v3117 = vadd.f32 %v456, %v3116
  %v3118 = vpop.f32.mrb[0].mxu0
  %3119 = vmatprep.mubr.bf16.mxu0 %v1729
  %3120 = vmatmul.mubr.bf16.gmra.mrb[0].mxu0 %v1728
  %v3121 = vpop.f32.mrb[0].mxu0
  %v3122 = vadd.f32 %v456, %v3121
  %v3123 = vpop.f32.mrb[0].mxu0
  %v3124 = vpop.f32.mrb[0].mxu0
  %v3125 = vadd.f32 %v456, %v3124
  %v3126 = vpop.f32.mrb[0].mxu0
  %3127 = vmatprep.mubr.bf16.mxu0 %v1732
  %3128 = vmatmul.mubr.bf16.gmra.mrb[0].mxu0 %v1731
  %v3129 = vpop.f32.mrb[0].mxu0
  %v3130 = vadd.f32 %v456, %v3129
  %v3131 = vpop.f32.mrb[0].mxu0
  %v3132 = vpop.f32.mrb[0].mxu0
  %v3133 = vadd.f32 %v456, %v3132
  %v3134 = vpop.f32.mrb[0].mxu0
  %3135 = vmatprep.mubr.bf16.mxu0 %v1735
  %3136 = vmatmul.mubr.bf16.gmra.mrb[0].mxu0 %v1734
  %v3137 = vpop.f32.mrb[0].mxu0
  %v3138 = vadd.f32 %v456, %v3137
  %v3139 = vpop.f32.mrb[0].mxu0
  %v3140 = vpop.f32.mrb[0].mxu0
  %v3141 = vadd.f32 %v456, %v3140
  %v3142 = vpop.f32.mrb[0].mxu0
  %3143 = vmatprep.mubr.bf16.mxu0 %v1738
  %3144 = vmatmul.mubr.bf16.gmra.mrb[0].mxu0 %v1737
  %v3145 = vpop.f32.mrb[0].mxu0
  %v3146 = vadd.f32 %v456, %v3145
  %v3147 = vpop.f32.mrb[0].mxu0
  %v3148 = vpop.f32.mrb[0].mxu0
  %v3149 = vadd.f32 %v456, %v3148
  %v3150 = vpop.f32.mrb[0].mxu0
  %3151 = vmatprep.mubr.bf16.mxu0 %v1741
  %3152 = vmatmul.mubr.bf16.gmra.mrb[0].mxu0 %v1740
  %v3153 = vpop.f32.mrb[0].mxu0
  %v3154 = vadd.f32 %v456, %v3153
  %v3155 = vpop.f32.mrb[0].mxu0
  %v3156 = vpop.f32.mrb[0].mxu0
  %v3157 = vadd.f32 %v456, %v3156
  %v3158 = vpop.f32.mrb[0].mxu0
  %3159 = vmatprep.mubr.bf16.mxu0 %v1744
  %3160 = vmatmul.mubr.bf16.gmra.mrb[0].mxu0 %v1743
  %v3161 = vpop.f32.mrb[0].mxu0
  %v3162 = vadd.f32 %v456, %v3161
  %v3163 = vpop.f32.mrb[0].mxu0
  %v3164 = vpop.f32.mrb[0].mxu0
  %v3165 = vadd.f32 %v456, %v3164
  %v3166 = vpop.f32.mrb[0].mxu0
  %3167 = vmatprep.mubr.bf16.mxu0 %v1747
  %3168 = vmatmul.mubr.bf16.gmra.mrb[0].mxu0 %v1746
  %v3169 = vpop.f32.mrb[0].mxu0
  %v3170 = vadd.f32 %v456, %v3169
  %v3171 = vpop.f32.mrb[0].mxu0
  %v3172 = vpop.f32.mrb[0].mxu0
  %v3173 = vadd.f32 %v456, %v3172
  %v3174 = vpop.f32.mrb[0].mxu0
  %3175 = vmatprep.mubr.bf16.mxu0 %v1750
  %3176 = vmatmul.mubr.bf16.gmra.mrb[0].mxu0 %v1749
  %v3177 = vpop.f32.mrb[0].mxu0
  %v3178 = vadd.f32 %v456, %v3177
  %v3179 = vpop.f32.mrb[0].mxu0
  %v3180 = vpop.f32.mrb[0].mxu0
  %v3181 = vadd.f32 %v456, %v3180
  %v3182 = vpop.f32.mrb[0].mxu0
  %3183 = vmatprep.mubr.bf16.mxu0 %v1753
  %3184 = vmatmul.mubr.bf16.gmra.mrb[0].mxu0 %v1752
  %v3185 = vpop.f32.mrb[0].mxu0
  %v3186 = vadd.f32 %v456, %v3185
  %v3187 = vpop.f32.mrb[0].mxu0
  %v3188 = vpop.f32.mrb[0].mxu0
  %v3189 = vadd.f32 %v456, %v3188
  %v3190 = vpop.f32.mrb[0].mxu0
  %3191 = vmatprep.mubr.bf16.mxu0 %v1756
  %3192 = vmatmul.mubr.bf16.gmra.mrb[0].mxu0 %v1755
  %v3193 = vpop.f32.mrb[0].mxu0
  %v3194 = vadd.f32 %v456, %v3193
  %v3195 = vpop.f32.mrb[0].mxu0
  %v3196 = vpop.f32.mrb[0].mxu0
  %v3197 = vadd.f32 %v456, %v3196
  %v3198 = vpop.f32.mrb[0].mxu0
  %3199 = vdwg.mxu0
  %3200 = vmatprep.subr.bf16.mxu0 0
  %3201 = vmatpush1.bf16.msra.mxu0 %v2046
  %3202 = vmatprep.subr.bf16.mxu0 0
  %3203 = vmatpush1.bf16.msra.mxu0 %v2047
  %3204 = vmatprep.subr.bf16.mxu0 0
  %3205 = vmatpush1.bf16.msra.mxu0 0
  %3206 = vmatprep.subr.bf16.mxu0 0
  %3207 = vmatpush1.bf16.msra.mxu0 0
  %3208 = vmatprep.subr.bf16.mxu0 0
  %3209 = vmatpush1.bf16.msra.mxu0 0
  %3210 = vmatprep.subr.bf16.mxu0 0
  %3211 = vmatpush1.bf16.msra.mxu0 0
  %3212 = vmatprep.subr.bf16.mxu0 0
  %3213 = vmatpush1.bf16.msra.mxu0 0
  %3214 = vmatprep.subr.bf16.mxu0 0
  %3215 = vmatpush1.bf16.msra.mxu0 0
  %3216 = vmatprep.subr.bf16.mxu0 0
  %3217 = vmatpush1.bf16.msra.mxu0 0
  %3218 = vmatprep.subr.bf16.mxu0 0
  %3219 = vmatpush1.bf16.msra.mxu0 0
  %3220 = vmatprep.subr.bf16.mxu0 0
  %3221 = vmatpush1.bf16.msra.mxu0 0
  %3222 = vmatprep.subr.bf16.mxu0 0
  %3223 = vmatpush1.bf16.msra.mxu0 0
  %3224 = vmatprep.subr.bf16.mxu0 0
  %3225 = vmatpush1.bf16.msra.mxu0 0
  %3226 = vmatprep.subr.bf16.mxu0 0
  %3227 = vmatpush1.bf16.msra.mxu0 0
  %3228 = vmatprep.subr.bf16.mxu0 0
  %3229 = vmatpush1.bf16.msra.mxu0 0
  %3230 = vmatprep.subr.bf16.mxu0 0
  %3231 = vmatpush1.bf16.msra.mxu0 0
  %3232 = vmatprep.mubr.bf16.mxu0 0
  %3233 = vmatmul.mubr.bf16.gmra.mrb[0].mxu0 %v2068
  %v3234 = vpop.f32.mrb[0].mxu0
  %v3235 = vadd.f32 %v2402, %v3234
  %v3236 = vpop.f32.mrb[0].mxu0
  %v3237 = vpop.f32.mrb[0].mxu0
  %v3238 = vadd.f32 %v2405, %v3237
  %v3239 = vpop.f32.mrb[0].mxu0
  %3240 = vmatprep.mubr.bf16.mxu0 0
  %3241 = vmatmul.mubr.bf16.gmra.mrb[0].mxu0 %v2071
  %v3242 = vpop.f32.mrb[0].mxu0
  %v3243 = vadd.f32 %v2410, %v3242
  %v3244 = vpop.f32.mrb[0].mxu0
  %v3245 = vpop.f32.mrb[0].mxu0
  %v3246 = vadd.f32 %v2413, %v3245
  %v3247 = vpop.f32.mrb[0].mxu0
  %3248 = vmatprep.mubr.bf16.mxu0 0
  %3249 = vmatmul.mubr.bf16.gmra.mrb[0].mxu0 %v2074
  %v3250 = vpop.f32.mrb[0].mxu0
  %v3251 = vadd.f32 %v2418, %v3250
  %v3252 = vpop.f32.mrb[0].mxu0
  %v3253 = vpop.f32.mrb[0].mxu0
  %v3254 = vadd.f32 %v2421, %v3253
  %v3255 = vpop.f32.mrb[0].mxu0
  %3256 = vmatprep.mubr.bf16.mxu0 0
  %3257 = vmatmul.mubr.bf16.gmra.mrb[0].mxu0 %v2077
  %v3258 = vpop.f32.mrb[0].mxu0
  %v3259 = vadd.f32 %v2426, %v3258
  %v3260 = vpop.f32.mrb[0].mxu0
  %v3261 = vpop.f32.mrb[0].mxu0
  %v3262 = vadd.f32 %v2429, %v3261
  %v3263 = vpop.f32.mrb[0].mxu0
  %3264 = vmatprep.mubr.bf16.mxu0 0
  %3265 = vmatmul.mubr.bf16.gmra.mrb[0].mxu0 %v2080
  %v3266 = vpop.f32.mrb[0].mxu0
  %v3267 = vadd.f32 %v2434, %v3266
  %v3268 = vpop.f32.mrb[0].mxu0
  %v3269 = vpop.f32.mrb[0].mxu0
  %v3270 = vadd.f32 %v2437, %v3269
  %v3271 = vpop.f32.mrb[0].mxu0
  %3272 = vmatprep.mubr.bf16.mxu0 0
  %3273 = vmatmul.mubr.bf16.gmra.mrb[0].mxu0 %v2083
  %v3274 = vpop.f32.mrb[0].mxu0
  %v3275 = vadd.f32 %v2442, %v3274
  %v3276 = vpop.f32.mrb[0].mxu0
  %v3277 = vpop.f32.mrb[0].mxu0
  %v3278 = vadd.f32 %v2445, %v3277
  %v3279 = vpop.f32.mrb[0].mxu0
  %3280 = vmatprep.mubr.bf16.mxu0 0
  %3281 = vmatmul.mubr.bf16.gmra.mrb[0].mxu0 %v2086
  %v3282 = vpop.f32.mrb[0].mxu0
  %v3283 = vadd.f32 %v2450, %v3282
  %v3284 = vpop.f32.mrb[0].mxu0
  %v3285 = vpop.f32.mrb[0].mxu0
  %v3286 = vadd.f32 %v2453, %v3285
  %v3287 = vpop.f32.mrb[0].mxu0
  %3288 = vmatprep.mubr.bf16.mxu0 0
  %3289 = vmatmul.mubr.bf16.gmra.mrb[0].mxu0 %v2089
  %v3290 = vpop.f32.mrb[0].mxu0
  %v3291 = vadd.f32 %v2458, %v3290
  %v3292 = vpop.f32.mrb[0].mxu0
  %v3293 = vpop.f32.mrb[0].mxu0
  %v3294 = vadd.f32 %v2461, %v3293
  %v3295 = vpop.f32.mrb[0].mxu0
  %3296 = vmatprep.mubr.bf16.mxu0 0
  %3297 = vmatmul.mubr.bf16.gmra.mrb[0].mxu0 %v2092
  %v3298 = vpop.f32.mrb[0].mxu0
  %v3299 = vadd.f32 %v2466, %v3298
  %v3300 = vpop.f32.mrb[0].mxu0
  %v3301 = vpop.f32.mrb[0].mxu0
  %v3302 = vadd.f32 %v2469, %v3301
  %v3303 = vpop.f32.mrb[0].mxu0
  %3304 = vmatprep.mubr.bf16.mxu0 0
  %3305 = vmatmul.mubr.bf16.gmra.mrb[0].mxu0 %v2095
  %v3306 = vpop.f32.mrb[0].mxu0
  %v3307 = vadd.f32 %v2474, %v3306
  %v3308 = vpop.f32.mrb[0].mxu0
  %v3309 = vpop.f32.mrb[0].mxu0
  %v3310 = vadd.f32 %v2477, %v3309
  %v3311 = vpop.f32.mrb[0].mxu0
  %3312 = vmatprep.mubr.bf16.mxu0 0
  %3313 = vmatmul.mubr.bf16.gmra.mrb[0].mxu0 %v2098
  %v3314 = vpop.f32.mrb[0].mxu0
  %v3315 = vadd.f32 %v2482, %v3314
  %v3316 = vpop.f32.mrb[0].mxu0
  %v3317 = vpop.f32.mrb[0].mxu0
  %v3318 = vadd.f32 %v2485, %v3317
  %v3319 = vpop.f32.mrb[0].mxu0
  %3320 = vmatprep.mubr.bf16.mxu0 0
  %3321 = vmatmul.mubr.bf16.gmra.mrb[0].mxu0 %v2101
  %v3322 = vpop.f32.mrb[0].mxu0
  %v3323 = vadd.f32 %v2490, %v3322
  %v3324 = vpop.f32.mrb[0].mxu0
  %v3325 = vpop.f32.mrb[0].mxu0
  %v3326 = vadd.f32 %v2493, %v3325
  %v3327 = vpop.f32.mrb[0].mxu0
  %3328 = vmatprep.mubr.bf16.mxu0 0
  %3329 = vmatmul.mubr.bf16.gmra.mrb[0].mxu0 %v2104
  %v3330 = vpop.f32.mrb[0].mxu0
  %v3331 = vadd.f32 %v2498, %v3330
  %v3332 = vpop.f32.mrb[0].mxu0
  %v3333 = vpop.f32.mrb[0].mxu0
  %v3334 = vadd.f32 %v2501, %v3333
  %v3335 = vpop.f32.mrb[0].mxu0
  %3336 = vmatprep.mubr.bf16.mxu0 0
  %3337 = vmatmul.mubr.bf16.gmra.mrb[0].mxu0 %v2107
  %v3338 = vpop.f32.mrb[0].mxu0
  %v3339 = vadd.f32 %v2506, %v3338
  %v3340 = vpop.f32.mrb[0].mxu0
  %v3341 = vpop.f32.mrb[0].mxu0
  %v3342 = vadd.f32 %v2509, %v3341
  %v3343 = vpop.f32.mrb[0].mxu0
  %3344 = vmatprep.mubr.bf16.mxu0 0
  %3345 = vmatmul.mubr.bf16.gmra.mrb[0].mxu0 %v2110
  %v3346 = vpop.f32.mrb[0].mxu0
  %v3347 = vadd.f32 %v2514, %v3346
  %v3348 = vpop.f32.mrb[0].mxu0
  %v3349 = vpop.f32.mrb[0].mxu0
  %v3350 = vadd.f32 %v2517, %v3349
  %v3351 = vpop.f32.mrb[0].mxu0
  %3352 = vmatprep.mubr.bf16.mxu0 0
  %3353 = vmatmul.mubr.bf16.gmra.mrb[0].mxu0 %v2113
  %v3354 = vpop.f32.mrb[0].mxu0
  %v3355 = vadd.f32 %v2522, %v3354
  %v3356 = vpop.f32.mrb[0].mxu0
  %v3357 = vpop.f32.mrb[0].mxu0
  %v3358 = vadd.f32 %v2525, %v3357
  %v3359 = vpop.f32.mrb[0].mxu0
  %3360 = vmatprep.mubr.bf16.mxu0 0
  %3361 = vmatmul.mubr.bf16.gmra.mrb[0].mxu0 %v2116
  %v3362 = vpop.f32.mrb[0].mxu0
  %v3363 = vadd.f32 %v2530, %v3362
  %v3364 = vpop.f32.mrb[0].mxu0
  %v3365 = vpop.f32.mrb[0].mxu0
  %v3366 = vadd.f32 %v2533, %v3365
  %v3367 = vpop.f32.mrb[0].mxu0
  %3368 = vmatprep.mubr.bf16.mxu0 0
  %3369 = vmatmul.mubr.bf16.gmra.mrb[0].mxu0 %v2119
  %v3370 = vpop.f32.mrb[0].mxu0
  %v3371 = vadd.f32 %v2538, %v3370
  %v3372 = vpop.f32.mrb[0].mxu0
  %v3373 = vpop.f32.mrb[0].mxu0
  %v3374 = vadd.f32 %v2541, %v3373
  %v3375 = vpop.f32.mrb[0].mxu0
  %3376 = vmatprep.mubr.bf16.mxu0 0
  %3377 = vmatmul.mubr.bf16.gmra.mrb[0].mxu0 %v2122
  %v3378 = vpop.f32.mrb[0].mxu0
  %v3379 = vadd.f32 %v2546, %v3378
  %v3380 = vpop.f32.mrb[0].mxu0
  %v3381 = vpop.f32.mrb[0].mxu0
  %v3382 = vadd.f32 %v2549, %v3381
  %v3383 = vpop.f32.mrb[0].mxu0
  %3384 = vmatprep.mubr.bf16.mxu0 0
  %3385 = vmatmul.mubr.bf16.gmra.mrb[0].mxu0 %v2125
  %v3386 = vpop.f32.mrb[0].mxu0
  %v3387 = vadd.f32 %v2554, %v3386
  %v3388 = vpop.f32.mrb[0].mxu0
  %v3389 = vpop.f32.mrb[0].mxu0
  %v3390 = vadd.f32 %v2557, %v3389
  %v3391 = vpop.f32.mrb[0].mxu0
  %3392 = vmatprep.mubr.bf16.mxu0 0
  %3393 = vmatmul.mubr.bf16.gmra.mrb[0].mxu0 %v2128
  %v3394 = vpop.f32.mrb[0].mxu0
  %v3395 = vadd.f32 %v2562, %v3394
  %v3396 = vpop.f32.mrb[0].mxu0
  %v3397 = vpop.f32.mrb[0].mxu0
  %v3398 = vadd.f32 %v2565, %v3397
  %v3399 = vpop.f32.mrb[0].mxu0
  %3400 = vmatprep.mubr.bf16.mxu0 0
  %3401 = vmatmul.mubr.bf16.gmra.mrb[0].mxu0 %v2131
  %v3402 = vpop.f32.mrb[0].mxu0
  %v3403 = vadd.f32 %v2570, %v3402
  %v3404 = vpop.f32.mrb[0].mxu0
  %v3405 = vpop.f32.mrb[0].mxu0
  %v3406 = vadd.f32 %v2573, %v3405
  %v3407 = vpop.f32.mrb[0].mxu0
  %3408 = vmatprep.mubr.bf16.mxu0 0
  %3409 = vmatmul.mubr.bf16.gmra.mrb[0].mxu0 %v2134
  %v3410 = vpop.f32.mrb[0].mxu0
  %v3411 = vadd.f32 %v2578, %v3410
  %v3412 = vpop.f32.mrb[0].mxu0
  %v3413 = vpop.f32.mrb[0].mxu0
  %v3414 = vadd.f32 %v2581, %v3413
  %v3415 = vpop.f32.mrb[0].mxu0
  %3416 = vmatprep.mubr.bf16.mxu0 0
  %3417 = vmatmul.mubr.bf16.gmra.mrb[0].mxu0 %v2137
  %v3418 = vpop.f32.mrb[0].mxu0
  %v3419 = vadd.f32 %v2586, %v3418
  %v3420 = vpop.f32.mrb[0].mxu0
  %v3421 = vpop.f32.mrb[0].mxu0
  %v3422 = vadd.f32 %v2589, %v3421
  %v3423 = vpop.f32.mrb[0].mxu0
  %3424 = vmatprep.mubr.bf16.mxu0 0
  %3425 = vmatmul.mubr.bf16.gmra.mrb[0].mxu0 %v2140
  %v3426 = vpop.f32.mrb[0].mxu0
  %v3427 = vadd.f32 %v2594, %v3426
  %v3428 = vpop.f32.mrb[0].mxu0
  %v3429 = vpop.f32.mrb[0].mxu0
  %v3430 = vadd.f32 %v2597, %v3429
  %v3431 = vpop.f32.mrb[0].mxu0
  %3432 = vmatprep.mubr.bf16.mxu0 0
  %3433 = vmatmul.mubr.bf16.gmra.mrb[0].mxu0 %v2143
  %v3434 = vpop.f32.mrb[0].mxu0
  %v3435 = vadd.f32 %v2602, %v3434
  %v3436 = vpop.f32.mrb[0].mxu0
  %v3437 = vpop.f32.mrb[0].mxu0
  %v3438 = vadd.f32 %v2605, %v3437
  %v3439 = vpop.f32.mrb[0].mxu0
  %3440 = vmatprep.mubr.bf16.mxu0 0
  %3441 = vmatmul.mubr.bf16.gmra.mrb[0].mxu0 %v2146
  %v3442 = vpop.f32.mrb[0].mxu0
  %v3443 = vadd.f32 %v2610, %v3442
  %v3444 = vpop.f32.mrb[0].mxu0
  %v3445 = vpop.f32.mrb[0].mxu0
  %v3446 = vadd.f32 %v2613, %v3445
  %v3447 = vpop.f32.mrb[0].mxu0
  %3448 = vmatprep.mubr.bf16.mxu0 0
  %3449 = vmatmul.mubr.bf16.gmra.mrb[0].mxu0 %v2149
  %v3450 = vpop.f32.mrb[0].mxu0
  %v3451 = vadd.f32 %v2618, %v3450
  %v3452 = vpop.f32.mrb[0].mxu0
  %v3453 = vpop.f32.mrb[0].mxu0
  %v3454 = vadd.f32 %v2621, %v3453
  %v3455 = vpop.f32.mrb[0].mxu0
  %3456 = vmatprep.mubr.bf16.mxu0 0
  %3457 = vmatmul.mubr.bf16.gmra.mrb[0].mxu0 %v2152
  %v3458 = vpop.f32.mrb[0].mxu0
  %v3459 = vadd.f32 %v2626, %v3458
  %v3460 = vpop.f32.mrb[0].mxu0
  %v3461 = vpop.f32.mrb[0].mxu0
  %v3462 = vadd.f32 %v2629, %v3461
  %v3463 = vpop.f32.mrb[0].mxu0
  %3464 = vmatprep.mubr.bf16.mxu0 0
  %3465 = vmatmul.mubr.bf16.gmra.mrb[0].mxu0 %v2155
  %v3466 = vpop.f32.mrb[0].mxu0
  %v3467 = vadd.f32 %v2634, %v3466
  %v3468 = vpop.f32.mrb[0].mxu0
  %v3469 = vpop.f32.mrb[0].mxu0
  %v3470 = vadd.f32 %v2637, %v3469
  %v3471 = vpop.f32.mrb[0].mxu0
  %3472 = vmatprep.mubr.bf16.mxu0 0
  %3473 = vmatmul.mubr.bf16.gmra.mrb[0].mxu0 %v2158
  %v3474 = vpop.f32.mrb[0].mxu0
  %v3475 = vadd.f32 %v2642, %v3474
  %v3476 = vpop.f32.mrb[0].mxu0
  %v3477 = vpop.f32.mrb[0].mxu0
  %v3478 = vadd.f32 %v2645, %v3477
  %v3479 = vpop.f32.mrb[0].mxu0
  %3480 = vmatprep.mubr.bf16.mxu0 0
  %3481 = vmatmul.mubr.bf16.gmra.mrb[0].mxu0 %v2161
  %v3482 = vpop.f32.mrb[0].mxu0
  %v3483 = vadd.f32 %v2650, %v3482
  %v3484 = vpop.f32.mrb[0].mxu0
  %v3485 = vpop.f32.mrb[0].mxu0
  %v3486 = vadd.f32 %v2653, %v3485
  %v3487 = vpop.f32.mrb[0].mxu0
  %3488 = vmatprep.mubr.bf16.mxu0 0
  %3489 = vmatmul.mubr.bf16.gmra.mrb[0].mxu0 %v2164
  %v3490 = vpop.f32.mrb[0].mxu0
  %v3491 = vadd.f32 %v2658, %v3490
  %v3492 = vpop.f32.mrb[0].mxu0
  %v3493 = vpop.f32.mrb[0].mxu0
  %v3494 = vadd.f32 %v2661, %v3493
  %v3495 = vpop.f32.mrb[0].mxu0
  %3496 = vmatprep.mubr.bf16.mxu0 0
  %3497 = vmatmul.mubr.bf16.gmra.mrb[0].mxu0 %v2167
  %v3498 = vpop.f32.mrb[0].mxu0
  %v3499 = vadd.f32 %v2666, %v3498
  %v3500 = vpop.f32.mrb[0].mxu0
  %v3501 = vpop.f32.mrb[0].mxu0
  %v3502 = vadd.f32 %v2669, %v3501
  %v3503 = vpop.f32.mrb[0].mxu0
  %3504 = vmatprep.mubr.bf16.mxu0 0
  %3505 = vmatmul.mubr.bf16.gmra.mrb[0].mxu0 %v2170
  %v3506 = vpop.f32.mrb[0].mxu0
  %v3507 = vadd.f32 %v2674, %v3506
  %v3508 = vpop.f32.mrb[0].mxu0
  %v3509 = vpop.f32.mrb[0].mxu0
  %v3510 = vadd.f32 %v2677, %v3509
  %v3511 = vpop.f32.mrb[0].mxu0
  %3512 = vmatprep.mubr.bf16.mxu0 0
  %3513 = vmatmul.mubr.bf16.gmra.mrb[0].mxu0 %v2173
  %v3514 = vpop.f32.mrb[0].mxu0
  %v3515 = vadd.f32 %v2682, %v3514
  %v3516 = vpop.f32.mrb[0].mxu0
  %v3517 = vpop.f32.mrb[0].mxu0
  %v3518 = vadd.f32 %v2685, %v3517
  %v3519 = vpop.f32.mrb[0].mxu0
  %3520 = vmatprep.mubr.bf16.mxu0 0
  %3521 = vmatmul.mubr.bf16.gmra.mrb[0].mxu0 %v2176
  %v3522 = vpop.f32.mrb[0].mxu0
  %v3523 = vadd.f32 %v2690, %v3522
  %v3524 = vpop.f32.mrb[0].mxu0
  %v3525 = vpop.f32.mrb[0].mxu0
  %v3526 = vadd.f32 %v2693, %v3525
  %v3527 = vpop.f32.mrb[0].mxu0
  %3528 = vmatprep.mubr.bf16.mxu0 0
  %3529 = vmatmul.mubr.bf16.gmra.mrb[0].mxu0 %v2179
  %v3530 = vpop.f32.mrb[0].mxu0
  %v3531 = vadd.f32 %v2698, %v3530
  %v3532 = vpop.f32.mrb[0].mxu0
  %v3533 = vpop.f32.mrb[0].mxu0
  %v3534 = vadd.f32 %v2701, %v3533
  %v3535 = vpop.f32.mrb[0].mxu0
  %3536 = vmatprep.mubr.bf16.mxu0 0
  %3537 = vmatmul.mubr.bf16.gmra.mrb[0].mxu0 %v2182
  %v3538 = vpop.f32.mrb[0].mxu0
  %v3539 = vadd.f32 %v2706, %v3538
  %v3540 = vpop.f32.mrb[0].mxu0
  %v3541 = vpop.f32.mrb[0].mxu0
  %v3542 = vadd.f32 %v2709, %v3541
  %v3543 = vpop.f32.mrb[0].mxu0
  %3544 = vmatprep.mubr.bf16.mxu0 0
  %3545 = vmatmul.mubr.bf16.gmra.mrb[0].mxu0 %v2185
  %v3546 = vpop.f32.mrb[0].mxu0
  %v3547 = vadd.f32 %v2714, %v3546
  %v3548 = vpop.f32.mrb[0].mxu0
  %v3549 = vpop.f32.mrb[0].mxu0
  %v3550 = vadd.f32 %v2717, %v3549
  %v3551 = vpop.f32.mrb[0].mxu0
  %3552 = vmatprep.mubr.bf16.mxu0 0
  %3553 = vmatmul.mubr.bf16.gmra.mrb[0].mxu0 %v2188
  %v3554 = vpop.f32.mrb[0].mxu0
  %v3555 = vadd.f32 %v2722, %v3554
  %v3556 = vpop.f32.mrb[0].mxu0
  %v3557 = vpop.f32.mrb[0].mxu0
  %v3558 = vadd.f32 %v2725, %v3557
  %v3559 = vpop.f32.mrb[0].mxu0
  %3560 = vmatprep.mubr.bf16.mxu0 0
  %3561 = vmatmul.mubr.bf16.gmra.mrb[0].mxu0 %v2191
  %v3562 = vpop.f32.mrb[0].mxu0
  %v3563 = vadd.f32 %v2730, %v3562
  %v3564 = vpop.f32.mrb[0].mxu0
  %v3565 = vpop.f32.mrb[0].mxu0
  %v3566 = vadd.f32 %v2733, %v3565
  %v3567 = vpop.f32.mrb[0].mxu0
  %3568 = vmatprep.mubr.bf16.mxu0 0
  %3569 = vmatmul.mubr.bf16.gmra.mrb[0].mxu0 %v2194
  %v3570 = vpop.f32.mrb[0].mxu0
  %v3571 = vadd.f32 %v2738, %v3570
  %v3572 = vpop.f32.mrb[0].mxu0
  %v3573 = vpop.f32.mrb[0].mxu0
  %v3574 = vadd.f32 %v2741, %v3573
  %v3575 = vpop.f32.mrb[0].mxu0
  %3576 = vmatprep.mubr.bf16.mxu0 0
  %3577 = vmatmul.mubr.bf16.gmra.mrb[0].mxu0 %v2197
  %v3578 = vpop.f32.mrb[0].mxu0
  %v3579 = vadd.f32 %v2746, %v3578
  %v3580 = vpop.f32.mrb[0].mxu0
  %v3581 = vpop.f32.mrb[0].mxu0
  %v3582 = vadd.f32 %v2749, %v3581
  %v3583 = vpop.f32.mrb[0].mxu0
  %3584 = vmatprep.mubr.bf16.mxu0 0
  %3585 = vmatmul.mubr.bf16.gmra.mrb[0].mxu0 %v2200
  %v3586 = vpop.f32.mrb[0].mxu0
  %v3587 = vadd.f32 %v2754, %v3586
  %v3588 = vpop.f32.mrb[0].mxu0
  %v3589 = vpop.f32.mrb[0].mxu0
  %v3590 = vadd.f32 %v2757, %v3589
  %v3591 = vpop.f32.mrb[0].mxu0
  %3592 = vmatprep.mubr.bf16.mxu0 0
  %3593 = vmatmul.mubr.bf16.gmra.mrb[0].mxu0 %v2203
  %v3594 = vpop.f32.mrb[0].mxu0
  %v3595 = vadd.f32 %v2762, %v3594
  %v3596 = vpop.f32.mrb[0].mxu0
  %v3597 = vpop.f32.mrb[0].mxu0
  %v3598 = vadd.f32 %v2765, %v3597
  %v3599 = vpop.f32.mrb[0].mxu0
  %3600 = vmatprep.mubr.bf16.mxu0 0
  %3601 = vmatmul.mubr.bf16.gmra.mrb[0].mxu0 %v2206
  %v3602 = vpop.f32.mrb[0].mxu0
  %v3603 = vadd.f32 %v2770, %v3602
  %v3604 = vpop.f32.mrb[0].mxu0
  %v3605 = vpop.f32.mrb[0].mxu0
  %v3606 = vadd.f32 %v2773, %v3605
  %v3607 = vpop.f32.mrb[0].mxu0
  %3608 = vmatprep.mubr.bf16.mxu0 0
  %3609 = vmatmul.mubr.bf16.gmra.mrb[0].mxu0 %v2209
  %v3610 = vpop.f32.mrb[0].mxu0
  %v3611 = vadd.f32 %v2778, %v3610
  %v3612 = vpop.f32.mrb[0].mxu0
  %v3613 = vpop.f32.mrb[0].mxu0
  %v3614 = vadd.f32 %v2781, %v3613
  %v3615 = vpop.f32.mrb[0].mxu0
  %3616 = vmatprep.mubr.bf16.mxu0 0
  %3617 = vmatmul.mubr.bf16.gmra.mrb[0].mxu0 %v2212
  %v3618 = vpop.f32.mrb[0].mxu0
  %v3619 = vadd.f32 %v2786, %v3618
  %v3620 = vpop.f32.mrb[0].mxu0
  %v3621 = vpop.f32.mrb[0].mxu0
  %v3622 = vadd.f32 %v2789, %v3621
  %v3623 = vpop.f32.mrb[0].mxu0
  %3624 = vmatprep.mubr.bf16.mxu0 0
  %3625 = vmatmul.mubr.bf16.gmra.mrb[0].mxu0 %v2215
  %v3626 = vpop.f32.mrb[0].mxu0
  %v3627 = vadd.f32 %v2794, %v3626
  %v3628 = vpop.f32.mrb[0].mxu0
  %v3629 = vpop.f32.mrb[0].mxu0
  %v3630 = vadd.f32 %v2797, %v3629
  %v3631 = vpop.f32.mrb[0].mxu0
  %3632 = vmatprep.mubr.bf16.mxu0 0
  %3633 = vmatmul.mubr.bf16.gmra.mrb[0].mxu0 %v2218
  %v3634 = vpop.f32.mrb[0].mxu0
  %v3635 = vadd.f32 %v2802, %v3634
  %v3636 = vpop.f32.mrb[0].mxu0
  %v3637 = vpop.f32.mrb[0].mxu0
  %v3638 = vadd.f32 %v2805, %v3637
  %v3639 = vpop.f32.mrb[0].mxu0
  %3640 = vmatprep.mubr.bf16.mxu0 0
  %3641 = vmatmul.mubr.bf16.gmra.mrb[0].mxu0 %v2221
  %v3642 = vpop.f32.mrb[0].mxu0
  %v3643 = vadd.f32 %v2810, %v3642
  %v3644 = vpop.f32.mrb[0].mxu0
  %v3645 = vpop.f32.mrb[0].mxu0
  %v3646 = vadd.f32 %v2813, %v3645
  %v3647 = vpop.f32.mrb[0].mxu0
  %3648 = vmatprep.mubr.bf16.mxu0 0
  %3649 = vmatmul.mubr.bf16.gmra.mrb[0].mxu0 %v2224
  %v3650 = vpop.f32.mrb[0].mxu0
  %v3651 = vadd.f32 %v2818, %v3650
  %v3652 = vpop.f32.mrb[0].mxu0
  %v3653 = vpop.f32.mrb[0].mxu0
  %v3654 = vadd.f32 %v2821, %v3653
  %v3655 = vpop.f32.mrb[0].mxu0
  %3656 = vmatprep.mubr.bf16.mxu0 0
  %3657 = vmatmul.mubr.bf16.gmra.mrb[0].mxu0 %v2227
  %v3658 = vpop.f32.mrb[0].mxu0
  %v3659 = vadd.f32 %v2826, %v3658
  %v3660 = vpop.f32.mrb[0].mxu0
  %v3661 = vpop.f32.mrb[0].mxu0
  %v3662 = vadd.f32 %v2829, %v3661
  %v3663 = vpop.f32.mrb[0].mxu0
  %3664 = vmatprep.mubr.bf16.mxu0 0
  %3665 = vmatmul.mubr.bf16.gmra.mrb[0].mxu0 %v2230
  %v3666 = vpop.f32.mrb[0].mxu0
  %v3667 = vadd.f32 %v2834, %v3666
  %v3668 = vpop.f32.mrb[0].mxu0
  %v3669 = vpop.f32.mrb[0].mxu0
  %v3670 = vadd.f32 %v2837, %v3669
  %v3671 = vpop.f32.mrb[0].mxu0
  %3672 = vmatprep.mubr.bf16.mxu0 0
  %3673 = vmatmul.mubr.bf16.gmra.mrb[0].mxu0 %v2233
  %v3674 = vpop.f32.mrb[0].mxu0
  %v3675 = vadd.f32 %v2842, %v3674
  %v3676 = vpop.f32.mrb[0].mxu0
  %v3677 = vpop.f32.mrb[0].mxu0
  %v3678 = vadd.f32 %v2845, %v3677
  %v3679 = vpop.f32.mrb[0].mxu0
  %3680 = vmatprep.mubr.bf16.mxu0 0
  %3681 = vmatmul.mubr.bf16.gmra.mrb[0].mxu0 %v2236
  %v3682 = vpop.f32.mrb[0].mxu0
  %v3683 = vadd.f32 %v2850, %v3682
  %v3684 = vpop.f32.mrb[0].mxu0
  %v3685 = vpop.f32.mrb[0].mxu0
  %v3686 = vadd.f32 %v2853, %v3685
  %v3687 = vpop.f32.mrb[0].mxu0
  %3688 = vmatprep.mubr.bf16.mxu0 0
  %3689 = vmatmul.mubr.bf16.gmra.mrb[0].mxu0 %v2239
  %v3690 = vpop.f32.mrb[0].mxu0
  %v3691 = vadd.f32 %v2858, %v3690
  %v3692 = vpop.f32.mrb[0].mxu0
  %v3693 = vpop.f32.mrb[0].mxu0
  %v3694 = vadd.f32 %v2861, %v3693
  %v3695 = vpop.f32.mrb[0].mxu0
  %3696 = vmatprep.mubr.bf16.mxu0 0
  %3697 = vmatmul.mubr.bf16.gmra.mrb[0].mxu0 %v2242
  %v3698 = vpop.f32.mrb[0].mxu0
  %v3699 = vadd.f32 %v2866, %v3698
  %v3700 = vpop.f32.mrb[0].mxu0
  %v3701 = vpop.f32.mrb[0].mxu0
  %v3702 = vadd.f32 %v2869, %v3701
  %v3703 = vpop.f32.mrb[0].mxu0
  %3704 = vmatprep.mubr.bf16.mxu0 0
  %3705 = vmatmul.mubr.bf16.gmra.mrb[0].mxu0 %v2245
  %v3706 = vpop.f32.mrb[0].mxu0
  %v3707 = vadd.f32 %v2874, %v3706
  %v3708 = vpop.f32.mrb[0].mxu0
  %v3709 = vpop.f32.mrb[0].mxu0
  %v3710 = vadd.f32 %v2877, %v3709
  %v3711 = vpop.f32.mrb[0].mxu0
  %3712 = vmatprep.mubr.bf16.mxu0 0
  %3713 = vmatmul.mubr.bf16.gmra.mrb[0].mxu0 %v2248
  %v3714 = vpop.f32.mrb[0].mxu0
  %v3715 = vadd.f32 %v2882, %v3714
  %v3716 = vpop.f32.mrb[0].mxu0
  %v3717 = vpop.f32.mrb[0].mxu0
  %v3718 = vadd.f32 %v2885, %v3717
  %v3719 = vpop.f32.mrb[0].mxu0
  %3720 = vmatprep.mubr.bf16.mxu0 0
  %3721 = vmatmul.mubr.bf16.gmra.mrb[0].mxu0 %v2251
  %v3722 = vpop.f32.mrb[0].mxu0
  %v3723 = vadd.f32 %v2890, %v3722
  %v3724 = vpop.f32.mrb[0].mxu0
  %v3725 = vpop.f32.mrb[0].mxu0
  %v3726 = vadd.f32 %v2893, %v3725
  %v3727 = vpop.f32.mrb[0].mxu0
  %3728 = vmatprep.mubr.bf16.mxu0 0
  %3729 = vmatmul.mubr.bf16.gmra.mrb[0].mxu0 %v2254
  %v3730 = vpop.f32.mrb[0].mxu0
  %v3731 = vadd.f32 %v2898, %v3730
  %v3732 = vpop.f32.mrb[0].mxu0
  %v3733 = vpop.f32.mrb[0].mxu0
  %v3734 = vadd.f32 %v2901, %v3733
  %v3735 = vpop.f32.mrb[0].mxu0
  %3736 = vmatprep.mubr.bf16.mxu0 0
  %3737 = vmatmul.mubr.bf16.gmra.mrb[0].mxu0 %v2257
  %v3738 = vpop.f32.mrb[0].mxu0
  %v3739 = vadd.f32 %v2906, %v3738
  %v3740 = vpop.f32.mrb[0].mxu0
  %v3741 = vpop.f32.mrb[0].mxu0
  %v3742 = vadd.f32 %v2909, %v3741
  %v3743 = vpop.f32.mrb[0].mxu0
  %3744 = vmatprep.mubr.bf16.mxu0 0
  %3745 = vmatmul.mubr.bf16.gmra.mrb[0].mxu0 %v2260
  %v3746 = vpop.f32.mrb[0].mxu0
  %v3747 = vadd.f32 %v2914, %v3746
  %v3748 = vpop.f32.mrb[0].mxu0
  %v3749 = vpop.f32.mrb[0].mxu0
  %v3750 = vadd.f32 %v2917, %v3749
  %v3751 = vpop.f32.mrb[0].mxu0
  %3752 = vmatprep.mubr.bf16.mxu0 0
  %3753 = vmatmul.mubr.bf16.gmra.mrb[0].mxu0 %v2263
  %v3754 = vpop.f32.mrb[0].mxu0
  %v3755 = vadd.f32 %v2922, %v3754
  %v3756 = vpop.f32.mrb[0].mxu0
  %v3757 = vpop.f32.mrb[0].mxu0
  %v3758 = vadd.f32 %v2925, %v3757
  %v3759 = vpop.f32.mrb[0].mxu0
  %3760 = vmatprep.mubr.bf16.mxu0 0
  %3761 = vmatmul.mubr.bf16.gmra.mrb[0].mxu0 %v2266
  %v3762 = vpop.f32.mrb[0].mxu0
  %v3763 = vadd.f32 %v2930, %v3762
  %v3764 = vpop.f32.mrb[0].mxu0
  %v3765 = vpop.f32.mrb[0].mxu0
  %v3766 = vadd.f32 %v2933, %v3765
  %v3767 = vpop.f32.mrb[0].mxu0
  %3768 = vmatprep.mubr.bf16.mxu0 0
  %3769 = vmatmul.mubr.bf16.gmra.mrb[0].mxu0 %v2269
  %v3770 = vpop.f32.mrb[0].mxu0
  %v3771 = vadd.f32 %v2938, %v3770
  %v3772 = vpop.f32.mrb[0].mxu0
  %v3773 = vpop.f32.mrb[0].mxu0
  %v3774 = vadd.f32 %v2941, %v3773
  %v3775 = vpop.f32.mrb[0].mxu0
  %3776 = vmatprep.mubr.bf16.mxu0 0
  %3777 = vmatmul.mubr.bf16.gmra.mrb[0].mxu0 %v2272
  %v3778 = vpop.f32.mrb[0].mxu0
  %v3779 = vadd.f32 %v2946, %v3778
  %v3780 = vpop.f32.mrb[0].mxu0
  %v3781 = vpop.f32.mrb[0].mxu0
  %v3782 = vadd.f32 %v2949, %v3781
  %v3783 = vpop.f32.mrb[0].mxu0
  %3784 = vmatprep.mubr.bf16.mxu0 0
  %3785 = vmatmul.mubr.bf16.gmra.mrb[0].mxu0 %v2275
  %v3786 = vpop.f32.mrb[0].mxu0
  %v3787 = vadd.f32 %v2954, %v3786
  %v3788 = vpop.f32.mrb[0].mxu0
  %v3789 = vpop.f32.mrb[0].mxu0
  %v3790 = vadd.f32 %v2957, %v3789
  %v3791 = vpop.f32.mrb[0].mxu0
  %3792 = vmatprep.mubr.bf16.mxu0 0
  %3793 = vmatmul.mubr.bf16.gmra.mrb[0].mxu0 %v2278
  %v3794 = vpop.f32.mrb[0].mxu0
  %v3795 = vadd.f32 %v2962, %v3794
  %v3796 = vpop.f32.mrb[0].mxu0
  %v3797 = vpop.f32.mrb[0].mxu0
  %v3798 = vadd.f32 %v2965, %v3797
  %v3799 = vpop.f32.mrb[0].mxu0
  %3800 = vmatprep.mubr.bf16.mxu0 0
  %3801 = vmatmul.mubr.bf16.gmra.mrb[0].mxu0 %v2281
  %v3802 = vpop.f32.mrb[0].mxu0
  %v3803 = vadd.f32 %v2970, %v3802
  %v3804 = vpop.f32.mrb[0].mxu0
  %v3805 = vpop.f32.mrb[0].mxu0
  %v3806 = vadd.f32 %v2973, %v3805
  %v3807 = vpop.f32.mrb[0].mxu0
  %3808 = vmatprep.mubr.bf16.mxu0 0
  %3809 = vmatmul.mubr.bf16.gmra.mrb[0].mxu0 %v2284
  %v3810 = vpop.f32.mrb[0].mxu0
  %v3811 = vadd.f32 %v2978, %v3810
  %v3812 = vpop.f32.mrb[0].mxu0
  %v3813 = vpop.f32.mrb[0].mxu0
  %v3814 = vadd.f32 %v2981, %v3813
  %v3815 = vpop.f32.mrb[0].mxu0
  %3816 = vmatprep.mubr.bf16.mxu0 0
  %3817 = vmatmul.mubr.bf16.gmra.mrb[0].mxu0 %v2287
  %v3818 = vpop.f32.mrb[0].mxu0
  %v3819 = vadd.f32 %v2986, %v3818
  %v3820 = vpop.f32.mrb[0].mxu0
  %v3821 = vpop.f32.mrb[0].mxu0
  %v3822 = vadd.f32 %v2989, %v3821
  %v3823 = vpop.f32.mrb[0].mxu0
  %3824 = vmatprep.mubr.bf16.mxu0 0
  %3825 = vmatmul.mubr.bf16.gmra.mrb[0].mxu0 %v2290
  %v3826 = vpop.f32.mrb[0].mxu0
  %v3827 = vadd.f32 %v2994, %v3826
  %v3828 = vpop.f32.mrb[0].mxu0
  %v3829 = vpop.f32.mrb[0].mxu0
  %v3830 = vadd.f32 %v2997, %v3829
  %v3831 = vpop.f32.mrb[0].mxu0
  %3832 = vmatprep.mubr.bf16.mxu0 0
  %3833 = vmatmul.mubr.bf16.gmra.mrb[0].mxu0 %v2293
  %v3834 = vpop.f32.mrb[0].mxu0
  %v3835 = vadd.f32 %v3002, %v3834
  %v3836 = vpop.f32.mrb[0].mxu0
  %v3837 = vpop.f32.mrb[0].mxu0
  %v3838 = vadd.f32 %v3005, %v3837
  %v3839 = vpop.f32.mrb[0].mxu0
  %3840 = vmatprep.mubr.bf16.mxu0 0
  %3841 = vmatmul.mubr.bf16.gmra.mrb[0].mxu0 %v2296
  %v3842 = vpop.f32.mrb[0].mxu0
  %v3843 = vadd.f32 %v3010, %v3842
  %v3844 = vpop.f32.mrb[0].mxu0
  %v3845 = vpop.f32.mrb[0].mxu0
  %v3846 = vadd.f32 %v3013, %v3845
  %v3847 = vpop.f32.mrb[0].mxu0
  %3848 = vmatprep.mubr.bf16.mxu0 0
  %3849 = vmatmul.mubr.bf16.gmra.mrb[0].mxu0 %v2299
  %v3850 = vpop.f32.mrb[0].mxu0
  %v3851 = vadd.f32 %v3018, %v3850
  %v3852 = vpop.f32.mrb[0].mxu0
  %v3853 = vpop.f32.mrb[0].mxu0
  %v3854 = vadd.f32 %v3021, %v3853
  %v3855 = vpop.f32.mrb[0].mxu0
  %3856 = vmatprep.mubr.bf16.mxu0 0
  %3857 = vmatmul.mubr.bf16.gmra.mrb[0].mxu0 %v2302
  %v3858 = vpop.f32.mrb[0].mxu0
  %v3859 = vadd.f32 %v3026, %v3858
  %v3860 = vpop.f32.mrb[0].mxu0
  %v3861 = vpop.f32.mrb[0].mxu0
  %v3862 = vadd.f32 %v3029, %v3861
  %v3863 = vpop.f32.mrb[0].mxu0
  %3864 = vmatprep.mubr.bf16.mxu0 0
  %3865 = vmatmul.mubr.bf16.gmra.mrb[0].mxu0 %v2305
  %v3866 = vpop.f32.mrb[0].mxu0
  %v3867 = vadd.f32 %v3034, %v3866
  %v3868 = vpop.f32.mrb[0].mxu0
  %v3869 = vpop.f32.mrb[0].mxu0
  %v3870 = vadd.f32 %v3037, %v3869
  %v3871 = vpop.f32.mrb[0].mxu0
  %3872 = vmatprep.mubr.bf16.mxu0 0
  %3873 = vmatmul.mubr.bf16.gmra.mrb[0].mxu0 %v2308
  %v3874 = vpop.f32.mrb[0].mxu0
  %v3875 = vadd.f32 %v3042, %v3874
  %v3876 = vpop.f32.mrb[0].mxu0
  %v3877 = vpop.f32.mrb[0].mxu0
  %v3878 = vadd.f32 %v3045, %v3877
  %v3879 = vpop.f32.mrb[0].mxu0
  %3880 = vmatprep.mubr.bf16.mxu0 0
  %3881 = vmatmul.mubr.bf16.gmra.mrb[0].mxu0 %v2311
  %v3882 = vpop.f32.mrb[0].mxu0
  %v3883 = vadd.f32 %v3050, %v3882
  %v3884 = vpop.f32.mrb[0].mxu0
  %v3885 = vpop.f32.mrb[0].mxu0
  %v3886 = vadd.f32 %v3053, %v3885
  %v3887 = vpop.f32.mrb[0].mxu0
  %3888 = vmatprep.mubr.bf16.mxu0 0
  %3889 = vmatmul.mubr.bf16.gmra.mrb[0].mxu0 %v2314
  %v3890 = vpop.f32.mrb[0].mxu0
  %v3891 = vadd.f32 %v3058, %v3890
  %v3892 = vpop.f32.mrb[0].mxu0
  %v3893 = vpop.f32.mrb[0].mxu0
  %v3894 = vadd.f32 %v3061, %v3893
  %v3895 = vpop.f32.mrb[0].mxu0
  %3896 = vmatprep.mubr.bf16.mxu0 0
  %3897 = vmatmul.mubr.bf16.gmra.mrb[0].mxu0 %v2317
  %v3898 = vpop.f32.mrb[0].mxu0
  %v3899 = vadd.f32 %v3066, %v3898
  %v3900 = vpop.f32.mrb[0].mxu0
  %v3901 = vpop.f32.mrb[0].mxu0
  %v3902 = vadd.f32 %v3069, %v3901
  %v3903 = vpop.f32.mrb[0].mxu0
  %3904 = vmatprep.mubr.bf16.mxu0 0
  %3905 = vmatmul.mubr.bf16.gmra.mrb[0].mxu0 %v2320
  %v3906 = vpop.f32.mrb[0].mxu0
  %v3907 = vadd.f32 %v3074, %v3906
  %v3908 = vpop.f32.mrb[0].mxu0
  %v3909 = vpop.f32.mrb[0].mxu0
  %v3910 = vadd.f32 %v3077, %v3909
  %v3911 = vpop.f32.mrb[0].mxu0
  %3912 = vmatprep.mubr.bf16.mxu0 0
  %3913 = vmatmul.mubr.bf16.gmra.mrb[0].mxu0 %v2323
  %v3914 = vpop.f32.mrb[0].mxu0
  %v3915 = vadd.f32 %v3082, %v3914
  %v3916 = vpop.f32.mrb[0].mxu0
  %v3917 = vpop.f32.mrb[0].mxu0
  %v3918 = vadd.f32 %v3085, %v3917
  %v3919 = vpop.f32.mrb[0].mxu0
  %3920 = vmatprep.mubr.bf16.mxu0 0
  %3921 = vmatmul.mubr.bf16.gmra.mrb[0].mxu0 %v2326
  %v3922 = vpop.f32.mrb[0].mxu0
  %v3923 = vadd.f32 %v3090, %v3922
  %v3924 = vpop.f32.mrb[0].mxu0
  %v3925 = vpop.f32.mrb[0].mxu0
  %v3926 = vadd.f32 %v3093, %v3925
  %v3927 = vpop.f32.mrb[0].mxu0
  %3928 = vmatprep.mubr.bf16.mxu0 0
  %3929 = vmatmul.mubr.bf16.gmra.mrb[0].mxu0 %v2329
  %v3930 = vpop.f32.mrb[0].mxu0
  %v3931 = vadd.f32 %v3098, %v3930
  %v3932 = vpop.f32.mrb[0].mxu0
  %v3933 = vpop.f32.mrb[0].mxu0
  %v3934 = vadd.f32 %v3101, %v3933
  %v3935 = vpop.f32.mrb[0].mxu0
  %3936 = vmatprep.mubr.bf16.mxu0 0
  %3937 = vmatmul.mubr.bf16.gmra.mrb[0].mxu0 %v2332
  %v3938 = vpop.f32.mrb[0].mxu0
  %v3939 = vadd.f32 %v3106, %v3938
  %v3940 = vpop.f32.mrb[0].mxu0
  %v3941 = vpop.f32.mrb[0].mxu0
  %v3942 = vadd.f32 %v3109, %v3941
  %v3943 = vpop.f32.mrb[0].mxu0
  %3944 = vmatprep.mubr.bf16.mxu0 0
  %3945 = vmatmul.mubr.bf16.gmra.mrb[0].mxu0 %v2335
  %v3946 = vpop.f32.mrb[0].mxu0
  %v3947 = vadd.f32 %v3114, %v3946
  %v3948 = vpop.f32.mrb[0].mxu0
  %v3949 = vpop.f32.mrb[0].mxu0
  %v3950 = vadd.f32 %v3117, %v3949
  %v3951 = vpop.f32.mrb[0].mxu0
  %3952 = vmatprep.mubr.bf16.mxu0 0
  %3953 = vmatmul.mubr.bf16.gmra.mrb[0].mxu0 %v2338
  %v3954 = vpop.f32.mrb[0].mxu0
  %v3955 = vadd.f32 %v3122, %v3954
  %v3956 = vpop.f32.mrb[0].mxu0
  %v3957 = vpop.f32.mrb[0].mxu0
  %v3958 = vadd.f32 %v3125, %v3957
  %v3959 = vpop.f32.mrb[0].mxu0
  %3960 = vmatprep.mubr.bf16.mxu0 0
  %3961 = vmatmul.mubr.bf16.gmra.mrb[0].mxu0 %v2341
  %v3962 = vpop.f32.mrb[0].mxu0
  %v3963 = vadd.f32 %v3130, %v3962
  %v3964 = vpop.f32.mrb[0].mxu0
  %v3965 = vpop.f32.mrb[0].mxu0
  %v3966 = vadd.f32 %v3133, %v3965
  %v3967 = vpop.f32.mrb[0].mxu0
  %3968 = vmatprep.mubr.bf16.mxu0 0
  %3969 = vmatmul.mubr.bf16.gmra.mrb[0].mxu0 %v2344
  %v3970 = vpop.f32.mrb[0].mxu0
  %v3971 = vadd.f32 %v3138, %v3970
  %v3972 = vpop.f32.mrb[0].mxu0
  %v3973 = vpop.f32.mrb[0].mxu0
  %v3974 = vadd.f32 %v3141, %v3973
  %v3975 = vpop.f32.mrb[0].mxu0
  %3976 = vmatprep.mubr.bf16.mxu0 0
  %3977 = vmatmul.mubr.bf16.gmra.mrb[0].mxu0 %v2347
  %v3978 = vpop.f32.mrb[0].mxu0
  %v3979 = vadd.f32 %v3146, %v3978
  %v3980 = vpop.f32.mrb[0].mxu0
  %v3981 = vpop.f32.mrb[0].mxu0
  %v3982 = vadd.f32 %v3149, %v3981
  %v3983 = vpop.f32.mrb[0].mxu0
  %3984 = vmatprep.mubr.bf16.mxu0 0
  %3985 = vmatmul.mubr.bf16.gmra.mrb[0].mxu0 %v2350
  %v3986 = vpop.f32.mrb[0].mxu0
  %v3987 = vadd.f32 %v3154, %v3986
  %v3988 = vpop.f32.mrb[0].mxu0
  %v3989 = vpop.f32.mrb[0].mxu0
  %v3990 = vadd.f32 %v3157, %v3989
  %v3991 = vpop.f32.mrb[0].mxu0
  %3992 = vmatprep.mubr.bf16.mxu0 0
  %3993 = vmatmul.mubr.bf16.gmra.mrb[0].mxu0 %v2353
  %v3994 = vpop.f32.mrb[0].mxu0
  %v3995 = vadd.f32 %v3162, %v3994
  %v3996 = vpop.f32.mrb[0].mxu0
  %v3997 = vpop.f32.mrb[0].mxu0
  %v3998 = vadd.f32 %v3165, %v3997
  %v3999 = vpop.f32.mrb[0].mxu0
  %4000 = vmatprep.mubr.bf16.mxu0 0
  %4001 = vmatmul.mubr.bf16.gmra.mrb[0].mxu0 %v2356
  %v4002 = vpop.f32.mrb[0].mxu0
  %v4003 = vadd.f32 %v3170, %v4002
  %v4004 = vpop.f32.mrb[0].mxu0
  %v4005 = vpop.f32.mrb[0].mxu0
  %v4006 = vadd.f32 %v3173, %v4005
  %v4007 = vpop.f32.mrb[0].mxu0
  %4008 = vmatprep.mubr.bf16.mxu0 0
  %4009 = vmatmul.mubr.bf16.gmra.mrb[0].mxu0 %v2359
  %v4010 = vpop.f32.mrb[0].mxu0
  %v4011 = vadd.f32 %v3178, %v4010
  %v4012 = vpop.f32.mrb[0].mxu0
  %v4013 = vpop.f32.mrb[0].mxu0
  %v4014 = vadd.f32 %v3181, %v4013
  %v4015 = vpop.f32.mrb[0].mxu0
  %4016 = vmatprep.mubr.bf16.mxu0 0
  %4017 = vmatmul.mubr.bf16.gmra.mrb[0].mxu0 %v2362
  %v4018 = vpop.f32.mrb[0].mxu0
  %v4019 = vadd.f32 %v3186, %v4018
  %v4020 = vpop.f32.mrb[0].mxu0
  %v4021 = vpop.f32.mrb[0].mxu0
  %v4022 = vadd.f32 %v3189, %v4021
  %v4023 = vpop.f32.mrb[0].mxu0
  %4024 = vmatprep.mubr.bf16.mxu0 0
  %4025 = vmatmul.mubr.bf16.gmra.mrb[0].mxu0 %v2365
  %v4026 = vpop.f32.mrb[0].mxu0
  %v4027 = vadd.f32 %v3194, %v4026
  %v4028 = vpop.f32.mrb[0].mxu0
  %v4029 = vpop.f32.mrb[0].mxu0
  %v4030 = vadd.f32 %v3197, %v4029
  %v4031 = vpop.f32.mrb[0].mxu0
  %4032 = vdwg.mxu0
  %v4033 = vmax.f32 %v3235, 0.0
  %v4034 = vmax.f32 %v3238, 0.0
  %v4035 = vmax.f32 %v3243, 0.0
  %v4036 = vmax.f32 %v3246, 0.0
  %v4037 = vmax.f32 %v3251, 0.0
  %v4038 = vmax.f32 %v3254, 0.0
  %v4039 = vmax.f32 %v3259, 0.0
  %v4040 = vmax.f32 %v3262, 0.0
  %v4041 = vmax.f32 %v3267, 0.0
  %v4042 = vmax.f32 %v3270, 0.0
  %v4043 = vmax.f32 %v3275, 0.0
  %v4044 = vmax.f32 %v3278, 0.0
  %v4045 = vmax.f32 %v3283, 0.0
  %v4046 = vmax.f32 %v3286, 0.0
  %v4047 = vmax.f32 %v3291, 0.0
  %v4048 = vmax.f32 %v3294, 0.0
  %v4049 = vmax.f32 %v3299, 0.0
  %v4050 = vmax.f32 %v3302, 0.0
  %v4051 = vmax.f32 %v3307, 0.0
  %v4052 = vmax.f32 %v3310, 0.0
  %v4053 = vmax.f32 %v3315, 0.0
  %v4054 = vmax.f32 %v3318, 0.0
  %v4055 = vmax.f32 %v3323, 0.0
  %v4056 = vmax.f32 %v3326, 0.0
  %v4057 = vmax.f32 %v3331, 0.0
  %v4058 = vmax.f32 %v3334, 0.0
  %v4059 = vmax.f32 %v3339, 0.0
  %v4060 = vmax.f32 %v3342, 0.0
  %v4061 = vmax.f32 %v3347, 0.0
  %v4062 = vmax.f32 %v3350, 0.0
  %v4063 = vmax.f32 %v3355, 0.0
  %v4064 = vmax.f32 %v3358, 0.0
  %v4065 = vmax.f32 %v3363, 0.0
  %v4066 = vmax.f32 %v3366, 0.0
  %v4067 = vmax.f32 %v3371, 0.0
  %v4068 = vmax.f32 %v3374, 0.0
  %v4069 = vmax.f32 %v3379, 0.0
  %v4070 = vmax.f32 %v3382, 0.0
  %v4071 = vmax.f32 %v3387, 0.0
  %v4072 = vmax.f32 %v3390, 0.0
  %v4073 = vmax.f32 %v3395, 0.0
  %v4074 = vmax.f32 %v3398, 0.0
  %v4075 = vmax.f32 %v3403, 0.0
  %v4076 = vmax.f32 %v3406, 0.0
  %v4077 = vmax.f32 %v3411, 0.0
  %v4078 = vmax.f32 %v3414, 0.0
  %v4079 = vmax.f32 %v3419, 0.0
  %v4080 = vmax.f32 %v3422, 0.0
  %v4081 = vmax.f32 %v3427, 0.0
  %v4082 = vmax.f32 %v3430, 0.0
  %v4083 = vmax.f32 %v3435, 0.0
  %v4084 = vmax.f32 %v3438, 0.0
  %v4085 = vmax.f32 %v3443, 0.0
  %v4086 = vmax.f32 %v3446, 0.0
  %v4087 = vmax.f32 %v3451, 0.0
  %v4088 = vmax.f32 %v3454, 0.0
  %v4089 = vmax.f32 %v3459, 0.0
  %v4090 = vmax.f32 %v3462, 0.0
  %v4091 = vmax.f32 %v3467, 0.0
  %v4092 = vmax.f32 %v3470, 0.0
  %v4093 = vmax.f32 %v3475, 0.0
  %v4094 = vmax.f32 %v3478, 0.0
  %v4095 = vmax.f32 %v3483, 0.0
  %v4096 = vmax.f32 %v3486, 0.0
  %v4097 = vmax.f32 %v3491, 0.0
  %v4098 = vmax.f32 %v3494, 0.0
  %v4099 = vmax.f32 %v3499, 0.0
  %v4100 = vmax.f32 %v3502, 0.0
  %v4101 = vmax.f32 %v3507, 0.0
  %v4102 = vmax.f32 %v3510, 0.0
  %v4103 = vmax.f32 %v3515, 0.0
  %v4104 = vmax.f32 %v3518, 0.0
  %v4105 = vmax.f32 %v3523, 0.0
  %v4106 = vmax.f32 %v3526, 0.0
  %v4107 = vmax.f32 %v3531, 0.0
  %v4108 = vmax.f32 %v3534, 0.0
  %v4109 = vmax.f32 %v3539, 0.0
  %v4110 = vmax.f32 %v3542, 0.0
  %v4111 = vmax.f32 %v3547, 0.0
  %v4112 = vmax.f32 %v3550, 0.0
  %v4113 = vmax.f32 %v3555, 0.0
  %v4114 = vmax.f32 %v3558, 0.0
  %v4115 = vmax.f32 %v3563, 0.0
  %v4116 = vmax.f32 %v3566, 0.0
  %v4117 = vmax.f32 %v3571, 0.0
  %v4118 = vmax.f32 %v3574, 0.0
  %v4119 = vmax.f32 %v3579, 0.0
  %v4120 = vmax.f32 %v3582, 0.0
  %v4121 = vmax.f32 %v3587, 0.0
  %v4122 = vmax.f32 %v3590, 0.0
  %v4123 = vmax.f32 %v3595, 0.0
  %v4124 = vmax.f32 %v3598, 0.0
  %v4125 = vmax.f32 %v3603, 0.0
  %v4126 = vmax.f32 %v3606, 0.0
  %v4127 = vmax.f32 %v3611, 0.0
  %v4128 = vmax.f32 %v3614, 0.0
  %v4129 = vmax.f32 %v3619, 0.0
  %v4130 = vmax.f32 %v3622, 0.0
  %v4131 = vmax.f32 %v3627, 0.0
  %v4132 = vmax.f32 %v3630, 0.0
  %v4133 = vmax.f32 %v3635, 0.0
  %v4134 = vmax.f32 %v3638, 0.0
  %v4135 = vmax.f32 %v3643, 0.0
  %v4136 = vmax.f32 %v3646, 0.0
  %v4137 = vmax.f32 %v3651, 0.0
  %v4138 = vmax.f32 %v3654, 0.0
  %v4139 = vmax.f32 %v3659, 0.0
  %v4140 = vmax.f32 %v3662, 0.0
  %v4141 = vmax.f32 %v3667, 0.0
  %v4142 = vmax.f32 %v3670, 0.0
  %v4143 = vmax.f32 %v3675, 0.0
  %v4144 = vmax.f32 %v3678, 0.0
  %v4145 = vmax.f32 %v3683, 0.0
  %v4146 = vmax.f32 %v3686, 0.0
  %v4147 = vmax.f32 %v3691, 0.0
  %v4148 = vmax.f32 %v3694, 0.0
  %v4149 = vmax.f32 %v3699, 0.0
  %v4150 = vmax.f32 %v3702, 0.0
  %v4151 = vmax.f32 %v3707, 0.0
  %v4152 = vmax.f32 %v3710, 0.0
  %v4153 = vmax.f32 %v3715, 0.0
  %v4154 = vmax.f32 %v3718, 0.0
  %v4155 = vmax.f32 %v3723, 0.0
  %v4156 = vmax.f32 %v3726, 0.0
  %v4157 = vmax.f32 %v3731, 0.0
  %v4158 = vmax.f32 %v3734, 0.0
  %v4159 = vmax.f32 %v3739, 0.0
  %v4160 = vmax.f32 %v3742, 0.0
  %v4161 = vmax.f32 %v3747, 0.0
  %v4162 = vmax.f32 %v3750, 0.0
  %v4163 = vmax.f32 %v3755, 0.0
  %v4164 = vmax.f32 %v3758, 0.0
  %v4165 = vmax.f32 %v3763, 0.0
  %v4166 = vmax.f32 %v3766, 0.0
  %v4167 = vmax.f32 %v3771, 0.0
  %v4168 = vmax.f32 %v3774, 0.0
  %v4169 = vmax.f32 %v3779, 0.0
  %v4170 = vmax.f32 %v3782, 0.0
  %v4171 = vmax.f32 %v3787, 0.0
  %v4172 = vmax.f32 %v3790, 0.0
  %v4173 = vmax.f32 %v3795, 0.0
  %v4174 = vmax.f32 %v3798, 0.0
  %v4175 = vmax.f32 %v3803, 0.0
  %v4176 = vmax.f32 %v3806, 0.0
  %v4177 = vmax.f32 %v3811, 0.0
  %v4178 = vmax.f32 %v3814, 0.0
  %v4179 = vmax.f32 %v3819, 0.0
  %v4180 = vmax.f32 %v3822, 0.0
  %v4181 = vmax.f32 %v3827, 0.0
  %v4182 = vmax.f32 %v3830, 0.0
  %v4183 = vmax.f32 %v3835, 0.0
  %v4184 = vmax.f32 %v3838, 0.0
  %v4185 = vmax.f32 %v3843, 0.0
  %v4186 = vmax.f32 %v3846, 0.0
  %v4187 = vmax.f32 %v3851, 0.0
  %v4188 = vmax.f32 %v3854, 0.0
  %v4189 = vmax.f32 %v3859, 0.0
  %v4190 = vmax.f32 %v3862, 0.0
  %v4191 = vmax.f32 %v3867, 0.0
  %v4192 = vmax.f32 %v3870, 0.0
  %v4193 = vmax.f32 %v3875, 0.0
  %v4194 = vmax.f32 %v3878, 0.0
  %v4195 = vmax.f32 %v3883, 0.0
  %v4196 = vmax.f32 %v3886, 0.0
  %v4197 = vmax.f32 %v3891, 0.0
  %v4198 = vmax.f32 %v3894, 0.0
  %v4199 = vmax.f32 %v3899, 0.0
  %v4200 = vmax.f32 %v3902, 0.0
  %v4201 = vmax.f32 %v3907, 0.0
  %v4202 = vmax.f32 %v3910, 0.0
  %v4203 = vmax.f32 %v3915, 0.0
  %v4204 = vmax.f32 %v3918, 0.0
  %v4205 = vmax.f32 %v3923, 0.0
  %v4206 = vmax.f32 %v3926, 0.0
  %v4207 = vmax.f32 %v3931, 0.0
  %v4208 = vmax.f32 %v3934, 0.0
  %v4209 = vmax.f32 %v3939, 0.0
  %v4210 = vmax.f32 %v3942, 0.0
  %v4211 = vmax.f32 %v3947, 0.0
  %v4212 = vmax.f32 %v3950, 0.0
  %v4213 = vmax.f32 %v3955, 0.0
  %v4214 = vmax.f32 %v3958, 0.0
  %v4215 = vmax.f32 %v3963, 0.0
  %v4216 = vmax.f32 %v3966, 0.0
  %v4217 = vmax.f32 %v3971, 0.0
  %v4218 = vmax.f32 %v3974, 0.0
  %v4219 = vmax.f32 %v3979, 0.0
  %v4220 = vmax.f32 %v3982, 0.0
  %v4221 = vmax.f32 %v3987, 0.0
  %v4222 = vmax.f32 %v3990, 0.0
  %v4223 = vmax.f32 %v3995, 0.0
  %v4224 = vmax.f32 %v3998, 0.0
  %v4225 = vmax.f32 %v4003, 0.0
  %v4226 = vmax.f32 %v4006, 0.0
  %v4227 = vmax.f32 %v4011, 0.0
  %v4228 = vmax.f32 %v4014, 0.0
  %v4229 = vmax.f32 %v4019, 0.0
  %v4230 = vmax.f32 %v4022, 0.0
  %v4231 = vmax.f32 %v4027, 0.0
  %v4232 = vmax.f32 %v4030, 0.0
  %v4233 = vmax.f32 %v4033, %v4083
  %v4234 = vmax.f32 %v4034, %v4084
  %v4235 = vmax.f32 %v4035, %v4085
  %v4236 = vmax.f32 %v4036, %v4086
  %v4237 = vmax.f32 %v4037, %v4087
  %v4238 = vmax.f32 %v4038, %v4088
  %v4239 = vmax.f32 %v4039, %v4089
  %v4240 = vmax.f32 %v4040, %v4090
  %v4241 = vmax.f32 %v4041, %v4091
  %v4242 = vmax.f32 %v4042, %v4092
  %v4243 = vmax.f32 %v4043, %v4093
  %v4244 = vmax.f32 %v4044, %v4094
  %v4245 = vmax.f32 %v4045, %v4095
  %v4246 = vmax.f32 %v4046, %v4096
  %v4247 = vmax.f32 %v4047, %v4097
  %v4248 = vmax.f32 %v4048, %v4098
  %v4249 = vmax.f32 %v4049, %v4099
  %v4250 = vmax.f32 %v4050, %v4100
  %v4251 = vmax.f32 %v4051, %v4101
  %v4252 = vmax.f32 %v4052, %v4102
  %v4253 = vmax.f32 %v4053, %v4103
  %v4254 = vmax.f32 %v4054, %v4104
  %v4255 = vmax.f32 %v4055, %v4105
  %v4256 = vmax.f32 %v4056, %v4106
  %v4257 = vmax.f32 %v4057, %v4107
  %v4258 = vmax.f32 %v4058, %v4108
  %v4259 = vmax.f32 %v4059, %v4109
  %v4260 = vmax.f32 %v4060, %v4110
  %v4261 = vmax.f32 %v4061, %v4111
  %v4262 = vmax.f32 %v4062, %v4112
  %v4263 = vmax.f32 %v4063, %v4113
  %v4264 = vmax.f32 %v4064, %v4114
  %v4265 = vmax.f32 %v4065, %v4115
  %v4266 = vmax.f32 %v4066, %v4116
  %v4267 = vmax.f32 %v4067, %v4117
  %v4268 = vmax.f32 %v4068, %v4118
  %v4269 = vmax.f32 %v4069, %v4119
  %v4270 = vmax.f32 %v4070, %v4120
  %v4271 = vmax.f32 %v4071, %v4121
  %v4272 = vmax.f32 %v4072, %v4122
  %v4273 = vmax.f32 %v4073, %v4123
  %v4274 = vmax.f32 %v4074, %v4124
  %v4275 = vmax.f32 %v4075, %v4125
  %v4276 = vmax.f32 %v4076, %v4126
  %v4277 = vmax.f32 %v4077, %v4127
  %v4278 = vmax.f32 %v4078, %v4128
  %v4279 = vmax.f32 %v4079, %v4129
  %v4280 = vmax.f32 %v4080, %v4130
  %v4281 = vmax.f32 %v4081, %v4131
  %v4282 = vmax.f32 %v4082, %v4132
  %v4283 = vmax.f32 %v4133, %v4183
  %v4284 = vmax.f32 %v4134, %v4184
  %v4285 = vmax.f32 %v4135, %v4185
  %v4286 = vmax.f32 %v4136, %v4186
  %v4287 = vmax.f32 %v4137, %v4187
  %v4288 = vmax.f32 %v4138, %v4188
  %v4289 = vmax.f32 %v4139, %v4189
  %v4290 = vmax.f32 %v4140, %v4190
  %v4291 = vmax.f32 %v4141, %v4191
  %v4292 = vmax.f32 %v4142, %v4192
  %v4293 = vmax.f32 %v4143, %v4193
  %v4294 = vmax.f32 %v4144, %v4194
  %v4295 = vmax.f32 %v4145, %v4195
  %v4296 = vmax.f32 %v4146, %v4196
  %v4297 = vmax.f32 %v4147, %v4197
  %v4298 = vmax.f32 %v4148, %v4198
  %v4299 = vmax.f32 %v4149, %v4199
  %v4300 = vmax.f32 %v4150, %v4200
  %v4301 = vmax.f32 %v4151, %v4201
  %v4302 = vmax.f32 %v4152, %v4202
  %v4303 = vmax.f32 %v4153, %v4203
  %v4304 = vmax.f32 %v4154, %v4204
  %v4305 = vmax.f32 %v4155, %v4205
  %v4306 = vmax.f32 %v4156, %v4206
  %v4307 = vmax.f32 %v4157, %v4207
  %v4308 = vmax.f32 %v4158, %v4208
  %v4309 = vmax.f32 %v4159, %v4209
  %v4310 = vmax.f32 %v4160, %v4210
  %v4311 = vmax.f32 %v4161, %v4211
  %v4312 = vmax.f32 %v4162, %v4212
  %v4313 = vmax.f32 %v4163, %v4213
  %v4314 = vmax.f32 %v4164, %v4214
  %v4315 = vmax.f32 %v4165, %v4215
  %v4316 = vmax.f32 %v4166, %v4216
  %v4317 = vmax.f32 %v4167, %v4217
  %v4318 = vmax.f32 %v4168, %v4218
  %v4319 = vmax.f32 %v4169, %v4219
  %v4320 = vmax.f32 %v4170, %v4220
  %v4321 = vmax.f32 %v4171, %v4221
  %v4322 = vmax.f32 %v4172, %v4222
  %v4323 = vmax.f32 %v4173, %v4223
  %v4324 = vmax.f32 %v4174, %v4224
  %v4325 = vmax.f32 %v4175, %v4225
  %v4326 = vmax.f32 %v4176, %v4226
  %v4327 = vmax.f32 %v4177, %v4227
  %v4328 = vmax.f32 %v4178, %v4228
  %v4329 = vmax.f32 %v4179, %v4229
  %v4330 = vmax.f32 %v4180, %v4230
  %v4331 = vmax.f32 %v4181, %v4231
  %v4332 = vmax.f32 %v4182, %v4232
  %v4333 = vmax.f32 %v4233, %v4283
  %v4334 = vmax.f32 %v4234, %v4284
  %v4335 = vmax.f32 %v4235, %v4285
  %v4336 = vmax.f32 %v4236, %v4286
  %v4337 = vmax.f32 %v4237, %v4287
  %v4338 = vmax.f32 %v4238, %v4288
  %v4339 = vmax.f32 %v4239, %v4289
  %v4340 = vmax.f32 %v4240, %v4290
  %v4341 = vmax.f32 %v4241, %v4291
  %v4342 = vmax.f32 %v4242, %v4292
  %v4343 = vmax.f32 %v4243, %v4293
  %v4344 = vmax.f32 %v4244, %v4294
  %v4345 = vmax.f32 %v4245, %v4295
  %v4346 = vmax.f32 %v4246, %v4296
  %v4347 = vmax.f32 %v4247, %v4297
  %v4348 = vmax.f32 %v4248, %v4298
  %v4349 = vmax.f32 %v4249, %v4299
  %v4350 = vmax.f32 %v4250, %v4300
  %v4351 = vmax.f32 %v4251, %v4301
  %v4352 = vmax.f32 %v4252, %v4302
  %v4353 = vmax.f32 %v4253, %v4303
  %v4354 = vmax.f32 %v4254, %v4304
  %v4355 = vmax.f32 %v4255, %v4305
  %v4356 = vmax.f32 %v4256, %v4306
  %v4357 = vmax.f32 %v4257, %v4307
  %v4358 = vmax.f32 %v4258, %v4308
  %v4359 = vmax.f32 %v4259, %v4309
  %v4360 = vmax.f32 %v4260, %v4310
  %v4361 = vmax.f32 %v4261, %v4311
  %v4362 = vmax.f32 %v4262, %v4312
  %v4363 = vmax.f32 %v4263, %v4313
  %v4364 = vmax.f32 %v4264, %v4314
  %v4365 = vmax.f32 %v4265, %v4315
  %v4366 = vmax.f32 %v4266, %v4316
  %v4367 = vmax.f32 %v4267, %v4317
  %v4368 = vmax.f32 %v4268, %v4318
  %v4369 = vmax.f32 %v4269, %v4319
  %v4370 = vmax.f32 %v4270, %v4320
  %v4371 = vmax.f32 %v4271, %v4321
  %v4372 = vmax.f32 %v4272, %v4322
  %v4373 = vmax.f32 %v4273, %v4323
  %v4374 = vmax.f32 %v4274, %v4324
  %v4375 = vmax.f32 %v4275, %v4325
  %v4376 = vmax.f32 %v4276, %v4326
  %v4377 = vmax.f32 %v4277, %v4327
  %v4378 = vmax.f32 %v4278, %v4328
  %v4379 = vmax.f32 %v4279, %v4329
  %v4380 = vmax.f32 %v4280, %v4330
  %v4381 = vmax.f32 %v4281, %v4331
  %v4382 = vmax.f32 %v4282, %v4332
  %v4383 = vpack.c.bf16 %v4334, %v4333
  %v4384 = vpack.c.bf16 %v4336, %v4335
  %v4385 = vpack.c.bf16 %v4338, %v4337
  %v4386 = vpack.c.bf16 %v4340, %v4339
  %v4387 = vpack.c.bf16 %v4342, %v4341
  %v4388 = vpack.c.bf16 %v4344, %v4343
  %v4389 = vpack.c.bf16 %v4346, %v4345
  %v4390 = vpack.c.bf16 %v4348, %v4347
  %v4391 = vpack.c.bf16 %v4350, %v4349
  %v4392 = vpack.c.bf16 %v4352, %v4351
  %v4393 = vpack.c.bf16 %v4354, %v4353
  %v4394 = vpack.c.bf16 %v4356, %v4355
  %v4395 = vpack.c.bf16 %v4358, %v4357
  %v4396 = vpack.c.bf16 %v4360, %v4359
  %v4397 = vpack.c.bf16 %v4362, %v4361
  %v4398 = vpack.c.bf16 %v4364, %v4363
  %v4399 = vpack.c.bf16 %v4366, %v4365
  %v4400 = vpack.c.bf16 %v4368, %v4367
  %v4401 = vpack.c.bf16 %v4370, %v4369
  %v4402 = vpack.c.bf16 %v4372, %v4371
  %v4403 = vpack.c.bf16 %v4374, %v4373
  %v4404 = vpack.c.bf16 %v4376, %v4375
  %v4405 = vpack.c.bf16 %v4378, %v4377
  %v4406 = vpack.c.bf16 %v4380, %v4379
  %v4407 = vpack.c.bf16 %v4382, %v4381
  %v4433 = vunpack.c.l.b16 %v4383
  %v4434 = vunpack.c.h.b16 %v4383
  %v4435 = vunpack.c.l.b16 %v4384
  %v4436 = vunpack.c.h.b16 %v4384
  %v4437 = vunpack.c.l.b16 %v4385
  %v4438 = vunpack.c.h.b16 %v4385
  %v4439 = vunpack.c.l.b16 %v4386
  %v4440 = vunpack.c.h.b16 %v4386
  %v4441 = vunpack.c.l.b16 %v4387
  %v4442 = vunpack.c.h.b16 %v4387
  %v4443 = vunpack.c.l.b16 %v4388
  %v4444 = vunpack.c.h.b16 %v4388
  %v4445 = vunpack.c.l.b16 %v4389
  %v4446 = vunpack.c.h.b16 %v4389
  %v4447 = vunpack.c.l.b16 %v4390
  %v4448 = vunpack.c.h.b16 %v4390
  %v4449 = vunpack.c.l.b16 %v4391
  %v4450 = vunpack.c.h.b16 %v4391
  %v4451 = vunpack.c.l.b16 %v4392
  %v4452 = vunpack.c.h.b16 %v4392
  %v4453 = vunpack.c.l.b16 %v4393
  %v4454 = vunpack.c.h.b16 %v4393
  %v4455 = vunpack.c.l.b16 %v4394
  %v4456 = vunpack.c.h.b16 %v4394
  %v4457 = vunpack.c.l.b16 %v4395
  %v4458 = vunpack.c.h.b16 %v4395
  %v4459 = vunpack.c.l.b16 %v4396
  %v4460 = vunpack.c.h.b16 %v4396
  %v4461 = vunpack.c.l.b16 %v4397
  %v4462 = vunpack.c.h.b16 %v4397
  %v4463 = vunpack.c.l.b16 %v4398
  %v4464 = vunpack.c.h.b16 %v4398
  %v4465 = vunpack.c.l.b16 %v4399
  %v4466 = vunpack.c.h.b16 %v4399
  %v4467 = vunpack.c.l.b16 %v4400
  %v4468 = vunpack.c.h.b16 %v4400
  %v4469 = vunpack.c.l.b16 %v4401
  %v4470 = vunpack.c.h.b16 %v4401
  %v4471 = vunpack.c.l.b16 %v4402
  %v4472 = vunpack.c.h.b16 %v4402
  %v4473 = vunpack.c.l.b16 %v4403
  %v4474 = vunpack.c.h.b16 %v4403
  %v4475 = vunpack.c.l.b16 %v4404
  %v4476 = vunpack.c.h.b16 %v4404
  %v4477 = vunpack.c.l.b16 %v4405
  %v4478 = vunpack.c.h.b16 %v4405
  %v4479 = vunpack.c.l.b16 %v4406
  %v4480 = vunpack.c.h.b16 %v4406
  %v4481 = vunpack.c.l.b16 %v4407
  %v4482 = vunpack.c.h.b16 %v4407
  %v4483 = vpack.c.b16 %v4433, %v4433
  %v4484 = vpack.c.b16 %v4434, %v4434
  %v4485 = vpack.c.b16 %v4435, %v4435
  %v4486 = vpack.c.b16 %v4436, %v4436
  %v4487 = vpack.c.b16 %v4437, %v4437
  %v4488 = vpack.c.b16 %v4438, %v4438
  %v4489 = vpack.c.b16 %v4439, %v4439
  %v4490 = vpack.c.b16 %v4440, %v4440
  %v4491 = vpack.c.b16 %v4441, %v4441
  %v4492 = vpack.c.b16 %v4442, %v4442
  %v4493 = vpack.c.b16 %v4443, %v4443
  %v4494 = vpack.c.b16 %v4444, %v4444
  %v4495 = vpack.c.b16 %v4445, %v4445
  %v4496 = vpack.c.b16 %v4446, %v4446
  %v4497 = vpack.c.b16 %v4447, %v4447
  %v4498 = vpack.c.b16 %v4448, %v4448
  %v4499 = vpack.c.b16 %v4449, %v4449
  %v4500 = vpack.c.b16 %v4450, %v4450
  %v4501 = vpack.c.b16 %v4451, %v4451
  %v4502 = vpack.c.b16 %v4452, %v4452
  %v4503 = vpack.c.b16 %v4453, %v4453
  %v4504 = vpack.c.b16 %v4454, %v4454
  %v4505 = vpack.c.b16 %v4455, %v4455
  %v4506 = vpack.c.b16 %v4456, %v4456
  %v4507 = vpack.c.b16 %v4457, %v4457
  %v4508 = vpack.c.b16 %v4458, %v4458
  %v4509 = vpack.c.b16 %v4459, %v4459
  %v4510 = vpack.c.b16 %v4460, %v4460
  %v4511 = vpack.c.b16 %v4461, %v4461
  %v4512 = vpack.c.b16 %v4462, %v4462
  %v4513 = vpack.c.b16 %v4463, %v4463
  %v4514 = vpack.c.b16 %v4464, %v4464
  %v4515 = vpack.c.b16 %v4465, %v4465
  %v4516 = vpack.c.b16 %v4466, %v4466
  %v4517 = vpack.c.b16 %v4467, %v4467
  %v4518 = vpack.c.b16 %v4468, %v4468
  %v4519 = vpack.c.b16 %v4469, %v4469
  %v4520 = vpack.c.b16 %v4470, %v4470
  %v4521 = vpack.c.b16 %v4471, %v4471
  %v4522 = vpack.c.b16 %v4472, %v4472
  %v4523 = vpack.c.b16 %v4473, %v4473
  %v4524 = vpack.c.b16 %v4474, %v4474
  %v4525 = vpack.c.b16 %v4475, %v4475
  %v4526 = vpack.c.b16 %v4476, %v4476
  %v4527 = vpack.c.b16 %v4477, %v4477
  %v4528 = vpack.c.b16 %v4478, %v4478
  %v4529 = vpack.c.b16 %v4479, %v4479
  %v4530 = vpack.c.b16 %v4480, %v4480
  %v4531 = vpack.c.b16 %v4481, %v4481
  %v4532 = vpack.c.b16 %v4482, %v4482
  %vm4583 = vcmask 519168
  %4584 = vst.msk [vmem:[%s3] sm:$0xf] %vm4583, %v4483
  %4585 = vst.msk [vmem:[%s3 + $0x4] sm:$0xf] %vm4583, %v4484
  %4586 = vst.msk [vmem:[%s3 + $0x8] sm:$0xf] %vm4583, %v4485
  %4587 = vst.msk [vmem:[%s3 + $0xc] sm:$0xf] %vm4583, %v4486
  %4588 = vst.msk [vmem:[%s3 + $0x10] sm:$0xf] %vm4583, %v4487
  %4589 = vst.msk [vmem:[%s3 + $0x14] sm:$0xf] %vm4583, %v4488
  %4590 = vst.msk [vmem:[%s3 + $0x18] sm:$0xf] %vm4583, %v4489
  %4591 = vst.msk [vmem:[%s3 + $0x1c] sm:$0xf] %vm4583, %v4490
  %4592 = vst.msk [vmem:[%s3 + $0x20] sm:$0xf] %vm4583, %v4491
  %4593 = vst.msk [vmem:[%s3 + $0x24] sm:$0xf] %vm4583, %v4492
  %4594 = vst.msk [vmem:[%s3 + $0x28] sm:$0xf] %vm4583, %v4493
  %4595 = vst.msk [vmem:[%s3 + $0x2c] sm:$0xf] %vm4583, %v4494
  %4596 = vst.msk [vmem:[%s3 + $0x30] sm:$0xf] %vm4583, %v4495
  %4597 = vst.msk [vmem:[%s3 + $0x34] sm:$0xf] %vm4583, %v4496
  %4598 = vst.msk [vmem:[%s3 + $0x38] sm:$0xf] %vm4583, %v4497
  %4599 = vst.msk [vmem:[%s3 + $0x3c] sm:$0xf] %vm4583, %v4498
  %4600 = vst.msk [vmem:[%s3 + $0x40] sm:$0xf] %vm4583, %v4499
  %4601 = vst.msk [vmem:[%s3 + $0x44] sm:$0xf] %vm4583, %v4500
  %4602 = vst.msk [vmem:[%s3 + $0x48] sm:$0xf] %vm4583, %v4501
  %4603 = vst.msk [vmem:[%s3 + $0x4c] sm:$0xf] %vm4583, %v4502
  %4604 = vst.msk [vmem:[%s3 + $0x50] sm:$0xf] %vm4583, %v4503
  %4605 = vst.msk [vmem:[%s3 + $0x54] sm:$0xf] %vm4583, %v4504
  %4606 = vst.msk [vmem:[%s3 + $0x58] sm:$0xf] %vm4583, %v4505
  %4607 = vst.msk [vmem:[%s3 + $0x5c] sm:$0xf] %vm4583, %v4506
  %4608 = vst.msk [vmem:[%s3 + $0x60] sm:$0xf] %vm4583, %v4507
  %4609 = vst.msk [vmem:[%s3 + $0x64] sm:$0xf] %vm4583, %v4508
  %4610 = vst.msk [vmem:[%s3 + $0x68] sm:$0xf] %vm4583, %v4509
  %4611 = vst.msk [vmem:[%s3 + $0x6c] sm:$0xf] %vm4583, %v4510
  %4612 = vst.msk [vmem:[%s3 + $0x70] sm:$0xf] %vm4583, %v4511
  %4613 = vst.msk [vmem:[%s3 + $0x74] sm:$0xf] %vm4583, %v4512
  %4614 = vst.msk [vmem:[%s3 + $0x78] sm:$0xf] %vm4583, %v4513
  %4615 = vst.msk [vmem:[%s3 + $0x7c] sm:$0xf] %vm4583, %v4514
  %4616 = vst.msk [vmem:[%s3 + $0x80] sm:$0xf] %vm4583, %v4515
  %4617 = vst.msk [vmem:[%s3 + $0x84] sm:$0xf] %vm4583, %v4516
  %4618 = vst.msk [vmem:[%s3 + $0x88] sm:$0xf] %vm4583, %v4517
  %4619 = vst.msk [vmem:[%s3 + $0x8c] sm:$0xf] %vm4583, %v4518
  %4620 = vst.msk [vmem:[%s3 + $0x90] sm:$0xf] %vm4583, %v4519
  %4621 = vst.msk [vmem:[%s3 + $0x94] sm:$0xf] %vm4583, %v4520
  %4622 = vst.msk [vmem:[%s3 + $0x98] sm:$0xf] %vm4583, %v4521
  %4623 = vst.msk [vmem:[%s3 + $0x9c] sm:$0xf] %vm4583, %v4522
  %4624 = vst.msk [vmem:[%s3 + $0xa0] sm:$0xf] %vm4583, %v4523
  %4625 = vst.msk [vmem:[%s3 + $0xa4] sm:$0xf] %vm4583, %v4524
  %4626 = vst.msk [vmem:[%s3 + $0xa8] sm:$0xf] %vm4583, %v4525
  %4627 = vst.msk [vmem:[%s3 + $0xac] sm:$0xf] %vm4583, %v4526
  %4628 = vst.msk [vmem:[%s3 + $0xb0] sm:$0xf] %vm4583, %v4527
  %4629 = vst.msk [vmem:[%s3 + $0xb4] sm:$0xf] %vm4583, %v4528
  %4630 = vst.msk [vmem:[%s3 + $0xb8] sm:$0xf] %vm4583, %v4529
  %4631 = vst.msk [vmem:[%s3 + $0xbc] sm:$0xf] %vm4583, %v4530
  %4632 = vst.msk [vmem:[%s3 + $0xc0] sm:$0xf] %vm4583, %v4531
  %4633 = vst.msk [vmem:[%s3 + $0xc4] sm:$0xf] %vm4583, %v4532
  // Predicated region
  $region14: #{forward.5} parent=0 // pred_check
    _
  $region15: #{forward.5} parent=0 // pred_check_branch
    %4635 = sbr.rel (0) target = $region17
  $region16: #{forward.5} parent=0 // pred_region
    _
  $region17: #{forward.5} parent=0 // pred_fallthru
    _
  // Predicated region
  $region18: #{forward.5} parent=0 // pred_check
    _
  $region19: #{forward.5} parent=0 // pred_check_branch
    %4637 = sbr.rel (0) target = $region21
  $region20: #{forward.5} parent=0 // pred_region
    _
  $region21: #{forward.5} parent=0 // pred_fallthru
    _

// kernel: forward.6
$region0: #{forward.6}
  #allocation0 [shape = 'u32[]', space=smem, size = 0x4, offset = 0x4, fixed_abs, tag = 'smem constant byte address 0x4 - core index']
  #allocation1 [shape = 'u32[144,128]{1,0:T(1,128)}', space=vmem, size = 0x12000, scoped, tag = 'internal scratch']
  %s0 = inlined_call_operand.vmem [shape: bf16[4,80,576], index: 0, kind: input, shape index: {}]
  %s1 = inlined_call_operand.vmem [shape: bf16[576,128], index: 1, kind: input, shape index: {}]
  %s2 = inlined_call_operand.vmem [shape: f32[1,128], index: 2, kind: input, shape index: {}]
  %s3 = inlined_call_operand.vmem [shape: bf16[80,128], index: 3, kind: output, shape index: {}]
  %s4 = sld [smem:[#allocation0]]
  $region22: #{forward.6} parent=0
    _
  %s6 = ssub.s32 1, %s4
  %s7 = scalar_select 0, %s6, %s4
  // Predicated region
  $region2: #{forward.6} parent=0 // pred_check
    _
  $region3: #{forward.6} parent=0 // pred_check_branch
    %9 = sbr.rel (0) target = $region5
  $region4: #{forward.6} parent=0 // pred_region
    _
  $region5: #{forward.6} parent=0 // pred_fallthru
    _
  // Predicated region
  $region6: #{forward.6} parent=0 // pred_check
    _
  $region7: #{forward.6} parent=0 // pred_check_branch
    %11 = sbr.rel (0) target = $region9
  $region8: #{forward.6} parent=0 // pred_region
    _
  $region9: #{forward.6} parent=0 // pred_fallthru
    _
  // Predicated region
  $region10: #{forward.6} parent=0 // pred_check
    _
  $region11: #{forward.6} parent=0 // pred_check_branch
    %13 = sbr.rel (0) target = $region13
  $region12: #{forward.6} parent=0 // pred_region
    _
  $region13: #{forward.6} parent=0 // pred_fallthru
    _
  %v15 = vld [vmem:[%s0] sm:$0xff]
  %v16 = vld [vmem:[%s0 + $0x8] sm:$0xff]
  %v17 = vld [vmem:[%s0 + $0x10] sm:$0xf]
  %v18 = vld [vmem:[%s0 + $0x14] sm:$0xff]
  %v19 = vld [vmem:[%s0 + $0x1c] sm:$0xff]
  %v20 = vld [vmem:[%s0 + $0x24] sm:$0xf]
  %v21 = vld [vmem:[%s0 + $0x28] sm:$0xff]
  %v22 = vld [vmem:[%s0 + $0x30] sm:$0xff]
  %v23 = vld [vmem:[%s0 + $0x38] sm:$0xf]
  %v24 = vld [vmem:[%s0 + $0x3c] sm:$0xff]
  %v25 = vld [vmem:[%s0 + $0x44] sm:$0xff]
  %v26 = vld [vmem:[%s0 + $0x4c] sm:$0xf]
  %v27 = vld [vmem:[%s0 + $0x50] sm:$0xff]
  %v28 = vld [vmem:[%s0 + $0x58] sm:$0xff]
  %v29 = vld [vmem:[%s0 + $0x60] sm:$0xf]
  %v30 = vld [vmem:[%s0 + $0x64] sm:$0xff]
  %v31 = vld [vmem:[%s0 + $0x6c] sm:$0xff]
  %v32 = vld [vmem:[%s0 + $0x74] sm:$0xf]
  %v33 = vld [vmem:[%s0 + $0x78] sm:$0xff]
  %v34 = vld [vmem:[%s0 + $0x80] sm:$0xff]
  %v35 = vld [vmem:[%s0 + $0x88] sm:$0xf]
  %v36 = vld [vmem:[%s0 + $0x8c] sm:$0xff]
  %v37 = vld [vmem:[%s0 + $0x94] sm:$0xff]
  %v38 = vld [vmem:[%s0 + $0x9c] sm:$0xf]
  %v39 = vld [vmem:[%s0 + $0xa0] sm:$0xff]
  %v40 = vld [vmem:[%s0 + $0xa8] sm:$0xff]
  %v41 = vld [vmem:[%s0 + $0xb0] sm:$0xf]
  %v42 = vld [vmem:[%s0 + $0xb4] sm:$0xff]
  %v43 = vld [vmem:[%s0 + $0xbc] sm:$0xff]
  %v44 = vld [vmem:[%s0 + $0xc4] sm:$0xf]
  %v45 = vld [vmem:[%s0 + $0xc8] sm:$0xff]
  %v46 = vld [vmem:[%s0 + $0xd0] sm:$0xff]
  %v47 = vld [vmem:[%s0 + $0xd8] sm:$0xf]
  %v48 = vld [vmem:[%s0 + $0xdc] sm:$0xff]
  %v49 = vld [vmem:[%s0 + $0xe4] sm:$0xff]
  %v50 = vld [vmem:[%s0 + $0xec] sm:$0xf]
  %v51 = vld [vmem:[%s0 + $0xf0] sm:$0xff]
  %v52 = vld [vmem:[%s0 + $0xf8] sm:$0xff]
  %v53 = vld [vmem:[%s0 + $0x100] sm:$0xf]
  %v54 = vld [vmem:[%s0 + $0x104] sm:$0xff]
  %v55 = vld [vmem:[%s0 + $0x10c] sm:$0xff]
  %v56 = vld [vmem:[%s0 + $0x114] sm:$0xf]
  %v57 = vld [vmem:[%s0 + $0x118] sm:$0xff]
  %v58 = vld [vmem:[%s0 + $0x120] sm:$0xff]
  %v59 = vld [vmem:[%s0 + $0x128] sm:$0xf]
  %v60 = vld [vmem:[%s0 + $0x12c] sm:$0xff]
  %v61 = vld [vmem:[%s0 + $0x134] sm:$0xff]
  %v62 = vld [vmem:[%s0 + $0x13c] sm:$0xf]
  %v63 = vld [vmem:[%s0 + $0x140] sm:$0xff]
  %v64 = vld [vmem:[%s0 + $0x148] sm:$0xff]
  %v65 = vld [vmem:[%s0 + $0x150] sm:$0xf]
  %v66 = vld [vmem:[%s0 + $0x154] sm:$0xff]
  %v67 = vld [vmem:[%s0 + $0x15c] sm:$0xff]
  %v68 = vld [vmem:[%s0 + $0x164] sm:$0xf]
  %v69 = vld [vmem:[%s0 + $0x168] sm:$0xff]
  %v70 = vld [vmem:[%s0 + $0x170] sm:$0xff]
  %v71 = vld [vmem:[%s0 + $0x178] sm:$0xf]
  %v72 = vld [vmem:[%s0 + $0x17c] sm:$0xff]
  %v73 = vld [vmem:[%s0 + $0x184] sm:$0xff]
  %v74 = vld [vmem:[%s0 + $0x18c] sm:$0xf]
  %v75 = vld [vmem:[%s0 + $0x190] sm:$0xff]
  %v76 = vld [vmem:[%s0 + $0x198] sm:$0xff]
  %v77 = vld [vmem:[%s0 + $0x1a0] sm:$0xf]
  %v78 = vld [vmem:[%s0 + $0x1a4] sm:$0xff]
  %v79 = vld [vmem:[%s0 + $0x1ac] sm:$0xff]
  %v80 = vld [vmem:[%s0 + $0x1b4] sm:$0xf]
  %v81 = vld [vmem:[%s0 + $0x1b8] sm:$0xff]
  %v82 = vld [vmem:[%s0 + $0x1c0] sm:$0xff]
  %v83 = vld [vmem:[%s0 + $0x1c8] sm:$0xf]
  %v84 = vld [vmem:[%s0 + $0x1cc] sm:$0xff]
  %v85 = vld [vmem:[%s0 + $0x1d4] sm:$0xff]
  %v86 = vld [vmem:[%s0 + $0x1dc] sm:$0xf]
  %v87 = vld [vmem:[%s0 + $0x1e0] sm:$0xff]
  %v88 = vld [vmem:[%s0 + $0x1e8] sm:$0xff]
  %v89 = vld [vmem:[%s0 + $0x1f0] sm:$0xf]
  %v90 = vld [vmem:[%s0 + $0x1f4] sm:$0xff]
  %v91 = vld [vmem:[%s0 + $0x1fc] sm:$0xff]
  %v92 = vld [vmem:[%s0 + $0x204] sm:$0xf]
  %v93 = vld [vmem:[%s0 + $0x208] sm:$0xff]
  %v94 = vld [vmem:[%s0 + $0x210] sm:$0xff]
  %v95 = vld [vmem:[%s0 + $0x218] sm:$0xf]
  %v96 = vld [vmem:[%s0 + $0x21c] sm:$0xff]
  %v97 = vld [vmem:[%s0 + $0x224] sm:$0xff]
  %v98 = vld [vmem:[%s0 + $0x22c] sm:$0xf]
  %v99 = vld [vmem:[%s0 + $0x230] sm:$0xff]
  %v100 = vld [vmem:[%s0 + $0x238] sm:$0xff]
  %v101 = vld [vmem:[%s0 + $0x240] sm:$0xf]
  %v102 = vld [vmem:[%s0 + $0x244] sm:$0xff]
  %v103 = vld [vmem:[%s0 + $0x24c] sm:$0xff]
  %v104 = vld [vmem:[%s0 + $0x254] sm:$0xf]
  %v105 = vld [vmem:[%s0 + $0x258] sm:$0xff]
  %v106 = vld [vmem:[%s0 + $0x260] sm:$0xff]
  %v107 = vld [vmem:[%s0 + $0x268] sm:$0xf]
  %v108 = vld [vmem:[%s0 + $0x26c] sm:$0xff]
  %v109 = vld [vmem:[%s0 + $0x274] sm:$0xff]
  %v110 = vld [vmem:[%s0 + $0x27c] sm:$0xf]
  %v111 = vld [vmem:[%s0 + $0x280] sm:$0xff]
  %v112 = vld [vmem:[%s0 + $0x288] sm:$0xff]
  %v113 = vld [vmem:[%s0 + $0x290] sm:$0xf]
  %v114 = vld [vmem:[%s0 + $0x294] sm:$0xff]
  %v115 = vld [vmem:[%s0 + $0x29c] sm:$0xff]
  %v116 = vld [vmem:[%s0 + $0x2a4] sm:$0xf]
  %v117 = vld [vmem:[%s0 + $0x2a8] sm:$0xff]
  %v118 = vld [vmem:[%s0 + $0x2b0] sm:$0xff]
  %v119 = vld [vmem:[%s0 + $0x2b8] sm:$0xf]
  %v120 = vld [vmem:[%s0 + $0x2bc] sm:$0xff]
  %v121 = vld [vmem:[%s0 + $0x2c4] sm:$0xff]
  %v122 = vld [vmem:[%s0 + $0x2cc] sm:$0xf]
  %v123 = vld [vmem:[%s0 + $0x2d0] sm:$0xff]
  %v124 = vld [vmem:[%s0 + $0x2d8] sm:$0xff]
  %v125 = vld [vmem:[%s0 + $0x2e0] sm:$0xf]
  %v126 = vld [vmem:[%s0 + $0x2e4] sm:$0xff]
  %v127 = vld [vmem:[%s0 + $0x2ec] sm:$0xff]
  %v128 = vld [vmem:[%s0 + $0x2f4] sm:$0xf]
  %v129 = vld [vmem:[%s0 + $0x2f8] sm:$0xff]
  %v130 = vld [vmem:[%s0 + $0x300] sm:$0xff]
  %v131 = vld [vmem:[%s0 + $0x308] sm:$0xf]
  %v132 = vld [vmem:[%s0 + $0x30c] sm:$0xff]
  %v133 = vld [vmem:[%s0 + $0x314] sm:$0xff]
  %v134 = vld [vmem:[%s0 + $0x31c] sm:$0xf]
  %v135 = vld [vmem:[%s1] sm:$0xf]
  %v136 = vld [vmem:[%s1 + $0x4] sm:$0xf]
  %v137 = vld [vmem:[%s1 + $0x8] sm:$0xf]
  %v138 = vld [vmem:[%s1 + $0xc] sm:$0xf]
  %v139 = vld [vmem:[%s1 + $0x10] sm:$0xf]
  %v140 = vld [vmem:[%s1 + $0x14] sm:$0xf]
  %v141 = vld [vmem:[%s1 + $0x18] sm:$0xf]
  %v142 = vld [vmem:[%s1 + $0x1c] sm:$0xf]
  %v143 = vld [vmem:[%s1 + $0x20] sm:$0xf]
  %v144 = vld [vmem:[%s1 + $0x24] sm:$0xf]
  %v145 = vld [vmem:[%s1 + $0x28] sm:$0xf]
  %v146 = vld [vmem:[%s1 + $0x2c] sm:$0xf]
  %v147 = vld [vmem:[%s1 + $0x30] sm:$0xf]
  %v148 = vld [vmem:[%s1 + $0x34] sm:$0xf]
  %v149 = vld [vmem:[%s1 + $0x38] sm:$0xf]
  %v150 = vld [vmem:[%s1 + $0x3c] sm:$0xf]
  %v151 = vld [vmem:[%s1 + $0x40] sm:$0xf]
  %v152 = vld [vmem:[%s1 + $0x44] sm:$0xf]
  %v153 = vld [vmem:[%s1 + $0x48] sm:$0xf]
  %v154 = vld [vmem:[%s1 + $0x4c] sm:$0xf]
  %v155 = vld [vmem:[%s1 + $0x50] sm:$0xf]
  %v156 = vld [vmem:[%s1 + $0x54] sm:$0xf]
  %v157 = vld [vmem:[%s1 + $0x58] sm:$0xf]
  %v158 = vld [vmem:[%s1 + $0x5c] sm:$0xf]
  %v159 = vld [vmem:[%s1 + $0x60] sm:$0xf]
  %v160 = vld [vmem:[%s1 + $0x64] sm:$0xf]
  %v161 = vld [vmem:[%s1 + $0x68] sm:$0xf]
  %v162 = vld [vmem:[%s1 + $0x6c] sm:$0xf]
  %v163 = vld [vmem:[%s1 + $0x70] sm:$0xf]
  %v164 = vld [vmem:[%s1 + $0x74] sm:$0xf]
  %v165 = vld [vmem:[%s1 + $0x78] sm:$0xf]
  %v166 = vld [vmem:[%s1 + $0x7c] sm:$0xf]
  %v167 = vld [vmem:[%s1 + $0x80] sm:$0xf]
  %v168 = vld [vmem:[%s1 + $0x84] sm:$0xf]
  %v169 = vld [vmem:[%s1 + $0x88] sm:$0xf]
  %v170 = vld [vmem:[%s1 + $0x8c] sm:$0xf]
  %v171 = vld [vmem:[%s1 + $0x90] sm:$0xf]
  %v172 = vld [vmem:[%s1 + $0x94] sm:$0xf]
  %v173 = vld [vmem:[%s1 + $0x98] sm:$0xf]
  %v174 = vld [vmem:[%s1 + $0x9c] sm:$0xf]
  %v175 = vld [vmem:[%s1 + $0xa0] sm:$0xf]
  %v176 = vld [vmem:[%s1 + $0xa4] sm:$0xf]
  %v177 = vld [vmem:[%s1 + $0xa8] sm:$0xf]
  %v178 = vld [vmem:[%s1 + $0xac] sm:$0xf]
  %v179 = vld [vmem:[%s1 + $0xb0] sm:$0xf]
  %v180 = vld [vmem:[%s1 + $0xb4] sm:$0xf]
  %v181 = vld [vmem:[%s1 + $0xb8] sm:$0xf]
  %v182 = vld [vmem:[%s1 + $0xbc] sm:$0xf]
  %v183 = vld [vmem:[%s1 + $0xc0] sm:$0xf]
  %v184 = vld [vmem:[%s1 + $0xc4] sm:$0xf]
  %v185 = vld [vmem:[%s1 + $0xc8] sm:$0xf]
  %v186 = vld [vmem:[%s1 + $0xcc] sm:$0xf]
  %v187 = vld [vmem:[%s1 + $0xd0] sm:$0xf]
  %v188 = vld [vmem:[%s1 + $0xd4] sm:$0xf]
  %v189 = vld [vmem:[%s1 + $0xd8] sm:$0xf]
  %v190 = vld [vmem:[%s1 + $0xdc] sm:$0xf]
  %v191 = vld [vmem:[%s1 + $0xe0] sm:$0xf]
  %v192 = vld [vmem:[%s1 + $0xe4] sm:$0xf]
  %v193 = vld [vmem:[%s1 + $0xe8] sm:$0xf]
  %v194 = vld [vmem:[%s1 + $0xec] sm:$0xf]
  %v195 = vld [vmem:[%s1 + $0xf0] sm:$0xf]
  %v196 = vld [vmem:[%s1 + $0xf4] sm:$0xf]
  %v197 = vld [vmem:[%s1 + $0xf8] sm:$0xf]
  %v198 = vld [vmem:[%s1 + $0xfc] sm:$0xf]
  %v199 = vld [vmem:[%s1 + $0x100] sm:$0xf]
  %v200 = vld [vmem:[%s1 + $0x104] sm:$0xf]
  %v201 = vld [vmem:[%s1 + $0x108] sm:$0xf]
  %v202 = vld [vmem:[%s1 + $0x10c] sm:$0xf]
  %v203 = vld [vmem:[%s1 + $0x110] sm:$0xf]
  %v204 = vld [vmem:[%s1 + $0x114] sm:$0xf]
  %v205 = vld [vmem:[%s1 + $0x118] sm:$0xf]
  %v206 = vld [vmem:[%s1 + $0x11c] sm:$0xf]
  %v207 = vld [vmem:[%s2] sm:$0x1]
  %v209 = vlaneseq
  %v210 = vshrl.u32 %v209, 7
  %v211 = vsub.s32 0, %v210
  %v212 = vrot.slane %v207, %v211
  %v334 = vunpack.c.l.b16 %v15
  %v335 = vunpack.c.h.b16 %v15
  %v336 = vunpack.c.l.b16 %v16
  %v337 = vunpack.c.h.b16 %v16
  %v338 = vunpack.c.l.b16 %v17
  %v339 = vunpack.c.l.b16 %v18
  %v340 = vunpack.c.h.b16 %v18
  %v341 = vunpack.c.l.b16 %v19
  %v342 = vunpack.c.h.b16 %v19
  %v343 = vunpack.c.l.b16 %v20
  %v344 = vunpack.c.l.b16 %v21
  %v345 = vunpack.c.h.b16 %v21
  %v346 = vunpack.c.l.b16 %v22
  %v347 = vunpack.c.h.b16 %v22
  %v348 = vunpack.c.l.b16 %v23
  %v349 = vunpack.c.l.b16 %v24
  %v350 = vunpack.c.h.b16 %v24
  %v351 = vunpack.c.l.b16 %v25
  %v352 = vunpack.c.h.b16 %v25
  %v353 = vunpack.c.l.b16 %v26
  %v354 = vunpack.c.l.b16 %v27
  %v355 = vunpack.c.h.b16 %v27
  %v356 = vunpack.c.l.b16 %v28
  %v357 = vunpack.c.h.b16 %v28
  %v358 = vunpack.c.l.b16 %v29
  %v359 = vunpack.c.l.b16 %v30
  %v360 = vunpack.c.h.b16 %v30
  %v361 = vunpack.c.l.b16 %v31
  %v362 = vunpack.c.h.b16 %v31
  %v363 = vunpack.c.l.b16 %v32
  %v364 = vunpack.c.l.b16 %v33
  %v365 = vunpack.c.h.b16 %v33
  %v366 = vunpack.c.l.b16 %v34
  %v367 = vunpack.c.h.b16 %v34
  %v368 = vunpack.c.l.b16 %v35
  %v369 = vunpack.c.l.b16 %v36
  %v370 = vunpack.c.h.b16 %v36
  %v371 = vunpack.c.l.b16 %v37
  %v372 = vunpack.c.h.b16 %v37
  %v373 = vunpack.c.l.b16 %v38
  %v374 = vunpack.c.l.b16 %v39
  %v375 = vunpack.c.h.b16 %v39
  %v376 = vunpack.c.l.b16 %v40
  %v377 = vunpack.c.h.b16 %v40
  %v378 = vunpack.c.l.b16 %v41
  %v379 = vunpack.c.l.b16 %v42
  %v380 = vunpack.c.h.b16 %v42
  %v381 = vunpack.c.l.b16 %v43
  %v382 = vunpack.c.h.b16 %v43
  %v383 = vunpack.c.l.b16 %v44
  %v384 = vunpack.c.l.b16 %v45
  %v385 = vunpack.c.h.b16 %v45
  %v386 = vunpack.c.l.b16 %v46
  %v387 = vunpack.c.h.b16 %v46
  %v388 = vunpack.c.l.b16 %v47
  %v389 = vunpack.c.l.b16 %v48
  %v390 = vunpack.c.h.b16 %v48
  %v391 = vunpack.c.l.b16 %v49
  %v392 = vunpack.c.h.b16 %v49
  %v393 = vunpack.c.l.b16 %v50
  %v394 = vunpack.c.l.b16 %v51
  %v395 = vunpack.c.h.b16 %v51
  %v396 = vunpack.c.l.b16 %v52
  %v397 = vunpack.c.h.b16 %v52
  %v398 = vunpack.c.l.b16 %v53
  %v399 = vunpack.c.l.b16 %v54
  %v400 = vunpack.c.h.b16 %v54
  %v401 = vunpack.c.l.b16 %v55
  %v402 = vunpack.c.h.b16 %v55
  %v403 = vunpack.c.l.b16 %v56
  %v404 = vunpack.c.l.b16 %v57
  %v405 = vunpack.c.h.b16 %v57
  %v406 = vunpack.c.l.b16 %v58
  %v407 = vunpack.c.h.b16 %v58
  %v408 = vunpack.c.l.b16 %v59
  %v409 = vunpack.c.l.b16 %v60
  %v410 = vunpack.c.h.b16 %v60
  %v411 = vunpack.c.l.b16 %v61
  %v412 = vunpack.c.h.b16 %v61
  %v413 = vunpack.c.l.b16 %v62
  %v414 = vunpack.c.l.b16 %v63
  %v415 = vunpack.c.h.b16 %v63
  %v416 = vunpack.c.l.b16 %v64
  %v417 = vunpack.c.h.b16 %v64
  %v418 = vunpack.c.l.b16 %v65
  %v419 = vunpack.c.l.b16 %v66
  %v420 = vunpack.c.h.b16 %v66
  %v421 = vunpack.c.l.b16 %v67
  %v422 = vunpack.c.h.b16 %v67
  %v423 = vunpack.c.l.b16 %v68
  %v424 = vunpack.c.l.b16 %v69
  %v425 = vunpack.c.h.b16 %v69
  %v426 = vunpack.c.l.b16 %v70
  %v427 = vunpack.c.h.b16 %v70
  %v428 = vunpack.c.l.b16 %v71
  %v429 = vunpack.c.l.b16 %v72
  %v430 = vunpack.c.h.b16 %v72
  %v431 = vunpack.c.l.b16 %v73
  %v432 = vunpack.c.h.b16 %v73
  %v433 = vunpack.c.l.b16 %v74
  %v434 = vunpack.c.l.b16 %v75
  %v435 = vunpack.c.h.b16 %v75
  %v436 = vunpack.c.l.b16 %v76
  %v437 = vunpack.c.h.b16 %v76
  %v438 = vunpack.c.l.b16 %v77
  %v439 = vunpack.c.l.b16 %v78
  %v440 = vunpack.c.h.b16 %v78
  %v441 = vunpack.c.l.b16 %v79
  %v442 = vunpack.c.h.b16 %v79
  %v443 = vunpack.c.l.b16 %v80
  %v444 = vunpack.c.l.b16 %v81
  %v445 = vunpack.c.h.b16 %v81
  %v446 = vunpack.c.l.b16 %v82
  %v447 = vunpack.c.h.b16 %v82
  %v448 = vunpack.c.l.b16 %v83
  %v449 = vunpack.c.l.b16 %v84
  %v450 = vunpack.c.h.b16 %v84
  %v451 = vunpack.c.l.b16 %v85
  %v452 = vunpack.c.h.b16 %v85
  %v453 = vunpack.c.l.b16 %v86
  %v454 = vunpack.c.l.b16 %v87
  %v455 = vunpack.c.h.b16 %v87
  %v456 = vunpack.c.l.b16 %v88
  %v457 = vunpack.c.h.b16 %v88
  %v458 = vunpack.c.l.b16 %v89
  %v459 = vunpack.c.l.b16 %v90
  %v460 = vunpack.c.h.b16 %v90
  %v461 = vunpack.c.l.b16 %v91
  %v462 = vunpack.c.h.b16 %v91
  %v463 = vunpack.c.l.b16 %v92
  %v464 = vunpack.c.l.b16 %v93
  %v465 = vunpack.c.h.b16 %v93
  %v466 = vunpack.c.l.b16 %v94
  %v467 = vunpack.c.h.b16 %v94
  %v468 = vunpack.c.l.b16 %v95
  %v469 = vunpack.c.l.b16 %v96
  %v470 = vunpack.c.h.b16 %v96
  %v471 = vunpack.c.l.b16 %v97
  %v472 = vunpack.c.h.b16 %v97
  %v473 = vunpack.c.l.b16 %v98
  %v474 = vunpack.c.l.b16 %v99
  %v475 = vunpack.c.h.b16 %v99
  %v476 = vunpack.c.l.b16 %v100
  %v477 = vunpack.c.h.b16 %v100
  %v478 = vunpack.c.l.b16 %v101
  %v479 = vunpack.c.l.b16 %v102
  %v480 = vunpack.c.h.b16 %v102
  %v481 = vunpack.c.l.b16 %v103
  %v482 = vunpack.c.h.b16 %v103
  %v483 = vunpack.c.l.b16 %v104
  %v484 = vunpack.c.l.b16 %v105
  %v485 = vunpack.c.h.b16 %v105
  %v486 = vunpack.c.l.b16 %v106
  %v487 = vunpack.c.h.b16 %v106
  %v488 = vunpack.c.l.b16 %v107
  %v489 = vunpack.c.l.b16 %v108
  %v490 = vunpack.c.h.b16 %v108
  %v491 = vunpack.c.l.b16 %v109
  %v492 = vunpack.c.h.b16 %v109
  %v493 = vunpack.c.l.b16 %v110
  %v494 = vunpack.c.l.b16 %v111
  %v495 = vunpack.c.h.b16 %v111
  %v496 = vunpack.c.l.b16 %v112
  %v497 = vunpack.c.h.b16 %v112
  %v498 = vunpack.c.l.b16 %v113
  %v499 = vunpack.c.l.b16 %v114
  %v500 = vunpack.c.h.b16 %v114
  %v501 = vunpack.c.l.b16 %v115
  %v502 = vunpack.c.h.b16 %v115
  %v503 = vunpack.c.l.b16 %v116
  %v504 = vunpack.c.l.b16 %v117
  %v505 = vunpack.c.h.b16 %v117
  %v506 = vunpack.c.l.b16 %v118
  %v507 = vunpack.c.h.b16 %v118
  %v508 = vunpack.c.l.b16 %v119
  %v509 = vunpack.c.l.b16 %v120
  %v510 = vunpack.c.h.b16 %v120
  %v511 = vunpack.c.l.b16 %v121
  %v512 = vunpack.c.h.b16 %v121
  %v513 = vunpack.c.l.b16 %v122
  %v514 = vunpack.c.l.b16 %v123
  %v515 = vunpack.c.h.b16 %v123
  %v516 = vunpack.c.l.b16 %v124
  %v517 = vunpack.c.h.b16 %v124
  %v518 = vunpack.c.l.b16 %v125
  %v519 = vunpack.c.l.b16 %v126
  %v520 = vunpack.c.h.b16 %v126
  %v521 = vunpack.c.l.b16 %v127
  %v522 = vunpack.c.h.b16 %v127
  %v523 = vunpack.c.l.b16 %v128
  %v524 = vunpack.c.l.b16 %v129
  %v525 = vunpack.c.h.b16 %v129
  %v526 = vunpack.c.l.b16 %v130
  %v527 = vunpack.c.h.b16 %v130
  %v528 = vunpack.c.l.b16 %v131
  %v529 = vunpack.c.l.b16 %v132
  %v530 = vunpack.c.h.b16 %v132
  %v531 = vunpack.c.l.b16 %v133
  %v532 = vunpack.c.h.b16 %v133
  %v533 = vunpack.c.l.b16 %v134
  %v534 = vpack.c.b16 %v339, %v334
  %v535 = vpack.c.b16 %v340, %v335
  %v536 = vpack.c.b16 %v341, %v336
  %v537 = vpack.c.b16 %v342, %v337
  %v538 = vpack.c.b16 %v343, %v338
  %v539 = vpack.c.b16 %v349, %v344
  %v540 = vpack.c.b16 %v350, %v345
  %v541 = vpack.c.b16 %v351, %v346
  %v542 = vpack.c.b16 %v352, %v347
  %v543 = vpack.c.b16 %v353, %v348
  %v544 = vpack.c.b16 %v359, %v354
  %v545 = vpack.c.b16 %v360, %v355
  %v546 = vpack.c.b16 %v361, %v356
  %v547 = vpack.c.b16 %v362, %v357
  %v548 = vpack.c.b16 %v363, %v358
  %v549 = vpack.c.b16 %v369, %v364
  %v550 = vpack.c.b16 %v370, %v365
  %v551 = vpack.c.b16 %v371, %v366
  %v552 = vpack.c.b16 %v372, %v367
  %v553 = vpack.c.b16 %v373, %v368
  %v554 = vpack.c.b16 %v379, %v374
  %v555 = vpack.c.b16 %v380, %v375
  %v556 = vpack.c.b16 %v381, %v376
  %v557 = vpack.c.b16 %v382, %v377
  %v558 = vpack.c.b16 %v383, %v378
  %v559 = vpack.c.b16 %v389, %v384
  %v560 = vpack.c.b16 %v390, %v385
  %v561 = vpack.c.b16 %v391, %v386
  %v562 = vpack.c.b16 %v392, %v387
  %v563 = vpack.c.b16 %v393, %v388
  %v564 = vpack.c.b16 %v399, %v394
  %v565 = vpack.c.b16 %v400, %v395
  %v566 = vpack.c.b16 %v401, %v396
  %v567 = vpack.c.b16 %v402, %v397
  %v568 = vpack.c.b16 %v403, %v398
  %v569 = vpack.c.b16 %v409, %v404
  %v570 = vpack.c.b16 %v410, %v405
  %v571 = vpack.c.b16 %v411, %v406
  %v572 = vpack.c.b16 %v412, %v407
  %v573 = vpack.c.b16 %v413, %v408
  %v574 = vpack.c.b16 %v419, %v414
  %v575 = vpack.c.b16 %v420, %v415
  %v576 = vpack.c.b16 %v421, %v416
  %v577 = vpack.c.b16 %v422, %v417
  %v578 = vpack.c.b16 %v423, %v418
  %v579 = vpack.c.b16 %v429, %v424
  %v580 = vpack.c.b16 %v430, %v425
  %v581 = vpack.c.b16 %v431, %v426
  %v582 = vpack.c.b16 %v432, %v427
  %v583 = vpack.c.b16 %v433, %v428
  %v584 = vpack.c.b16 %v439, %v434
  %v585 = vpack.c.b16 %v440, %v435
  %v586 = vpack.c.b16 %v441, %v436
  %v587 = vpack.c.b16 %v442, %v437
  %v588 = vpack.c.b16 %v443, %v438
  %v589 = vpack.c.b16 %v449, %v444
  %v590 = vpack.c.b16 %v450, %v445
  %v591 = vpack.c.b16 %v451, %v446
  %v592 = vpack.c.b16 %v452, %v447
  %v593 = vpack.c.b16 %v453, %v448
  %v594 = vpack.c.b16 %v459, %v454
  %v595 = vpack.c.b16 %v460, %v455
  %v596 = vpack.c.b16 %v461, %v456
  %v597 = vpack.c.b16 %v462, %v457
  %v598 = vpack.c.b16 %v463, %v458
  %v599 = vpack.c.b16 %v469, %v464
  %v600 = vpack.c.b16 %v470, %v465
  %v601 = vpack.c.b16 %v471, %v466
  %v602 = vpack.c.b16 %v472, %v467
  %v603 = vpack.c.b16 %v473, %v468
  %v604 = vpack.c.b16 %v479, %v474
  %v605 = vpack.c.b16 %v480, %v475
  %v606 = vpack.c.b16 %v481, %v476
  %v607 = vpack.c.b16 %v482, %v477
  %v608 = vpack.c.b16 %v483, %v478
  %v609 = vpack.c.b16 %v489, %v484
  %v610 = vpack.c.b16 %v490, %v485
  %v611 = vpack.c.b16 %v491, %v486
  %v612 = vpack.c.b16 %v492, %v487
  %v613 = vpack.c.b16 %v493, %v488
  %v614 = vpack.c.b16 %v499, %v494
  %v615 = vpack.c.b16 %v500, %v495
  %v616 = vpack.c.b16 %v501, %v496
  %v617 = vpack.c.b16 %v502, %v497
  %v618 = vpack.c.b16 %v503, %v498
  %v619 = vpack.c.b16 %v509, %v504
  %v620 = vpack.c.b16 %v510, %v505
  %v621 = vpack.c.b16 %v511, %v506
  %v622 = vpack.c.b16 %v512, %v507
  %v623 = vpack.c.b16 %v513, %v508
  %v624 = vpack.c.b16 %v519, %v514
  %v625 = vpack.c.b16 %v520, %v515
  %v626 = vpack.c.b16 %v521, %v516
  %v627 = vpack.c.b16 %v522, %v517
  %v628 = vpack.c.b16 %v523, %v518
  %v629 = vpack.c.b16 %v529, %v524
  %v630 = vpack.c.b16 %v530, %v525
  %v631 = vpack.c.b16 %v531, %v526
  %v632 = vpack.c.b16 %v532, %v527
  %v633 = vpack.c.b16 %v533, %v528
  %v786 = vunpack.c.l.b16 %v135
  %v787 = vunpack.c.l.b16 %v136
  %v788 = vunpack.c.l.b16 %v137
  %v789 = vunpack.c.l.b16 %v138
  %v790 = vunpack.c.l.b16 %v139
  %v791 = vunpack.c.l.b16 %v140
  %v792 = vunpack.c.l.b16 %v141
  %v793 = vunpack.c.l.b16 %v142
  %v794 = vunpack.c.l.b16 %v143
  %v795 = vunpack.c.l.b16 %v144
  %v796 = vunpack.c.l.b16 %v145
  %v797 = vunpack.c.l.b16 %v146
  %v798 = vunpack.c.l.b16 %v147
  %v799 = vunpack.c.l.b16 %v148
  %v800 = vunpack.c.l.b16 %v149
  %v801 = vunpack.c.l.b16 %v150
  %v802 = vunpack.c.l.b16 %v151
  %v803 = vunpack.c.l.b16 %v152
  %v804 = vunpack.c.l.b16 %v153
  %v805 = vunpack.c.l.b16 %v154
  %v806 = vunpack.c.l.b16 %v155
  %v807 = vunpack.c.l.b16 %v156
  %v808 = vunpack.c.l.b16 %v157
  %v809 = vunpack.c.l.b16 %v158
  %v810 = vunpack.c.l.b16 %v159
  %v811 = vunpack.c.l.b16 %v160
  %v812 = vunpack.c.l.b16 %v161
  %v813 = vunpack.c.l.b16 %v162
  %v814 = vunpack.c.l.b16 %v163
  %v815 = vunpack.c.l.b16 %v164
  %v816 = vunpack.c.l.b16 %v165
  %v817 = vunpack.c.l.b16 %v166
  %v818 = vunpack.c.l.b16 %v167
  %v819 = vunpack.c.l.b16 %v168
  %v820 = vunpack.c.l.b16 %v169
  %v821 = vunpack.c.l.b16 %v170
  %v822 = vunpack.c.l.b16 %v171
  %v823 = vunpack.c.l.b16 %v172
  %v824 = vunpack.c.l.b16 %v173
  %v825 = vunpack.c.l.b16 %v174
  %v826 = vunpack.c.l.b16 %v175
  %v827 = vunpack.c.l.b16 %v176
  %v828 = vunpack.c.l.b16 %v177
  %v829 = vunpack.c.l.b16 %v178
  %v830 = vunpack.c.l.b16 %v179
  %v831 = vunpack.c.l.b16 %v180
  %v832 = vunpack.c.l.b16 %v181
  %v833 = vunpack.c.l.b16 %v182
  %v834 = vunpack.c.l.b16 %v183
  %v835 = vunpack.c.l.b16 %v184
  %v836 = vunpack.c.l.b16 %v185
  %v837 = vunpack.c.l.b16 %v186
  %v838 = vunpack.c.l.b16 %v187
  %v839 = vunpack.c.l.b16 %v188
  %v840 = vunpack.c.l.b16 %v189
  %v841 = vunpack.c.l.b16 %v190
  %v842 = vunpack.c.l.b16 %v191
  %v843 = vunpack.c.l.b16 %v192
  %v844 = vunpack.c.l.b16 %v193
  %v845 = vunpack.c.l.b16 %v194
  %v846 = vunpack.c.l.b16 %v195
  %v847 = vunpack.c.l.b16 %v196
  %v848 = vunpack.c.l.b16 %v197
  %v849 = vunpack.c.l.b16 %v198
  %v850 = vunpack.c.l.b16 %v199
  %v851 = vunpack.c.l.b16 %v200
  %v852 = vunpack.c.l.b16 %v201
  %v853 = vunpack.c.l.b16 %v202
  %v854 = vunpack.c.l.b16 %v203
  %v855 = vunpack.c.l.b16 %v204
  %v856 = vunpack.c.l.b16 %v205
  %v857 = vunpack.c.l.b16 %v206
  %v858 = vpack.c.b16 %v787, %v786
  %v859 = vpack.c.b16 %v789, %v788
  %v860 = vpack.c.b16 %v791, %v790
  %v861 = vpack.c.b16 %v793, %v792
  %v862 = vpack.c.b16 %v795, %v794
  %v863 = vpack.c.b16 %v797, %v796
  %v864 = vpack.c.b16 %v799, %v798
  %v865 = vpack.c.b16 %v801, %v800
  %v866 = vpack.c.b16 %v803, %v802
  %v867 = vpack.c.b16 %v805, %v804
  %v868 = vpack.c.b16 %v807, %v806
  %v869 = vpack.c.b16 %v809, %v808
  %v870 = vpack.c.b16 %v811, %v810
  %v871 = vpack.c.b16 %v813, %v812
  %v872 = vpack.c.b16 %v815, %v814
  %v873 = vpack.c.b16 %v817, %v816
  %v874 = vpack.c.b16 %v819, %v818
  %v875 = vpack.c.b16 %v821, %v820
  %v876 = vpack.c.b16 %v823, %v822
  %v877 = vpack.c.b16 %v825, %v824
  %v878 = vpack.c.b16 %v827, %v826
  %v879 = vpack.c.b16 %v829, %v828
  %v880 = vpack.c.b16 %v831, %v830
  %v881 = vpack.c.b16 %v833, %v832
  %v882 = vpack.c.b16 %v835, %v834
  %v883 = vpack.c.b16 %v837, %v836
  %v884 = vpack.c.b16 %v839, %v838
  %v885 = vpack.c.b16 %v841, %v840
  %v886 = vpack.c.b16 %v843, %v842
  %v887 = vpack.c.b16 %v845, %v844
  %v888 = vpack.c.b16 %v847, %v846
  %v889 = vpack.c.b16 %v849, %v848
  %v890 = vpack.c.b16 %v851, %v850
  %v891 = vpack.c.b16 %v853, %v852
  %v892 = vpack.c.b16 %v855, %v854
  %v893 = vpack.c.b16 %v857, %v856
  %vm930 = vcmask 523264
  %v932 = vsel %vm930, %v538, 0
  %v935 = vsel %vm930, %v543, 0
  %v938 = vsel %vm930, %v548, 0
  %v941 = vsel %vm930, %v553, 0
  %v944 = vsel %vm930, %v558, 0
  %v947 = vsel %vm930, %v563, 0
  %v950 = vsel %vm930, %v568, 0
  %v953 = vsel %vm930, %v573, 0
  %v956 = vsel %vm930, %v578, 0
  %v959 = vsel %vm930, %v583, 0
  %v962 = vsel %vm930, %v588, 0
  %v965 = vsel %vm930, %v593, 0
  %v968 = vsel %vm930, %v598, 0
  %v971 = vsel %vm930, %v603, 0
  %v974 = vsel %vm930, %v608, 0
  %v977 = vsel %vm930, %v613, 0
  %v980 = vsel %vm930, %v618, 0
  %v983 = vsel %vm930, %v623, 0
  %v986 = vsel %vm930, %v628, 0
  %v989 = vsel %vm930, %v633, 0
  %991 = vmatprep.subr.bf16.mxu0 0
  %992 = vmatpush1.bf16.msra.mxu0 %v858
  %993 = vmatprep.subr.bf16.mxu0 0
  %994 = vmatpush1.bf16.msra.mxu0 %v859
  %995 = vmatprep.subr.bf16.mxu0 0
  %996 = vmatpush1.bf16.msra.mxu0 %v860
  %997 = vmatprep.subr.bf16.mxu0 0
  %998 = vmatpush1.bf16.msra.mxu0 %v861
  %999 = vmatprep.subr.bf16.mxu0 0
  %1000 = vmatpush1.bf16.msra.mxu0 %v862
  %1001 = vmatprep.subr.bf16.mxu0 0
  %1002 = vmatpush1.bf16.msra.mxu0 %v863
  %1003 = vmatprep.subr.bf16.mxu0 0
  %1004 = vmatpush1.bf16.msra.mxu0 %v864
  %1005 = vmatprep.subr.bf16.mxu0 0
  %1006 = vmatpush1.bf16.msra.mxu0 %v865
  %1007 = vmatprep.subr.bf16.mxu0 0
  %1008 = vmatpush1.bf16.msra.mxu0 %v866
  %1009 = vmatprep.subr.bf16.mxu0 0
  %1010 = vmatpush1.bf16.msra.mxu0 %v867
  %1011 = vmatprep.subr.bf16.mxu0 0
  %1012 = vmatpush1.bf16.msra.mxu0 %v868
  %1013 = vmatprep.subr.bf16.mxu0 0
  %1014 = vmatpush1.bf16.msra.mxu0 %v869
  %1015 = vmatprep.subr.bf16.mxu0 0
  %1016 = vmatpush1.bf16.msra.mxu0 %v870
  %1017 = vmatprep.subr.bf16.mxu0 0
  %1018 = vmatpush1.bf16.msra.mxu0 %v871
  %1019 = vmatprep.subr.bf16.mxu0 0
  %1020 = vmatpush1.bf16.msra.mxu0 %v872
  %1021 = vmatprep.subr.bf16.mxu0 0
  %1022 = vmatpush1.bf16.msra.mxu0 %v873
  %1023 = vmatprep.mubr.bf16.mxu0 %v535
  %1024 = vmatmul.mubr.bf16.gmra.mrb[0].mxu0 %v534
  %v1025 = vpop.f32.mrb[0].mxu0
  %v1026 = vadd.f32 %v212, %v1025
  %v1027 = vpop.f32.mrb[0].mxu0
  %v1028 = vpop.f32.mrb[0].mxu0
  %v1029 = vadd.f32 %v212, %v1028
  %v1030 = vpop.f32.mrb[0].mxu0
  %1031 = vmatprep.mubr.bf16.mxu0 %v540
  %1032 = vmatmul.mubr.bf16.gmra.mrb[0].mxu0 %v539
  %v1033 = vpop.f32.mrb[0].mxu0
  %v1034 = vadd.f32 %v212, %v1033
  %v1035 = vpop.f32.mrb[0].mxu0
  %v1036 = vpop.f32.mrb[0].mxu0
  %v1037 = vadd.f32 %v212, %v1036
  %v1038 = vpop.f32.mrb[0].mxu0
  %1039 = vmatprep.mubr.bf16.mxu0 %v545
  %1040 = vmatmul.mubr.bf16.gmra.mrb[0].mxu0 %v544
  %v1041 = vpop.f32.mrb[0].mxu0
  %v1042 = vadd.f32 %v212, %v1041
  %v1043 = vpop.f32.mrb[0].mxu0
  %v1044 = vpop.f32.mrb[0].mxu0
  %v1045 = vadd.f32 %v212, %v1044
  %v1046 = vpop.f32.mrb[0].mxu0
  %1047 = vmatprep.mubr.bf16.mxu0 %v550
  %1048 = vmatmul.mubr.bf16.gmra.mrb[0].mxu0 %v549
  %v1049 = vpop.f32.mrb[0].mxu0
  %v1050 = vadd.f32 %v212, %v1049
  %v1051 = vpop.f32.mrb[0].mxu0
  %v1052 = vpop.f32.mrb[0].mxu0
  %v1053 = vadd.f32 %v212, %v1052
  %v1054 = vpop.f32.mrb[0].mxu0
  %1055 = vmatprep.mubr.bf16.mxu0 %v555
  %1056 = vmatmul.mubr.bf16.gmra.mrb[0].mxu0 %v554
  %v1057 = vpop.f32.mrb[0].mxu0
  %v1058 = vadd.f32 %v212, %v1057
  %v1059 = vpop.f32.mrb[0].mxu0
  %v1060 = vpop.f32.mrb[0].mxu0
  %v1061 = vadd.f32 %v212, %v1060
  %v1062 = vpop.f32.mrb[0].mxu0
  %1063 = vmatprep.mubr.bf16.mxu0 %v560
  %1064 = vmatmul.mubr.bf16.gmra.mrb[0].mxu0 %v559
  %v1065 = vpop.f32.mrb[0].mxu0
  %v1066 = vadd.f32 %v212, %v1065
  %v1067 = vpop.f32.mrb[0].mxu0
  %v1068 = vpop.f32.mrb[0].mxu0
  %v1069 = vadd.f32 %v212, %v1068
  %v1070 = vpop.f32.mrb[0].mxu0
  %1071 = vmatprep.mubr.bf16.mxu0 %v565
  %1072 = vmatmul.mubr.bf16.gmra.mrb[0].mxu0 %v564
  %v1073 = vpop.f32.mrb[0].mxu0
  %v1074 = vadd.f32 %v212, %v1073
  %v1075 = vpop.f32.mrb[0].mxu0
  %v1076 = vpop.f32.mrb[0].mxu0
  %v1077 = vadd.f32 %v212, %v1076
  %v1078 = vpop.f32.mrb[0].mxu0
  %1079 = vmatprep.mubr.bf16.mxu0 %v570
  %1080 = vmatmul.mubr.bf16.gmra.mrb[0].mxu0 %v569
  %v1081 = vpop.f32.mrb[0].mxu0
  %v1082 = vadd.f32 %v212, %v1081
  %v1083 = vpop.f32.mrb[0].mxu0
  %v1084 = vpop.f32.mrb[0].mxu0
  %v1085 = vadd.f32 %v212, %v1084
  %v1086 = vpop.f32.mrb[0].mxu0
  %1087 = vmatprep.mubr.bf16.mxu0 %v575
  %1088 = vmatmul.mubr.bf16.gmra.mrb[0].mxu0 %v574
  %v1089 = vpop.f32.mrb[0].mxu0
  %v1090 = vadd.f32 %v212, %v1089
  %v1091 = vpop.f32.mrb[0].mxu0
  %v1092 = vpop.f32.mrb[0].mxu0
  %v1093 = vadd.f32 %v212, %v1092
  %v1094 = vpop.f32.mrb[0].mxu0
  %1095 = vmatprep.mubr.bf16.mxu0 %v580
  %1096 = vmatmul.mubr.bf16.gmra.mrb[0].mxu0 %v579
  %v1097 = vpop.f32.mrb[0].mxu0
  %v1098 = vadd.f32 %v212, %v1097
  %v1099 = vpop.f32.mrb[0].mxu0
  %v1100 = vpop.f32.mrb[0].mxu0
  %v1101 = vadd.f32 %v212, %v1100
  %v1102 = vpop.f32.mrb[0].mxu0
  %1103 = vmatprep.mubr.bf16.mxu0 %v585
  %1104 = vmatmul.mubr.bf16.gmra.mrb[0].mxu0 %v584
  %v1105 = vpop.f32.mrb[0].mxu0
  %v1106 = vadd.f32 %v212, %v1105
  %v1107 = vpop.f32.mrb[0].mxu0
  %v1108 = vpop.f32.mrb[0].mxu0
  %v1109 = vadd.f32 %v212, %v1108
  %v1110 = vpop.f32.mrb[0].mxu0
  %1111 = vmatprep.mubr.bf16.mxu0 %v590
  %1112 = vmatmul.mubr.bf16.gmra.mrb[0].mxu0 %v589
  %v1113 = vpop.f32.mrb[0].mxu0
  %v1114 = vadd.f32 %v212, %v1113
  %v1115 = vpop.f32.mrb[0].mxu0
  %v1116 = vpop.f32.mrb[0].mxu0
  %v1117 = vadd.f32 %v212, %v1116
  %v1118 = vpop.f32.mrb[0].mxu0
  %1119 = vmatprep.mubr.bf16.mxu0 %v595
  %1120 = vmatmul.mubr.bf16.gmra.mrb[0].mxu0 %v594
  %v1121 = vpop.f32.mrb[0].mxu0
  %v1122 = vadd.f32 %v212, %v1121
  %v1123 = vpop.f32.mrb[0].mxu0
  %v1124 = vpop.f32.mrb[0].mxu0
  %v1125 = vadd.f32 %v212, %v1124
  %v1126 = vpop.f32.mrb[0].mxu0
  %1127 = vmatprep.mubr.bf16.mxu0 %v600
  %1128 = vmatmul.mubr.bf16.gmra.mrb[0].mxu0 %v599
  %v1129 = vpop.f32.mrb[0].mxu0
  %v1130 = vadd.f32 %v212, %v1129
  %v1131 = vpop.f32.mrb[0].mxu0
  %v1132 = vpop.f32.mrb[0].mxu0
  %v1133 = vadd.f32 %v212, %v1132
  %v1134 = vpop.f32.mrb[0].mxu0
  %1135 = vmatprep.mubr.bf16.mxu0 %v605
  %1136 = vmatmul.mubr.bf16.gmra.mrb[0].mxu0 %v604
  %v1137 = vpop.f32.mrb[0].mxu0
  %v1138 = vadd.f32 %v212, %v1137
  %v1139 = vpop.f32.mrb[0].mxu0
  %v1140 = vpop.f32.mrb[0].mxu0
  %v1141 = vadd.f32 %v212, %v1140
  %v1142 = vpop.f32.mrb[0].mxu0
  %1143 = vmatprep.mubr.bf16.mxu0 %v610
  %1144 = vmatmul.mubr.bf16.gmra.mrb[0].mxu0 %v609
  %v1145 = vpop.f32.mrb[0].mxu0
  %v1146 = vadd.f32 %v212, %v1145
  %v1147 = vpop.f32.mrb[0].mxu0
  %v1148 = vpop.f32.mrb[0].mxu0
  %v1149 = vadd.f32 %v212, %v1148
  %v1150 = vpop.f32.mrb[0].mxu0
  %1151 = vmatprep.mubr.bf16.mxu0 %v615
  %1152 = vmatmul.mubr.bf16.gmra.mrb[0].mxu0 %v614
  %v1153 = vpop.f32.mrb[0].mxu0
  %v1154 = vadd.f32 %v212, %v1153
  %v1155 = vpop.f32.mrb[0].mxu0
  %v1156 = vpop.f32.mrb[0].mxu0
  %v1157 = vadd.f32 %v212, %v1156
  %v1158 = vpop.f32.mrb[0].mxu0
  %1159 = vmatprep.mubr.bf16.mxu0 %v620
  %1160 = vmatmul.mubr.bf16.gmra.mrb[0].mxu0 %v619
  %v1161 = vpop.f32.mrb[0].mxu0
  %v1162 = vadd.f32 %v212, %v1161
  %v1163 = vpop.f32.mrb[0].mxu0
  %v1164 = vpop.f32.mrb[0].mxu0
  %v1165 = vadd.f32 %v212, %v1164
  %v1166 = vpop.f32.mrb[0].mxu0
  %1167 = vmatprep.mubr.bf16.mxu0 %v625
  %1168 = vmatmul.mubr.bf16.gmra.mrb[0].mxu0 %v624
  %v1169 = vpop.f32.mrb[0].mxu0
  %v1170 = vadd.f32 %v212, %v1169
  %v1171 = vpop.f32.mrb[0].mxu0
  %v1172 = vpop.f32.mrb[0].mxu0
  %v1173 = vadd.f32 %v212, %v1172
  %v1174 = vpop.f32.mrb[0].mxu0
  %1175 = vmatprep.mubr.bf16.mxu0 %v630
  %1176 = vmatmul.mubr.bf16.gmra.mrb[0].mxu0 %v629
  %v1177 = vpop.f32.mrb[0].mxu0
  %v1178 = vadd.f32 %v212, %v1177
  %v1179 = vpop.f32.mrb[0].mxu0
  %v1180 = vpop.f32.mrb[0].mxu0
  %v1181 = vadd.f32 %v212, %v1180
  %v1182 = vpop.f32.mrb[0].mxu0
  %1183 = vdwg.mxu0
  %1184 = vmatprep.subr.bf16.mxu0 0
  %1185 = vmatpush1.bf16.msra.mxu0 %v874
  %1186 = vmatprep.subr.bf16.mxu0 0
  %1187 = vmatpush1.bf16.msra.mxu0 %v875
  %1188 = vmatprep.subr.bf16.mxu0 0
  %1189 = vmatpush1.bf16.msra.mxu0 %v876
  %1190 = vmatprep.subr.bf16.mxu0 0
  %1191 = vmatpush1.bf16.msra.mxu0 %v877
  %1192 = vmatprep.subr.bf16.mxu0 0
  %1193 = vmatpush1.bf16.msra.mxu0 %v878
  %1194 = vmatprep.subr.bf16.mxu0 0
  %1195 = vmatpush1.bf16.msra.mxu0 %v879
  %1196 = vmatprep.subr.bf16.mxu0 0
  %1197 = vmatpush1.bf16.msra.mxu0 %v880
  %1198 = vmatprep.subr.bf16.mxu0 0
  %1199 = vmatpush1.bf16.msra.mxu0 %v881
  %1200 = vmatprep.subr.bf16.mxu0 0
  %1201 = vmatpush1.bf16.msra.mxu0 %v882
  %1202 = vmatprep.subr.bf16.mxu0 0
  %1203 = vmatpush1.bf16.msra.mxu0 %v883
  %1204 = vmatprep.subr.bf16.mxu0 0
  %1205 = vmatpush1.bf16.msra.mxu0 %v884
  %1206 = vmatprep.subr.bf16.mxu0 0
  %1207 = vmatpush1.bf16.msra.mxu0 %v885
  %1208 = vmatprep.subr.bf16.mxu0 0
  %1209 = vmatpush1.bf16.msra.mxu0 %v886
  %1210 = vmatprep.subr.bf16.mxu0 0
  %1211 = vmatpush1.bf16.msra.mxu0 %v887
  %1212 = vmatprep.subr.bf16.mxu0 0
  %1213 = vmatpush1.bf16.msra.mxu0 %v888
  %1214 = vmatprep.subr.bf16.mxu0 0
  %1215 = vmatpush1.bf16.msra.mxu0 %v889
  %1216 = vmatprep.mubr.bf16.mxu0 %v537
  %1217 = vmatmul.mubr.bf16.gmra.mrb[0].mxu0 %v536
  %v1218 = vpop.f32.mrb[0].mxu0
  %v1219 = vadd.f32 %v1026, %v1218
  %v1220 = vpop.f32.mrb[0].mxu0
  %v1221 = vpop.f32.mrb[0].mxu0
  %v1222 = vadd.f32 %v1029, %v1221
  %v1223 = vpop.f32.mrb[0].mxu0
  %1224 = vmatprep.mubr.bf16.mxu0 %v542
  %1225 = vmatmul.mubr.bf16.gmra.mrb[0].mxu0 %v541
  %v1226 = vpop.f32.mrb[0].mxu0
  %v1227 = vadd.f32 %v1034, %v1226
  %v1228 = vpop.f32.mrb[0].mxu0
  %v1229 = vpop.f32.mrb[0].mxu0
  %v1230 = vadd.f32 %v1037, %v1229
  %v1231 = vpop.f32.mrb[0].mxu0
  %1232 = vmatprep.mubr.bf16.mxu0 %v547
  %1233 = vmatmul.mubr.bf16.gmra.mrb[0].mxu0 %v546
  %v1234 = vpop.f32.mrb[0].mxu0
  %v1235 = vadd.f32 %v1042, %v1234
  %v1236 = vpop.f32.mrb[0].mxu0
  %v1237 = vpop.f32.mrb[0].mxu0
  %v1238 = vadd.f32 %v1045, %v1237
  %v1239 = vpop.f32.mrb[0].mxu0
  %1240 = vmatprep.mubr.bf16.mxu0 %v552
  %1241 = vmatmul.mubr.bf16.gmra.mrb[0].mxu0 %v551
  %v1242 = vpop.f32.mrb[0].mxu0
  %v1243 = vadd.f32 %v1050, %v1242
  %v1244 = vpop.f32.mrb[0].mxu0
  %v1245 = vpop.f32.mrb[0].mxu0
  %v1246 = vadd.f32 %v1053, %v1245
  %v1247 = vpop.f32.mrb[0].mxu0
  %1248 = vmatprep.mubr.bf16.mxu0 %v557
  %1249 = vmatmul.mubr.bf16.gmra.mrb[0].mxu0 %v556
  %v1250 = vpop.f32.mrb[0].mxu0
  %v1251 = vadd.f32 %v1058, %v1250
  %v1252 = vpop.f32.mrb[0].mxu0
  %v1253 = vpop.f32.mrb[0].mxu0
  %v1254 = vadd.f32 %v1061, %v1253
  %v1255 = vpop.f32.mrb[0].mxu0
  %1256 = vmatprep.mubr.bf16.mxu0 %v562
  %1257 = vmatmul.mubr.bf16.gmra.mrb[0].mxu0 %v561
  %v1258 = vpop.f32.mrb[0].mxu0
  %v1259 = vadd.f32 %v1066, %v1258
  %v1260 = vpop.f32.mrb[0].mxu0
  %v1261 = vpop.f32.mrb[0].mxu0
  %v1262 = vadd.f32 %v1069, %v1261
  %v1263 = vpop.f32.mrb[0].mxu0
  %1264 = vmatprep.mubr.bf16.mxu0 %v567
  %1265 = vmatmul.mubr.bf16.gmra.mrb[0].mxu0 %v566
  %v1266 = vpop.f32.mrb[0].mxu0
  %v1267 = vadd.f32 %v1074, %v1266
  %v1268 = vpop.f32.mrb[0].mxu0
  %v1269 = vpop.f32.mrb[0].mxu0
  %v1270 = vadd.f32 %v1077, %v1269
  %v1271 = vpop.f32.mrb[0].mxu0
  %1272 = vmatprep.mubr.bf16.mxu0 %v572
  %1273 = vmatmul.mubr.bf16.gmra.mrb[0].mxu0 %v571
  %v1274 = vpop.f32.mrb[0].mxu0
  %v1275 = vadd.f32 %v1082, %v1274
  %v1276 = vpop.f32.mrb[0].mxu0
  %v1277 = vpop.f32.mrb[0].mxu0
  %v1278 = vadd.f32 %v1085, %v1277
  %v1279 = vpop.f32.mrb[0].mxu0
  %1280 = vmatprep.mubr.bf16.mxu0 %v577
  %1281 = vmatmul.mubr.bf16.gmra.mrb[0].mxu0 %v576
  %v1282 = vpop.f32.mrb[0].mxu0
  %v1283 = vadd.f32 %v1090, %v1282
  %v1284 = vpop.f32.mrb[0].mxu0
  %v1285 = vpop.f32.mrb[0].mxu0
  %v1286 = vadd.f32 %v1093, %v1285
  %v1287 = vpop.f32.mrb[0].mxu0
  %1288 = vmatprep.mubr.bf16.mxu0 %v582
  %1289 = vmatmul.mubr.bf16.gmra.mrb[0].mxu0 %v581
  %v1290 = vpop.f32.mrb[0].mxu0
  %v1291 = vadd.f32 %v1098, %v1290
  %v1292 = vpop.f32.mrb[0].mxu0
  %v1293 = vpop.f32.mrb[0].mxu0
  %v1294 = vadd.f32 %v1101, %v1293
  %v1295 = vpop.f32.mrb[0].mxu0
  %1296 = vmatprep.mubr.bf16.mxu0 %v587
  %1297 = vmatmul.mubr.bf16.gmra.mrb[0].mxu0 %v586
  %v1298 = vpop.f32.mrb[0].mxu0
  %v1299 = vadd.f32 %v1106, %v1298
  %v1300 = vpop.f32.mrb[0].mxu0
  %v1301 = vpop.f32.mrb[0].mxu0
  %v1302 = vadd.f32 %v1109, %v1301
  %v1303 = vpop.f32.mrb[0].mxu0
  %1304 = vmatprep.mubr.bf16.mxu0 %v592
  %1305 = vmatmul.mubr.bf16.gmra.mrb[0].mxu0 %v591
  %v1306 = vpop.f32.mrb[0].mxu0
  %v1307 = vadd.f32 %v1114, %v1306
  %v1308 = vpop.f32.mrb[0].mxu0
  %v1309 = vpop.f32.mrb[0].mxu0
  %v1310 = vadd.f32 %v1117, %v1309
  %v1311 = vpop.f32.mrb[0].mxu0
  %1312 = vmatprep.mubr.bf16.mxu0 %v597
  %1313 = vmatmul.mubr.bf16.gmra.mrb[0].mxu0 %v596
  %v1314 = vpop.f32.mrb[0].mxu0
  %v1315 = vadd.f32 %v1122, %v1314
  %v1316 = vpop.f32.mrb[0].mxu0
  %v1317 = vpop.f32.mrb[0].mxu0
  %v1318 = vadd.f32 %v1125, %v1317
  %v1319 = vpop.f32.mrb[0].mxu0
  %1320 = vmatprep.mubr.bf16.mxu0 %v602
  %1321 = vmatmul.mubr.bf16.gmra.mrb[0].mxu0 %v601
  %v1322 = vpop.f32.mrb[0].mxu0
  %v1323 = vadd.f32 %v1130, %v1322
  %v1324 = vpop.f32.mrb[0].mxu0
  %v1325 = vpop.f32.mrb[0].mxu0
  %v1326 = vadd.f32 %v1133, %v1325
  %v1327 = vpop.f32.mrb[0].mxu0
  %1328 = vmatprep.mubr.bf16.mxu0 %v607
  %1329 = vmatmul.mubr.bf16.gmra.mrb[0].mxu0 %v606
  %v1330 = vpop.f32.mrb[0].mxu0
  %v1331 = vadd.f32 %v1138, %v1330
  %v1332 = vpop.f32.mrb[0].mxu0
  %v1333 = vpop.f32.mrb[0].mxu0
  %v1334 = vadd.f32 %v1141, %v1333
  %v1335 = vpop.f32.mrb[0].mxu0
  %1336 = vmatprep.mubr.bf16.mxu0 %v612
  %1337 = vmatmul.mubr.bf16.gmra.mrb[0].mxu0 %v611
  %v1338 = vpop.f32.mrb[0].mxu0
  %v1339 = vadd.f32 %v1146, %v1338
  %v1340 = vpop.f32.mrb[0].mxu0
  %v1341 = vpop.f32.mrb[0].mxu0
  %v1342 = vadd.f32 %v1149, %v1341
  %v1343 = vpop.f32.mrb[0].mxu0
  %1344 = vmatprep.mubr.bf16.mxu0 %v617
  %1345 = vmatmul.mubr.bf16.gmra.mrb[0].mxu0 %v616
  %v1346 = vpop.f32.mrb[0].mxu0
  %v1347 = vadd.f32 %v1154, %v1346
  %v1348 = vpop.f32.mrb[0].mxu0
  %v1349 = vpop.f32.mrb[0].mxu0
  %v1350 = vadd.f32 %v1157, %v1349
  %v1351 = vpop.f32.mrb[0].mxu0
  %1352 = vmatprep.mubr.bf16.mxu0 %v622
  %1353 = vmatmul.mubr.bf16.gmra.mrb[0].mxu0 %v621
  %v1354 = vpop.f32.mrb[0].mxu0
  %v1355 = vadd.f32 %v1162, %v1354
  %v1356 = vpop.f32.mrb[0].mxu0
  %v1357 = vpop.f32.mrb[0].mxu0
  %v1358 = vadd.f32 %v1165, %v1357
  %v1359 = vpop.f32.mrb[0].mxu0
  %1360 = vmatprep.mubr.bf16.mxu0 %v627
  %1361 = vmatmul.mubr.bf16.gmra.mrb[0].mxu0 %v626
  %v1362 = vpop.f32.mrb[0].mxu0
  %v1363 = vadd.f32 %v1170, %v1362
  %v1364 = vpop.f32.mrb[0].mxu0
  %v1365 = vpop.f32.mrb[0].mxu0
  %v1366 = vadd.f32 %v1173, %v1365
  %v1367 = vpop.f32.mrb[0].mxu0
  %1368 = vmatprep.mubr.bf16.mxu0 %v632
  %1369 = vmatmul.mubr.bf16.gmra.mrb[0].mxu0 %v631
  %v1370 = vpop.f32.mrb[0].mxu0
  %v1371 = vadd.f32 %v1178, %v1370
  %v1372 = vpop.f32.mrb[0].mxu0
  %v1373 = vpop.f32.mrb[0].mxu0
  %v1374 = vadd.f32 %v1181, %v1373
  %v1375 = vpop.f32.mrb[0].mxu0
  %1376 = vdwg.mxu0
  %1377 = vmatprep.subr.bf16.mxu0 0
  %1378 = vmatpush1.bf16.msra.mxu0 %v890
  %1379 = vmatprep.subr.bf16.mxu0 0
  %1380 = vmatpush1.bf16.msra.mxu0 %v891
  %1381 = vmatprep.subr.bf16.mxu0 0
  %1382 = vmatpush1.bf16.msra.mxu0 %v892
  %1383 = vmatprep.subr.bf16.mxu0 0
  %1384 = vmatpush1.bf16.msra.mxu0 %v893
  %1385 = vmatprep.subr.bf16.mxu0 0
  %1386 = vmatpush1.bf16.msra.mxu0 0
  %1387 = vmatprep.subr.bf16.mxu0 0
  %1388 = vmatpush1.bf16.msra.mxu0 0
  %1389 = vmatprep.subr.bf16.mxu0 0
  %1390 = vmatpush1.bf16.msra.mxu0 0
  %1391 = vmatprep.subr.bf16.mxu0 0
  %1392 = vmatpush1.bf16.msra.mxu0 0
  %1393 = vmatprep.subr.bf16.mxu0 0
  %1394 = vmatpush1.bf16.msra.mxu0 0
  %1395 = vmatprep.subr.bf16.mxu0 0
  %1396 = vmatpush1.bf16.msra.mxu0 0
  %1397 = vmatprep.subr.bf16.mxu0 0
  %1398 = vmatpush1.bf16.msra.mxu0 0
  %1399 = vmatprep.subr.bf16.mxu0 0
  %1400 = vmatpush1.bf16.msra.mxu0 0
  %1401 = vmatprep.subr.bf16.mxu0 0
  %1402 = vmatpush1.bf16.msra.mxu0 0
  %1403 = vmatprep.subr.bf16.mxu0 0
  %1404 = vmatpush1.bf16.msra.mxu0 0
  %1405 = vmatprep.subr.bf16.mxu0 0
  %1406 = vmatpush1.bf16.msra.mxu0 0
  %1407 = vmatprep.subr.bf16.mxu0 0
  %1408 = vmatpush1.bf16.msra.mxu0 0
  %1409 = vmatprep.mubr.bf16.mxu0 0
  %1410 = vmatmul.mubr.bf16.gmra.mrb[0].mxu0 %v932
  %v1411 = vpop.f32.mrb[0].mxu0
  %v1412 = vadd.f32 %v1219, %v1411
  %v1413 = vpop.f32.mrb[0].mxu0
  %v1414 = vpop.f32.mrb[0].mxu0
  %v1415 = vadd.f32 %v1222, %v1414
  %v1416 = vpop.f32.mrb[0].mxu0
  %1417 = vmatprep.mubr.bf16.mxu0 0
  %1418 = vmatmul.mubr.bf16.gmra.mrb[0].mxu0 %v935
  %v1419 = vpop.f32.mrb[0].mxu0
  %v1420 = vadd.f32 %v1227, %v1419
  %v1421 = vpop.f32.mrb[0].mxu0
  %v1422 = vpop.f32.mrb[0].mxu0
  %v1423 = vadd.f32 %v1230, %v1422
  %v1424 = vpop.f32.mrb[0].mxu0
  %1425 = vmatprep.mubr.bf16.mxu0 0
  %1426 = vmatmul.mubr.bf16.gmra.mrb[0].mxu0 %v938
  %v1427 = vpop.f32.mrb[0].mxu0
  %v1428 = vadd.f32 %v1235, %v1427
  %v1429 = vpop.f32.mrb[0].mxu0
  %v1430 = vpop.f32.mrb[0].mxu0
  %v1431 = vadd.f32 %v1238, %v1430
  %v1432 = vpop.f32.mrb[0].mxu0
  %1433 = vmatprep.mubr.bf16.mxu0 0
  %1434 = vmatmul.mubr.bf16.gmra.mrb[0].mxu0 %v941
  %v1435 = vpop.f32.mrb[0].mxu0
  %v1436 = vadd.f32 %v1243, %v1435
  %v1437 = vpop.f32.mrb[0].mxu0
  %v1438 = vpop.f32.mrb[0].mxu0
  %v1439 = vadd.f32 %v1246, %v1438
  %v1440 = vpop.f32.mrb[0].mxu0
  %1441 = vmatprep.mubr.bf16.mxu0 0
  %1442 = vmatmul.mubr.bf16.gmra.mrb[0].mxu0 %v944
  %v1443 = vpop.f32.mrb[0].mxu0
  %v1444 = vadd.f32 %v1251, %v1443
  %v1445 = vpop.f32.mrb[0].mxu0
  %v1446 = vpop.f32.mrb[0].mxu0
  %v1447 = vadd.f32 %v1254, %v1446
  %v1448 = vpop.f32.mrb[0].mxu0
  %1449 = vmatprep.mubr.bf16.mxu0 0
  %1450 = vmatmul.mubr.bf16.gmra.mrb[0].mxu0 %v947
  %v1451 = vpop.f32.mrb[0].mxu0
  %v1452 = vadd.f32 %v1259, %v1451
  %v1453 = vpop.f32.mrb[0].mxu0
  %v1454 = vpop.f32.mrb[0].mxu0
  %v1455 = vadd.f32 %v1262, %v1454
  %v1456 = vpop.f32.mrb[0].mxu0
  %1457 = vmatprep.mubr.bf16.mxu0 0
  %1458 = vmatmul.mubr.bf16.gmra.mrb[0].mxu0 %v950
  %v1459 = vpop.f32.mrb[0].mxu0
  %v1460 = vadd.f32 %v1267, %v1459
  %v1461 = vpop.f32.mrb[0].mxu0
  %v1462 = vpop.f32.mrb[0].mxu0
  %v1463 = vadd.f32 %v1270, %v1462
  %v1464 = vpop.f32.mrb[0].mxu0
  %1465 = vmatprep.mubr.bf16.mxu0 0
  %1466 = vmatmul.mubr.bf16.gmra.mrb[0].mxu0 %v953
  %v1467 = vpop.f32.mrb[0].mxu0
  %v1468 = vadd.f32 %v1275, %v1467
  %v1469 = vpop.f32.mrb[0].mxu0
  %v1470 = vpop.f32.mrb[0].mxu0
  %v1471 = vadd.f32 %v1278, %v1470
  %v1472 = vpop.f32.mrb[0].mxu0
  %1473 = vmatprep.mubr.bf16.mxu0 0
  %1474 = vmatmul.mubr.bf16.gmra.mrb[0].mxu0 %v956
  %v1475 = vpop.f32.mrb[0].mxu0
  %v1476 = vadd.f32 %v1283, %v1475
  %v1477 = vpop.f32.mrb[0].mxu0
  %v1478 = vpop.f32.mrb[0].mxu0
  %v1479 = vadd.f32 %v1286, %v1478
  %v1480 = vpop.f32.mrb[0].mxu0
  %1481 = vmatprep.mubr.bf16.mxu0 0
  %1482 = vmatmul.mubr.bf16.gmra.mrb[0].mxu0 %v959
  %v1483 = vpop.f32.mrb[0].mxu0
  %v1484 = vadd.f32 %v1291, %v1483
  %v1485 = vpop.f32.mrb[0].mxu0
  %v1486 = vpop.f32.mrb[0].mxu0
  %v1487 = vadd.f32 %v1294, %v1486
  %v1488 = vpop.f32.mrb[0].mxu0
  %1489 = vmatprep.mubr.bf16.mxu0 0
  %1490 = vmatmul.mubr.bf16.gmra.mrb[0].mxu0 %v962
  %v1491 = vpop.f32.mrb[0].mxu0
  %v1492 = vadd.f32 %v1299, %v1491
  %v1493 = vpop.f32.mrb[0].mxu0
  %v1494 = vpop.f32.mrb[0].mxu0
  %v1495 = vadd.f32 %v1302, %v1494
  %v1496 = vpop.f32.mrb[0].mxu0
  %1497 = vmatprep.mubr.bf16.mxu0 0
  %1498 = vmatmul.mubr.bf16.gmra.mrb[0].mxu0 %v965
  %v1499 = vpop.f32.mrb[0].mxu0
  %v1500 = vadd.f32 %v1307, %v1499
  %v1501 = vpop.f32.mrb[0].mxu0
  %v1502 = vpop.f32.mrb[0].mxu0
  %v1503 = vadd.f32 %v1310, %v1502
  %v1504 = vpop.f32.mrb[0].mxu0
  %1505 = vmatprep.mubr.bf16.mxu0 0
  %1506 = vmatmul.mubr.bf16.gmra.mrb[0].mxu0 %v968
  %v1507 = vpop.f32.mrb[0].mxu0
  %v1508 = vadd.f32 %v1315, %v1507
  %v1509 = vpop.f32.mrb[0].mxu0
  %v1510 = vpop.f32.mrb[0].mxu0
  %v1511 = vadd.f32 %v1318, %v1510
  %v1512 = vpop.f32.mrb[0].mxu0
  %1513 = vmatprep.mubr.bf16.mxu0 0
  %1514 = vmatmul.mubr.bf16.gmra.mrb[0].mxu0 %v971
  %v1515 = vpop.f32.mrb[0].mxu0
  %v1516 = vadd.f32 %v1323, %v1515
  %v1517 = vpop.f32.mrb[0].mxu0
  %v1518 = vpop.f32.mrb[0].mxu0
  %v1519 = vadd.f32 %v1326, %v1518
  %v1520 = vpop.f32.mrb[0].mxu0
  %1521 = vmatprep.mubr.bf16.mxu0 0
  %1522 = vmatmul.mubr.bf16.gmra.mrb[0].mxu0 %v974
  %v1523 = vpop.f32.mrb[0].mxu0
  %v1524 = vadd.f32 %v1331, %v1523
  %v1525 = vpop.f32.mrb[0].mxu0
  %v1526 = vpop.f32.mrb[0].mxu0
  %v1527 = vadd.f32 %v1334, %v1526
  %v1528 = vpop.f32.mrb[0].mxu0
  %1529 = vmatprep.mubr.bf16.mxu0 0
  %1530 = vmatmul.mubr.bf16.gmra.mrb[0].mxu0 %v977
  %v1531 = vpop.f32.mrb[0].mxu0
  %v1532 = vadd.f32 %v1339, %v1531
  %v1533 = vpop.f32.mrb[0].mxu0
  %v1534 = vpop.f32.mrb[0].mxu0
  %v1535 = vadd.f32 %v1342, %v1534
  %v1536 = vpop.f32.mrb[0].mxu0
  %1537 = vmatprep.mubr.bf16.mxu0 0
  %1538 = vmatmul.mubr.bf16.gmra.mrb[0].mxu0 %v980
  %v1539 = vpop.f32.mrb[0].mxu0
  %v1540 = vadd.f32 %v1347, %v1539
  %v1541 = vpop.f32.mrb[0].mxu0
  %v1542 = vpop.f32.mrb[0].mxu0
  %v1543 = vadd.f32 %v1350, %v1542
  %v1544 = vpop.f32.mrb[0].mxu0
  %1545 = vmatprep.mubr.bf16.mxu0 0
  %1546 = vmatmul.mubr.bf16.gmra.mrb[0].mxu0 %v983
  %v1547 = vpop.f32.mrb[0].mxu0
  %v1548 = vadd.f32 %v1355, %v1547
  %v1549 = vpop.f32.mrb[0].mxu0
  %v1550 = vpop.f32.mrb[0].mxu0
  %v1551 = vadd.f32 %v1358, %v1550
  %v1552 = vpop.f32.mrb[0].mxu0
  %1553 = vmatprep.mubr.bf16.mxu0 0
  %1554 = vmatmul.mubr.bf16.gmra.mrb[0].mxu0 %v986
  %v1555 = vpop.f32.mrb[0].mxu0
  %v1556 = vadd.f32 %v1363, %v1555
  %v1557 = vpop.f32.mrb[0].mxu0
  %v1558 = vpop.f32.mrb[0].mxu0
  %v1559 = vadd.f32 %v1366, %v1558
  %v1560 = vpop.f32.mrb[0].mxu0
  %1561 = vmatprep.mubr.bf16.mxu0 0
  %1562 = vmatmul.mubr.bf16.gmra.mrb[0].mxu0 %v989
  %v1563 = vpop.f32.mrb[0].mxu0
  %v1564 = vadd.f32 %v1371, %v1563
  %v1565 = vpop.f32.mrb[0].mxu0
  %v1566 = vpop.f32.mrb[0].mxu0
  %v1567 = vadd.f32 %v1374, %v1566
  %v1568 = vpop.f32.mrb[0].mxu0
  %1569 = vdwg.mxu0
  %v1570 = vmax.f32 %v1412, 0.0
  %v1571 = vmax.f32 %v1415, 0.0
  %v1572 = vmax.f32 %v1420, 0.0
  %v1573 = vmax.f32 %v1423, 0.0
  %v1574 = vmax.f32 %v1428, 0.0
  %v1575 = vmax.f32 %v1431, 0.0
  %v1576 = vmax.f32 %v1436, 0.0
  %v1577 = vmax.f32 %v1439, 0.0
  %v1578 = vmax.f32 %v1444, 0.0
  %v1579 = vmax.f32 %v1447, 0.0
  %v1580 = vmax.f32 %v1452, 0.0
  %v1581 = vmax.f32 %v1455, 0.0
  %v1582 = vmax.f32 %v1460, 0.0
  %v1583 = vmax.f32 %v1463, 0.0
  %v1584 = vmax.f32 %v1468, 0.0
  %v1585 = vmax.f32 %v1471, 0.0
  %v1586 = vmax.f32 %v1476, 0.0
  %v1587 = vmax.f32 %v1479, 0.0
  %v1588 = vmax.f32 %v1484, 0.0
  %v1589 = vmax.f32 %v1487, 0.0
  %v1590 = vmax.f32 %v1492, 0.0
  %v1591 = vmax.f32 %v1495, 0.0
  %v1592 = vmax.f32 %v1500, 0.0
  %v1593 = vmax.f32 %v1503, 0.0
  %v1594 = vmax.f32 %v1508, 0.0
  %v1595 = vmax.f32 %v1511, 0.0
  %v1596 = vmax.f32 %v1516, 0.0
  %v1597 = vmax.f32 %v1519, 0.0
  %v1598 = vmax.f32 %v1524, 0.0
  %v1599 = vmax.f32 %v1527, 0.0
  %v1600 = vmax.f32 %v1532, 0.0
  %v1601 = vmax.f32 %v1535, 0.0
  %v1602 = vmax.f32 %v1540, 0.0
  %v1603 = vmax.f32 %v1543, 0.0
  %v1604 = vmax.f32 %v1548, 0.0
  %v1605 = vmax.f32 %v1551, 0.0
  %v1606 = vmax.f32 %v1556, 0.0
  %v1607 = vmax.f32 %v1559, 0.0
  %v1608 = vmax.f32 %v1564, 0.0
  %v1609 = vmax.f32 %v1567, 0.0
  %v1610 = vmax.f32 %v1570, %v1580
  %v1611 = vmax.f32 %v1571, %v1581
  %v1612 = vmax.f32 %v1572, %v1582
  %v1613 = vmax.f32 %v1573, %v1583
  %v1614 = vmax.f32 %v1574, %v1584
  %v1615 = vmax.f32 %v1575, %v1585
  %v1616 = vmax.f32 %v1576, %v1586
  %v1617 = vmax.f32 %v1577, %v1587
  %v1618 = vmax.f32 %v1578, %v1588
  %v1619 = vmax.f32 %v1579, %v1589
  %v1620 = vmax.f32 %v1590, %v1600
  %v1621 = vmax.f32 %v1591, %v1601
  %v1622 = vmax.f32 %v1592, %v1602
  %v1623 = vmax.f32 %v1593, %v1603
  %v1624 = vmax.f32 %v1594, %v1604
  %v1625 = vmax.f32 %v1595, %v1605
  %v1626 = vmax.f32 %v1596, %v1606
  %v1627 = vmax.f32 %v1597, %v1607
  %v1628 = vmax.f32 %v1598, %v1608
  %v1629 = vmax.f32 %v1599, %v1609
  %v1630 = vmax.f32 %v1610, %v1620
  %v1631 = vmax.f32 %v1611, %v1621
  %v1632 = vmax.f32 %v1612, %v1622
  %v1633 = vmax.f32 %v1613, %v1623
  %v1634 = vmax.f32 %v1614, %v1624
  %v1635 = vmax.f32 %v1615, %v1625
  %v1636 = vmax.f32 %v1616, %v1626
  %v1637 = vmax.f32 %v1617, %v1627
  %v1638 = vmax.f32 %v1618, %v1628
  %v1639 = vmax.f32 %v1619, %v1629
  %v1640 = vpack.c.bf16 %v1631, %v1630
  %v1641 = vpack.c.bf16 %v1633, %v1632
  %v1642 = vpack.c.bf16 %v1635, %v1634
  %v1643 = vpack.c.bf16 %v1637, %v1636
  %v1644 = vpack.c.bf16 %v1639, %v1638
  %v1650 = vunpack.c.l.b16 %v1640
  %v1651 = vunpack.c.h.b16 %v1640
  %v1652 = vunpack.c.l.b16 %v1641
  %v1653 = vunpack.c.h.b16 %v1641
  %v1654 = vunpack.c.l.b16 %v1642
  %v1655 = vunpack.c.h.b16 %v1642
  %v1656 = vunpack.c.l.b16 %v1643
  %v1657 = vunpack.c.h.b16 %v1643
  %v1658 = vunpack.c.l.b16 %v1644
  %v1659 = vunpack.c.h.b16 %v1644
  %v1660 = vpack.c.b16 %v1650, %v1650
  %v1661 = vpack.c.b16 %v1651, %v1651
  %v1662 = vpack.c.b16 %v1652, %v1652
  %v1663 = vpack.c.b16 %v1653, %v1653
  %v1664 = vpack.c.b16 %v1654, %v1654
  %v1665 = vpack.c.b16 %v1655, %v1655
  %v1666 = vpack.c.b16 %v1656, %v1656
  %v1667 = vpack.c.b16 %v1657, %v1657
  %v1668 = vpack.c.b16 %v1658, %v1658
  %v1669 = vpack.c.b16 %v1659, %v1659
  %1680 = vst [vmem:[%s3] sm:$0xf] %v1660
  %1681 = vst [vmem:[%s3 + $0x4] sm:$0xf] %v1661
  %1682 = vst [vmem:[%s3 + $0x8] sm:$0xf] %v1662
  %1683 = vst [vmem:[%s3 + $0xc] sm:$0xf] %v1663
  %1684 = vst [vmem:[%s3 + $0x10] sm:$0xf] %v1664
  %1685 = vst [vmem:[%s3 + $0x14] sm:$0xf] %v1665
  %1686 = vst [vmem:[%s3 + $0x18] sm:$0xf] %v1666
  %1687 = vst [vmem:[%s3 + $0x1c] sm:$0xf] %v1667
  %1688 = vst [vmem:[%s3 + $0x20] sm:$0xf] %v1668
  %1689 = vst [vmem:[%s3 + $0x24] sm:$0xf] %v1669
  // Predicated region
  $region14: #{forward.6} parent=0 // pred_check
    _
  $region15: #{forward.6} parent=0 // pred_check_branch
    %1691 = sbr.rel (0) target = $region17
  $region16: #{forward.6} parent=0 // pred_region
    _
  $region17: #{forward.6} parent=0 // pred_fallthru
    _
  // Predicated region
  $region18: #{forward.6} parent=0 // pred_check
    _
  $region19: #{forward.6} parent=0 // pred_check_branch
    %1693 = sbr.rel (0) target = $region21
  $region20: #{forward.6} parent=0 // pred_region
    _
  $region21: #{forward.6} parent=0 // pred_fallthru
    _

// kernel: forward.7
$region0: #{forward.7}
  #allocation0 [shape = 'u32[]', space=smem, size = 0x4, offset = 0x4, fixed_abs, tag = 'smem constant byte address 0x4 - core index']
  #allocation1 [shape = 'u32[144,128]{1,0:T(1,128)}', space=vmem, size = 0x12000, scoped, tag = 'internal scratch']
  #allocation2 [shape = 'f32[2,256]{1,0:T(2,128)}', space=vmem, size = 0x800, scoped, tag = 'scratch operand']
  %s0 = inlined_call_operand.vmem [shape: bf16[2,4608], index: 0, kind: input, shape index: {}]
  %s1 = inlined_call_operand.vmem [shape: bf16[4608,256], index: 1, kind: input, shape index: {}]
  %s2 = inlined_call_operand.vmem [shape: f32[1,256], index: 2, kind: input, shape index: {}]
  %s3 = inlined_call_operand.vmem [shape: bf16[256,128], index: 3, kind: input, shape index: {}]
  %s4 = inlined_call_operand.vmem [shape: f32[1,128], index: 4, kind: input, shape index: {}]
  %s5 = inlined_call_operand.vmem [shape: bf16[128,24], index: 5, kind: input, shape index: {}]
  %s6 = inlined_call_operand.vmem [shape: f32[1,24], index: 6, kind: input, shape index: {}]
  %s7 = inlined_call_operand.hbm [shape: f32[2,24], index: 7, kind: output, shape index: {}]
  %s8 = sld [smem:[#allocation0]]
  $region69: #{forward.7} parent=0
    _
  %s10 = ssub.s32 1, %s8
  %s11 = scalar_select 0, %s10, %s8
  $region1: #{forward.7} parent=0
    #allocation3 [shape = 'u8[1024]{0}', space=vmem, size = 0x400, scoped, tag = 'output window, operand 0, single buffered']
    #allocation4 [shape = 's32[2]{0}', space=sflag, size = 0x8, scoped, tag = 'scoped memory for forward.7']
    %12 = vsyncpa [#allocation4], 0
    loop: start=0, step=1, limit=6
    $region2: #{forward.7} parent=1 // loop_pre_header
      _
    $region3: #{forward.7} parent=1 // loop_header
      %s14 = sphi 0, %s18
      %p15 = scmp.ge.s32.totalorder %s14, 6
      %s24 = sphi 0, %s26
      %s27 = sphi 0, %s24
      %s28 = sphi 0, %s27
      %s44 = sphi 0, %s28
      %s50 = sphi 0, %s52
      %s53 = sphi 0, %s50
      %s54 = sphi 0, %s53
      %s70 = sphi 0, %s54
      %s74 = sphi 0, %s74
      %s76 = sphi 0, %s74
      %s77 = sphi 0, %s76
      %s91 = sphi 0, %s77
      %s95 = sphi 0, %s95
      %s97 = sphi 0, %s95
      %s98 = sphi 0, %s97
      %s112 = sphi 0, %s98
      %s116 = sphi 0, %s116
      %s118 = sphi 0, %s116
      %s119 = sphi 0, %s118
      %s133 = sphi 0, %s119
      %s137 = sphi 0, %s137
      %s139 = sphi 0, %s137
      %s140 = sphi 0, %s139
      %s154 = sphi 0, %s140
      %s158 = sphi 0, %s158
      %s160 = sphi 0, %s158
      %s161 = sphi 0, %s160
      %s175 = sphi 0, %s161
      %s179 = sphi 0, %s179
      %s181 = sphi 0, %s179
      %s182 = sphi 0, %s181
      %s196 = sphi 0, %s182
    $region4: #{forward.7} parent=1 // loop_header_branch
      %17 = sbr.rel (%p15) target = $region8
    $region5: #{forward.7} parent=1 // loop_body
      %s19 = ssub.s32 %s14, 1
      %s20 = ssub.s32 %s14, 2
      %s21 = sadd.s32 %s14, 1
      %s22 = ssub.s32 %s14, %s21
      %p23 = scmp.eq.s32.totalorder %s22, 0
      %s25 = sadd.s32 %s24, 1
      %s26 = scalar_select %p23, %s24, %s25
      %p29 = pneg %p23
      %p30 = scmp.eq.s32.totalorder %s14, 3
      %p31 = por %p29, %p30
      %p32 = scmp.ne.s32.totalorder %s24, %s27
      %p33 = scmp.eq.s32.totalorder %s14, 0
      %p34 = por %p32, %p33
      %p35 = scmp.ne.s32.totalorder %s24, %s27
      %p36 = scmp.eq.s32.totalorder %s19, 3
      %p37 = por %p35, %p36
      %p38 = scmp.ne.s32.totalorder %s27, %s28
      %p39 = scmp.eq.s32.totalorder %s19, 0
      %p40 = por %p38, %p39
      %p41 = scmp.ne.s32.totalorder %s27, %s28
      %p42 = scmp.eq.s32.totalorder %s20, 3
      %p43 = por %p41, %p42
      %p45 = scmp.ne.s32.totalorder %s28, %s44
      %p46 = scmp.eq.s32.totalorder %s20, 0
      %p47 = por %p45, %p46
      %s48 = ssub.s32 %s14, %s21
      %p49 = scmp.eq.s32.totalorder %s48, 0
      %s51 = sadd.s32 %s50, 1
      %s52 = scalar_select %p49, %s50, %s51
      %p55 = pneg %p49
      %p56 = scmp.eq.s32.totalorder %s14, 3
      %p57 = por %p55, %p56
      %p58 = scmp.ne.s32.totalorder %s50, %s53
      %p59 = scmp.eq.s32.totalorder %s14, 0
      %p60 = por %p58, %p59
      %p61 = scmp.ne.s32.totalorder %s50, %s53
      %p62 = scmp.eq.s32.totalorder %s19, 3
      %p63 = por %p61, %p62
      %p64 = scmp.ne.s32.totalorder %s53, %s54
      %p65 = scmp.eq.s32.totalorder %s19, 0
      %p66 = por %p64, %p65
      %p67 = scmp.ne.s32.totalorder %s53, %s54
      %p68 = scmp.eq.s32.totalorder %s20, 3
      %p69 = por %p67, %p68
      %p71 = scmp.ne.s32.totalorder %s54, %s70
      %p72 = scmp.eq.s32.totalorder %s20, 0
      %p73 = por %p71, %p72
      %s75 = sadd.s32 %s74, 1
      %p78 = scmp.eq.s32.totalorder %s14, 3
      %p79 = scmp.ne.s32.totalorder %s74, %s76
      %p80 = scmp.eq.s32.totalorder %s14, 0
      %p81 = por %p79, %p80
      %p82 = scmp.ne.s32.totalorder %s74, %s76
      %p83 = scmp.eq.s32.totalorder %s19, 3
      %p84 = por %p82, %p83
      %p85 = scmp.ne.s32.totalorder %s76, %s77
      %p86 = scmp.eq.s32.totalorder %s19, 0
      %p87 = por %p85, %p86
      %p88 = scmp.ne.s32.totalorder %s76, %s77
      %p89 = scmp.eq.s32.totalorder %s20, 3
      %p90 = por %p88, %p89
      %p92 = scmp.ne.s32.totalorder %s77, %s91
      %p93 = scmp.eq.s32.totalorder %s20, 0
      %p94 = por %p92, %p93
      %s96 = sadd.s32 %s95, 1
      %p99 = scmp.eq.s32.totalorder %s14, 3
      %p100 = scmp.ne.s32.totalorder %s95, %s97
      %p101 = scmp.eq.s32.totalorder %s14, 0
      %p102 = por %p100, %p101
      %p103 = scmp.ne.s32.totalorder %s95, %s97
      %p104 = scmp.eq.s32.totalorder %s19, 3
      %p105 = por %p103, %p104
      %p106 = scmp.ne.s32.totalorder %s97, %s98
      %p107 = scmp.eq.s32.totalorder %s19, 0
      %p108 = por %p106, %p107
      %p109 = scmp.ne.s32.totalorder %s97, %s98
      %p110 = scmp.eq.s32.totalorder %s20, 3
      %p111 = por %p109, %p110
      %p113 = scmp.ne.s32.totalorder %s98, %s112
      %p114 = scmp.eq.s32.totalorder %s20, 0
      %p115 = por %p113, %p114
      %s117 = sadd.s32 %s116, 1
      %p120 = scmp.eq.s32.totalorder %s14, 3
      %p121 = scmp.ne.s32.totalorder %s116, %s118
      %p122 = scmp.eq.s32.totalorder %s14, 0
      %p123 = por %p121, %p122
      %p124 = scmp.ne.s32.totalorder %s116, %s118
      %p125 = scmp.eq.s32.totalorder %s19, 3
      %p126 = por %p124, %p125
      %p127 = scmp.ne.s32.totalorder %s118, %s119
      %p128 = scmp.eq.s32.totalorder %s19, 0
      %p129 = por %p127, %p128
      %p130 = scmp.ne.s32.totalorder %s118, %s119
      %p131 = scmp.eq.s32.totalorder %s20, 3
      %p132 = por %p130, %p131
      %p134 = scmp.ne.s32.totalorder %s119, %s133
      %p135 = scmp.eq.s32.totalorder %s20, 0
      %p136 = por %p134, %p135
      %s138 = sadd.s32 %s137, 1
      %p141 = scmp.eq.s32.totalorder %s14, 3
      %p142 = scmp.ne.s32.totalorder %s137, %s139
      %p143 = scmp.eq.s32.totalorder %s14, 0
      %p144 = por %p142, %p143
      %p145 = scmp.ne.s32.totalorder %s137, %s139
      %p146 = scmp.eq.s32.totalorder %s19, 3
      %p147 = por %p145, %p146
      %p148 = scmp.ne.s32.totalorder %s139, %s140
      %p149 = scmp.eq.s32.totalorder %s19, 0
      %p150 = por %p148, %p149
      %p151 = scmp.ne.s32.totalorder %s139, %s140
      %p152 = scmp.eq.s32.totalorder %s20, 3
      %p153 = por %p151, %p152
      %p155 = scmp.ne.s32.totalorder %s140, %s154
      %p156 = scmp.eq.s32.totalorder %s20, 0
      %p157 = por %p155, %p156
      %s159 = sadd.s32 %s158, 1
      %p162 = scmp.eq.s32.totalorder %s14, 3
      %p163 = scmp.ne.s32.totalorder %s158, %s160
      %p164 = scmp.eq.s32.totalorder %s14, 0
      %p165 = por %p163, %p164
      %p166 = scmp.ne.s32.totalorder %s158, %s160
      %p167 = scmp.eq.s32.totalorder %s19, 3
      %p168 = por %p166, %p167
      %p169 = scmp.ne.s32.totalorder %s160, %s161
      %p170 = scmp.eq.s32.totalorder %s19, 0
      %p171 = por %p169, %p170
      %p172 = scmp.ne.s32.totalorder %s160, %s161
      %p173 = scmp.eq.s32.totalorder %s20, 3
      %p174 = por %p172, %p173
      %p176 = scmp.ne.s32.totalorder %s161, %s175
      %p177 = scmp.eq.s32.totalorder %s20, 0
      %p178 = por %p176, %p177
      %s180 = sadd.s32 %s179, 1
      %p183 = scmp.eq.s32.totalorder %s14, 3
      %p184 = scmp.ne.s32.totalorder %s179, %s181
      %p185 = scmp.eq.s32.totalorder %s14, 0
      %p186 = por %p184, %p185
      %p187 = scmp.ne.s32.totalorder %s179, %s181
      %p188 = scmp.eq.s32.totalorder %s19, 3
      %p189 = por %p187, %p188
      %p190 = scmp.ne.s32.totalorder %s181, %s182
      %p191 = scmp.eq.s32.totalorder %s19, 0
      %p192 = por %p190, %p191
      %p193 = scmp.ne.s32.totalorder %s181, %s182
      %p194 = scmp.eq.s32.totalorder %s20, 3
      %p195 = por %p193, %p194
      %p197 = scmp.ne.s32.totalorder %s182, %s196
      %p198 = scmp.eq.s32.totalorder %s20, 0
      %p199 = por %p197, %p198
      %p200 = scmp.le.s32.totalorder 1, %s14
      %p201 = scmp.lt.s32.totalorder %s14, 5
      %p202 = pnand %p200, %p201
      %p203 = pneg %p202
      // Predicated region
      $region9: #{forward.7} parent=5 // pred_check
        _
      $region10: #{forward.7} parent=5 // pred_check_branch
        %205 = sbr.rel (%p202) target = $region12
      $region11: #{forward.7} parent=5 // pred_region
        %s206 = ssub.s32 %s14, 1
        // Predicated region
        $region13: #{forward.7} parent=11 // pred_check
          %p207 = pneg %p87
        $region14: #{forward.7} parent=11 // pred_check_branch
          %209 = sbr.rel (%p207) target = $region16
        $region15: #{forward.7} parent=11 // pred_region
          _
        $region16: #{forward.7} parent=11 // pred_fallthru
          _
        // Predicated region
        $region17: #{forward.7} parent=11 // pred_check
          %p210 = pneg %p108
        $region18: #{forward.7} parent=11 // pred_check_branch
          %212 = sbr.rel (%p210) target = $region20
        $region19: #{forward.7} parent=11 // pred_region
          _
        $region20: #{forward.7} parent=11 // pred_fallthru
          _
        // Predicated region
        $region21: #{forward.7} parent=11 // pred_check
          %p213 = pneg %p129
        $region22: #{forward.7} parent=11 // pred_check_branch
          %215 = sbr.rel (%p213) target = $region24
        $region23: #{forward.7} parent=11 // pred_region
          _
        $region24: #{forward.7} parent=11 // pred_fallthru
          _
        // Predicated region
        $region25: #{forward.7} parent=11 // pred_check
          %p216 = pneg %p150
        $region26: #{forward.7} parent=11 // pred_check_branch
          %218 = sbr.rel (%p216) target = $region28
        $region27: #{forward.7} parent=11 // pred_region
          _
        $region28: #{forward.7} parent=11 // pred_fallthru
          _
        // Predicated region
        $region29: #{forward.7} parent=11 // pred_check
          %p219 = pneg %p171
        $region30: #{forward.7} parent=11 // pred_check_branch
          %221 = sbr.rel (%p219) target = $region32
        $region31: #{forward.7} parent=11 // pred_region
          _
        $region32: #{forward.7} parent=11 // pred_fallthru
          _
      $region12: #{forward.7} parent=5 // pred_fallthru
        _
      %p222 = scmp.lt.s32.totalorder %s14, 4
      // Predicated region
      $region33: #{forward.7} parent=5 // pred_check
        %p223 = pneg %p222
      $region34: #{forward.7} parent=5 // pred_check_branch
        %225 = sbr.rel (%p223) target = $region36
      $region35: #{forward.7} parent=5 // pred_region
        // Predicated region
        $region37: #{forward.7} parent=35 // pred_check
          %p226 = pneg %p34
        $region38: #{forward.7} parent=35 // pred_check_branch
          %228 = sbr.rel (%p226) target = $region40
        $region39: #{forward.7} parent=35 // pred_region
          %s229 = smul.u32 9, %s14
          %p230 = scmp.lt.s32.totalorder %s229, 35
          %s231 = scalar_select %p230, %s229, 35
          %s232 = scalar_lea.vmem %s0, %s231
          %s233 = smul.u32 9, %s14
        $region40: #{forward.7} parent=35 // pred_fallthru
          _
        // Predicated region
        $region41: #{forward.7} parent=35 // pred_check
          %p234 = pneg %p60
        $region42: #{forward.7} parent=35 // pred_check_branch
          %236 = sbr.rel (%p234) target = $region44
        $region43: #{forward.7} parent=35 // pred_region
          %s237 = smul.u32 144, %s14
          %p238 = scmp.lt.s32.totalorder %s237, 575
          %s239 = scalar_select %p238, %s237, 575
          %s240 = smul.addr %s239, 2
          %s241 = smul.addr %s240, 4
          %s242 = scalar_lea.vmem %s1, %s241
          %s243 = smul.u32 144, %s14
        $region44: #{forward.7} parent=35 // pred_fallthru
          _
      $region36: #{forward.7} parent=5 // pred_fallthru
        _
      %p244 = scmp.le.s32.totalorder 1, %s14
      %p245 = scmp.lt.s32.totalorder %s14, 5
      %p246 = pnand %p244, %p245
      %p247 = pneg %p246
      // Predicated region
      $region45: #{forward.7} parent=5 // pred_check
        _
      $region46: #{forward.7} parent=5 // pred_check_branch
        %249 = sbr.rel (%p246) target = $region48
      $region47: #{forward.7} parent=5 // pred_region
        %s250 = ssub.s32 %s14, 1
        %s251 = smul.u32 9, %s19
        %p252 = scmp.lt.s32.totalorder %s251, 35
        %s253 = scalar_select %p252, %s251, 35
        %s254 = scalar_lea.vmem %s0, %s253
        %p255 = pneg %p40
        %p256 = pneg %p37
        %s257 = smul.u32 144, %s19
        %p258 = scmp.lt.s32.totalorder %s257, 575
        %s259 = scalar_select %p258, %s257, 575
        %s260 = smul.addr %s259, 2
        %s261 = smul.addr %s260, 4
        %s262 = scalar_lea.vmem %s1, %s261
        %p263 = pneg %p66
        %p264 = pneg %p63
        %p265 = pneg %p87
        %p266 = pneg %p84
        %p267 = pneg %p108
        %p268 = pneg %p105
        %p269 = pneg %p129
        %p270 = pneg %p126
        %p271 = pneg %p150
        %p272 = pneg %p147
        %p273 = pneg %p171
        %p274 = pneg %p168
        %p275 = pneg %p192
        %p276 = pneg %p189
        %s277 = smul.u32 9, %s19
        %p278 = scmp.lt.s32.totalorder %s277, 35
        %s279 = scalar_select %p278, %s277, 35
        %s280 = scalar_lea.vmem %s0, %s279
        %s281 = smul.u32 9, %s19
        %s282 = smul.u32 144, %s19
        %p283 = scmp.lt.s32.totalorder %s282, 575
        %s284 = scalar_select %p283, %s282, 575
        %s285 = smul.addr %s284, 2
        %s286 = smul.addr %s285, 4
        %s287 = scalar_lea.vmem %s1, %s286
        %s288 = smul.u32 144, %s19
        %p290 = scmp.eq.s32.totalorder %s19, 0
        // Predicated region
        $region49: #{forward.7} parent=47 // pred_check
          %p291 = pneg %p290
        $region50: #{forward.7} parent=47 // pred_check_branch
          %293 = sbr.rel (%p291) target = $region52
        $region51: #{forward.7} parent=47 // pred_region
          %294 = vst [vmem:[#allocation2] sm:$0xf] 0.0
        $region52: #{forward.7} parent=47 // pred_fallthru
          _
        %v295 = vld [vmem:[#allocation2] sm:$0xf]
        %v296 = vld [vmem:[%s280] sm:$0xff]
        %v297 = vld [vmem:[%s280 + $0x8] sm:$0x1]
        %v298 = vld [vmem:[%s287] sm:$0xff]
        %v299 = vld [vmem:[%s287 + $0x8] sm:$0xff]
        %v300 = vld [vmem:[%s287 + $0x10] sm:$0xff]
        %v301 = vld [vmem:[%s287 + $0x18] sm:$0xff]
        %v302 = vld [vmem:[%s287 + $0x20] sm:$0xff]
        %v303 = vld [vmem:[%s287 + $0x28] sm:$0xff]
        %v304 = vld [vmem:[%s287 + $0x30] sm:$0xff]
        %v305 = vld [vmem:[%s287 + $0x38] sm:$0xff]
        %v306 = vld [vmem:[%s287 + $0x40] sm:$0xff]
        %v307 = vld [vmem:[%s287 + $0x48] sm:$0xff]
        %v308 = vld [vmem:[%s287 + $0x50] sm:$0xff]
        %v309 = vld [vmem:[%s287 + $0x58] sm:$0xff]
        %v310 = vld [vmem:[%s287 + $0x60] sm:$0xff]
        %v311 = vld [vmem:[%s287 + $0x68] sm:$0xff]
        %v312 = vld [vmem:[%s287 + $0x70] sm:$0xff]
        %v313 = vld [vmem:[%s287 + $0x78] sm:$0xff]
        %v314 = vld [vmem:[%s287 + $0x80] sm:$0xff]
        %v315 = vld [vmem:[%s287 + $0x88] sm:$0xff]
        %v316 = vld [vmem:[%s287 + $0x90] sm:$0xff]
        %v317 = vld [vmem:[%s287 + $0x98] sm:$0xff]
        %v318 = vld [vmem:[%s287 + $0xa0] sm:$0xff]
        %v319 = vld [vmem:[%s287 + $0xa8] sm:$0xff]
        %v320 = vld [vmem:[%s287 + $0xb0] sm:$0xff]
        %v321 = vld [vmem:[%s287 + $0xb8] sm:$0xff]
        %v322 = vld [vmem:[%s287 + $0xc0] sm:$0xff]
        %v323 = vld [vmem:[%s287 + $0xc8] sm:$0xff]
        %v324 = vld [vmem:[%s287 + $0xd0] sm:$0xff]
        %v325 = vld [vmem:[%s287 + $0xd8] sm:$0xff]
        %v326 = vld [vmem:[%s287 + $0xe0] sm:$0xff]
        %v327 = vld [vmem:[%s287 + $0xe8] sm:$0xff]
        %v328 = vld [vmem:[%s287 + $0xf0] sm:$0xff]
        %v329 = vld [vmem:[%s287 + $0xf8] sm:$0xff]
        %v330 = vld [vmem:[%s287 + $0x100] sm:$0xff]
        %v331 = vld [vmem:[%s287 + $0x108] sm:$0xff]
        %v332 = vld [vmem:[%s287 + $0x110] sm:$0xff]
        %v333 = vld [vmem:[%s287 + $0x118] sm:$0xff]
        %v334 = vld [vmem:[%s287 + $0x120] sm:$0xff]
        %v335 = vld [vmem:[%s287 + $0x128] sm:$0xff]
        %v336 = vld [vmem:[%s287 + $0x130] sm:$0xff]
        %v337 = vld [vmem:[%s287 + $0x138] sm:$0xff]
        %v338 = vld [vmem:[%s287 + $0x140] sm:$0xff]
        %v339 = vld [vmem:[%s287 + $0x148] sm:$0xff]
        %v340 = vld [vmem:[%s287 + $0x150] sm:$0xff]
        %v341 = vld [vmem:[%s287 + $0x158] sm:$0xff]
        %v342 = vld [vmem:[%s287 + $0x160] sm:$0xff]
        %v343 = vld [vmem:[%s287 + $0x168] sm:$0xff]
        %v344 = vld [vmem:[%s287 + $0x170] sm:$0xff]
        %v345 = vld [vmem:[%s287 + $0x178] sm:$0xff]
        %v346 = vld [vmem:[%s287 + $0x180] sm:$0xff]
        %v347 = vld [vmem:[%s287 + $0x188] sm:$0xff]
        %v348 = vld [vmem:[%s287 + $0x190] sm:$0xff]
        %v349 = vld [vmem:[%s287 + $0x198] sm:$0xff]
        %v350 = vld [vmem:[%s287 + $0x1a0] sm:$0xff]
        %v351 = vld [vmem:[%s287 + $0x1a8] sm:$0xff]
        %v352 = vld [vmem:[%s287 + $0x1b0] sm:$0xff]
        %v353 = vld [vmem:[%s287 + $0x1b8] sm:$0xff]
        %v354 = vld [vmem:[%s287 + $0x1c0] sm:$0xff]
        %v355 = vld [vmem:[%s287 + $0x1c8] sm:$0xff]
        %v356 = vld [vmem:[%s287 + $0x1d0] sm:$0xff]
        %v357 = vld [vmem:[%s287 + $0x1d8] sm:$0xff]
        %v358 = vld [vmem:[%s287 + $0x1e0] sm:$0xff]
        %v359 = vld [vmem:[%s287 + $0x1e8] sm:$0xff]
        %v360 = vld [vmem:[%s287 + $0x1f0] sm:$0xff]
        %v361 = vld [vmem:[%s287 + $0x1f8] sm:$0xff]
        %v362 = vld [vmem:[%s287 + $0x200] sm:$0xff]
        %v363 = vld [vmem:[%s287 + $0x208] sm:$0xff]
        %v364 = vld [vmem:[%s287 + $0x210] sm:$0xff]
        %v365 = vld [vmem:[%s287 + $0x218] sm:$0xff]
        %v366 = vld [vmem:[%s287 + $0x220] sm:$0xff]
        %v367 = vld [vmem:[%s287 + $0x228] sm:$0xff]
        %v368 = vld [vmem:[%s287 + $0x230] sm:$0xff]
        %v369 = vld [vmem:[%s287 + $0x238] sm:$0xff]
        %v370 = vld [vmem:[%s287 + $0x240] sm:$0xff]
        %v371 = vld [vmem:[%s287 + $0x248] sm:$0xff]
        %v372 = vld [vmem:[%s287 + $0x250] sm:$0xff]
        %v373 = vld [vmem:[%s287 + $0x258] sm:$0xff]
        %v374 = vld [vmem:[%s287 + $0x260] sm:$0xff]
        %v375 = vld [vmem:[%s287 + $0x268] sm:$0xff]
        %v376 = vld [vmem:[%s287 + $0x270] sm:$0xff]
        %v377 = vld [vmem:[%s287 + $0x278] sm:$0xff]
        %v378 = vld [vmem:[%s287 + $0x280] sm:$0xff]
        %v379 = vld [vmem:[%s287 + $0x288] sm:$0xff]
        %v380 = vld [vmem:[%s287 + $0x290] sm:$0xff]
        %v381 = vld [vmem:[%s287 + $0x298] sm:$0xff]
        %v382 = vld [vmem:[%s287 + $0x2a0] sm:$0xff]
        %v383 = vld [vmem:[%s287 + $0x2a8] sm:$0xff]
        %v384 = vld [vmem:[%s287 + $0x2b0] sm:$0xff]
        %v385 = vld [vmem:[%s287 + $0x2b8] sm:$0xff]
        %v386 = vld [vmem:[%s287 + $0x2c0] sm:$0xff]
        %v387 = vld [vmem:[%s287 + $0x2c8] sm:$0xff]
        %v388 = vld [vmem:[%s287 + $0x2d0] sm:$0xff]
        %v389 = vld [vmem:[%s287 + $0x2d8] sm:$0xff]
        %v390 = vld [vmem:[%s287 + $0x2e0] sm:$0xff]
        %v391 = vld [vmem:[%s287 + $0x2e8] sm:$0xff]
        %v392 = vld [vmem:[%s287 + $0x2f0] sm:$0xff]
        %v393 = vld [vmem:[%s287 + $0x2f8] sm:$0xff]
        %v394 = vld [vmem:[%s287 + $0x300] sm:$0xff]
        %v395 = vld [vmem:[%s287 + $0x308] sm:$0xff]
        %v396 = vld [vmem:[%s287 + $0x310] sm:$0xff]
        %v397 = vld [vmem:[%s287 + $0x318] sm:$0xff]
        %v398 = vld [vmem:[%s287 + $0x320] sm:$0xff]
        %v399 = vld [vmem:[%s287 + $0x328] sm:$0xff]
        %v400 = vld [vmem:[%s287 + $0x330] sm:$0xff]
        %v401 = vld [vmem:[%s287 + $0x338] sm:$0xff]
        %v402 = vld [vmem:[%s287 + $0x340] sm:$0xff]
        %v403 = vld [vmem:[%s287 + $0x348] sm:$0xff]
        %v404 = vld [vmem:[%s287 + $0x350] sm:$0xff]
        %v405 = vld [vmem:[%s287 + $0x358] sm:$0xff]
        %v406 = vld [vmem:[%s287 + $0x360] sm:$0xff]
        %v407 = vld [vmem:[%s287 + $0x368] sm:$0xff]
        %v408 = vld [vmem:[%s287 + $0x370] sm:$0xff]
        %v409 = vld [vmem:[%s287 + $0x378] sm:$0xff]
        %v410 = vld [vmem:[%s287 + $0x380] sm:$0xff]
        %v411 = vld [vmem:[%s287 + $0x388] sm:$0xff]
        %v412 = vld [vmem:[%s287 + $0x390] sm:$0xff]
        %v413 = vld [vmem:[%s287 + $0x398] sm:$0xff]
        %v414 = vld [vmem:[%s287 + $0x3a0] sm:$0xff]
        %v415 = vld [vmem:[%s287 + $0x3a8] sm:$0xff]
        %v416 = vld [vmem:[%s287 + $0x3b0] sm:$0xff]
        %v417 = vld [vmem:[%s287 + $0x3b8] sm:$0xff]
        %v418 = vld [vmem:[%s287 + $0x3c0] sm:$0xff]
        %v419 = vld [vmem:[%s287 + $0x3c8] sm:$0xff]
        %v420 = vld [vmem:[%s287 + $0x3d0] sm:$0xff]
        %v421 = vld [vmem:[%s287 + $0x3d8] sm:$0xff]
        %v422 = vld [vmem:[%s287 + $0x3e0] sm:$0xff]
        %v423 = vld [vmem:[%s287 + $0x3e8] sm:$0xff]
        %v424 = vld [vmem:[%s287 + $0x3f0] sm:$0xff]
        %v425 = vld [vmem:[%s287 + $0x3f8] sm:$0xff]
        %v426 = vld [vmem:[%s287 + $0x400] sm:$0xff]
        %v427 = vld [vmem:[%s287 + $0x408] sm:$0xff]
        %v428 = vld [vmem:[%s287 + $0x410] sm:$0xff]
        %v429 = vld [vmem:[%s287 + $0x418] sm:$0xff]
        %v430 = vld [vmem:[%s287 + $0x420] sm:$0xff]
        %v431 = vld [vmem:[%s287 + $0x428] sm:$0xff]
        %v432 = vld [vmem:[%s287 + $0x430] sm:$0xff]
        %v433 = vld [vmem:[%s287 + $0x438] sm:$0xff]
        %v434 = vld [vmem:[%s287 + $0x440] sm:$0xff]
        %v435 = vld [vmem:[%s287 + $0x448] sm:$0xff]
        %v436 = vld [vmem:[%s287 + $0x450] sm:$0xff]
        %v437 = vld [vmem:[%s287 + $0x458] sm:$0xff]
        %v438 = vld [vmem:[%s287 + $0x460] sm:$0xff]
        %v439 = vld [vmem:[%s287 + $0x468] sm:$0xff]
        %v440 = vld [vmem:[%s287 + $0x470] sm:$0xff]
        %v441 = vld [vmem:[%s287 + $0x478] sm:$0xff]
        %v444 = vcombine.high %v296, %v296
        %v446 = vunpack.c.l.s4 1966171168
        %v447 = vunpack.c.0.s8 %v446
        %v448 = vlaneseq
        %v449 = vshrl.u32 %v448, 7
        %v450 = vsub.s32 %v447, %v449
        %v451 = vrot.slane %v296, %v450
        %v453 = vunpack.c.l.s4 1966171168
        %v454 = vunpack.c.0.s8 %v453
        %v455 = vlaneseq
        %v456 = vshrl.u32 %v455, 7
        %v457 = vsub.s32 %v454, %v456
        %v458 = vrot.slane %v444, %v457
        %v459 = vcombine.high %v451, %v451
        %v460 = vcombine.high %v458, %v458
        %v462 = vunpack.c.l.s4 1966171168
        %v463 = vunpack.c.0.s8 %v462
        %v464 = vlaneseq
        %v465 = vshrl.u32 %v464, 7
        %v466 = vsub.s32 %v463, %v465
        %v467 = vrot.slane %v451, %v466
        %v469 = vunpack.c.l.s4 1966171168
        %v470 = vunpack.c.0.s8 %v469
        %v471 = vlaneseq
        %v472 = vshrl.u32 %v471, 7
        %v473 = vsub.s32 %v470, %v472
        %v474 = vrot.slane %v458, %v473
        %v476 = vunpack.c.l.s4 1966171168
        %v477 = vunpack.c.0.s8 %v476
        %v478 = vlaneseq
        %v479 = vshrl.u32 %v478, 7
        %v480 = vsub.s32 %v477, %v479
        %v481 = vrot.slane %v459, %v480
        %v483 = vunpack.c.l.s4 1966171168
        %v484 = vunpack.c.0.s8 %v483
        %v485 = vlaneseq
        %v486 = vshrl.u32 %v485, 7
        %v487 = vsub.s32 %v484, %v486
        %v488 = vrot.slane %v460, %v487
        %v489 = vcombine.high %v467, %v467
        %v490 = vcombine.high %v474, %v474
        %v491 = vcombine.high %v481, %v481
        %v492 = vcombine.high %v488, %v488
        %v494 = vunpack.c.l.s4 1966171168
        %v495 = vunpack.c.0.s8 %v494
        %v496 = vlaneseq
        %v497 = vshrl.u32 %v496, 7
        %v498 = vsub.s32 %v495, %v497
        %v499 = vrot.slane %v297, %v498
        %v501 = vunpack.c.l.s4 1966171168
        %v502 = vunpack.c.0.s8 %v501
        %v503 = vlaneseq
        %v504 = vshrl.u32 %v503, 7
        %v505 = vsub.s32 %v502, %v504
        %v506 = vrot.slane %v499, %v505
        %v660 = vunpack.c.l.b16 %v298
        %v661 = vunpack.c.h.b16 %v298
        %v662 = vunpack.c.l.b16 %v299
        %v663 = vunpack.c.h.b16 %v299
        %v664 = vunpack.c.l.b16 %v300
        %v665 = vunpack.c.h.b16 %v300
        %v666 = vunpack.c.l.b16 %v301
        %v667 = vunpack.c.h.b16 %v301
        %v668 = vunpack.c.l.b16 %v302
        %v669 = vunpack.c.h.b16 %v302
        %v670 = vunpack.c.l.b16 %v303
        %v671 = vunpack.c.h.b16 %v303
        %v672 = vunpack.c.l.b16 %v304
        %v673 = vunpack.c.h.b16 %v304
        %v674 = vunpack.c.l.b16 %v305
        %v675 = vunpack.c.h.b16 %v305
        %v676 = vunpack.c.l.b16 %v306
        %v677 = vunpack.c.h.b16 %v306
        %v678 = vunpack.c.l.b16 %v307
        %v679 = vunpack.c.h.b16 %v307
        %v680 = vunpack.c.l.b16 %v308
        %v681 = vunpack.c.h.b16 %v308
        %v682 = vunpack.c.l.b16 %v309
        %v683 = vunpack.c.h.b16 %v309
        %v684 = vunpack.c.l.b16 %v310
        %v685 = vunpack.c.h.b16 %v310
        %v686 = vunpack.c.l.b16 %v311
        %v687 = vunpack.c.h.b16 %v311
        %v688 = vunpack.c.l.b16 %v312
        %v689 = vunpack.c.h.b16 %v312
        %v690 = vunpack.c.l.b16 %v313
        %v691 = vunpack.c.h.b16 %v313
        %v692 = vunpack.c.l.b16 %v314
        %v693 = vunpack.c.h.b16 %v314
        %v694 = vunpack.c.l.b16 %v315
        %v695 = vunpack.c.h.b16 %v315
        %v696 = vunpack.c.l.b16 %v316
        %v697 = vunpack.c.h.b16 %v316
        %v698 = vunpack.c.l.b16 %v317
        %v699 = vunpack.c.h.b16 %v317
        %v700 = vunpack.c.l.b16 %v318
        %v701 = vunpack.c.h.b16 %v318
        %v702 = vunpack.c.l.b16 %v319
        %v703 = vunpack.c.h.b16 %v319
        %v704 = vunpack.c.l.b16 %v320
        %v705 = vunpack.c.h.b16 %v320
        %v706 = vunpack.c.l.b16 %v321
        %v707 = vunpack.c.h.b16 %v321
        %v708 = vunpack.c.l.b16 %v322
        %v709 = vunpack.c.h.b16 %v322
        %v710 = vunpack.c.l.b16 %v323
        %v711 = vunpack.c.h.b16 %v323
        %v712 = vunpack.c.l.b16 %v324
        %v713 = vunpack.c.h.b16 %v324
        %v714 = vunpack.c.l.b16 %v325
        %v715 = vunpack.c.h.b16 %v325
        %v716 = vunpack.c.l.b16 %v326
        %v717 = vunpack.c.h.b16 %v326
        %v718 = vunpack.c.l.b16 %v327
        %v719 = vunpack.c.h.b16 %v327
        %v720 = vunpack.c.l.b16 %v328
        %v721 = vunpack.c.h.b16 %v328
        %v722 = vunpack.c.l.b16 %v329
        %v723 = vunpack.c.h.b16 %v329
        %v724 = vunpack.c.l.b16 %v330
        %v725 = vunpack.c.h.b16 %v330
        %v726 = vunpack.c.l.b16 %v331
        %v727 = vunpack.c.h.b16 %v331
        %v728 = vunpack.c.l.b16 %v332
        %v729 = vunpack.c.h.b16 %v332
        %v730 = vunpack.c.l.b16 %v333
        %v731 = vunpack.c.h.b16 %v333
        %v732 = vunpack.c.l.b16 %v334
        %v733 = vunpack.c.h.b16 %v334
        %v734 = vunpack.c.l.b16 %v335
        %v735 = vunpack.c.h.b16 %v335
        %v736 = vunpack.c.l.b16 %v336
        %v737 = vunpack.c.h.b16 %v336
        %v738 = vunpack.c.l.b16 %v337
        %v739 = vunpack.c.h.b16 %v337
        %v740 = vunpack.c.l.b16 %v338
        %v741 = vunpack.c.h.b16 %v338
        %v742 = vunpack.c.l.b16 %v339
        %v743 = vunpack.c.h.b16 %v339
        %v744 = vunpack.c.l.b16 %v340
        %v745 = vunpack.c.h.b16 %v340
        %v746 = vunpack.c.l.b16 %v341
        %v747 = vunpack.c.h.b16 %v341
        %v748 = vunpack.c.l.b16 %v342
        %v749 = vunpack.c.h.b16 %v342
        %v750 = vunpack.c.l.b16 %v343
        %v751 = vunpack.c.h.b16 %v343
        %v752 = vunpack.c.l.b16 %v344
        %v753 = vunpack.c.h.b16 %v344
        %v754 = vunpack.c.l.b16 %v345
        %v755 = vunpack.c.h.b16 %v345
        %v756 = vunpack.c.l.b16 %v346
        %v757 = vunpack.c.h.b16 %v346
        %v758 = vunpack.c.l.b16 %v347
        %v759 = vunpack.c.h.b16 %v347
        %v760 = vunpack.c.l.b16 %v348
        %v761 = vunpack.c.h.b16 %v348
        %v762 = vunpack.c.l.b16 %v349
        %v763 = vunpack.c.h.b16 %v349
        %v764 = vunpack.c.l.b16 %v350
        %v765 = vunpack.c.h.b16 %v350
        %v766 = vunpack.c.l.b16 %v351
        %v767 = vunpack.c.h.b16 %v351
        %v768 = vunpack.c.l.b16 %v352
        %v769 = vunpack.c.h.b16 %v352
        %v770 = vunpack.c.l.b16 %v353
        %v771 = vunpack.c.h.b16 %v353
        %v772 = vunpack.c.l.b16 %v354
        %v773 = vunpack.c.h.b16 %v354
        %v774 = vunpack.c.l.b16 %v355
        %v775 = vunpack.c.h.b16 %v355
        %v776 = vunpack.c.l.b16 %v356
        %v777 = vunpack.c.h.b16 %v356
        %v778 = vunpack.c.l.b16 %v357
        %v779 = vunpack.c.h.b16 %v357
        %v780 = vunpack.c.l.b16 %v358
        %v781 = vunpack.c.h.b16 %v358
        %v782 = vunpack.c.l.b16 %v359
        %v783 = vunpack.c.h.b16 %v359
        %v784 = vunpack.c.l.b16 %v360
        %v785 = vunpack.c.h.b16 %v360
        %v786 = vunpack.c.l.b16 %v361
        %v787 = vunpack.c.h.b16 %v361
        %v788 = vunpack.c.l.b16 %v362
        %v789 = vunpack.c.h.b16 %v362
        %v790 = vunpack.c.l.b16 %v363
        %v791 = vunpack.c.h.b16 %v363
        %v792 = vunpack.c.l.b16 %v364
        %v793 = vunpack.c.h.b16 %v364
        %v794 = vunpack.c.l.b16 %v365
        %v795 = vunpack.c.h.b16 %v365
        %v796 = vunpack.c.l.b16 %v366
        %v797 = vunpack.c.h.b16 %v366
        %v798 = vunpack.c.l.b16 %v367
        %v799 = vunpack.c.h.b16 %v367
        %v800 = vunpack.c.l.b16 %v368
        %v801 = vunpack.c.h.b16 %v368
        %v802 = vunpack.c.l.b16 %v369
        %v803 = vunpack.c.h.b16 %v369
        %v804 = vunpack.c.l.b16 %v370
        %v805 = vunpack.c.h.b16 %v370
        %v806 = vunpack.c.l.b16 %v371
        %v807 = vunpack.c.h.b16 %v371
        %v808 = vunpack.c.l.b16 %v372
        %v809 = vunpack.c.h.b16 %v372
        %v810 = vunpack.c.l.b16 %v373
        %v811 = vunpack.c.h.b16 %v373
        %v812 = vunpack.c.l.b16 %v374
        %v813 = vunpack.c.h.b16 %v374
        %v814 = vunpack.c.l.b16 %v375
        %v815 = vunpack.c.h.b16 %v375
        %v816 = vunpack.c.l.b16 %v376
        %v817 = vunpack.c.h.b16 %v376
        %v818 = vunpack.c.l.b16 %v377
        %v819 = vunpack.c.h.b16 %v377
        %v820 = vunpack.c.l.b16 %v378
        %v821 = vunpack.c.h.b16 %v378
        %v822 = vunpack.c.l.b16 %v379
        %v823 = vunpack.c.h.b16 %v379
        %v824 = vunpack.c.l.b16 %v380
        %v825 = vunpack.c.h.b16 %v380
        %v826 = vunpack.c.l.b16 %v381
        %v827 = vunpack.c.h.b16 %v381
        %v828 = vunpack.c.l.b16 %v382
        %v829 = vunpack.c.h.b16 %v382
        %v830 = vunpack.c.l.b16 %v383
        %v831 = vunpack.c.h.b16 %v383
        %v832 = vunpack.c.l.b16 %v384
        %v833 = vunpack.c.h.b16 %v384
        %v834 = vunpack.c.l.b16 %v385
        %v835 = vunpack.c.h.b16 %v385
        %v836 = vunpack.c.l.b16 %v386
        %v837 = vunpack.c.h.b16 %v386
        %v838 = vunpack.c.l.b16 %v387
        %v839 = vunpack.c.h.b16 %v387
        %v840 = vunpack.c.l.b16 %v388
        %v841 = vunpack.c.h.b16 %v388
        %v842 = vunpack.c.l.b16 %v389
        %v843 = vunpack.c.h.b16 %v389
        %v844 = vunpack.c.l.b16 %v390
        %v845 = vunpack.c.h.b16 %v390
        %v846 = vunpack.c.l.b16 %v391
        %v847 = vunpack.c.h.b16 %v391
        %v848 = vunpack.c.l.b16 %v392
        %v849 = vunpack.c.h.b16 %v392
        %v850 = vunpack.c.l.b16 %v393
        %v851 = vunpack.c.h.b16 %v393
        %v852 = vunpack.c.l.b16 %v394
        %v853 = vunpack.c.h.b16 %v394
        %v854 = vunpack.c.l.b16 %v395
        %v855 = vunpack.c.h.b16 %v395
        %v856 = vunpack.c.l.b16 %v396
        %v857 = vunpack.c.h.b16 %v396
        %v858 = vunpack.c.l.b16 %v397
        %v859 = vunpack.c.h.b16 %v397
        %v860 = vunpack.c.l.b16 %v398
        %v861 = vunpack.c.h.b16 %v398
        %v862 = vunpack.c.l.b16 %v399
        %v863 = vunpack.c.h.b16 %v399
        %v864 = vunpack.c.l.b16 %v400
        %v865 = vunpack.c.h.b16 %v400
        %v866 = vunpack.c.l.b16 %v401
        %v867 = vunpack.c.h.b16 %v401
        %v868 = vunpack.c.l.b16 %v402
        %v869 = vunpack.c.h.b16 %v402
        %v870 = vunpack.c.l.b16 %v403
        %v871 = vunpack.c.h.b16 %v403
        %v872 = vunpack.c.l.b16 %v404
        %v873 = vunpack.c.h.b16 %v404
        %v874 = vunpack.c.l.b16 %v405
        %v875 = vunpack.c.h.b16 %v405
        %v876 = vunpack.c.l.b16 %v406
        %v877 = vunpack.c.h.b16 %v406
        %v878 = vunpack.c.l.b16 %v407
        %v879 = vunpack.c.h.b16 %v407
        %v880 = vunpack.c.l.b16 %v408
        %v881 = vunpack.c.h.b16 %v408
        %v882 = vunpack.c.l.b16 %v409
        %v883 = vunpack.c.h.b16 %v409
        %v884 = vunpack.c.l.b16 %v410
        %v885 = vunpack.c.h.b16 %v410
        %v886 = vunpack.c.l.b16 %v411
        %v887 = vunpack.c.h.b16 %v411
        %v888 = vunpack.c.l.b16 %v412
        %v889 = vunpack.c.h.b16 %v412
        %v890 = vunpack.c.l.b16 %v413
        %v891 = vunpack.c.h.b16 %v413
        %v892 = vunpack.c.l.b16 %v414
        %v893 = vunpack.c.h.b16 %v414
        %v894 = vunpack.c.l.b16 %v415
        %v895 = vunpack.c.h.b16 %v415
        %v896 = vunpack.c.l.b16 %v416
        %v897 = vunpack.c.h.b16 %v416
        %v898 = vunpack.c.l.b16 %v417
        %v899 = vunpack.c.h.b16 %v417
        %v900 = vunpack.c.l.b16 %v418
        %v901 = vunpack.c.h.b16 %v418
        %v902 = vunpack.c.l.b16 %v419
        %v903 = vunpack.c.h.b16 %v419
        %v904 = vunpack.c.l.b16 %v420
        %v905 = vunpack.c.h.b16 %v420
        %v906 = vunpack.c.l.b16 %v421
        %v907 = vunpack.c.h.b16 %v421
        %v908 = vunpack.c.l.b16 %v422
        %v909 = vunpack.c.h.b16 %v422
        %v910 = vunpack.c.l.b16 %v423
        %v911 = vunpack.c.h.b16 %v423
        %v912 = vunpack.c.l.b16 %v424
        %v913 = vunpack.c.h.b16 %v424
        %v914 = vunpack.c.l.b16 %v425
        %v915 = vunpack.c.h.b16 %v425
        %v916 = vunpack.c.l.b16 %v426
        %v917 = vunpack.c.h.b16 %v426
        %v918 = vunpack.c.l.b16 %v427
        %v919 = vunpack.c.h.b16 %v427
        %v920 = vunpack.c.l.b16 %v428
        %v921 = vunpack.c.h.b16 %v428
        %v922 = vunpack.c.l.b16 %v429
        %v923 = vunpack.c.h.b16 %v429
        %v924 = vunpack.c.l.b16 %v430
        %v925 = vunpack.c.h.b16 %v430
        %v926 = vunpack.c.l.b16 %v431
        %v927 = vunpack.c.h.b16 %v431
        %v928 = vunpack.c.l.b16 %v432
        %v929 = vunpack.c.h.b16 %v432
        %v930 = vunpack.c.l.b16 %v433
        %v931 = vunpack.c.h.b16 %v433
        %v932 = vunpack.c.l.b16 %v434
        %v933 = vunpack.c.h.b16 %v434
        %v934 = vunpack.c.l.b16 %v435
        %v935 = vunpack.c.h.b16 %v435
        %v936 = vunpack.c.l.b16 %v436
        %v937 = vunpack.c.h.b16 %v436
        %v938 = vunpack.c.l.b16 %v437
        %v939 = vunpack.c.h.b16 %v437
        %v940 = vunpack.c.l.b16 %v438
        %v941 = vunpack.c.h.b16 %v438
        %v942 = vunpack.c.l.b16 %v439
        %v943 = vunpack.c.h.b16 %v439
        %v944 = vunpack.c.l.b16 %v440
        %v945 = vunpack.c.h.b16 %v440
        %v946 = vunpack.c.l.b16 %v441
        %v947 = vunpack.c.h.b16 %v441
        %v948 = vpack.c.b16 %v662, %v660
        %v949 = vpack.c.b16 %v663, %v661
        %v950 = vpack.c.b16 %v666, %v664
        %v951 = vpack.c.b16 %v667, %v665
        %v952 = vpack.c.b16 %v670, %v668
        %v953 = vpack.c.b16 %v671, %v669
        %v954 = vpack.c.b16 %v674, %v672
        %v955 = vpack.c.b16 %v675, %v673
        %v956 = vpack.c.b16 %v678, %v676
        %v957 = vpack.c.b16 %v679, %v677
        %v958 = vpack.c.b16 %v682, %v680
        %v959 = vpack.c.b16 %v683, %v681
        %v960 = vpack.c.b16 %v686, %v684
        %v961 = vpack.c.b16 %v687, %v685
        %v962 = vpack.c.b16 %v690, %v688
        %v963 = vpack.c.b16 %v691, %v689
        %v964 = vpack.c.b16 %v694, %v692
        %v965 = vpack.c.b16 %v695, %v693
        %v966 = vpack.c.b16 %v698, %v696
        %v967 = vpack.c.b16 %v699, %v697
        %v968 = vpack.c.b16 %v702, %v700
        %v969 = vpack.c.b16 %v703, %v701
        %v970 = vpack.c.b16 %v706, %v704
        %v971 = vpack.c.b16 %v707, %v705
        %v972 = vpack.c.b16 %v710, %v708
        %v973 = vpack.c.b16 %v711, %v709
        %v974 = vpack.c.b16 %v714, %v712
        %v975 = vpack.c.b16 %v715, %v713
        %v976 = vpack.c.b16 %v718, %v716
        %v977 = vpack.c.b16 %v719, %v717
        %v978 = vpack.c.b16 %v722, %v720
        %v979 = vpack.c.b16 %v723, %v721
        %v980 = vpack.c.b16 %v726, %v724
        %v981 = vpack.c.b16 %v727, %v725
        %v982 = vpack.c.b16 %v730, %v728
        %v983 = vpack.c.b16 %v731, %v729
        %v984 = vpack.c.b16 %v734, %v732
        %v985 = vpack.c.b16 %v735, %v733
        %v986 = vpack.c.b16 %v738, %v736
        %v987 = vpack.c.b16 %v739, %v737
        %v988 = vpack.c.b16 %v742, %v740
        %v989 = vpack.c.b16 %v743, %v741
        %v990 = vpack.c.b16 %v746, %v744
        %v991 = vpack.c.b16 %v747, %v745
        %v992 = vpack.c.b16 %v750, %v748
        %v993 = vpack.c.b16 %v751, %v749
        %v994 = vpack.c.b16 %v754, %v752
        %v995 = vpack.c.b16 %v755, %v753
        %v996 = vpack.c.b16 %v758, %v756
        %v997 = vpack.c.b16 %v759, %v757
        %v998 = vpack.c.b16 %v762, %v760
        %v999 = vpack.c.b16 %v763, %v761
        %v1000 = vpack.c.b16 %v766, %v764
        %v1001 = vpack.c.b16 %v767, %v765
        %v1002 = vpack.c.b16 %v770, %v768
        %v1003 = vpack.c.b16 %v771, %v769
        %v1004 = vpack.c.b16 %v774, %v772
        %v1005 = vpack.c.b16 %v775, %v773
        %v1006 = vpack.c.b16 %v778, %v776
        %v1007 = vpack.c.b16 %v779, %v777
        %v1008 = vpack.c.b16 %v782, %v780
        %v1009 = vpack.c.b16 %v783, %v781
        %v1010 = vpack.c.b16 %v786, %v784
        %v1011 = vpack.c.b16 %v787, %v785
        %v1012 = vpack.c.b16 %v790, %v788
        %v1013 = vpack.c.b16 %v791, %v789
        %v1014 = vpack.c.b16 %v794, %v792
        %v1015 = vpack.c.b16 %v795, %v793
        %v1016 = vpack.c.b16 %v798, %v796
        %v1017 = vpack.c.b16 %v799, %v797
        %v1018 = vpack.c.b16 %v802, %v800
        %v1019 = vpack.c.b16 %v803, %v801
        %v1020 = vpack.c.b16 %v806, %v804
        %v1021 = vpack.c.b16 %v807, %v805
        %v1022 = vpack.c.b16 %v810, %v808
        %v1023 = vpack.c.b16 %v811, %v809
        %v1024 = vpack.c.b16 %v814, %v812
        %v1025 = vpack.c.b16 %v815, %v813
        %v1026 = vpack.c.b16 %v818, %v816
        %v1027 = vpack.c.b16 %v819, %v817
        %v1028 = vpack.c.b16 %v822, %v820
        %v1029 = vpack.c.b16 %v823, %v821
        %v1030 = vpack.c.b16 %v826, %v824
        %v1031 = vpack.c.b16 %v827, %v825
        %v1032 = vpack.c.b16 %v830, %v828
        %v1033 = vpack.c.b16 %v831, %v829
        %v1034 = vpack.c.b16 %v834, %v832
        %v1035 = vpack.c.b16 %v835, %v833
        %v1036 = vpack.c.b16 %v838, %v836
        %v1037 = vpack.c.b16 %v839, %v837
        %v1038 = vpack.c.b16 %v842, %v840
        %v1039 = vpack.c.b16 %v843, %v841
        %v1040 = vpack.c.b16 %v846, %v844
        %v1041 = vpack.c.b16 %v847, %v845
        %v1042 = vpack.c.b16 %v850, %v848
        %v1043 = vpack.c.b16 %v851, %v849
        %v1044 = vpack.c.b16 %v854, %v852
        %v1045 = vpack.c.b16 %v855, %v853
        %v1046 = vpack.c.b16 %v858, %v856
        %v1047 = vpack.c.b16 %v859, %v857
        %v1048 = vpack.c.b16 %v862, %v860
        %v1049 = vpack.c.b16 %v863, %v861
        %v1050 = vpack.c.b16 %v866, %v864
        %v1051 = vpack.c.b16 %v867, %v865
        %v1052 = vpack.c.b16 %v870, %v868
        %v1053 = vpack.c.b16 %v871, %v869
        %v1054 = vpack.c.b16 %v874, %v872
        %v1055 = vpack.c.b16 %v875, %v873
        %v1056 = vpack.c.b16 %v878, %v876
        %v1057 = vpack.c.b16 %v879, %v877
        %v1058 = vpack.c.b16 %v882, %v880
        %v1059 = vpack.c.b16 %v883, %v881
        %v1060 = vpack.c.b16 %v886, %v884
        %v1061 = vpack.c.b16 %v887, %v885
        %v1062 = vpack.c.b16 %v890, %v888
        %v1063 = vpack.c.b16 %v891, %v889
        %v1064 = vpack.c.b16 %v894, %v892
        %v1065 = vpack.c.b16 %v895, %v893
        %v1066 = vpack.c.b16 %v898, %v896
        %v1067 = vpack.c.b16 %v899, %v897
        %v1068 = vpack.c.b16 %v902, %v900
        %v1069 = vpack.c.b16 %v903, %v901
        %v1070 = vpack.c.b16 %v906, %v904
        %v1071 = vpack.c.b16 %v907, %v905
        %v1072 = vpack.c.b16 %v910, %v908
        %v1073 = vpack.c.b16 %v911, %v909
        %v1074 = vpack.c.b16 %v914, %v912
        %v1075 = vpack.c.b16 %v915, %v913
        %v1076 = vpack.c.b16 %v918, %v916
        %v1077 = vpack.c.b16 %v919, %v917
        %v1078 = vpack.c.b16 %v922, %v920
        %v1079 = vpack.c.b16 %v923, %v921
        %v1080 = vpack.c.b16 %v926, %v924
        %v1081 = vpack.c.b16 %v927, %v925
        %v1082 = vpack.c.b16 %v930, %v928
        %v1083 = vpack.c.b16 %v931, %v929
        %v1084 = vpack.c.b16 %v934, %v932
        %v1085 = vpack.c.b16 %v935, %v933
        %v1086 = vpack.c.b16 %v938, %v936
        %v1087 = vpack.c.b16 %v939, %v937
        %v1088 = vpack.c.b16 %v942, %v940
        %v1089 = vpack.c.b16 %v943, %v941
        %v1090 = vpack.c.b16 %v946, %v944
        %v1091 = vpack.c.b16 %v947, %v945
        %1236 = vmatprep.subr.bf16.mxu0 %v949
        %1237 = vmatpush1.bf16.msra.mxu0 %v948
        %1238 = vmatprep.subr.bf16.mxu0 %v951
        %1239 = vmatpush1.bf16.msra.mxu0 %v950
        %1240 = vmatprep.subr.bf16.mxu0 %v953
        %1241 = vmatpush1.bf16.msra.mxu0 %v952
        %1242 = vmatprep.subr.bf16.mxu0 %v955
        %1243 = vmatpush1.bf16.msra.mxu0 %v954
        %1244 = vmatprep.subr.bf16.mxu0 %v957
        %1245 = vmatpush1.bf16.msra.mxu0 %v956
        %1246 = vmatprep.subr.bf16.mxu0 %v959
        %1247 = vmatpush1.bf16.msra.mxu0 %v958
        %1248 = vmatprep.subr.bf16.mxu0 %v961
        %1249 = vmatpush1.bf16.msra.mxu0 %v960
        %1250 = vmatprep.subr.bf16.mxu0 %v963
        %1251 = vmatpush1.bf16.msra.mxu0 %v962
        %1252 = vmatprep.subr.bf16.mxu0 %v965
        %1253 = vmatpush1.bf16.msra.mxu0 %v964
        %1254 = vmatprep.subr.bf16.mxu0 %v967
        %1255 = vmatpush1.bf16.msra.mxu0 %v966
        %1256 = vmatprep.subr.bf16.mxu0 %v969
        %1257 = vmatpush1.bf16.msra.mxu0 %v968
        %1258 = vmatprep.subr.bf16.mxu0 %v971
        %1259 = vmatpush1.bf16.msra.mxu0 %v970
        %1260 = vmatprep.subr.bf16.mxu0 %v973
        %1261 = vmatpush1.bf16.msra.mxu0 %v972
        %1262 = vmatprep.subr.bf16.mxu0 %v975
        %1263 = vmatpush1.bf16.msra.mxu0 %v974
        %1264 = vmatprep.subr.bf16.mxu0 %v977
        %1265 = vmatpush1.bf16.msra.mxu0 %v976
        %1266 = vmatprep.subr.bf16.mxu0 %v979
        %1267 = vmatpush1.bf16.msra.mxu0 %v978
        %1268 = vmatprep.mubr.bf16.mxu0 %v481
        %1269 = vmatmul.mubr.bf16.gmra.mrb[0].mxu0 %v467
        %v1270 = vpop.f32.mrb[0].mxu0
        %v1271 = vadd.f32 0.0, %v1270
        %v1272 = vpop.f32.mrb[0].mxu0
        %v1273 = vadd.f32 0.0, %v1272
        %v1274 = vpop.f32.mrb[0].mxu0
        %v1275 = vpop.f32.mrb[0].mxu0
        %1276 = vdwg.mxu0
        %1277 = vmatprep.subr.bf16.mxu0 %v981
        %1278 = vmatpush1.bf16.msra.mxu0 %v980
        %1279 = vmatprep.subr.bf16.mxu0 %v983
        %1280 = vmatpush1.bf16.msra.mxu0 %v982
        %1281 = vmatprep.subr.bf16.mxu0 %v985
        %1282 = vmatpush1.bf16.msra.mxu0 %v984
        %1283 = vmatprep.subr.bf16.mxu0 %v987
        %1284 = vmatpush1.bf16.msra.mxu0 %v986
        %1285 = vmatprep.subr.bf16.mxu0 %v989
        %1286 = vmatpush1.bf16.msra.mxu0 %v988
        %1287 = vmatprep.subr.bf16.mxu0 %v991
        %1288 = vmatpush1.bf16.msra.mxu0 %v990
        %1289 = vmatprep.subr.bf16.mxu0 %v993
        %1290 = vmatpush1.bf16.msra.mxu0 %v992
        %1291 = vmatprep.subr.bf16.mxu0 %v995
        %1292 = vmatpush1.bf16.msra.mxu0 %v994
        %1293 = vmatprep.subr.bf16.mxu0 %v997
        %1294 = vmatpush1.bf16.msra.mxu0 %v996
        %1295 = vmatprep.subr.bf16.mxu0 %v999
        %1296 = vmatpush1.bf16.msra.mxu0 %v998
        %1297 = vmatprep.subr.bf16.mxu0 %v1001
        %1298 = vmatpush1.bf16.msra.mxu0 %v1000
        %1299 = vmatprep.subr.bf16.mxu0 %v1003
        %1300 = vmatpush1.bf16.msra.mxu0 %v1002
        %1301 = vmatprep.subr.bf16.mxu0 %v1005
        %1302 = vmatpush1.bf16.msra.mxu0 %v1004
        %1303 = vmatprep.subr.bf16.mxu0 %v1007
        %1304 = vmatpush1.bf16.msra.mxu0 %v1006
        %1305 = vmatprep.subr.bf16.mxu0 %v1009
        %1306 = vmatpush1.bf16.msra.mxu0 %v1008
        %1307 = vmatprep.subr.bf16.mxu0 %v1011
        %1308 = vmatpush1.bf16.msra.mxu0 %v1010
        %1309 = vmatprep.mubr.bf16.mxu0 %v491
        %1310 = vmatmul.mubr.bf16.gmra.mrb[0].mxu0 %v489
        %v1311 = vpop.f32.mrb[0].mxu0
        %v1312 = vadd.f32 %v1271, %v1311
        %v1313 = vpop.f32.mrb[0].mxu0
        %v1314 = vadd.f32 %v1273, %v1313
        %v1315 = vpop.f32.mrb[0].mxu0
        %v1316 = vpop.f32.mrb[0].mxu0
        %1317 = vdwg.mxu0
        %1318 = vmatprep.subr.bf16.mxu0 %v1013
        %1319 = vmatpush1.bf16.msra.mxu0 %v1012
        %1320 = vmatprep.subr.bf16.mxu0 %v1015
        %1321 = vmatpush1.bf16.msra.mxu0 %v1014
        %1322 = vmatprep.subr.bf16.mxu0 %v1017
        %1323 = vmatpush1.bf16.msra.mxu0 %v1016
        %1324 = vmatprep.subr.bf16.mxu0 %v1019
        %1325 = vmatpush1.bf16.msra.mxu0 %v1018
        %1326 = vmatprep.subr.bf16.mxu0 %v1021
        %1327 = vmatpush1.bf16.msra.mxu0 %v1020
        %1328 = vmatprep.subr.bf16.mxu0 %v1023
        %1329 = vmatpush1.bf16.msra.mxu0 %v1022
        %1330 = vmatprep.subr.bf16.mxu0 %v1025
        %1331 = vmatpush1.bf16.msra.mxu0 %v1024
        %1332 = vmatprep.subr.bf16.mxu0 %v1027
        %1333 = vmatpush1.bf16.msra.mxu0 %v1026
        %1334 = vmatprep.subr.bf16.mxu0 %v1029
        %1335 = vmatpush1.bf16.msra.mxu0 %v1028
        %1336 = vmatprep.subr.bf16.mxu0 %v1031
        %1337 = vmatpush1.bf16.msra.mxu0 %v1030
        %1338 = vmatprep.subr.bf16.mxu0 %v1033
        %1339 = vmatpush1.bf16.msra.mxu0 %v1032
        %1340 = vmatprep.subr.bf16.mxu0 %v1035
        %1341 = vmatpush1.bf16.msra.mxu0 %v1034
        %1342 = vmatprep.subr.bf16.mxu0 %v1037
        %1343 = vmatpush1.bf16.msra.mxu0 %v1036
        %1344 = vmatprep.subr.bf16.mxu0 %v1039
        %1345 = vmatpush1.bf16.msra.mxu0 %v1038
        %1346 = vmatprep.subr.bf16.mxu0 %v1041
        %1347 = vmatpush1.bf16.msra.mxu0 %v1040
        %1348 = vmatprep.subr.bf16.mxu0 %v1043
        %1349 = vmatpush1.bf16.msra.mxu0 %v1042
        %1350 = vmatprep.mubr.bf16.mxu0 %v488
        %1351 = vmatmul.mubr.bf16.gmra.mrb[0].mxu0 %v474
        %v1352 = vpop.f32.mrb[0].mxu0
        %v1353 = vadd.f32 %v1312, %v1352
        %v1354 = vpop.f32.mrb[0].mxu0
        %v1355 = vadd.f32 %v1314, %v1354
        %v1356 = vpop.f32.mrb[0].mxu0
        %v1357 = vpop.f32.mrb[0].mxu0
        %1358 = vdwg.mxu0
        %1359 = vmatprep.subr.bf16.mxu0 %v1045
        %1360 = vmatpush1.bf16.msra.mxu0 %v1044
        %1361 = vmatprep.subr.bf16.mxu0 %v1047
        %1362 = vmatpush1.bf16.msra.mxu0 %v1046
        %1363 = vmatprep.subr.bf16.mxu0 %v1049
        %1364 = vmatpush1.bf16.msra.mxu0 %v1048
        %1365 = vmatprep.subr.bf16.mxu0 %v1051
        %1366 = vmatpush1.bf16.msra.mxu0 %v1050
        %1367 = vmatprep.subr.bf16.mxu0 %v1053
        %1368 = vmatpush1.bf16.msra.mxu0 %v1052
        %1369 = vmatprep.subr.bf16.mxu0 %v1055
        %1370 = vmatpush1.bf16.msra.mxu0 %v1054
        %1371 = vmatprep.subr.bf16.mxu0 %v1057
        %1372 = vmatpush1.bf16.msra.mxu0 %v1056
        %1373 = vmatprep.subr.bf16.mxu0 %v1059
        %1374 = vmatpush1.bf16.msra.mxu0 %v1058
        %1375 = vmatprep.subr.bf16.mxu0 %v1061
        %1376 = vmatpush1.bf16.msra.mxu0 %v1060
        %1377 = vmatprep.subr.bf16.mxu0 %v1063
        %1378 = vmatpush1.bf16.msra.mxu0 %v1062
        %1379 = vmatprep.subr.bf16.mxu0 %v1065
        %1380 = vmatpush1.bf16.msra.mxu0 %v1064
        %1381 = vmatprep.subr.bf16.mxu0 %v1067
        %1382 = vmatpush1.bf16.msra.mxu0 %v1066
        %1383 = vmatprep.subr.bf16.mxu0 %v1069
        %1384 = vmatpush1.bf16.msra.mxu0 %v1068
        %1385 = vmatprep.subr.bf16.mxu0 %v1071
        %1386 = vmatpush1.bf16.msra.mxu0 %v1070
        %1387 = vmatprep.subr.bf16.mxu0 %v1073
        %1388 = vmatpush1.bf16.msra.mxu0 %v1072
        %1389 = vmatprep.subr.bf16.mxu0 %v1075
        %1390 = vmatpush1.bf16.msra.mxu0 %v1074
        %1391 = vmatprep.mubr.bf16.mxu0 %v492
        %1392 = vmatmul.mubr.bf16.gmra.mrb[0].mxu0 %v490
        %v1393 = vpop.f32.mrb[0].mxu0
        %v1394 = vadd.f32 %v1353, %v1393
        %v1395 = vpop.f32.mrb[0].mxu0
        %v1396 = vadd.f32 %v1355, %v1395
        %v1397 = vpop.f32.mrb[0].mxu0
        %v1398 = vpop.f32.mrb[0].mxu0
        %1399 = vdwg.mxu0
        %1400 = vmatprep.subr.bf16.mxu0 %v1077
        %1401 = vmatpush1.bf16.msra.mxu0 %v1076
        %1402 = vmatprep.subr.bf16.mxu0 %v1079
        %1403 = vmatpush1.bf16.msra.mxu0 %v1078
        %1404 = vmatprep.subr.bf16.mxu0 %v1081
        %1405 = vmatpush1.bf16.msra.mxu0 %v1080
        %1406 = vmatprep.subr.bf16.mxu0 %v1083
        %1407 = vmatpush1.bf16.msra.mxu0 %v1082
        %1408 = vmatprep.subr.bf16.mxu0 %v1085
        %1409 = vmatpush1.bf16.msra.mxu0 %v1084
        %1410 = vmatprep.subr.bf16.mxu0 %v1087
        %1411 = vmatpush1.bf16.msra.mxu0 %v1086
        %1412 = vmatprep.subr.bf16.mxu0 %v1089
        %1413 = vmatpush1.bf16.msra.mxu0 %v1088
        %1414 = vmatprep.subr.bf16.mxu0 %v1091
        %1415 = vmatpush1.bf16.msra.mxu0 %v1090
        %1416 = vmatprep.subr.bf16.mxu0 0
        %1417 = vmatpush1.bf16.msra.mxu0 0
        %1418 = vmatprep.subr.bf16.mxu0 0
        %1419 = vmatpush1.bf16.msra.mxu0 0
        %1420 = vmatprep.subr.bf16.mxu0 0
        %1421 = vmatpush1.bf16.msra.mxu0 0
        %1422 = vmatprep.subr.bf16.mxu0 0
        %1423 = vmatpush1.bf16.msra.mxu0 0
        %1424 = vmatprep.subr.bf16.mxu0 0
        %1425 = vmatpush1.bf16.msra.mxu0 0
        %1426 = vmatprep.subr.bf16.mxu0 0
        %1427 = vmatpush1.bf16.msra.mxu0 0
        %1428 = vmatprep.subr.bf16.mxu0 0
        %1429 = vmatpush1.bf16.msra.mxu0 0
        %1430 = vmatprep.subr.bf16.mxu0 0
        %1431 = vmatpush1.bf16.msra.mxu0 0
        %1432 = vmatprep.mubr.bf16.mxu0 0
        %1433 = vmatmul.mubr.bf16.gmra.mrb[0].mxu0 %v506
        %v1434 = vpop.f32.mrb[0].mxu0
        %v1435 = vadd.f32 %v1394, %v1434
        %v1436 = vpop.f32.mrb[0].mxu0
        %v1437 = vadd.f32 %v1396, %v1436
        %v1438 = vpop.f32.mrb[0].mxu0
        %v1439 = vpop.f32.mrb[0].mxu0
        %1440 = vdwg.mxu0
        %v1443 = vcombine.low %v1435, %v1437
        %v1445 = vunpack.c.l.s4 1983009808
        %v1446 = vunpack.c.0.s8 %v1445
        %v1447 = vlaneseq
        %v1448 = vshrl.u32 %v1447, 7
        %v1449 = vsub.s32 %v1446, %v1448
        %v1450 = vrot.slane %v1443, %v1449
        %v1452 = vadd.f32 %v295, %v1450
        %1453 = vst [vmem:[#allocation2] sm:$0xf] %v1452
        %p1454 = scmp.eq.s32.totalorder %s19, 3
        // Predicated region
        $region53: #{forward.7} parent=47 // pred_check
          %p1455 = pneg %p1454
        $region54: #{forward.7} parent=47 // pred_check_branch
          %1457 = sbr.rel (%p1455) target = $region56
        $region55: #{forward.7} parent=47 // pred_region
          %v1458 = vld [vmem:[#allocation2] sm:$0xf]
          %v1459 = vld [vmem:[%s2] sm:$0x3]
          %v1461 = vlaneseq
          %v1462 = vshrl.u32 %v1461, 7
          %v1463 = vsub.s32 0, %v1462
          %v1464 = vrot.slane %v1459, %v1463
          %v1465 = vlaneseq
          %v1466 = vshrl.u32 %v1465, 7
          %v1467 = vsub.s32 1, %v1466
          %v1468 = vrot.slane %v1459, %v1467
          %v1469 = vcombine.low %v1464, %v1468
          %v1471 = vunpack.c.l.s4 1983009808
          %v1472 = vunpack.c.0.s8 %v1471
          %v1473 = vlaneseq
          %v1474 = vshrl.u32 %v1473, 7
          %v1475 = vsub.s32 %v1472, %v1474
          %v1476 = vrot.slane %v1469, %v1475
          %v1478 = vadd.f32 %v1458, %v1476
          %v1479 = vmax.f32 %v1478, 0.0
          %v1482 = vunpack.c.l.s4 1983009808
          %v1483 = vunpack.c.0.s8 %v1482
          %v1484 = vlaneseq
          %v1485 = vshrl.u32 %v1484, 7
          %v1486 = vsub.s32 %v1483, %v1485
          %v1487 = vrot.slane %v1479, %v1486
          %v1488 = vcombine.high %v1487, %v1487
          %v1491 = vpack.c.bf16 %v1487, %v1487
          %v1492 = vpack.c.bf16 %v1488, %v1488
          %v1493 = vld [vmem:[%s3] sm:$0xf]
          %v1494 = vld [vmem:[%s3 + $0x4] sm:$0xf]
          %v1495 = vld [vmem:[%s3 + $0x8] sm:$0xf]
          %v1496 = vld [vmem:[%s3 + $0xc] sm:$0xf]
          %v1497 = vld [vmem:[%s3 + $0x10] sm:$0xf]
          %v1498 = vld [vmem:[%s3 + $0x14] sm:$0xf]
          %v1499 = vld [vmem:[%s3 + $0x18] sm:$0xf]
          %v1500 = vld [vmem:[%s3 + $0x1c] sm:$0xf]
          %v1501 = vld [vmem:[%s3 + $0x20] sm:$0xf]
          %v1502 = vld [vmem:[%s3 + $0x24] sm:$0xf]
          %v1503 = vld [vmem:[%s3 + $0x28] sm:$0xf]
          %v1504 = vld [vmem:[%s3 + $0x2c] sm:$0xf]
          %v1505 = vld [vmem:[%s3 + $0x30] sm:$0xf]
          %v1506 = vld [vmem:[%s3 + $0x34] sm:$0xf]
          %v1507 = vld [vmem:[%s3 + $0x38] sm:$0xf]
          %v1508 = vld [vmem:[%s3 + $0x3c] sm:$0xf]
          %v1509 = vld [vmem:[%s3 + $0x40] sm:$0xf]
          %v1510 = vld [vmem:[%s3 + $0x44] sm:$0xf]
          %v1511 = vld [vmem:[%s3 + $0x48] sm:$0xf]
          %v1512 = vld [vmem:[%s3 + $0x4c] sm:$0xf]
          %v1513 = vld [vmem:[%s3 + $0x50] sm:$0xf]
          %v1514 = vld [vmem:[%s3 + $0x54] sm:$0xf]
          %v1515 = vld [vmem:[%s3 + $0x58] sm:$0xf]
          %v1516 = vld [vmem:[%s3 + $0x5c] sm:$0xf]
          %v1517 = vld [vmem:[%s3 + $0x60] sm:$0xf]
          %v1518 = vld [vmem:[%s3 + $0x64] sm:$0xf]
          %v1519 = vld [vmem:[%s3 + $0x68] sm:$0xf]
          %v1520 = vld [vmem:[%s3 + $0x6c] sm:$0xf]
          %v1521 = vld [vmem:[%s3 + $0x70] sm:$0xf]
          %v1522 = vld [vmem:[%s3 + $0x74] sm:$0xf]
          %v1523 = vld [vmem:[%s3 + $0x78] sm:$0xf]
          %v1524 = vld [vmem:[%s3 + $0x7c] sm:$0xf]
          %v1525 = vld [vmem:[%s4] sm:$0x1]
          %v1527 = vlaneseq
          %v1528 = vshrl.u32 %v1527, 7
          %v1529 = vsub.s32 0, %v1528
          %v1530 = vrot.slane %v1525, %v1529
          %v1564 = vunpack.c.l.b16 %v1493
          %v1565 = vunpack.c.l.b16 %v1494
          %v1566 = vunpack.c.l.b16 %v1495
          %v1567 = vunpack.c.l.b16 %v1496
          %v1568 = vunpack.c.l.b16 %v1497
          %v1569 = vunpack.c.l.b16 %v1498
          %v1570 = vunpack.c.l.b16 %v1499
          %v1571 = vunpack.c.l.b16 %v1500
          %v1572 = vunpack.c.l.b16 %v1501
          %v1573 = vunpack.c.l.b16 %v1502
          %v1574 = vunpack.c.l.b16 %v1503
          %v1575 = vunpack.c.l.b16 %v1504
          %v1576 = vunpack.c.l.b16 %v1505
          %v1577 = vunpack.c.l.b16 %v1506
          %v1578 = vunpack.c.l.b16 %v1507
          %v1579 = vunpack.c.l.b16 %v1508
          %v1580 = vunpack.c.l.b16 %v1509
          %v1581 = vunpack.c.l.b16 %v1510
          %v1582 = vunpack.c.l.b16 %v1511
          %v1583 = vunpack.c.l.b16 %v1512
          %v1584 = vunpack.c.l.b16 %v1513
          %v1585 = vunpack.c.l.b16 %v1514
          %v1586 = vunpack.c.l.b16 %v1515
          %v1587 = vunpack.c.l.b16 %v1516
          %v1588 = vunpack.c.l.b16 %v1517
          %v1589 = vunpack.c.l.b16 %v1518
          %v1590 = vunpack.c.l.b16 %v1519
          %v1591 = vunpack.c.l.b16 %v1520
          %v1592 = vunpack.c.l.b16 %v1521
          %v1593 = vunpack.c.l.b16 %v1522
          %v1594 = vunpack.c.l.b16 %v1523
          %v1595 = vunpack.c.l.b16 %v1524
          %v1596 = vpack.c.b16 %v1565, %v1564
          %v1597 = vpack.c.b16 %v1567, %v1566
          %v1598 = vpack.c.b16 %v1569, %v1568
          %v1599 = vpack.c.b16 %v1571, %v1570
          %v1600 = vpack.c.b16 %v1573, %v1572
          %v1601 = vpack.c.b16 %v1575, %v1574
          %v1602 = vpack.c.b16 %v1577, %v1576
          %v1603 = vpack.c.b16 %v1579, %v1578
          %v1604 = vpack.c.b16 %v1581, %v1580
          %v1605 = vpack.c.b16 %v1583, %v1582
          %v1606 = vpack.c.b16 %v1585, %v1584
          %v1607 = vpack.c.b16 %v1587, %v1586
          %v1608 = vpack.c.b16 %v1589, %v1588
          %v1609 = vpack.c.b16 %v1591, %v1590
          %v1610 = vpack.c.b16 %v1593, %v1592
          %v1611 = vpack.c.b16 %v1595, %v1594
          %1628 = vmatprep.subr.bf16.mxu0 0
          %1629 = vmatpush1.bf16.msra.mxu0 %v1596
          %1630 = vmatprep.subr.bf16.mxu0 0
          %1631 = vmatpush1.bf16.msra.mxu0 %v1597
          %1632 = vmatprep.subr.bf16.mxu0 0
          %1633 = vmatpush1.bf16.msra.mxu0 %v1598
          %1634 = vmatprep.subr.bf16.mxu0 0
          %1635 = vmatpush1.bf16.msra.mxu0 %v1599
          %1636 = vmatprep.subr.bf16.mxu0 0
          %1637 = vmatpush1.bf16.msra.mxu0 %v1600
          %1638 = vmatprep.subr.bf16.mxu0 0
          %1639 = vmatpush1.bf16.msra.mxu0 %v1601
          %1640 = vmatprep.subr.bf16.mxu0 0
          %1641 = vmatpush1.bf16.msra.mxu0 %v1602
          %1642 = vmatprep.subr.bf16.mxu0 0
          %1643 = vmatpush1.bf16.msra.mxu0 %v1603
          %1644 = vmatprep.subr.bf16.mxu0 0
          %1645 = vmatpush1.bf16.msra.mxu0 %v1604
          %1646 = vmatprep.subr.bf16.mxu0 0
          %1647 = vmatpush1.bf16.msra.mxu0 %v1605
          %1648 = vmatprep.subr.bf16.mxu0 0
          %1649 = vmatpush1.bf16.msra.mxu0 %v1606
          %1650 = vmatprep.subr.bf16.mxu0 0
          %1651 = vmatpush1.bf16.msra.mxu0 %v1607
          %1652 = vmatprep.subr.bf16.mxu0 0
          %1653 = vmatpush1.bf16.msra.mxu0 %v1608
          %1654 = vmatprep.subr.bf16.mxu0 0
          %1655 = vmatpush1.bf16.msra.mxu0 %v1609
          %1656 = vmatprep.subr.bf16.mxu0 0
          %1657 = vmatpush1.bf16.msra.mxu0 %v1610
          %1658 = vmatprep.subr.bf16.mxu0 0
          %1659 = vmatpush1.bf16.msra.mxu0 %v1611
          %1660 = vmatprep.mubr.bf16.mxu0 %v1492
          %1661 = vmatmul.mubr.bf16.gmra.mrb[0].mxu0 %v1491
          %v1662 = vpop.f32.mrb[0].mxu0
          %v1663 = vadd.f32 %v1530, %v1662
          %v1664 = vpop.f32.mrb[0].mxu0
          %v1665 = vpop.f32.mrb[0].mxu0
          %v1666 = vpop.f32.mrb[0].mxu0
          %1667 = vdwg.mxu0
          %v1668 = vmax.f32 %v1663, 0.0
          %v1669 = vpack.c.bf16 %v1668, %v1668
          %v1670 = vld [vmem:[%s5] sm:$0xf]
          %v1671 = vld [vmem:[%s5 + $0x4] sm:$0xf]
          %v1672 = vld [vmem:[%s5 + $0x8] sm:$0xf]
          %v1673 = vld [vmem:[%s5 + $0xc] sm:$0xf]
          %v1674 = vld [vmem:[%s5 + $0x10] sm:$0xf]
          %v1675 = vld [vmem:[%s5 + $0x14] sm:$0xf]
          %v1676 = vld [vmem:[%s5 + $0x18] sm:$0xf]
          %v1677 = vld [vmem:[%s5 + $0x1c] sm:$0xf]
          %v1678 = vld [vmem:[%s5 + $0x20] sm:$0xf]
          %v1679 = vld [vmem:[%s5 + $0x24] sm:$0xf]
          %v1680 = vld [vmem:[%s5 + $0x28] sm:$0xf]
          %v1681 = vld [vmem:[%s5 + $0x2c] sm:$0xf]
          %v1682 = vld [vmem:[%s5 + $0x30] sm:$0xf]
          %v1683 = vld [vmem:[%s5 + $0x34] sm:$0xf]
          %v1684 = vld [vmem:[%s5 + $0x38] sm:$0xf]
          %v1685 = vld [vmem:[%s5 + $0x3c] sm:$0xf]
          %v1686 = vld [vmem:[%s6] sm:$0x1]
          %v1688 = vlaneseq
          %v1689 = vshrl.u32 %v1688, 7
          %v1690 = vsub.s32 0, %v1689
          %v1691 = vrot.slane %v1686, %v1690
          %v1709 = vunpack.c.l.b16 %v1670
          %v1710 = vunpack.c.l.b16 %v1671
          %v1711 = vunpack.c.l.b16 %v1672
          %v1712 = vunpack.c.l.b16 %v1673
          %v1713 = vunpack.c.l.b16 %v1674
          %v1714 = vunpack.c.l.b16 %v1675
          %v1715 = vunpack.c.l.b16 %v1676
          %v1716 = vunpack.c.l.b16 %v1677
          %v1717 = vunpack.c.l.b16 %v1678
          %v1718 = vunpack.c.l.b16 %v1679
          %v1719 = vunpack.c.l.b16 %v1680
          %v1720 = vunpack.c.l.b16 %v1681
          %v1721 = vunpack.c.l.b16 %v1682
          %v1722 = vunpack.c.l.b16 %v1683
          %v1723 = vunpack.c.l.b16 %v1684
          %v1724 = vunpack.c.l.b16 %v1685
          %v1725 = vpack.c.b16 %v1710, %v1709
          %v1726 = vpack.c.b16 %v1712, %v1711
          %v1727 = vpack.c.b16 %v1714, %v1713
          %v1728 = vpack.c.b16 %v1716, %v1715
          %v1729 = vpack.c.b16 %v1718, %v1717
          %v1730 = vpack.c.b16 %v1720, %v1719
          %v1731 = vpack.c.b16 %v1722, %v1721
          %v1732 = vpack.c.b16 %v1724, %v1723
          %1741 = vmatprep.subr.bf16.mxu0 0
          %1742 = vmatpush1.bf16.msra.mxu0 %v1725
          %1743 = vmatprep.subr.bf16.mxu0 0
          %1744 = vmatpush1.bf16.msra.mxu0 %v1726
          %1745 = vmatprep.subr.bf16.mxu0 0
          %1746 = vmatpush1.bf16.msra.mxu0 %v1727
          %1747 = vmatprep.subr.bf16.mxu0 0
          %1748 = vmatpush1.bf16.msra.mxu0 %v1728
          %1749 = vmatprep.subr.bf16.mxu0 0
          %1750 = vmatpush1.bf16.msra.mxu0 %v1729
          %1751 = vmatprep.subr.bf16.mxu0 0
          %1752 = vmatpush1.bf16.msra.mxu0 %v1730
          %1753 = vmatprep.subr.bf16.mxu0 0
          %1754 = vmatpush1.bf16.msra.mxu0 %v1731
          %1755 = vmatprep.subr.bf16.mxu0 0
          %1756 = vmatpush1.bf16.msra.mxu0 %v1732
          %1757 = vmatprep.subr.bf16.mxu0 0
          %1758 = vmatpush1.bf16.msra.mxu0 0
          %1759 = vmatprep.subr.bf16.mxu0 0
          %1760 = vmatpush1.bf16.msra.mxu0 0
          %1761 = vmatprep.subr.bf16.mxu0 0
          %1762 = vmatpush1.bf16.msra.mxu0 0
          %1763 = vmatprep.subr.bf16.mxu0 0
          %1764 = vmatpush1.bf16.msra.mxu0 0
          %1765 = vmatprep.subr.bf16.mxu0 0
          %1766 = vmatpush1.bf16.msra.mxu0 0
          %1767 = vmatprep.subr.bf16.mxu0 0
          %1768 = vmatpush1.bf16.msra.mxu0 0
          %1769 = vmatprep.subr.bf16.mxu0 0
          %1770 = vmatpush1.bf16.msra.mxu0 0
          %1771 = vmatprep.subr.bf16.mxu0 0
          %1772 = vmatpush1.bf16.msra.mxu0 0
          %1773 = vmatprep.mubr.bf16.mxu0 0
          %1774 = vmatmul.mubr.bf16.gmra.mrb[0].mxu0 %v1669
          %v1775 = vpop.f32.mrb[0].mxu0
          %v1776 = vadd.f32 %v1691, %v1775
          %v1777 = vpop.f32.mrb[0].mxu0
          %v1778 = vpop.f32.mrb[0].mxu0
          %v1779 = vpop.f32.mrb[0].mxu0
          %1780 = vdwg.mxu0
          %vm1781 = vcmask 189440
          %1782 = vst.msk [vmem:[#allocation3] sm:$0x3] %vm1781, %v1776
        $region56: #{forward.7} parent=47 // pred_fallthru
          _
        // Predicated region
        $region57: #{forward.7} parent=47 // pred_check
          %p1783 = pneg %p189
        $region58: #{forward.7} parent=47 // pred_check_branch
          %1785 = sbr.rel (%p1783) target = $region60
        $region59: #{forward.7} parent=47 // pred_region
          %s1787 = ssub.s32 32, 32
          %1788 = vsyncadd [#allocation4], %s1787
          %s1790 = sshll.u32 [#allocation3], 4
          %s1791 = int_to_ptr.vmem [resolvable:$true] %s1790
          %1793 = dma.vmem_to_hbm [thread:$0]  %s1791, 32, %s7, [#allocation4]
        $region60: #{forward.7} parent=47 // pred_fallthru
          _
        // Predicated region
        $region61: #{forward.7} parent=47 // pred_check
          %p1794 = pneg %p189
        $region62: #{forward.7} parent=47 // pred_check_branch
          %1796 = sbr.rel (%p1794) target = $region64
        $region63: #{forward.7} parent=47 // pred_region
          %1797 = dma.done [#allocation4], 32
        $region64: #{forward.7} parent=47 // pred_fallthru
          _
      $region48: #{forward.7} parent=5 // pred_fallthru
        _
      %p1798 = scmp.le.s32.totalorder 2, %s14
      // Predicated region
      $region65: #{forward.7} parent=5 // pred_check
        %p1799 = pneg %p1798
      $region66: #{forward.7} parent=5 // pred_check_branch
        %1801 = sbr.rel (%p1799) target = $region68
      $region67: #{forward.7} parent=5 // pred_region
        %s1802 = ssub.s32 %s14, 2
      $region68: #{forward.7} parent=5 // pred_fallthru
        _
    $region6: #{forward.7} parent=1 // loop_footer
      %s18 = sadd.s32 1, %s14
    $region7: #{forward.7} parent=1 // loop_footer_branch
      %13 = sbr.rel target = $region3
    $region8: #{forward.7} parent=1 // loop_exit
      _
    %1803 = vsyncpa [#allocation4], 1
    %s1804 = scalar_lea.sflag [#allocation4], 1
    %1805 = vsyncpa %s1804, 1

</llo_original>
